<compile_context>
chip_gen: v7x
topology: tpu7x:2x2x1
jax: 0.10.0
libtpu: 0.0.40
codegen_flags: <defaults>
</compile_context>

<pallas_src>
import functools

import jax
import jax.numpy as jnp
from jax.experimental import pallas as pl
from jax.experimental.pallas import tpu as pltpu


# ----------------------------------------------------------------------------
# Fused ResidualGroup kernel
# ----------------------------------------------------------------------------
def _residual_group_kernel(x_ref, wc_ref, bc_ref, caw1_ref, cab1_ref,
                           caw2_ref, cab2_ref, wt_ref, bt_ref, o_ref,
                           pad_ref, *, H, W, C, n_blocks, matmul_dtype):
    HW = H * W

    # Zero the padded scratch once per grid step; every conv below only
    # overwrites the interior, so the 1-pixel zero border survives all convs.
    pad_ref[...] = jnp.zeros_like(pad_ref)

    def conv3x3(v, w, b):
        """3x3 conv (pad=1) + bias.  v: (HW, C) f32 -> (HW, C) f32.

        Writes v into the padded VMEM scratch, takes the 9 shifted tap views
        as static slices and collapses them into a single (HW, 9C) @ (9C, C)
        MXU matmul (im2col entirely in VMEM).
        """
        pad_ref[1:H + 1, 1:W + 1, :] = v.reshape(H, W, C)
        taps = [pad_ref[dy:dy + H, dx:dx + W, :]            # each (H, W, C)
                for dy in range(3) for dx in range(3)]
        patches = jnp.concatenate(taps, axis=-1).reshape(HW, 9 * C)
        acc = jnp.dot(patches.astype(matmul_dtype), w.astype(matmul_dtype),
                      preferred_element_type=jnp.float32)
        return acc + b                                       # (HW, C) f32

    x = x_ref[0].reshape(HW, C).astype(jnp.float32)          # (HW, C)
    res = x

    # n_resblocks is small -> unrolled static loop; weights indexed statically.
    for blk in range(n_blocks):
        h = conv3x3(res, wc_ref[blk, 0], bc_ref[blk, 0])     # conv 1
        h = jnp.maximum(h, 0.0)                              # ReLU
        h = conv3x3(h, wc_ref[blk, 1], bc_ref[blk, 1])       # conv 2

        # ---- CALayer (squeeze-excite), kept entirely in VMEM -------------
        pooled = jnp.mean(h, axis=0, keepdims=True)          # (1, C) avg pool
        g = jnp.dot(pooled, caw1_ref[blk],
                    preferred_element_type=jnp.float32) + cab1_ref[blk]
        g = jnp.maximum(g, 0.0)
        g = jnp.dot(g, caw2_ref[blk],
                    preferred_element_type=jnp.float32) + cab2_ref[blk]
        g = 1.0 / (1.0 + jnp.exp(-g))                        # sigmoid, (1, C)

        res = h * g + res                                    # RCAB residual

    out = conv3x3(res, wt_ref[...], bt_ref[...]) + x         # tail + group res
    o_ref[...] = out.reshape(1, H, W, C).astype(o_ref.dtype)


def _full(ndim):
    """index_map for an un-tiled (whole-array) operand."""
    return lambda n: (0,) * ndim


def residual_group_forward(x, params, *, matmul_dtype=jnp.float32):
    """ResidualGroup forward.  x: (N, H, W, C) float32 NHWC.

    Set matmul_dtype=jnp.bfloat16 on v6e/v7x for ~2x MXU rate / half the
    operand traffic (accumulation and all elementwise math stay f32).
    """
    N, H, W, C = x.shape
    nb = params["conv_w"].shape[0]
    Cr = params["ca_w1"].shape[-1]

    kernel = functools.partial(_residual_group_kernel, H=H, W=W, C=C,
                               n_blocks=nb, matmul_dtype=matmul_dtype)

    out = pl.pallas_call(
        kernel,
        grid=(N,),
        in_specs=[
            pl.BlockSpec((1, H, W, C), lambda n: (n, 0, 0, 0)),    # x
            pl.BlockSpec((nb, 2, 9 * C, C), _full(4)),             # conv weights
            pl.BlockSpec((nb, 2, 1, C), _full(4)),                 # conv biases
            pl.BlockSpec((nb, C, Cr), _full(3)),                   # CA w1
            pl.BlockSpec((nb, 1, Cr), _full(3)),                   # CA b1
            pl.BlockSpec((nb, Cr, C), _full(3)),                   # CA w2
            pl.BlockSpec((nb, 1, C), _full(3)),                    # CA b2
            pl.BlockSpec((9 * C, C), _full(2)),                    # tail w
            pl.BlockSpec((1, C), _full(2)),                        # tail b
        ],
        out_specs=pl.BlockSpec((1, H, W, C), lambda n: (n, 0, 0, 0)),
        out_shape=jax.ShapeDtypeStruct((N, H, W, C), x.dtype),
        scratch_shapes=[pltpu.VMEM((H + 2, W + 2, C), jnp.float32)],
        input_output_aliases={0: 0},      # group output reuses x's HBM buffer
        compiler_params=pltpu.CompilerParams(
            dimension_semantics=("parallel",),
            vmem_limit_bytes=32 * 1024 * 1024),
    )(x, params["conv_w"], params["conv_b"],
      params["ca_w1"], params["ca_b1"], params["ca_w2"], params["ca_b2"],
      params["tail_w"], params["tail_b"])
    return out


# ----------------------------------------------------------------------------
# Parameter construction (random, module-consistent shapes)
# ----------------------------------------------------------------------------
def init_residual_group_params(key, n_feat, reduction, n_resblocks):
    c, cr = n_feat, n_feat // reduction

    def nrm(k, shape):
        return 0.1 * jax.random.normal(k, shape, dtype=jnp.float32)

    ks = jax.random.split(key, 8)
    return {
        # (block, conv{0,1}, tap*Cin, Cout); taps ordered (dy, dx) row-major.
        "conv_w": nrm(ks[0], (n_resblocks, 2, 9 * c, c)),
        "conv_b": nrm(ks[1], (n_resblocks, 2, 1, c)),
        "ca_w1": nrm(ks[2], (n_resblocks, c, cr)),
        "ca_b1": nrm(ks[3], (n_resblocks, 1, cr)),
        "ca_w2": nrm(ks[4], (n_resblocks, cr, c)),
        "ca_b2": nrm(ks[5], (n_resblocks, 1, c)),
        "tail_w": nrm(ks[6], (9 * c, c)),
        "tail_b": nrm(ks[7], (1, c)),
    }


if __name__ == "__main__":
    # small, module-consistent shapes
    batch, n_feat, H, W = 2, 16, 16, 16
    reduction, n_resblocks = 4, 2

    key = jax.random.PRNGKey(0)
    k_x, k_p = jax.random.split(key)

    # PyTorch input is NCHW; we use NHWC internally (documented layout above).
    x_nchw = jax.random.normal(k_x, (batch, n_feat, H, W), dtype=jnp.float32)
    x = jnp.transpose(x_nchw, (0, 2, 3, 1))                  # NCHW -> NHWC

    params = init_residual_group_params(k_p, n_feat, reduction, n_resblocks)

    out = residual_group_forward(x, params)
    out = jax.block_until_ready(out)
    assert out.shape == (batch, H, W, n_feat) and out.dtype == jnp.float32
    print("KERNEL_OK")
</pallas_src>

<mosaic_0001>
module attributes {stable_mosaic.version = 11 : i64} {
  func.func @_residual_group_kernel(%arg0: i32, %arg1: memref<1x16x16x16xf32, #tpu.memory_space<vmem>>, %arg2: memref<2x2x144x16xf32, #tpu.memory_space<vmem>>, %arg3: memref<2x2x1x16xf32, #tpu.memory_space<vmem>>, %arg4: memref<2x16x4xf32, #tpu.memory_space<vmem>>, %arg5: memref<2x1x4xf32, #tpu.memory_space<vmem>>, %arg6: memref<2x4x16xf32, #tpu.memory_space<vmem>>, %arg7: memref<2x1x16xf32, #tpu.memory_space<vmem>>, %arg8: memref<144x16xf32, #tpu.memory_space<vmem>>, %arg9: memref<1x16xf32, #tpu.memory_space<vmem>>, %arg10: memref<1x16x16x16xf32, #tpu.memory_space<vmem>>, %arg11: memref<18x18x16xf32, #tpu.memory_space<vmem>>) attributes {dimension_semantics = [#tpu.dimension_semantics<parallel>], iteration_bounds = array<i64: 2>, scalar_prefetch = 0 : i64, scratch_operands = 1 : i64, tpu.core_type = #tpu.core_type<tc>, window_params = [{transform_indices = @transform_0, window_bounds = array<i64: 1, 16, 16, 16>}, {pipeline_mode = #tpu.pipeline_mode<synchronous>, transform_indices = @transform_1, window_bounds = array<i64: 2, 2, 144, 16>}, {pipeline_mode = #tpu.pipeline_mode<synchronous>, transform_indices = @transform_2, window_bounds = array<i64: 2, 2, 1, 16>}, {pipeline_mode = #tpu.pipeline_mode<synchronous>, transform_indices = @transform_3, window_bounds = array<i64: 2, 16, 4>}, {pipeline_mode = #tpu.pipeline_mode<synchronous>, transform_indices = @transform_4, window_bounds = array<i64: 2, 1, 4>}, {pipeline_mode = #tpu.pipeline_mode<synchronous>, transform_indices = @transform_5, window_bounds = array<i64: 2, 4, 16>}, {pipeline_mode = #tpu.pipeline_mode<synchronous>, transform_indices = @transform_6, window_bounds = array<i64: 2, 1, 16>}, {pipeline_mode = #tpu.pipeline_mode<synchronous>, transform_indices = @transform_7, window_bounds = array<i64: 144, 16>}, {pipeline_mode = #tpu.pipeline_mode<synchronous>, transform_indices = @transform_8, window_bounds = array<i64: 1, 16>}, {transform_indices = @transform_9, window_bounds = array<i64: 1, 16, 16, 16>}]} {
    %cst = arith.constant 0.000000e+00 : f32
    %0 = vector.broadcast %cst : f32 to vector<18x18x16xf32>
    %c0 = arith.constant 0 : index
    %c0_0 = arith.constant 0 : index
    %c0_1 = arith.constant 0 : index
    %1 = vector.load %arg11[%c0, %c0_0, %c0_1] : memref<18x18x16xf32, #tpu.memory_space<vmem>>, vector<18x18x16xf32>
    tpu.vector_store %arg11[%c0, %c0_0, %c0_1], %0 {strides = array<i32>} : memref<18x18x16xf32, #tpu.memory_space<vmem>>, vector<18x18x16xf32>,
    %c0_2 = arith.constant 0 : index
    %c0_3 = arith.constant 0 : index
    %c0_4 = arith.constant 0 : index
    %c0_5 = arith.constant 0 : index
    %2 = vector.load %arg1[%c0_2, %c0_3, %c0_4, %c0_5] : memref<1x16x16x16xf32, #tpu.memory_space<vmem>>, vector<1x16x16x16xf32>
    %3 = vector.shape_cast %2 : vector<1x16x16x16xf32> to vector<16x16x16xf32>
    %4 = vector.shape_cast %3 : vector<16x16x16xf32> to vector<256x16xf32>
    %c0_6 = arith.constant 0 : index
    %c0_7 = arith.constant 0 : index
    %c0_8 = arith.constant 0 : index
    %c0_9 = arith.constant 0 : index
    %5 = vector.load %arg2[%c0_6, %c0_7, %c0_8, %c0_9] : memref<2x2x144x16xf32, #tpu.memory_space<vmem>>, vector<1x1x144x16xf32>
    %6 = vector.shape_cast %5 : vector<1x1x144x16xf32> to vector<144x16xf32>
    %c0_10 = arith.constant 0 : index
    %c0_11 = arith.constant 0 : index
    %c0_12 = arith.constant 0 : index
    %c0_13 = arith.constant 0 : index
    %7 = vector.load %arg3[%c0_10, %c0_11, %c0_12, %c0_13] : memref<2x2x1x16xf32, #tpu.memory_space<vmem>>, vector<1x1x1x16xf32>
    %8 = vector.shape_cast %7 : vector<1x1x1x16xf32> to vector<1x16xf32>
    %9 = vector.shape_cast %4 : vector<256x16xf32> to vector<16x16x16xf32>
    %c1 = arith.constant 1 : index
    %c1_14 = arith.constant 1 : index
    %c0_15 = arith.constant 0 : index
    %10 = vector.load %arg11[%c1, %c1_14, %c0_15] : memref<18x18x16xf32, #tpu.memory_space<vmem>>, vector<16x16x16xf32>
    tpu.vector_store %arg11[%c1, %c1_14, %c0_15], %9 {strides = array<i32>} : memref<18x18x16xf32, #tpu.memory_space<vmem>>, vector<16x16x16xf32>,
    %c0_16 = arith.constant 0 : index
    %c0_17 = arith.constant 0 : index
    %c0_18 = arith.constant 0 : index
    %11 = vector.load %arg11[%c0_16, %c0_17, %c0_18] : memref<18x18x16xf32, #tpu.memory_space<vmem>>, vector<16x16x16xf32>
    %c0_19 = arith.constant 0 : index
    %c1_20 = arith.constant 1 : index
    %c0_21 = arith.constant 0 : index
    %12 = vector.load %arg11[%c0_19, %c1_20, %c0_21] : memref<18x18x16xf32, #tpu.memory_space<vmem>>, vector<16x16x16xf32>
    %c0_22 = arith.constant 0 : index
    %c2 = arith.constant 2 : index
    %c0_23 = arith.constant 0 : index
    %13 = vector.load %arg11[%c0_22, %c2, %c0_23] : memref<18x18x16xf32, #tpu.memory_space<vmem>>, vector<16x16x16xf32>
    %c1_24 = arith.constant 1 : index
    %c0_25 = arith.constant 0 : index
    %c0_26 = arith.constant 0 : index
    %14 = vector.load %arg11[%c1_24, %c0_25, %c0_26] : memref<18x18x16xf32, #tpu.memory_space<vmem>>, vector<16x16x16xf32>
    %c1_27 = arith.constant 1 : index
    %c1_28 = arith.constant 1 : index
    %c0_29 = arith.constant 0 : index
    %15 = vector.load %arg11[%c1_27, %c1_28, %c0_29] : memref<18x18x16xf32, #tpu.memory_space<vmem>>, vector<16x16x16xf32>
    %c1_30 = arith.constant 1 : index
    %c2_31 = arith.constant 2 : index
    %c0_32 = arith.constant 0 : index
    %16 = vector.load %arg11[%c1_30, %c2_31, %c0_32] : memref<18x18x16xf32, #tpu.memory_space<vmem>>, vector<16x16x16xf32>
    %c2_33 = arith.constant 2 : index
    %c0_34 = arith.constant 0 : index
    %c0_35 = arith.constant 0 : index
    %17 = vector.load %arg11[%c2_33, %c0_34, %c0_35] : memref<18x18x16xf32, #tpu.memory_space<vmem>>, vector<16x16x16xf32>
    %c2_36 = arith.constant 2 : index
    %c1_37 = arith.constant 1 : index
    %c0_38 = arith.constant 0 : index
    %18 = vector.load %arg11[%c2_36, %c1_37, %c0_38] : memref<18x18x16xf32, #tpu.memory_space<vmem>>, vector<16x16x16xf32>
    %c2_39 = arith.constant 2 : index
    %c2_40 = arith.constant 2 : index
    %c0_41 = arith.constant 0 : index
    %19 = vector.load %arg11[%c2_39, %c2_40, %c0_41] : memref<18x18x16xf32, #tpu.memory_space<vmem>>, vector<16x16x16xf32>
    %20 = tpu.concatenate %11, %12, %13, %14, %15, %16, %17, %18, %19 in 2 : vector<16x16x16xf32>, vector<16x16x16xf32>, vector<16x16x16xf32>, vector<16x16x16xf32>, vector<16x16x16xf32>, vector<16x16x16xf32>, vector<16x16x16xf32>, vector<16x16x16xf32>, vector<16x16x16xf32> -> vector<16x16x144xf32>
    %21 = vector.shape_cast %20 : vector<16x16x144xf32> to vector<256x144xf32>
    %cst_42 = arith.constant dense<0.000000e+00> : vector<256x16xf32>
    %22 = tpu.matmul %21, %6, %cst_42 {dimension_numbers = #tpu.dot_dimension_numbers<[1], [0], [0], [1], [0, 0, 1, 1], [], []>} : vector<256x144xf32>, vector<144x16xf32>, vector<256x16xf32> -> vector<256x16xf32>
    %23 = vector.broadcast %8 : vector<1x16xf32> to vector<256x16xf32>
    %24 = arith.addf %22, %23 : vector<256x16xf32>
    %cst_43 = arith.constant 0.000000e+00 : f32
    %25 = vector.broadcast %cst_43 : f32 to vector<256x16xf32>
    %26 = arith.maximumf %24, %25 : vector<256x16xf32>
    %c0_44 = arith.constant 0 : index
    %c1_45 = arith.constant 1 : index
    %c0_46 = arith.constant 0 : index
    %c0_47 = arith.constant 0 : index
    %27 = vector.load %arg2[%c0_44, %c1_45, %c0_46, %c0_47] : memref<2x2x144x16xf32, #tpu.memory_space<vmem>>, vector<1x1x144x16xf32>
    %28 = vector.shape_cast %27 : vector<1x1x144x16xf32> to vector<144x16xf32>
    %c0_48 = arith.constant 0 : index
    %c1_49 = arith.constant 1 : index
    %c0_50 = arith.constant 0 : index
    %c0_51 = arith.constant 0 : index
    %29 = vector.load %arg3[%c0_48, %c1_49, %c0_50, %c0_51] : memref<2x2x1x16xf32, #tpu.memory_space<vmem>>, vector<1x1x1x16xf32>
    %30 = vector.shape_cast %29 : vector<1x1x1x16xf32> to vector<1x16xf32>
    %31 = vector.shape_cast %26 : vector<256x16xf32> to vector<16x16x16xf32>
    %c1_52 = arith.constant 1 : index
    %c1_53 = arith.constant 1 : index
    %c0_54 = arith.constant 0 : index
    %32 = vector.load %arg11[%c1_52, %c1_53, %c0_54] : memref<18x18x16xf32, #tpu.memory_space<vmem>>, vector<16x16x16xf32>
    tpu.vector_store %arg11[%c1_52, %c1_53, %c0_54], %31 {strides = array<i32>} : memref<18x18x16xf32, #tpu.memory_space<vmem>>, vector<16x16x16xf32>,
    %c0_55 = arith.constant 0 : index
    %c0_56 = arith.constant 0 : index
    %c0_57 = arith.constant 0 : index
    %33 = vector.load %arg11[%c0_55, %c0_56, %c0_57] : memref<18x18x16xf32, #tpu.memory_space<vmem>>, vector<16x16x16xf32>
    %c0_58 = arith.constant 0 : index
    %c1_59 = arith.constant 1 : index
    %c0_60 = arith.constant 0 : index
    %34 = vector.load %arg11[%c0_58, %c1_59, %c0_60] : memref<18x18x16xf32, #tpu.memory_space<vmem>>, vector<16x16x16xf32>
    %c0_61 = arith.constant 0 : index
    %c2_62 = arith.constant 2 : index
    %c0_63 = arith.constant 0 : index
    %35 = vector.load %arg11[%c0_61, %c2_62, %c0_63] : memref<18x18x16xf32, #tpu.memory_space<vmem>>, vector<16x16x16xf32>
    %c1_64 = arith.constant 1 : index
    %c0_65 = arith.constant 0 : index
    %c0_66 = arith.constant 0 : index
    %36 = vector.load %arg11[%c1_64, %c0_65, %c0_66] : memref<18x18x16xf32, #tpu.memory_space<vmem>>, vector<16x16x16xf32>
    %c1_67 = arith.constant 1 : index
    %c1_68 = arith.constant 1 : index
    %c0_69 = arith.constant 0 : index
    %37 = vector.load %arg11[%c1_67, %c1_68, %c0_69] : memref<18x18x16xf32, #tpu.memory_space<vmem>>, vector<16x16x16xf32>
    %c1_70 = arith.constant 1 : index
    %c2_71 = arith.constant 2 : index
    %c0_72 = arith.constant 0 : index
    %38 = vector.load %arg11[%c1_70, %c2_71, %c0_72] : memref<18x18x16xf32, #tpu.memory_space<vmem>>, vector<16x16x16xf32>
    %c2_73 = arith.constant 2 : index
    %c0_74 = arith.constant 0 : index
    %c0_75 = arith.constant 0 : index
    %39 = vector.load %arg11[%c2_73, %c0_74, %c0_75] : memref<18x18x16xf32, #tpu.memory_space<vmem>>, vector<16x16x16xf32>
    %c2_76 = arith.constant 2 : index
    %c1_77 = arith.constant 1 : index
    %c0_78 = arith.constant 0 : index
    %40 = vector.load %arg11[%c2_76, %c1_77, %c0_78] : memref<18x18x16xf32, #tpu.memory_space<vmem>>, vector<16x16x16xf32>
    %c2_79 = arith.constant 2 : index
    %c2_80 = arith.constant 2 : index
    %c0_81 = arith.constant 0 : index
    %41 = vector.load %arg11[%c2_79, %c2_80, %c0_81] : memref<18x18x16xf32, #tpu.memory_space<vmem>>, vector<16x16x16xf32>
    %42 = tpu.concatenate %33, %34, %35, %36, %37, %38, %39, %40, %41 in 2 : vector<16x16x16xf32>, vector<16x16x16xf32>, vector<16x16x16xf32>, vector<16x16x16xf32>, vector<16x16x16xf32>, vector<16x16x16xf32>, vector<16x16x16xf32>, vector<16x16x16xf32>, vector<16x16x16xf32> -> vector<16x16x144xf32>
    %43 = vector.shape_cast %42 : vector<16x16x144xf32> to vector<256x144xf32>
    %cst_82 = arith.constant dense<0.000000e+00> : vector<256x16xf32>
    %44 = tpu.matmul %43, %28, %cst_82 {dimension_numbers = #tpu.dot_dimension_numbers<[1], [0], [0], [1], [0, 0, 1, 1], [], []>} : vector<256x144xf32>, vector<144x16xf32>, vector<256x16xf32> -> vector<256x16xf32>
    %45 = vector.broadcast %30 : vector<1x16xf32> to vector<256x16xf32>
    %46 = arith.addf %44, %45 : vector<256x16xf32>
    %cst_83 = arith.constant dense<0.000000e+00> : vector<16xf32>
    %47 = vector.multi_reduction <add>, %46, %cst_83 [0] : vector<256x16xf32> to vector<16xf32>
    %48 = vector.shape_cast %47 : vector<16xf32> to vector<1x16xf32>
    %cst_84 = arith.constant 2.560000e+02 : f32
    %49 = vector.broadcast %cst_84 : f32 to vector<1x16xf32>
    %50 = arith.divf %48, %49 : vector<1x16xf32>
    %c0_85 = arith.constant 0 : index
    %c0_86 = arith.constant 0 : index
    %c0_87 = arith.constant 0 : index
    %51 = vector.load %arg4[%c0_85, %c0_86, %c0_87] : memref<2x16x4xf32, #tpu.memory_space<vmem>>, vector<1x16x4xf32>
    %52 = vector.shape_cast %51 : vector<1x16x4xf32> to vector<16x4xf32>
    %cst_88 = arith.constant dense<0.000000e+00> : vector<1x4xf32>
    %53 = tpu.matmul %50, %52, %cst_88 {dimension_numbers = #tpu.dot_dimension_numbers<[1], [0], [0], [1], [0, 0, 1, 1], [], []>} : vector<1x16xf32>, vector<16x4xf32>, vector<1x4xf32> -> vector<1x4xf32>
    %c0_89 = arith.constant 0 : index
    %c0_90 = arith.constant 0 : index
    %c0_91 = arith.constant 0 : index
    %54 = vector.load %arg5[%c0_89, %c0_90, %c0_91] : memref<2x1x4xf32, #tpu.memory_space<vmem>>, vector<1x1x4xf32>
    %55 = vector.shape_cast %54 : vector<1x1x4xf32> to vector<1x4xf32>
    %56 = arith.addf %53, %55 : vector<1x4xf32>
    %cst_92 = arith.constant 0.000000e+00 : f32
    %57 = vector.broadcast %cst_92 : f32 to vector<1x4xf32>
    %58 = arith.maximumf %56, %57 : vector<1x4xf32>
    %c0_93 = arith.constant 0 : index
    %c0_94 = arith.constant 0 : index
    %c0_95 = arith.constant 0 : index
    %59 = vector.load %arg6[%c0_93, %c0_94, %c0_95] : memref<2x4x16xf32, #tpu.memory_space<vmem>>, vector<1x4x16xf32>
    %60 = vector.shape_cast %59 : vector<1x4x16xf32> to vector<4x16xf32>
    %cst_96 = arith.constant dense<0.000000e+00> : vector<1x16xf32>
    %61 = tpu.matmul %58, %60, %cst_96 {dimension_numbers = #tpu.dot_dimension_numbers<[1], [0], [0], [1], [0, 0, 1, 1], [], []>} : vector<1x4xf32>, vector<4x16xf32>, vector<1x16xf32> -> vector<1x16xf32>
    %c0_97 = arith.constant 0 : index
    %c0_98 = arith.constant 0 : index
    %c0_99 = arith.constant 0 : index
    %62 = vector.load %arg7[%c0_97, %c0_98, %c0_99] : memref<2x1x16xf32, #tpu.memory_space<vmem>>, vector<1x1x16xf32>
    %63 = vector.shape_cast %62 : vector<1x1x16xf32> to vector<1x16xf32>
    %64 = arith.addf %61, %63 : vector<1x16xf32>
    %cst_100 = arith.constant 0.000000e+00 : f32
    %65 = vector.broadcast %cst_100 : f32 to vector<1x16xf32>
    %66 = arith.subf %65, %64 : vector<1x16xf32>
    %67 = math.exp %66 : vector<1x16xf32>
    %cst_101 = arith.constant 1.000000e+00 : f32
    %68 = vector.broadcast %cst_101 : f32 to vector<1x16xf32>
    %69 = arith.addf %68, %67 : vector<1x16xf32>
    %cst_102 = arith.constant 1.000000e+00 : f32
    %70 = vector.broadcast %cst_102 : f32 to vector<1x16xf32>
    %71 = arith.divf %70, %69 : vector<1x16xf32>
    %72 = vector.broadcast %71 : vector<1x16xf32> to vector<256x16xf32>
    %73 = arith.mulf %46, %72 : vector<256x16xf32>
    %74 = arith.addf %73, %4 : vector<256x16xf32>
    %c1_103 = arith.constant 1 : index
    %c0_104 = arith.constant 0 : index
    %c0_105 = arith.constant 0 : index
    %c0_106 = arith.constant 0 : index
    %75 = vector.load %arg2[%c1_103, %c0_104, %c0_105, %c0_106] : memref<2x2x144x16xf32, #tpu.memory_space<vmem>>, vector<1x1x144x16xf32>
    %76 = vector.shape_cast %75 : vector<1x1x144x16xf32> to vector<144x16xf32>
    %c1_107 = arith.constant 1 : index
    %c0_108 = arith.constant 0 : index
    %c0_109 = arith.constant 0 : index
    %c0_110 = arith.constant 0 : index
    %77 = vector.load %arg3[%c1_107, %c0_108, %c0_109, %c0_110] : memref<2x2x1x16xf32, #tpu.memory_space<vmem>>, vector<1x1x1x16xf32>
    %78 = vector.shape_cast %77 : vector<1x1x1x16xf32> to vector<1x16xf32>
    %79 = vector.shape_cast %74 : vector<256x16xf32> to vector<16x16x16xf32>
    %c1_111 = arith.constant 1 : index
    %c1_112 = arith.constant 1 : index
    %c0_113 = arith.constant 0 : index
    %80 = vector.load %arg11[%c1_111, %c1_112, %c0_113] : memref<18x18x16xf32, #tpu.memory_space<vmem>>, vector<16x16x16xf32>
    tpu.vector_store %arg11[%c1_111, %c1_112, %c0_113], %79 {strides = array<i32>} : memref<18x18x16xf32, #tpu.memory_space<vmem>>, vector<16x16x16xf32>,
    %c0_114 = arith.constant 0 : index
    %c0_115 = arith.constant 0 : index
    %c0_116 = arith.constant 0 : index
    %81 = vector.load %arg11[%c0_114, %c0_115, %c0_116] : memref<18x18x16xf32, #tpu.memory_space<vmem>>, vector<16x16x16xf32>
    %c0_117 = arith.constant 0 : index
    %c1_118 = arith.constant 1 : index
    %c0_119 = arith.constant 0 : index
    %82 = vector.load %arg11[%c0_117, %c1_118, %c0_119] : memref<18x18x16xf32, #tpu.memory_space<vmem>>, vector<16x16x16xf32>
    %c0_120 = arith.constant 0 : index
    %c2_121 = arith.constant 2 : index
    %c0_122 = arith.constant 0 : index
    %83 = vector.load %arg11[%c0_120, %c2_121, %c0_122] : memref<18x18x16xf32, #tpu.memory_space<vmem>>, vector<16x16x16xf32>
    %c1_123 = arith.constant 1 : index
    %c0_124 = arith.constant 0 : index
    %c0_125 = arith.constant 0 : index
    %84 = vector.load %arg11[%c1_123, %c0_124, %c0_125] : memref<18x18x16xf32, #tpu.memory_space<vmem>>, vector<16x16x16xf32>
    %c1_126 = arith.constant 1 : index
    %c1_127 = arith.constant 1 : index
    %c0_128 = arith.constant 0 : index
    %85 = vector.load %arg11[%c1_126, %c1_127, %c0_128] : memref<18x18x16xf32, #tpu.memory_space<vmem>>, vector<16x16x16xf32>
    %c1_129 = arith.constant 1 : index
    %c2_130 = arith.constant 2 : index
    %c0_131 = arith.constant 0 : index
    %86 = vector.load %arg11[%c1_129, %c2_130, %c0_131] : memref<18x18x16xf32, #tpu.memory_space<vmem>>, vector<16x16x16xf32>
    %c2_132 = arith.constant 2 : index
    %c0_133 = arith.constant 0 : index
    %c0_134 = arith.constant 0 : index
    %87 = vector.load %arg11[%c2_132, %c0_133, %c0_134] : memref<18x18x16xf32, #tpu.memory_space<vmem>>, vector<16x16x16xf32>
    %c2_135 = arith.constant 2 : index
    %c1_136 = arith.constant 1 : index
    %c0_137 = arith.constant 0 : index
    %88 = vector.load %arg11[%c2_135, %c1_136, %c0_137] : memref<18x18x16xf32, #tpu.memory_space<vmem>>, vector<16x16x16xf32>
    %c2_138 = arith.constant 2 : index
    %c2_139 = arith.constant 2 : index
    %c0_140 = arith.constant 0 : index
    %89 = vector.load %arg11[%c2_138, %c2_139, %c0_140] : memref<18x18x16xf32, #tpu.memory_space<vmem>>, vector<16x16x16xf32>
    %90 = tpu.concatenate %81, %82, %83, %84, %85, %86, %87, %88, %89 in 2 : vector<16x16x16xf32>, vector<16x16x16xf32>, vector<16x16x16xf32>, vector<16x16x16xf32>, vector<16x16x16xf32>, vector<16x16x16xf32>, vector<16x16x16xf32>, vector<16x16x16xf32>, vector<16x16x16xf32> -> vector<16x16x144xf32>
    %91 = vector.shape_cast %90 : vector<16x16x144xf32> to vector<256x144xf32>
    %cst_141 = arith.constant dense<0.000000e+00> : vector<256x16xf32>
    %92 = tpu.matmul %91, %76, %cst_141 {dimension_numbers = #tpu.dot_dimension_numbers<[1], [0], [0], [1], [0, 0, 1, 1], [], []>} : vector<256x144xf32>, vector<144x16xf32>, vector<256x16xf32> -> vector<256x16xf32>
    %93 = vector.broadcast %78 : vector<1x16xf32> to vector<256x16xf32>
    %94 = arith.addf %92, %93 : vector<256x16xf32>
    %cst_142 = arith.constant 0.000000e+00 : f32
    %95 = vector.broadcast %cst_142 : f32 to vector<256x16xf32>
    %96 = arith.maximumf %94, %95 : vector<256x16xf32>
    %c1_143 = arith.constant 1 : index
    %c1_144 = arith.constant 1 : index
    %c0_145 = arith.constant 0 : index
    %c0_146 = arith.constant 0 : index
    %97 = vector.load %arg2[%c1_143, %c1_144, %c0_145, %c0_146] : memref<2x2x144x16xf32, #tpu.memory_space<vmem>>, vector<1x1x144x16xf32>
    %98 = vector.shape_cast %97 : vector<1x1x144x16xf32> to vector<144x16xf32>
    %c1_147 = arith.constant 1 : index
    %c1_148 = arith.constant 1 : index
    %c0_149 = arith.constant 0 : index
    %c0_150 = arith.constant 0 : index
    %99 = vector.load %arg3[%c1_147, %c1_148, %c0_149, %c0_150] : memref<2x2x1x16xf32, #tpu.memory_space<vmem>>, vector<1x1x1x16xf32>
    %100 = vector.shape_cast %99 : vector<1x1x1x16xf32> to vector<1x16xf32>
    %101 = vector.shape_cast %96 : vector<256x16xf32> to vector<16x16x16xf32>
    %c1_151 = arith.constant 1 : index
    %c1_152 = arith.constant 1 : index
    %c0_153 = arith.constant 0 : index
    %102 = vector.load %arg11[%c1_151, %c1_152, %c0_153] : memref<18x18x16xf32, #tpu.memory_space<vmem>>, vector<16x16x16xf32>
    tpu.vector_store %arg11[%c1_151, %c1_152, %c0_153], %101 {strides = array<i32>} : memref<18x18x16xf32, #tpu.memory_space<vmem>>, vector<16x16x16xf32>,
    %c0_154 = arith.constant 0 : index
    %c0_155 = arith.constant 0 : index
    %c0_156 = arith.constant 0 : index
    %103 = vector.load %arg11[%c0_154, %c0_155, %c0_156] : memref<18x18x16xf32, #tpu.memory_space<vmem>>, vector<16x16x16xf32>
    %c0_157 = arith.constant 0 : index
    %c1_158 = arith.constant 1 : index
    %c0_159 = arith.constant 0 : index
    %104 = vector.load %arg11[%c0_157, %c1_158, %c0_159] : memref<18x18x16xf32, #tpu.memory_space<vmem>>, vector<16x16x16xf32>
    %c0_160 = arith.constant 0 : index
    %c2_161 = arith.constant 2 : index
    %c0_162 = arith.constant 0 : index
    %105 = vector.load %arg11[%c0_160, %c2_161, %c0_162] : memref<18x18x16xf32, #tpu.memory_space<vmem>>, vector<16x16x16xf32>
    %c1_163 = arith.constant 1 : index
    %c0_164 = arith.constant 0 : index
    %c0_165 = arith.constant 0 : index
    %106 = vector.load %arg11[%c1_163, %c0_164, %c0_165] : memref<18x18x16xf32, #tpu.memory_space<vmem>>, vector<16x16x16xf32>
    %c1_166 = arith.constant 1 : index
    %c1_167 = arith.constant 1 : index
    %c0_168 = arith.constant 0 : index
    %107 = vector.load %arg11[%c1_166, %c1_167, %c0_168] : memref<18x18x16xf32, #tpu.memory_space<vmem>>, vector<16x16x16xf32>
    %c1_169 = arith.constant 1 : index
    %c2_170 = arith.constant 2 : index
    %c0_171 = arith.constant 0 : index
    %108 = vector.load %arg11[%c1_169, %c2_170, %c0_171] : memref<18x18x16xf32, #tpu.memory_space<vmem>>, vector<16x16x16xf32>
    %c2_172 = arith.constant 2 : index
    %c0_173 = arith.constant 0 : index
    %c0_174 = arith.constant 0 : index
    %109 = vector.load %arg11[%c2_172, %c0_173, %c0_174] : memref<18x18x16xf32, #tpu.memory_space<vmem>>, vector<16x16x16xf32>
    %c2_175 = arith.constant 2 : index
    %c1_176 = arith.constant 1 : index
    %c0_177 = arith.constant 0 : index
    %110 = vector.load %arg11[%c2_175, %c1_176, %c0_177] : memref<18x18x16xf32, #tpu.memory_space<vmem>>, vector<16x16x16xf32>
    %c2_178 = arith.constant 2 : index
    %c2_179 = arith.constant 2 : index
    %c0_180 = arith.constant 0 : index
    %111 = vector.load %arg11[%c2_178, %c2_179, %c0_180] : memref<18x18x16xf32, #tpu.memory_space<vmem>>, vector<16x16x16xf32>
    %112 = tpu.concatenate %103, %104, %105, %106, %107, %108, %109, %110, %111 in 2 : vector<16x16x16xf32>, vector<16x16x16xf32>, vector<16x16x16xf32>, vector<16x16x16xf32>, vector<16x16x16xf32>, vector<16x16x16xf32>, vector<16x16x16xf32>, vector<16x16x16xf32>, vector<16x16x16xf32> -> vector<16x16x144xf32>
    %113 = vector.shape_cast %112 : vector<16x16x144xf32> to vector<256x144xf32>
    %cst_181 = arith.constant dense<0.000000e+00> : vector<256x16xf32>
    %114 = tpu.matmul %113, %98, %cst_181 {dimension_numbers = #tpu.dot_dimension_numbers<[1], [0], [0], [1], [0, 0, 1, 1], [], []>} : vector<256x144xf32>, vector<144x16xf32>, vector<256x16xf32> -> vector<256x16xf32>
    %115 = vector.broadcast %100 : vector<1x16xf32> to vector<256x16xf32>
    %116 = arith.addf %114, %115 : vector<256x16xf32>
    %cst_182 = arith.constant dense<0.000000e+00> : vector<16xf32>
    %117 = vector.multi_reduction <add>, %116, %cst_182 [0] : vector<256x16xf32> to vector<16xf32>
    %118 = vector.shape_cast %117 : vector<16xf32> to vector<1x16xf32>
    %cst_183 = arith.constant 2.560000e+02 : f32
    %119 = vector.broadcast %cst_183 : f32 to vector<1x16xf32>
    %120 = arith.divf %118, %119 : vector<1x16xf32>
    %c1_184 = arith.constant 1 : index
    %c0_185 = arith.constant 0 : index
    %c0_186 = arith.constant 0 : index
    %121 = vector.load %arg4[%c1_184, %c0_185, %c0_186] : memref<2x16x4xf32, #tpu.memory_space<vmem>>, vector<1x16x4xf32>
    %122 = vector.shape_cast %121 : vector<1x16x4xf32> to vector<16x4xf32>
    %cst_187 = arith.constant dense<0.000000e+00> : vector<1x4xf32>
    %123 = tpu.matmul %120, %122, %cst_187 {dimension_numbers = #tpu.dot_dimension_numbers<[1], [0], [0], [1], [0, 0, 1, 1], [], []>} : vector<1x16xf32>, vector<16x4xf32>, vector<1x4xf32> -> vector<1x4xf32>
    %c1_188 = arith.constant 1 : index
    %c0_189 = arith.constant 0 : index
    %c0_190 = arith.constant 0 : index
    %124 = vector.load %arg5[%c1_188, %c0_189, %c0_190] : memref<2x1x4xf32, #tpu.memory_space<vmem>>, vector<1x1x4xf32>
    %125 = vector.shape_cast %124 : vector<1x1x4xf32> to vector<1x4xf32>
    %126 = arith.addf %123, %125 : vector<1x4xf32>
    %cst_191 = arith.constant 0.000000e+00 : f32
    %127 = vector.broadcast %cst_191 : f32 to vector<1x4xf32>
    %128 = arith.maximumf %126, %127 : vector<1x4xf32>
    %c1_192 = arith.constant 1 : index
    %c0_193 = arith.constant 0 : index
    %c0_194 = arith.constant 0 : index
    %129 = vector.load %arg6[%c1_192, %c0_193, %c0_194] : memref<2x4x16xf32, #tpu.memory_space<vmem>>, vector<1x4x16xf32>
    %130 = vector.shape_cast %129 : vector<1x4x16xf32> to vector<4x16xf32>
    %cst_195 = arith.constant dense<0.000000e+00> : vector<1x16xf32>
    %131 = tpu.matmul %128, %130, %cst_195 {dimension_numbers = #tpu.dot_dimension_numbers<[1], [0], [0], [1], [0, 0, 1, 1], [], []>} : vector<1x4xf32>, vector<4x16xf32>, vector<1x16xf32> -> vector<1x16xf32>
    %c1_196 = arith.constant 1 : index
    %c0_197 = arith.constant 0 : index
    %c0_198 = arith.constant 0 : index
    %132 = vector.load %arg7[%c1_196, %c0_197, %c0_198] : memref<2x1x16xf32, #tpu.memory_space<vmem>>, vector<1x1x16xf32>
    %133 = vector.shape_cast %132 : vector<1x1x16xf32> to vector<1x16xf32>
    %134 = arith.addf %131, %133 : vector<1x16xf32>
    %cst_199 = arith.constant 0.000000e+00 : f32
    %135 = vector.broadcast %cst_199 : f32 to vector<1x16xf32>
    %136 = arith.subf %135, %134 : vector<1x16xf32>
    %137 = math.exp %136 : vector<1x16xf32>
    %cst_200 = arith.constant 1.000000e+00 : f32
    %138 = vector.broadcast %cst_200 : f32 to vector<1x16xf32>
    %139 = arith.addf %138, %137 : vector<1x16xf32>
    %cst_201 = arith.constant 1.000000e+00 : f32
    %140 = vector.broadcast %cst_201 : f32 to vector<1x16xf32>
    %141 = arith.divf %140, %139 : vector<1x16xf32>
    %142 = vector.broadcast %141 : vector<1x16xf32> to vector<256x16xf32>
    %143 = arith.mulf %116, %142 : vector<256x16xf32>
    %144 = arith.addf %143, %74 : vector<256x16xf32>
    %c0_202 = arith.constant 0 : index
    %c0_203 = arith.constant 0 : index
    %145 = vector.load %arg8[%c0_202, %c0_203] : memref<144x16xf32, #tpu.memory_space<vmem>>, vector<144x16xf32>
    %c0_204 = arith.constant 0 : index
    %c0_205 = arith.constant 0 : index
    %146 = vector.load %arg9[%c0_204, %c0_205] : memref<1x16xf32, #tpu.memory_space<vmem>>, vector<1x16xf32>
    %147 = vector.shape_cast %144 : vector<256x16xf32> to vector<16x16x16xf32>
    %c1_206 = arith.constant 1 : index
    %c1_207 = arith.constant 1 : index
    %c0_208 = arith.constant 0 : index
    %148 = vector.load %arg11[%c1_206, %c1_207, %c0_208] : memref<18x18x16xf32, #tpu.memory_space<vmem>>, vector<16x16x16xf32>
    tpu.vector_store %arg11[%c1_206, %c1_207, %c0_208], %147 {strides = array<i32>} : memref<18x18x16xf32, #tpu.memory_space<vmem>>, vector<16x16x16xf32>,
    %c0_209 = arith.constant 0 : index
    %c0_210 = arith.constant 0 : index
    %c0_211 = arith.constant 0 : index
    %149 = vector.load %arg11[%c0_209, %c0_210, %c0_211] : memref<18x18x16xf32, #tpu.memory_space<vmem>>, vector<16x16x16xf32>
    %c0_212 = arith.constant 0 : index
    %c1_213 = arith.constant 1 : index
    %c0_214 = arith.constant 0 : index
    %150 = vector.load %arg11[%c0_212, %c1_213, %c0_214] : memref<18x18x16xf32, #tpu.memory_space<vmem>>, vector<16x16x16xf32>
    %c0_215 = arith.constant 0 : index
    %c2_216 = arith.constant 2 : index
    %c0_217 = arith.constant 0 : index
    %151 = vector.load %arg11[%c0_215, %c2_216, %c0_217] : memref<18x18x16xf32, #tpu.memory_space<vmem>>, vector<16x16x16xf32>
    %c1_218 = arith.constant 1 : index
    %c0_219 = arith.constant 0 : index
    %c0_220 = arith.constant 0 : index
    %152 = vector.load %arg11[%c1_218, %c0_219, %c0_220] : memref<18x18x16xf32, #tpu.memory_space<vmem>>, vector<16x16x16xf32>
    %c1_221 = arith.constant 1 : index
    %c1_222 = arith.constant 1 : index
    %c0_223 = arith.constant 0 : index
    %153 = vector.load %arg11[%c1_221, %c1_222, %c0_223] : memref<18x18x16xf32, #tpu.memory_space<vmem>>, vector<16x16x16xf32>
    %c1_224 = arith.constant 1 : index
    %c2_225 = arith.constant 2 : index
    %c0_226 = arith.constant 0 : index
    %154 = vector.load %arg11[%c1_224, %c2_225, %c0_226] : memref<18x18x16xf32, #tpu.memory_space<vmem>>, vector<16x16x16xf32>
    %c2_227 = arith.constant 2 : index
    %c0_228 = arith.constant 0 : index
    %c0_229 = arith.constant 0 : index
    %155 = vector.load %arg11[%c2_227, %c0_228, %c0_229] : memref<18x18x16xf32, #tpu.memory_space<vmem>>, vector<16x16x16xf32>
    %c2_230 = arith.constant 2 : index
    %c1_231 = arith.constant 1 : index
    %c0_232 = arith.constant 0 : index
    %156 = vector.load %arg11[%c2_230, %c1_231, %c0_232] : memref<18x18x16xf32, #tpu.memory_space<vmem>>, vector<16x16x16xf32>
    %c2_233 = arith.constant 2 : index
    %c2_234 = arith.constant 2 : index
    %c0_235 = arith.constant 0 : index
    %157 = vector.load %arg11[%c2_233, %c2_234, %c0_235] : memref<18x18x16xf32, #tpu.memory_space<vmem>>, vector<16x16x16xf32>
    %158 = tpu.concatenate %149, %150, %151, %152, %153, %154, %155, %156, %157 in 2 : vector<16x16x16xf32>, vector<16x16x16xf32>, vector<16x16x16xf32>, vector<16x16x16xf32>, vector<16x16x16xf32>, vector<16x16x16xf32>, vector<16x16x16xf32>, vector<16x16x16xf32>, vector<16x16x16xf32> -> vector<16x16x144xf32>
    %159 = vector.shape_cast %158 : vector<16x16x144xf32> to vector<256x144xf32>
    %cst_236 = arith.constant dense<0.000000e+00> : vector<256x16xf32>
    %160 = tpu.matmul %159, %145, %cst_236 {dimension_numbers = #tpu.dot_dimension_numbers<[1], [0], [0], [1], [0, 0, 1, 1], [], []>} : vector<256x144xf32>, vector<144x16xf32>, vector<256x16xf32> -> vector<256x16xf32>
    %161 = vector.broadcast %146 : vector<1x16xf32> to vector<256x16xf32>
    %162 = arith.addf %160, %161 : vector<256x16xf32>
    %163 = arith.addf %162, %4 : vector<256x16xf32>
    %164 = vector.shape_cast %163 : vector<256x16xf32> to vector<1x16x16x16xf32>
    %c0_237 = arith.constant 0 : index
    %c0_238 = arith.constant 0 : index
    %c0_239 = arith.constant 0 : index
    %c0_240 = arith.constant 0 : index
    %165 = vector.load %arg10[%c0_237, %c0_238, %c0_239, %c0_240] : memref<1x16x16x16xf32, #tpu.memory_space<vmem>>, vector<1x16x16x16xf32>
    tpu.vector_store %arg10[%c0_237, %c0_238, %c0_239, %c0_240], %164 {strides = array<i32>} : memref<1x16x16x16xf32, #tpu.memory_space<vmem>>, vector<1x16x16x16xf32>,
    return
  }
  func.func @transform_0(%arg0: i32) -> (i32, i32, i32, i32) {
    %c0_i32 = arith.constant 0 : i32
    %c0_i32_0 = arith.constant 0 : i32
    %c0_i32_1 = arith.constant 0 : i32
    %c0_i32_2 = arith.constant 0 : i32
    return %arg0, %c0_i32, %c0_i32_0, %c0_i32_1 : i32, i32, i32, i32
  }
  func.func @transform_1(%arg0: i32) -> (i32, i32, i32, i32) {
    %c0_i32 = arith.constant 0 : i32
    %c0_i32_0 = arith.constant 0 : i32
    %c0_i32_1 = arith.constant 0 : i32
    %c0_i32_2 = arith.constant 0 : i32
    %c0_i32_3 = arith.constant 0 : i32
    return %c0_i32, %c0_i32_0, %c0_i32_1, %c0_i32_2 : i32, i32, i32, i32
  }
  func.func @transform_2(%arg0: i32) -> (i32, i32, i32, i32) {
    %c0_i32 = arith.constant 0 : i32
    %c0_i32_0 = arith.constant 0 : i32
    %c0_i32_1 = arith.constant 0 : i32
    %c0_i32_2 = arith.constant 0 : i32
    %c0_i32_3 = arith.constant 0 : i32
    return %c0_i32, %c0_i32_0, %c0_i32_1, %c0_i32_2 : i32, i32, i32, i32
  }
  func.func @transform_3(%arg0: i32) -> (i32, i32, i32) {
    %c0_i32 = arith.constant 0 : i32
    %c0_i32_0 = arith.constant 0 : i32
    %c0_i32_1 = arith.constant 0 : i32
    %c0_i32_2 = arith.constant 0 : i32
    return %c0_i32, %c0_i32_0, %c0_i32_1 : i32, i32, i32
  }
  func.func @transform_4(%arg0: i32) -> (i32, i32, i32) {
    %c0_i32 = arith.constant 0 : i32
    %c0_i32_0 = arith.constant 0 : i32
    %c0_i32_1 = arith.constant 0 : i32
    %c0_i32_2 = arith.constant 0 : i32
    return %c0_i32, %c0_i32_0, %c0_i32_1 : i32, i32, i32
  }
  func.func @transform_5(%arg0: i32) -> (i32, i32, i32) {
    %c0_i32 = arith.constant 0 : i32
    %c0_i32_0 = arith.constant 0 : i32
    %c0_i32_1 = arith.constant 0 : i32
    %c0_i32_2 = arith.constant 0 : i32
    return %c0_i32, %c0_i32_0, %c0_i32_1 : i32, i32, i32
  }
  func.func @transform_6(%arg0: i32) -> (i32, i32, i32) {
    %c0_i32 = arith.constant 0 : i32
    %c0_i32_0 = arith.constant 0 : i32
    %c0_i32_1 = arith.constant 0 : i32
    %c0_i32_2 = arith.constant 0 : i32
    return %c0_i32, %c0_i32_0, %c0_i32_1 : i32, i32, i32
  }
  func.func @transform_7(%arg0: i32) -> (i32, i32) {
    %c0_i32 = arith.constant 0 : i32
    %c0_i32_0 = arith.constant 0 : i32
    %c0_i32_1 = arith.constant 0 : i32
    return %c0_i32, %c0_i32_0 : i32, i32
  }
  func.func @transform_8(%arg0: i32) -> (i32, i32) {
    %c0_i32 = arith.constant 0 : i32
    %c0_i32_0 = arith.constant 0 : i32
    %c0_i32_1 = arith.constant 0 : i32
    return %c0_i32, %c0_i32_0 : i32, i32
  }
  func.func @transform_9(%arg0: i32) -> (i32, i32, i32, i32) {
    %c0_i32 = arith.constant 0 : i32
    %c0_i32_0 = arith.constant 0 : i32
    %c0_i32_1 = arith.constant 0 : i32
    %c0_i32_2 = arith.constant 0 : i32
    return %arg0, %c0_i32, %c0_i32_0, %c0_i32_1 : i32, i32, i32, i32
  }
}

</mosaic_0001>

<llo_original>
// kernel: tpu_custom_call.1
$region0: #{tpu_custom_call.1}
  #allocation0 [shape = 'u32[]', space=smem, size = 0x4, offset = 0x4, fixed_abs, tag = 'smem constant byte address 0x4 - core index']
  #allocation1 [shape = 'u32[144,128]{1,0:T(1,128)}', space=vmem, size = 0x12000, scoped, tag = 'internal scratch']
  #allocation2 [shape = 'f32[18,18,16]{2,1,0:T(8,128)}', space=vmem, size = 0x36000, scoped, tag = 'scratch operand']
  %s0 = inlined_call_operand.hbm [shape: f32[2,16,16,16], index: 0, kind: input, shape index: {}, may-alias: {0,9}]
  %s1 = inlined_call_operand.vmem [shape: f32[2,2,144,16], index: 1, kind: input, shape index: {}]
  %s2 = inlined_call_operand.vmem [shape: f32[2,2,1,16], index: 2, kind: input, shape index: {}]
  %s3 = inlined_call_operand.vmem [shape: f32[2,16,4], index: 3, kind: input, shape index: {}]
  %s4 = inlined_call_operand.vmem [shape: f32[2,1,4], index: 4, kind: input, shape index: {}]
  %s5 = inlined_call_operand.vmem [shape: f32[2,4,16], index: 5, kind: input, shape index: {}]
  %s6 = inlined_call_operand.vmem [shape: f32[2,1,16], index: 6, kind: input, shape index: {}]
  %s7 = inlined_call_operand.vmem [shape: f32[144,16], index: 7, kind: input, shape index: {}]
  %s8 = inlined_call_operand.vmem [shape: f32[1,16], index: 8, kind: input, shape index: {}]
  %s9 = inlined_call_operand.hbm [shape: f32[2,16,16,16], index: 9, kind: output, shape index: {}, may-alias: {0,9}]
  %s10 = sld [smem:[#allocation0]]
  $region73: #{tpu_custom_call.1} parent=0
    _
  %s12 = ssub.s32 1, %s10
  %s13 = scalar_select 0, %s12, %s10
  $region1: #{tpu_custom_call.1} parent=0
    #allocation3 [shape = 'u8[262144]{0}', space=vmem, size = 0x40000, scoped, tag = 'input window, operand 0']
    #allocation4 [shape = 's32[2]{0}', space=sflag, size = 0x8, scoped, tag = 'scoped memory for tpu_custom_call.1']
    #allocation5 [shape = 's32[2]{0}', space=sflag, size = 0x8, scoped, tag = 'scoped memory for tpu_custom_call.1']
    #allocation6 [shape = 'u8[262144]{0}', space=vmem, size = 0x40000, scoped, tag = 'output window, operand 0']
    %14 = vsyncpa [#allocation4], 0
    %s15 = scalar_lea.sflag [#allocation4], 1
    %16 = vsyncpa %s15, 0
    %17 = vsyncpa [#allocation5], 0
    %s18 = scalar_lea.sflag [#allocation5], 1
    %19 = vsyncpa %s18, 0
    loop: start=0, step=1, limit=4
    $region2: #{tpu_custom_call.1} parent=1 // loop_pre_header
      _
    $region3: #{tpu_custom_call.1} parent=1 // loop_header
      %s21 = sphi 0, %s25
      %p22 = scmp.ge.s32.totalorder %s21, 4
      %s31 = sphi 0, %s33
      %s34 = sphi 0, %s31
      %s35 = sphi 0, %s34
      %s51 = sphi 0, %s35
      %s55 = sphi 0, %s55
      %s57 = sphi 0, %s55
      %s58 = sphi 0, %s57
      %s72 = sphi 0, %s58
      %s76 = sphi 0, %s76
      %s78 = sphi 0, %s76
      %s79 = sphi 0, %s78
      %s93 = sphi 0, %s79
      %s97 = sphi 0, %s97
      %s99 = sphi 0, %s97
      %s100 = sphi 0, %s99
      %s114 = sphi 0, %s100
      %s118 = sphi 0, %s118
      %s120 = sphi 0, %s118
      %s121 = sphi 0, %s120
      %s135 = sphi 0, %s121
      %s139 = sphi 0, %s139
      %s141 = sphi 0, %s139
      %s142 = sphi 0, %s141
      %s156 = sphi 0, %s142
      %s160 = sphi 0, %s160
      %s162 = sphi 0, %s160
      %s163 = sphi 0, %s162
      %s177 = sphi 0, %s163
      %s181 = sphi 0, %s181
      %s183 = sphi 0, %s181
      %s184 = sphi 0, %s183
      %s198 = sphi 0, %s184
      %s202 = sphi 0, %s202
      %s204 = sphi 0, %s202
      %s205 = sphi 0, %s204
      %s219 = sphi 0, %s205
      %s225 = sphi 0, %s227
      %s228 = sphi 0, %s225
      %s229 = sphi 0, %s228
      %s245 = sphi 0, %s229
    $region4: #{tpu_custom_call.1} parent=1 // loop_header_branch
      %24 = sbr.rel (%p22) target = $region8
    $region5: #{tpu_custom_call.1} parent=1 // loop_body
      %s26 = ssub.s32 %s21, 1
      %s27 = ssub.s32 %s21, 2
      %s28 = sadd.s32 %s21, 1
      %s29 = ssub.s32 %s21, %s28
      %p30 = scmp.eq.s32.totalorder %s29, 0
      %s32 = sadd.s32 %s31, 1
      %s33 = scalar_select %p30, %s31, %s32
      %p36 = pneg %p30
      %p37 = scmp.eq.s32.totalorder %s21, 1
      %p38 = por %p36, %p37
      %p39 = scmp.ne.s32.totalorder %s31, %s34
      %p40 = scmp.eq.s32.totalorder %s21, 0
      %p41 = por %p39, %p40
      %p42 = scmp.ne.s32.totalorder %s31, %s34
      %p43 = scmp.eq.s32.totalorder %s26, 1
      %p44 = por %p42, %p43
      %p45 = scmp.ne.s32.totalorder %s34, %s35
      %p46 = scmp.eq.s32.totalorder %s26, 0
      %p47 = por %p45, %p46
      %p48 = scmp.ne.s32.totalorder %s34, %s35
      %p49 = scmp.eq.s32.totalorder %s27, 1
      %p50 = por %p48, %p49
      %p52 = scmp.ne.s32.totalorder %s35, %s51
      %p53 = scmp.eq.s32.totalorder %s27, 0
      %p54 = por %p52, %p53
      %s56 = sadd.s32 %s55, 1
      %p59 = scmp.eq.s32.totalorder %s21, 1
      %p60 = scmp.ne.s32.totalorder %s55, %s57
      %p61 = scmp.eq.s32.totalorder %s21, 0
      %p62 = por %p60, %p61
      %p63 = scmp.ne.s32.totalorder %s55, %s57
      %p64 = scmp.eq.s32.totalorder %s26, 1
      %p65 = por %p63, %p64
      %p66 = scmp.ne.s32.totalorder %s57, %s58
      %p67 = scmp.eq.s32.totalorder %s26, 0
      %p68 = por %p66, %p67
      %p69 = scmp.ne.s32.totalorder %s57, %s58
      %p70 = scmp.eq.s32.totalorder %s27, 1
      %p71 = por %p69, %p70
      %p73 = scmp.ne.s32.totalorder %s58, %s72
      %p74 = scmp.eq.s32.totalorder %s27, 0
      %p75 = por %p73, %p74
      %s77 = sadd.s32 %s76, 1
      %p80 = scmp.eq.s32.totalorder %s21, 1
      %p81 = scmp.ne.s32.totalorder %s76, %s78
      %p82 = scmp.eq.s32.totalorder %s21, 0
      %p83 = por %p81, %p82
      %p84 = scmp.ne.s32.totalorder %s76, %s78
      %p85 = scmp.eq.s32.totalorder %s26, 1
      %p86 = por %p84, %p85
      %p87 = scmp.ne.s32.totalorder %s78, %s79
      %p88 = scmp.eq.s32.totalorder %s26, 0
      %p89 = por %p87, %p88
      %p90 = scmp.ne.s32.totalorder %s78, %s79
      %p91 = scmp.eq.s32.totalorder %s27, 1
      %p92 = por %p90, %p91
      %p94 = scmp.ne.s32.totalorder %s79, %s93
      %p95 = scmp.eq.s32.totalorder %s27, 0
      %p96 = por %p94, %p95
      %s98 = sadd.s32 %s97, 1
      %p101 = scmp.eq.s32.totalorder %s21, 1
      %p102 = scmp.ne.s32.totalorder %s97, %s99
      %p103 = scmp.eq.s32.totalorder %s21, 0
      %p104 = por %p102, %p103
      %p105 = scmp.ne.s32.totalorder %s97, %s99
      %p106 = scmp.eq.s32.totalorder %s26, 1
      %p107 = por %p105, %p106
      %p108 = scmp.ne.s32.totalorder %s99, %s100
      %p109 = scmp.eq.s32.totalorder %s26, 0
      %p110 = por %p108, %p109
      %p111 = scmp.ne.s32.totalorder %s99, %s100
      %p112 = scmp.eq.s32.totalorder %s27, 1
      %p113 = por %p111, %p112
      %p115 = scmp.ne.s32.totalorder %s100, %s114
      %p116 = scmp.eq.s32.totalorder %s27, 0
      %p117 = por %p115, %p116
      %s119 = sadd.s32 %s118, 1
      %p122 = scmp.eq.s32.totalorder %s21, 1
      %p123 = scmp.ne.s32.totalorder %s118, %s120
      %p124 = scmp.eq.s32.totalorder %s21, 0
      %p125 = por %p123, %p124
      %p126 = scmp.ne.s32.totalorder %s118, %s120
      %p127 = scmp.eq.s32.totalorder %s26, 1
      %p128 = por %p126, %p127
      %p129 = scmp.ne.s32.totalorder %s120, %s121
      %p130 = scmp.eq.s32.totalorder %s26, 0
      %p131 = por %p129, %p130
      %p132 = scmp.ne.s32.totalorder %s120, %s121
      %p133 = scmp.eq.s32.totalorder %s27, 1
      %p134 = por %p132, %p133
      %p136 = scmp.ne.s32.totalorder %s121, %s135
      %p137 = scmp.eq.s32.totalorder %s27, 0
      %p138 = por %p136, %p137
      %s140 = sadd.s32 %s139, 1
      %p143 = scmp.eq.s32.totalorder %s21, 1
      %p144 = scmp.ne.s32.totalorder %s139, %s141
      %p145 = scmp.eq.s32.totalorder %s21, 0
      %p146 = por %p144, %p145
      %p147 = scmp.ne.s32.totalorder %s139, %s141
      %p148 = scmp.eq.s32.totalorder %s26, 1
      %p149 = por %p147, %p148
      %p150 = scmp.ne.s32.totalorder %s141, %s142
      %p151 = scmp.eq.s32.totalorder %s26, 0
      %p152 = por %p150, %p151
      %p153 = scmp.ne.s32.totalorder %s141, %s142
      %p154 = scmp.eq.s32.totalorder %s27, 1
      %p155 = por %p153, %p154
      %p157 = scmp.ne.s32.totalorder %s142, %s156
      %p158 = scmp.eq.s32.totalorder %s27, 0
      %p159 = por %p157, %p158
      %s161 = sadd.s32 %s160, 1
      %p164 = scmp.eq.s32.totalorder %s21, 1
      %p165 = scmp.ne.s32.totalorder %s160, %s162
      %p166 = scmp.eq.s32.totalorder %s21, 0
      %p167 = por %p165, %p166
      %p168 = scmp.ne.s32.totalorder %s160, %s162
      %p169 = scmp.eq.s32.totalorder %s26, 1
      %p170 = por %p168, %p169
      %p171 = scmp.ne.s32.totalorder %s162, %s163
      %p172 = scmp.eq.s32.totalorder %s26, 0
      %p173 = por %p171, %p172
      %p174 = scmp.ne.s32.totalorder %s162, %s163
      %p175 = scmp.eq.s32.totalorder %s27, 1
      %p176 = por %p174, %p175
      %p178 = scmp.ne.s32.totalorder %s163, %s177
      %p179 = scmp.eq.s32.totalorder %s27, 0
      %p180 = por %p178, %p179
      %s182 = sadd.s32 %s181, 1
      %p185 = scmp.eq.s32.totalorder %s21, 1
      %p186 = scmp.ne.s32.totalorder %s181, %s183
      %p187 = scmp.eq.s32.totalorder %s21, 0
      %p188 = por %p186, %p187
      %p189 = scmp.ne.s32.totalorder %s181, %s183
      %p190 = scmp.eq.s32.totalorder %s26, 1
      %p191 = por %p189, %p190
      %p192 = scmp.ne.s32.totalorder %s183, %s184
      %p193 = scmp.eq.s32.totalorder %s26, 0
      %p194 = por %p192, %p193
      %p195 = scmp.ne.s32.totalorder %s183, %s184
      %p196 = scmp.eq.s32.totalorder %s27, 1
      %p197 = por %p195, %p196
      %p199 = scmp.ne.s32.totalorder %s184, %s198
      %p200 = scmp.eq.s32.totalorder %s27, 0
      %p201 = por %p199, %p200
      %s203 = sadd.s32 %s202, 1
      %p206 = scmp.eq.s32.totalorder %s21, 1
      %p207 = scmp.ne.s32.totalorder %s202, %s204
      %p208 = scmp.eq.s32.totalorder %s21, 0
      %p209 = por %p207, %p208
      %p210 = scmp.ne.s32.totalorder %s202, %s204
      %p211 = scmp.eq.s32.totalorder %s26, 1
      %p212 = por %p210, %p211
      %p213 = scmp.ne.s32.totalorder %s204, %s205
      %p214 = scmp.eq.s32.totalorder %s26, 0
      %p215 = por %p213, %p214
      %p216 = scmp.ne.s32.totalorder %s204, %s205
      %p217 = scmp.eq.s32.totalorder %s27, 1
      %p218 = por %p216, %p217
      %p220 = scmp.ne.s32.totalorder %s205, %s219
      %p221 = scmp.eq.s32.totalorder %s27, 0
      %p222 = por %p220, %p221
      %s223 = ssub.s32 %s21, %s28
      %p224 = scmp.eq.s32.totalorder %s223, 0
      %s226 = sadd.s32 %s225, 1
      %s227 = scalar_select %p224, %s225, %s226
      %p230 = pneg %p224
      %p231 = scmp.eq.s32.totalorder %s21, 1
      %p232 = por %p230, %p231
      %p233 = scmp.ne.s32.totalorder %s225, %s228
      %p234 = scmp.eq.s32.totalorder %s21, 0
      %p235 = por %p233, %p234
      %p236 = scmp.ne.s32.totalorder %s225, %s228
      %p237 = scmp.eq.s32.totalorder %s26, 1
      %p238 = por %p236, %p237
      %p239 = scmp.ne.s32.totalorder %s228, %s229
      %p240 = scmp.eq.s32.totalorder %s26, 0
      %p241 = por %p239, %p240
      %p242 = scmp.ne.s32.totalorder %s228, %s229
      %p243 = scmp.eq.s32.totalorder %s27, 1
      %p244 = por %p242, %p243
      %p246 = scmp.ne.s32.totalorder %s229, %s245
      %p247 = scmp.eq.s32.totalorder %s27, 0
      %p248 = por %p246, %p247
      %p249 = scmp.le.s32.totalorder 1, %s21
      %p250 = scmp.lt.s32.totalorder %s21, 3
      %p251 = pnand %p249, %p250
      %p252 = pneg %p251
      // Predicated region
      $region9: #{tpu_custom_call.1} parent=5 // pred_check
        _
      $region10: #{tpu_custom_call.1} parent=5 // pred_check_branch
        %254 = sbr.rel (%p251) target = $region12
      $region11: #{tpu_custom_call.1} parent=5 // pred_region
        %s255 = ssub.s32 %s21, 1
        // Predicated region
        $region13: #{tpu_custom_call.1} parent=11 // pred_check
          %p256 = pneg %p68
        $region14: #{tpu_custom_call.1} parent=11 // pred_check_branch
          %258 = sbr.rel (%p256) target = $region16
        $region15: #{tpu_custom_call.1} parent=11 // pred_region
          _
        $region16: #{tpu_custom_call.1} parent=11 // pred_fallthru
          _
        // Predicated region
        $region17: #{tpu_custom_call.1} parent=11 // pred_check
          %p259 = pneg %p89
        $region18: #{tpu_custom_call.1} parent=11 // pred_check_branch
          %261 = sbr.rel (%p259) target = $region20
        $region19: #{tpu_custom_call.1} parent=11 // pred_region
          _
        $region20: #{tpu_custom_call.1} parent=11 // pred_fallthru
          _
        // Predicated region
        $region21: #{tpu_custom_call.1} parent=11 // pred_check
          %p262 = pneg %p110
        $region22: #{tpu_custom_call.1} parent=11 // pred_check_branch
          %264 = sbr.rel (%p262) target = $region24
        $region23: #{tpu_custom_call.1} parent=11 // pred_region
          _
        $region24: #{tpu_custom_call.1} parent=11 // pred_fallthru
          _
        // Predicated region
        $region25: #{tpu_custom_call.1} parent=11 // pred_check
          %p265 = pneg %p131
        $region26: #{tpu_custom_call.1} parent=11 // pred_check_branch
          %267 = sbr.rel (%p265) target = $region28
        $region27: #{tpu_custom_call.1} parent=11 // pred_region
          _
        $region28: #{tpu_custom_call.1} parent=11 // pred_fallthru
          _
        // Predicated region
        $region29: #{tpu_custom_call.1} parent=11 // pred_check
          %p268 = pneg %p152
        $region30: #{tpu_custom_call.1} parent=11 // pred_check_branch
          %270 = sbr.rel (%p268) target = $region32
        $region31: #{tpu_custom_call.1} parent=11 // pred_region
          _
        $region32: #{tpu_custom_call.1} parent=11 // pred_fallthru
          _
        // Predicated region
        $region33: #{tpu_custom_call.1} parent=11 // pred_check
          %p271 = pneg %p173
        $region34: #{tpu_custom_call.1} parent=11 // pred_check_branch
          %273 = sbr.rel (%p271) target = $region36
        $region35: #{tpu_custom_call.1} parent=11 // pred_region
          _
        $region36: #{tpu_custom_call.1} parent=11 // pred_fallthru
          _
        // Predicated region
        $region37: #{tpu_custom_call.1} parent=11 // pred_check
          %p274 = pneg %p194
        $region38: #{tpu_custom_call.1} parent=11 // pred_check_branch
          %276 = sbr.rel (%p274) target = $region40
        $region39: #{tpu_custom_call.1} parent=11 // pred_region
          _
        $region40: #{tpu_custom_call.1} parent=11 // pred_fallthru
          _
        // Predicated region
        $region41: #{tpu_custom_call.1} parent=11 // pred_check
          %p277 = pneg %p215
        $region42: #{tpu_custom_call.1} parent=11 // pred_check_branch
          %279 = sbr.rel (%p277) target = $region44
        $region43: #{tpu_custom_call.1} parent=11 // pred_region
          _
        $region44: #{tpu_custom_call.1} parent=11 // pred_fallthru
          _
      $region12: #{tpu_custom_call.1} parent=5 // pred_fallthru
        _
      %p280 = scmp.lt.s32.totalorder %s21, 2
      // Predicated region
      $region45: #{tpu_custom_call.1} parent=5 // pred_check
        %p281 = pneg %p280
      $region46: #{tpu_custom_call.1} parent=5 // pred_check_branch
        %283 = sbr.rel (%p281) target = $region48
      $region47: #{tpu_custom_call.1} parent=5 // pred_region
        // Predicated region
        $region49: #{tpu_custom_call.1} parent=47 // pred_check
          %p284 = pneg %p41
        $region50: #{tpu_custom_call.1} parent=47 // pred_check_branch
          %286 = sbr.rel (%p284) target = $region52
        $region51: #{tpu_custom_call.1} parent=47 // pred_region
          %s287 = sand.u32 %s31, 1
          %s288 = scalar_lea.sflag [#allocation4], %s287
          %s289 = sand.u32 %s31, 1
          %s290 = smul.addr %s289, 256
          %s291 = scalar_lea.vmem [#allocation3], %s290
          %s293 = ssub.s32 4096, 4096
          %294 = vsyncadd %s288, %s293
          %s295 = smul.addr %s21, 32
          %s296 = smul.addr %s295, 128
          %s297 = scalar_lea.hbm %s0, %s296
          %s298 = sshll.u32 %s291, 4
          %s299 = int_to_ptr.vmem [resolvable:$true] %s298
          %304 = dma.hbm_to_vmem [thread:$0]  %s297, 4096, %s299, %s288, 128, 128, 8
        $region52: #{tpu_custom_call.1} parent=47 // pred_fallthru
          _
      $region48: #{tpu_custom_call.1} parent=5 // pred_fallthru
        _
      %p305 = scmp.le.s32.totalorder 1, %s21
      %p306 = scmp.lt.s32.totalorder %s21, 3
      %p307 = pnand %p305, %p306
      %p308 = pneg %p307
      // Predicated region
      $region53: #{tpu_custom_call.1} parent=5 // pred_check
        _
      $region54: #{tpu_custom_call.1} parent=5 // pred_check_branch
        %310 = sbr.rel (%p307) target = $region56
      $region55: #{tpu_custom_call.1} parent=5 // pred_region
        %s311 = ssub.s32 %s21, 1
        %s312 = sand.u32 %s34, 1
        %s313 = scalar_lea.sflag [#allocation4], %s312
        %s314 = sand.u32 %s34, 1
        %s315 = smul.addr %s314, 256
        %s316 = scalar_lea.vmem [#allocation3], %s315
        // Predicated region
        $region57: #{tpu_custom_call.1} parent=55 // pred_check
          %p317 = pneg %p47
        $region58: #{tpu_custom_call.1} parent=55 // pred_check_branch
          %319 = sbr.rel (%p317) target = $region60
        $region59: #{tpu_custom_call.1} parent=55 // pred_region
          %320 = dma.done %s313, 4096
        $region60: #{tpu_custom_call.1} parent=55 // pred_fallthru
          _
        %s321 = sand.u32 %s34, 1
        %s322 = scalar_lea.sflag [#allocation4], %s321
        %s323 = sand.u32 %s34, 1
        %s324 = smul.addr %s323, 256
        %s325 = scalar_lea.vmem [#allocation3], %s324
        %p326 = pneg %p47
        %p327 = pneg %p44
        %p328 = pneg %p68
        %p329 = pneg %p65
        %p330 = pneg %p89
        %p331 = pneg %p86
        %p332 = pneg %p110
        %p333 = pneg %p107
        %p334 = pneg %p131
        %p335 = pneg %p128
        %p336 = pneg %p152
        %p337 = pneg %p149
        %p338 = pneg %p173
        %p339 = pneg %p170
        %p340 = pneg %p194
        %p341 = pneg %p191
        %p342 = pneg %p215
        %p343 = pneg %p212
        %p344 = pneg %p241
        %p345 = pneg %p238
        %s346 = sand.u32 %s228, 1
        %s347 = scalar_lea.sflag [#allocation5], %s346
        %s348 = sand.u32 %s228, 1
        %s349 = smul.addr %s348, 256
        %s350 = scalar_lea.vmem [#allocation6], %s349
        %vm351 = vcmask 130048
        %352 = vst.msk [vmem:[#allocation2] sm:$0xff] %vm351, 0.0
        %353 = vst.msk [vmem:[#allocation2 + $0x8] sm:$0xff] %vm351, 0.0
        %vm354 = vcmask 123904
        %355 = vst.msk [vmem:[#allocation2 + $0x10] sm:$0x3] %vm354, 0.0
        %356 = vst.msk [vmem:[#allocation2 + $0x18] sm:$0xff] %vm351, 0.0
        %357 = vst.msk [vmem:[#allocation2 + $0x20] sm:$0xff] %vm351, 0.0
        %358 = vst.msk [vmem:[#allocation2 + $0x28] sm:$0x3] %vm354, 0.0
        %359 = vst.msk [vmem:[#allocation2 + $0x30] sm:$0xff] %vm351, 0.0
        %360 = vst.msk [vmem:[#allocation2 + $0x38] sm:$0xff] %vm351, 0.0
        %361 = vst.msk [vmem:[#allocation2 + $0x40] sm:$0x3] %vm354, 0.0
        %362 = vst.msk [vmem:[#allocation2 + $0x48] sm:$0xff] %vm351, 0.0
        %363 = vst.msk [vmem:[#allocation2 + $0x50] sm:$0xff] %vm351, 0.0
        %364 = vst.msk [vmem:[#allocation2 + $0x58] sm:$0x3] %vm354, 0.0
        %365 = vst.msk [vmem:[#allocation2 + $0x60] sm:$0xff] %vm351, 0.0
        %366 = vst.msk [vmem:[#allocation2 + $0x68] sm:$0xff] %vm351, 0.0
        %367 = vst.msk [vmem:[#allocation2 + $0x70] sm:$0x3] %vm354, 0.0
        %368 = vst.msk [vmem:[#allocation2 + $0x78] sm:$0xff] %vm351, 0.0
        %369 = vst.msk [vmem:[#allocation2 + $0x80] sm:$0xff] %vm351, 0.0
        %370 = vst.msk [vmem:[#allocation2 + $0x88] sm:$0x3] %vm354, 0.0
        %371 = vst.msk [vmem:[#allocation2 + $0x90] sm:$0xff] %vm351, 0.0
        %372 = vst.msk [vmem:[#allocation2 + $0x98] sm:$0xff] %vm351, 0.0
        %373 = vst.msk [vmem:[#allocation2 + $0xa0] sm:$0x3] %vm354, 0.0
        %374 = vst.msk [vmem:[#allocation2 + $0xa8] sm:$0xff] %vm351, 0.0
        %375 = vst.msk [vmem:[#allocation2 + $0xb0] sm:$0xff] %vm351, 0.0
        %376 = vst.msk [vmem:[#allocation2 + $0xb8] sm:$0x3] %vm354, 0.0
        %377 = vst.msk [vmem:[#allocation2 + $0xc0] sm:$0xff] %vm351, 0.0
        %378 = vst.msk [vmem:[#allocation2 + $0xc8] sm:$0xff] %vm351, 0.0
        %379 = vst.msk [vmem:[#allocation2 + $0xd0] sm:$0x3] %vm354, 0.0
        %380 = vst.msk [vmem:[#allocation2 + $0xd8] sm:$0xff] %vm351, 0.0
        %381 = vst.msk [vmem:[#allocation2 + $0xe0] sm:$0xff] %vm351, 0.0
        %382 = vst.msk [vmem:[#allocation2 + $0xe8] sm:$0x3] %vm354, 0.0
        %383 = vst.msk [vmem:[#allocation2 + $0xf0] sm:$0xff] %vm351, 0.0
        %384 = vst.msk [vmem:[#allocation2 + $0xf8] sm:$0xff] %vm351, 0.0
        %385 = vst.msk [vmem:[#allocation2 + $0x100] sm:$0x3] %vm354, 0.0
        %386 = vst.msk [vmem:[#allocation2 + $0x108] sm:$0xff] %vm351, 0.0
        %387 = vst.msk [vmem:[#allocation2 + $0x110] sm:$0xff] %vm351, 0.0
        %388 = vst.msk [vmem:[#allocation2 + $0x118] sm:$0x3] %vm354, 0.0
        %389 = vst.msk [vmem:[#allocation2 + $0x120] sm:$0xff] %vm351, 0.0
        %390 = vst.msk [vmem:[#allocation2 + $0x128] sm:$0xff] %vm351, 0.0
        %391 = vst.msk [vmem:[#allocation2 + $0x130] sm:$0x3] %vm354, 0.0
        %392 = vst.msk [vmem:[#allocation2 + $0x138] sm:$0xff] %vm351, 0.0
        %393 = vst.msk [vmem:[#allocation2 + $0x140] sm:$0xff] %vm351, 0.0
        %394 = vst.msk [vmem:[#allocation2 + $0x148] sm:$0x3] %vm354, 0.0
        %395 = vst.msk [vmem:[#allocation2 + $0x150] sm:$0xff] %vm351, 0.0
        %396 = vst.msk [vmem:[#allocation2 + $0x158] sm:$0xff] %vm351, 0.0
        %397 = vst.msk [vmem:[#allocation2 + $0x160] sm:$0x3] %vm354, 0.0
        %398 = vst.msk [vmem:[#allocation2 + $0x168] sm:$0xff] %vm351, 0.0
        %399 = vst.msk [vmem:[#allocation2 + $0x170] sm:$0xff] %vm351, 0.0
        %400 = vst.msk [vmem:[#allocation2 + $0x178] sm:$0x3] %vm354, 0.0
        %401 = vst.msk [vmem:[#allocation2 + $0x180] sm:$0xff] %vm351, 0.0
        %402 = vst.msk [vmem:[#allocation2 + $0x188] sm:$0xff] %vm351, 0.0
        %403 = vst.msk [vmem:[#allocation2 + $0x190] sm:$0x3] %vm354, 0.0
        %404 = vst.msk [vmem:[#allocation2 + $0x198] sm:$0xff] %vm351, 0.0
        %405 = vst.msk [vmem:[#allocation2 + $0x1a0] sm:$0xff] %vm351, 0.0
        %406 = vst.msk [vmem:[#allocation2 + $0x1a8] sm:$0x3] %vm354, 0.0
        %v407 = vld [vmem:[%s316] sm:$0xff]
        %v408 = vld [vmem:[%s316 + $0x8] sm:$0xff]
        %v409 = vld [vmem:[%s316 + $0x10] sm:$0xff]
        %v410 = vld [vmem:[%s316 + $0x18] sm:$0xff]
        %v411 = vld [vmem:[%s316 + $0x20] sm:$0xff]
        %v412 = vld [vmem:[%s316 + $0x28] sm:$0xff]
        %v413 = vld [vmem:[%s316 + $0x30] sm:$0xff]
        %v414 = vld [vmem:[%s316 + $0x38] sm:$0xff]
        %v415 = vld [vmem:[%s316 + $0x40] sm:$0xff]
        %v416 = vld [vmem:[%s316 + $0x48] sm:$0xff]
        %v417 = vld [vmem:[%s316 + $0x50] sm:$0xff]
        %v418 = vld [vmem:[%s316 + $0x58] sm:$0xff]
        %v419 = vld [vmem:[%s316 + $0x60] sm:$0xff]
        %v420 = vld [vmem:[%s316 + $0x68] sm:$0xff]
        %v421 = vld [vmem:[%s316 + $0x70] sm:$0xff]
        %v422 = vld [vmem:[%s316 + $0x78] sm:$0xff]
        %v423 = vld [vmem:[%s316 + $0x80] sm:$0xff]
        %v424 = vld [vmem:[%s316 + $0x88] sm:$0xff]
        %v425 = vld [vmem:[%s316 + $0x90] sm:$0xff]
        %v426 = vld [vmem:[%s316 + $0x98] sm:$0xff]
        %v427 = vld [vmem:[%s316 + $0xa0] sm:$0xff]
        %v428 = vld [vmem:[%s316 + $0xa8] sm:$0xff]
        %v429 = vld [vmem:[%s316 + $0xb0] sm:$0xff]
        %v430 = vld [vmem:[%s316 + $0xb8] sm:$0xff]
        %v431 = vld [vmem:[%s316 + $0xc0] sm:$0xff]
        %v432 = vld [vmem:[%s316 + $0xc8] sm:$0xff]
        %v433 = vld [vmem:[%s316 + $0xd0] sm:$0xff]
        %v434 = vld [vmem:[%s316 + $0xd8] sm:$0xff]
        %v435 = vld [vmem:[%s316 + $0xe0] sm:$0xff]
        %v436 = vld [vmem:[%s316 + $0xe8] sm:$0xff]
        %v437 = vld [vmem:[%s316 + $0xf0] sm:$0xff]
        %v438 = vld [vmem:[%s316 + $0xf8] sm:$0xff]
        %v439 = vld [vmem:[%s1] sm:$0xff]
        %v440 = vld [vmem:[%s1 + $0x8] sm:$0xff]
        %v441 = vld [vmem:[%s1 + $0x10] sm:$0xff]
        %v442 = vld [vmem:[%s1 + $0x18] sm:$0xff]
        %v443 = vld [vmem:[%s1 + $0x20] sm:$0xff]
        %v444 = vld [vmem:[%s1 + $0x28] sm:$0xff]
        %v445 = vld [vmem:[%s1 + $0x30] sm:$0xff]
        %v446 = vld [vmem:[%s1 + $0x38] sm:$0xff]
        %v447 = vld [vmem:[%s1 + $0x40] sm:$0xff]
        %v448 = vld [vmem:[%s1 + $0x48] sm:$0xff]
        %v449 = vld [vmem:[%s1 + $0x50] sm:$0xff]
        %v450 = vld [vmem:[%s1 + $0x58] sm:$0xff]
        %v451 = vld [vmem:[%s1 + $0x60] sm:$0xff]
        %v452 = vld [vmem:[%s1 + $0x68] sm:$0xff]
        %v453 = vld [vmem:[%s1 + $0x70] sm:$0xff]
        %v454 = vld [vmem:[%s1 + $0x78] sm:$0xff]
        %v455 = vld [vmem:[%s1 + $0x80] sm:$0xff]
        %v456 = vld [vmem:[%s1 + $0x88] sm:$0xff]
        %v457 = vld [vmem:[%s2] sm:$0x1]
        %s458 = scalar_lea.vmem [#allocation2], 24
        %459 = vst.msk [vmem:[%s458 + $0x1] sm:$0xff] %vm351, %v407
        %460 = vst.msk [vmem:[%s458 + $0x9] sm:$0xff] %vm351, %v408
        %461 = vst.msk [vmem:[%s458 + $0x19] sm:$0xff] %vm351, %v409
        %462 = vst.msk [vmem:[%s458 + $0x21] sm:$0xff] %vm351, %v410
        %463 = vst.msk [vmem:[%s458 + $0x31] sm:$0xff] %vm351, %v411
        %464 = vst.msk [vmem:[%s458 + $0x39] sm:$0xff] %vm351, %v412
        %465 = vst.msk [vmem:[%s458 + $0x49] sm:$0xff] %vm351, %v413
        %466 = vst.msk [vmem:[%s458 + $0x51] sm:$0xff] %vm351, %v414
        %467 = vst.msk [vmem:[%s458 + $0x61] sm:$0xff] %vm351, %v415
        %468 = vst.msk [vmem:[%s458 + $0x69] sm:$0xff] %vm351, %v416
        %469 = vst.msk [vmem:[%s458 + $0x79] sm:$0xff] %vm351, %v417
        %470 = vst.msk [vmem:[%s458 + $0x81] sm:$0xff] %vm351, %v418
        %471 = vst.msk [vmem:[%s458 + $0x91] sm:$0xff] %vm351, %v419
        %472 = vst.msk [vmem:[%s458 + $0x99] sm:$0xff] %vm351, %v420
        %473 = vst.msk [vmem:[%s458 + $0xa9] sm:$0xff] %vm351, %v421
        %474 = vst.msk [vmem:[%s458 + $0xb1] sm:$0xff] %vm351, %v422
        %475 = vst.msk [vmem:[%s458 + $0xc1] sm:$0xff] %vm351, %v423
        %476 = vst.msk [vmem:[%s458 + $0xc9] sm:$0xff] %vm351, %v424
        %477 = vst.msk [vmem:[%s458 + $0xd9] sm:$0xff] %vm351, %v425
        %478 = vst.msk [vmem:[%s458 + $0xe1] sm:$0xff] %vm351, %v426
        %479 = vst.msk [vmem:[%s458 + $0xf1] sm:$0xff] %vm351, %v427
        %480 = vst.msk [vmem:[%s458 + $0xf9] sm:$0xff] %vm351, %v428
        %481 = vst.msk [vmem:[%s458 + $0x109] sm:$0xff] %vm351, %v429
        %482 = vst.msk [vmem:[%s458 + $0x111] sm:$0xff] %vm351, %v430
        %483 = vst.msk [vmem:[%s458 + $0x121] sm:$0xff] %vm351, %v431
        %484 = vst.msk [vmem:[%s458 + $0x129] sm:$0xff] %vm351, %v432
        %485 = vst.msk [vmem:[%s458 + $0x139] sm:$0xff] %vm351, %v433
        %486 = vst.msk [vmem:[%s458 + $0x141] sm:$0xff] %vm351, %v434
        %487 = vst.msk [vmem:[%s458 + $0x151] sm:$0xff] %vm351, %v435
        %488 = vst.msk [vmem:[%s458 + $0x159] sm:$0xff] %vm351, %v436
        %489 = vst.msk [vmem:[%s458 + $0x169] sm:$0xff] %vm351, %v437
        %490 = vst.msk [vmem:[%s458 + $0x171] sm:$0xff] %vm351, %v438
        %v491 = vld [vmem:[#allocation2] sm:$0xff]
        %v492 = vld [vmem:[#allocation2 + $0x8] sm:$0xff]
        %v493 = vld [vmem:[#allocation2 + $0x18] sm:$0xff]
        %v494 = vld [vmem:[#allocation2 + $0x20] sm:$0xff]
        %v495 = vld [vmem:[#allocation2 + $0x30] sm:$0xff]
        %v496 = vld [vmem:[#allocation2 + $0x38] sm:$0xff]
        %v497 = vld [vmem:[#allocation2 + $0x48] sm:$0xff]
        %v498 = vld [vmem:[#allocation2 + $0x50] sm:$0xff]
        %v499 = vld [vmem:[#allocation2 + $0x60] sm:$0xff]
        %v500 = vld [vmem:[#allocation2 + $0x68] sm:$0xff]
        %v501 = vld [vmem:[#allocation2 + $0x78] sm:$0xff]
        %v502 = vld [vmem:[#allocation2 + $0x80] sm:$0xff]
        %v503 = vld [vmem:[#allocation2 + $0x90] sm:$0xff]
        %v504 = vld [vmem:[#allocation2 + $0x98] sm:$0xff]
        %v505 = vld [vmem:[#allocation2 + $0xa8] sm:$0xff]
        %v506 = vld [vmem:[#allocation2 + $0xb0] sm:$0xff]
        %v507 = vld [vmem:[#allocation2 + $0xc0] sm:$0xff]
        %v508 = vld [vmem:[#allocation2 + $0xc8] sm:$0xff]
        %v509 = vld [vmem:[#allocation2 + $0xd8] sm:$0xff]
        %v510 = vld [vmem:[#allocation2 + $0xe0] sm:$0xff]
        %v511 = vld [vmem:[#allocation2 + $0xf0] sm:$0xff]
        %v512 = vld [vmem:[#allocation2 + $0xf8] sm:$0xff]
        %v513 = vld [vmem:[#allocation2 + $0x108] sm:$0xff]
        %v514 = vld [vmem:[#allocation2 + $0x110] sm:$0xff]
        %v515 = vld [vmem:[#allocation2 + $0x120] sm:$0xff]
        %v516 = vld [vmem:[#allocation2 + $0x128] sm:$0xff]
        %v517 = vld [vmem:[#allocation2 + $0x138] sm:$0xff]
        %v518 = vld [vmem:[#allocation2 + $0x140] sm:$0xff]
        %v519 = vld [vmem:[#allocation2 + $0x150] sm:$0xff]
        %v520 = vld [vmem:[#allocation2 + $0x158] sm:$0xff]
        %v521 = vld [vmem:[#allocation2 + $0x168] sm:$0xff]
        %v522 = vld [vmem:[#allocation2 + $0x170] sm:$0xff]
        %v523 = vld [vmem:[#allocation2 + $0x1] sm:$0xff]
        %v524 = vld [vmem:[#allocation2 + $0x9] sm:$0xff]
        %v525 = vld [vmem:[#allocation2 + $0x19] sm:$0xff]
        %v526 = vld [vmem:[#allocation2 + $0x21] sm:$0xff]
        %v527 = vld [vmem:[#allocation2 + $0x31] sm:$0xff]
        %v528 = vld [vmem:[#allocation2 + $0x39] sm:$0xff]
        %v529 = vld [vmem:[#allocation2 + $0x49] sm:$0xff]
        %v530 = vld [vmem:[#allocation2 + $0x51] sm:$0xff]
        %v531 = vld [vmem:[#allocation2 + $0x61] sm:$0xff]
        %v532 = vld [vmem:[#allocation2 + $0x69] sm:$0xff]
        %v533 = vld [vmem:[#allocation2 + $0x79] sm:$0xff]
        %v534 = vld [vmem:[#allocation2 + $0x81] sm:$0xff]
        %v535 = vld [vmem:[#allocation2 + $0x91] sm:$0xff]
        %v536 = vld [vmem:[#allocation2 + $0x99] sm:$0xff]
        %v537 = vld [vmem:[#allocation2 + $0xa9] sm:$0xff]
        %v538 = vld [vmem:[#allocation2 + $0xb1] sm:$0xff]
        %v539 = vld [vmem:[#allocation2 + $0xc1] sm:$0xff]
        %v540 = vld [vmem:[#allocation2 + $0xc9] sm:$0xff]
        %v541 = vld [vmem:[#allocation2 + $0xd9] sm:$0xff]
        %v542 = vld [vmem:[#allocation2 + $0xe1] sm:$0xff]
        %v543 = vld [vmem:[#allocation2 + $0xf1] sm:$0xff]
        %v544 = vld [vmem:[#allocation2 + $0xf9] sm:$0xff]
        %v545 = vld [vmem:[#allocation2 + $0x109] sm:$0xff]
        %v546 = vld [vmem:[#allocation2 + $0x111] sm:$0xff]
        %v547 = vld [vmem:[#allocation2 + $0x121] sm:$0xff]
        %v548 = vld [vmem:[#allocation2 + $0x129] sm:$0xff]
        %v549 = vld [vmem:[#allocation2 + $0x139] sm:$0xff]
        %v550 = vld [vmem:[#allocation2 + $0x141] sm:$0xff]
        %v551 = vld [vmem:[#allocation2 + $0x151] sm:$0xff]
        %v552 = vld [vmem:[#allocation2 + $0x159] sm:$0xff]
        %v553 = vld [vmem:[#allocation2 + $0x169] sm:$0xff]
        %v554 = vld [vmem:[#allocation2 + $0x171] sm:$0xff]
        %v555 = vld [vmem:[#allocation2 + $0x2] sm:$0xff]
        %v556 = vld [vmem:[#allocation2 + $0xa] sm:$0xff]
        %v557 = vld [vmem:[#allocation2 + $0x1a] sm:$0xff]
        %v558 = vld [vmem:[#allocation2 + $0x22] sm:$0xff]
        %v559 = vld [vmem:[#allocation2 + $0x32] sm:$0xff]
        %v560 = vld [vmem:[#allocation2 + $0x3a] sm:$0xff]
        %v561 = vld [vmem:[#allocation2 + $0x4a] sm:$0xff]
        %v562 = vld [vmem:[#allocation2 + $0x52] sm:$0xff]
        %v563 = vld [vmem:[#allocation2 + $0x62] sm:$0xff]
        %v564 = vld [vmem:[#allocation2 + $0x6a] sm:$0xff]
        %v565 = vld [vmem:[#allocation2 + $0x7a] sm:$0xff]
        %v566 = vld [vmem:[#allocation2 + $0x82] sm:$0xff]
        %v567 = vld [vmem:[#allocation2 + $0x92] sm:$0xff]
        %v568 = vld [vmem:[#allocation2 + $0x9a] sm:$0xff]
        %v569 = vld [vmem:[#allocation2 + $0xaa] sm:$0xff]
        %v570 = vld [vmem:[#allocation2 + $0xb2] sm:$0xff]
        %v571 = vld [vmem:[#allocation2 + $0xc2] sm:$0xff]
        %v572 = vld [vmem:[#allocation2 + $0xca] sm:$0xff]
        %v573 = vld [vmem:[#allocation2 + $0xda] sm:$0xff]
        %v574 = vld [vmem:[#allocation2 + $0xe2] sm:$0xff]
        %v575 = vld [vmem:[#allocation2 + $0xf2] sm:$0xff]
        %v576 = vld [vmem:[#allocation2 + $0xfa] sm:$0xff]
        %v577 = vld [vmem:[#allocation2 + $0x10a] sm:$0xff]
        %v578 = vld [vmem:[#allocation2 + $0x112] sm:$0xff]
        %v579 = vld [vmem:[#allocation2 + $0x122] sm:$0xff]
        %v580 = vld [vmem:[#allocation2 + $0x12a] sm:$0xff]
        %v581 = vld [vmem:[#allocation2 + $0x13a] sm:$0xff]
        %v582 = vld [vmem:[#allocation2 + $0x142] sm:$0xff]
        %v583 = vld [vmem:[#allocation2 + $0x152] sm:$0xff]
        %v584 = vld [vmem:[#allocation2 + $0x15a] sm:$0xff]
        %v585 = vld [vmem:[#allocation2 + $0x16a] sm:$0xff]
        %v586 = vld [vmem:[#allocation2 + $0x172] sm:$0xff]
        %v587 = vld [vmem:[%s458] sm:$0xff]
        %v588 = vld [vmem:[%s458 + $0x8] sm:$0xff]
        %v589 = vld [vmem:[%s458 + $0x18] sm:$0xff]
        %v590 = vld [vmem:[%s458 + $0x20] sm:$0xff]
        %v591 = vld [vmem:[%s458 + $0x30] sm:$0xff]
        %v592 = vld [vmem:[%s458 + $0x38] sm:$0xff]
        %v593 = vld [vmem:[%s458 + $0x48] sm:$0xff]
        %v594 = vld [vmem:[%s458 + $0x50] sm:$0xff]
        %v595 = vld [vmem:[%s458 + $0x60] sm:$0xff]
        %v596 = vld [vmem:[%s458 + $0x68] sm:$0xff]
        %v597 = vld [vmem:[%s458 + $0x78] sm:$0xff]
        %v598 = vld [vmem:[%s458 + $0x80] sm:$0xff]
        %v599 = vld [vmem:[%s458 + $0x90] sm:$0xff]
        %v600 = vld [vmem:[%s458 + $0x98] sm:$0xff]
        %v601 = vld [vmem:[%s458 + $0xa8] sm:$0xff]
        %v602 = vld [vmem:[%s458 + $0xb0] sm:$0xff]
        %v603 = vld [vmem:[%s458 + $0xc0] sm:$0xff]
        %v604 = vld [vmem:[%s458 + $0xc8] sm:$0xff]
        %v605 = vld [vmem:[%s458 + $0xd8] sm:$0xff]
        %v606 = vld [vmem:[%s458 + $0xe0] sm:$0xff]
        %v607 = vld [vmem:[%s458 + $0xf0] sm:$0xff]
        %v608 = vld [vmem:[%s458 + $0xf8] sm:$0xff]
        %v609 = vld [vmem:[%s458 + $0x108] sm:$0xff]
        %v610 = vld [vmem:[%s458 + $0x110] sm:$0xff]
        %v611 = vld [vmem:[%s458 + $0x120] sm:$0xff]
        %v612 = vld [vmem:[%s458 + $0x128] sm:$0xff]
        %v613 = vld [vmem:[%s458 + $0x138] sm:$0xff]
        %v614 = vld [vmem:[%s458 + $0x140] sm:$0xff]
        %v615 = vld [vmem:[%s458 + $0x150] sm:$0xff]
        %v616 = vld [vmem:[%s458 + $0x158] sm:$0xff]
        %v617 = vld [vmem:[%s458 + $0x168] sm:$0xff]
        %v618 = vld [vmem:[%s458 + $0x170] sm:$0xff]
        %v619 = vld [vmem:[%s458 + $0x1] sm:$0xff]
        %v620 = vld [vmem:[%s458 + $0x9] sm:$0xff]
        %v621 = vld [vmem:[%s458 + $0x19] sm:$0xff]
        %v622 = vld [vmem:[%s458 + $0x21] sm:$0xff]
        %v623 = vld [vmem:[%s458 + $0x31] sm:$0xff]
        %v624 = vld [vmem:[%s458 + $0x39] sm:$0xff]
        %v625 = vld [vmem:[%s458 + $0x49] sm:$0xff]
        %v626 = vld [vmem:[%s458 + $0x51] sm:$0xff]
        %v627 = vld [vmem:[%s458 + $0x61] sm:$0xff]
        %v628 = vld [vmem:[%s458 + $0x69] sm:$0xff]
        %v629 = vld [vmem:[%s458 + $0x79] sm:$0xff]
        %v630 = vld [vmem:[%s458 + $0x81] sm:$0xff]
        %v631 = vld [vmem:[%s458 + $0x91] sm:$0xff]
        %v632 = vld [vmem:[%s458 + $0x99] sm:$0xff]
        %v633 = vld [vmem:[%s458 + $0xa9] sm:$0xff]
        %v634 = vld [vmem:[%s458 + $0xb1] sm:$0xff]
        %v635 = vld [vmem:[%s458 + $0xc1] sm:$0xff]
        %v636 = vld [vmem:[%s458 + $0xc9] sm:$0xff]
        %v637 = vld [vmem:[%s458 + $0xd9] sm:$0xff]
        %v638 = vld [vmem:[%s458 + $0xe1] sm:$0xff]
        %v639 = vld [vmem:[%s458 + $0xf1] sm:$0xff]
        %v640 = vld [vmem:[%s458 + $0xf9] sm:$0xff]
        %v641 = vld [vmem:[%s458 + $0x109] sm:$0xff]
        %v642 = vld [vmem:[%s458 + $0x111] sm:$0xff]
        %v643 = vld [vmem:[%s458 + $0x121] sm:$0xff]
        %v644 = vld [vmem:[%s458 + $0x129] sm:$0xff]
        %v645 = vld [vmem:[%s458 + $0x139] sm:$0xff]
        %v646 = vld [vmem:[%s458 + $0x141] sm:$0xff]
        %v647 = vld [vmem:[%s458 + $0x151] sm:$0xff]
        %v648 = vld [vmem:[%s458 + $0x159] sm:$0xff]
        %v649 = vld [vmem:[%s458 + $0x169] sm:$0xff]
        %v650 = vld [vmem:[%s458 + $0x171] sm:$0xff]
        %v651 = vld [vmem:[%s458 + $0x2] sm:$0xff]
        %v652 = vld [vmem:[%s458 + $0xa] sm:$0xff]
        %v653 = vld [vmem:[%s458 + $0x1a] sm:$0xff]
        %v654 = vld [vmem:[%s458 + $0x22] sm:$0xff]
        %v655 = vld [vmem:[%s458 + $0x32] sm:$0xff]
        %v656 = vld [vmem:[%s458 + $0x3a] sm:$0xff]
        %v657 = vld [vmem:[%s458 + $0x4a] sm:$0xff]
        %v658 = vld [vmem:[%s458 + $0x52] sm:$0xff]
        %v659 = vld [vmem:[%s458 + $0x62] sm:$0xff]
        %v660 = vld [vmem:[%s458 + $0x6a] sm:$0xff]
        %v661 = vld [vmem:[%s458 + $0x7a] sm:$0xff]
        %v662 = vld [vmem:[%s458 + $0x82] sm:$0xff]
        %v663 = vld [vmem:[%s458 + $0x92] sm:$0xff]
        %v664 = vld [vmem:[%s458 + $0x9a] sm:$0xff]
        %v665 = vld [vmem:[%s458 + $0xaa] sm:$0xff]
        %v666 = vld [vmem:[%s458 + $0xb2] sm:$0xff]
        %v667 = vld [vmem:[%s458 + $0xc2] sm:$0xff]
        %v668 = vld [vmem:[%s458 + $0xca] sm:$0xff]
        %v669 = vld [vmem:[%s458 + $0xda] sm:$0xff]
        %v670 = vld [vmem:[%s458 + $0xe2] sm:$0xff]
        %v671 = vld [vmem:[%s458 + $0xf2] sm:$0xff]
        %v672 = vld [vmem:[%s458 + $0xfa] sm:$0xff]
        %v673 = vld [vmem:[%s458 + $0x10a] sm:$0xff]
        %v674 = vld [vmem:[%s458 + $0x112] sm:$0xff]
        %v675 = vld [vmem:[%s458 + $0x122] sm:$0xff]
        %v676 = vld [vmem:[%s458 + $0x12a] sm:$0xff]
        %v677 = vld [vmem:[%s458 + $0x13a] sm:$0xff]
        %v678 = vld [vmem:[%s458 + $0x142] sm:$0xff]
        %v679 = vld [vmem:[%s458 + $0x152] sm:$0xff]
        %v680 = vld [vmem:[%s458 + $0x15a] sm:$0xff]
        %v681 = vld [vmem:[%s458 + $0x16a] sm:$0xff]
        %v682 = vld [vmem:[%s458 + $0x172] sm:$0xff]
        %s683 = scalar_lea.vmem [#allocation2], 48
        %v684 = vld [vmem:[%s683] sm:$0xff]
        %v685 = vld [vmem:[%s683 + $0x8] sm:$0xff]
        %v686 = vld [vmem:[%s683 + $0x18] sm:$0xff]
        %v687 = vld [vmem:[%s683 + $0x20] sm:$0xff]
        %v688 = vld [vmem:[%s683 + $0x30] sm:$0xff]
        %v689 = vld [vmem:[%s683 + $0x38] sm:$0xff]
        %v690 = vld [vmem:[%s683 + $0x48] sm:$0xff]
        %v691 = vld [vmem:[%s683 + $0x50] sm:$0xff]
        %v692 = vld [vmem:[%s683 + $0x60] sm:$0xff]
        %v693 = vld [vmem:[%s683 + $0x68] sm:$0xff]
        %v694 = vld [vmem:[%s683 + $0x78] sm:$0xff]
        %v695 = vld [vmem:[%s683 + $0x80] sm:$0xff]
        %v696 = vld [vmem:[%s683 + $0x90] sm:$0xff]
        %v697 = vld [vmem:[%s683 + $0x98] sm:$0xff]
        %v698 = vld [vmem:[%s683 + $0xa8] sm:$0xff]
        %v699 = vld [vmem:[%s683 + $0xb0] sm:$0xff]
        %v700 = vld [vmem:[%s683 + $0xc0] sm:$0xff]
        %v701 = vld [vmem:[%s683 + $0xc8] sm:$0xff]
        %v702 = vld [vmem:[%s683 + $0xd8] sm:$0xff]
        %v703 = vld [vmem:[%s683 + $0xe0] sm:$0xff]
        %v704 = vld [vmem:[%s683 + $0xf0] sm:$0xff]
        %v705 = vld [vmem:[%s683 + $0xf8] sm:$0xff]
        %v706 = vld [vmem:[%s683 + $0x108] sm:$0xff]
        %v707 = vld [vmem:[%s683 + $0x110] sm:$0xff]
        %v708 = vld [vmem:[%s683 + $0x120] sm:$0xff]
        %v709 = vld [vmem:[%s683 + $0x128] sm:$0xff]
        %v710 = vld [vmem:[%s683 + $0x138] sm:$0xff]
        %v711 = vld [vmem:[%s683 + $0x140] sm:$0xff]
        %v712 = vld [vmem:[%s683 + $0x150] sm:$0xff]
        %v713 = vld [vmem:[%s683 + $0x158] sm:$0xff]
        %v714 = vld [vmem:[%s683 + $0x168] sm:$0xff]
        %v715 = vld [vmem:[%s683 + $0x170] sm:$0xff]
        %v716 = vld [vmem:[%s683 + $0x1] sm:$0xff]
        %v717 = vld [vmem:[%s683 + $0x9] sm:$0xff]
        %v718 = vld [vmem:[%s683 + $0x19] sm:$0xff]
        %v719 = vld [vmem:[%s683 + $0x21] sm:$0xff]
        %v720 = vld [vmem:[%s683 + $0x31] sm:$0xff]
        %v721 = vld [vmem:[%s683 + $0x39] sm:$0xff]
        %v722 = vld [vmem:[%s683 + $0x49] sm:$0xff]
        %v723 = vld [vmem:[%s683 + $0x51] sm:$0xff]
        %v724 = vld [vmem:[%s683 + $0x61] sm:$0xff]
        %v725 = vld [vmem:[%s683 + $0x69] sm:$0xff]
        %v726 = vld [vmem:[%s683 + $0x79] sm:$0xff]
        %v727 = vld [vmem:[%s683 + $0x81] sm:$0xff]
        %v728 = vld [vmem:[%s683 + $0x91] sm:$0xff]
        %v729 = vld [vmem:[%s683 + $0x99] sm:$0xff]
        %v730 = vld [vmem:[%s683 + $0xa9] sm:$0xff]
        %v731 = vld [vmem:[%s683 + $0xb1] sm:$0xff]
        %v732 = vld [vmem:[%s683 + $0xc1] sm:$0xff]
        %v733 = vld [vmem:[%s683 + $0xc9] sm:$0xff]
        %v734 = vld [vmem:[%s683 + $0xd9] sm:$0xff]
        %v735 = vld [vmem:[%s683 + $0xe1] sm:$0xff]
        %v736 = vld [vmem:[%s683 + $0xf1] sm:$0xff]
        %v737 = vld [vmem:[%s683 + $0xf9] sm:$0xff]
        %v738 = vld [vmem:[%s683 + $0x109] sm:$0xff]
        %v739 = vld [vmem:[%s683 + $0x111] sm:$0xff]
        %v740 = vld [vmem:[%s683 + $0x121] sm:$0xff]
        %v741 = vld [vmem:[%s683 + $0x129] sm:$0xff]
        %v742 = vld [vmem:[%s683 + $0x139] sm:$0xff]
        %v743 = vld [vmem:[%s683 + $0x141] sm:$0xff]
        %v744 = vld [vmem:[%s683 + $0x151] sm:$0xff]
        %v745 = vld [vmem:[%s683 + $0x159] sm:$0xff]
        %v746 = vld [vmem:[%s683 + $0x169] sm:$0xff]
        %v747 = vld [vmem:[%s683 + $0x171] sm:$0xff]
        %v748 = vld [vmem:[%s683 + $0x2] sm:$0xff]
        %v749 = vld [vmem:[%s683 + $0xa] sm:$0xff]
        %v750 = vld [vmem:[%s683 + $0x1a] sm:$0xff]
        %v751 = vld [vmem:[%s683 + $0x22] sm:$0xff]
        %v752 = vld [vmem:[%s683 + $0x32] sm:$0xff]
        %v753 = vld [vmem:[%s683 + $0x3a] sm:$0xff]
        %v754 = vld [vmem:[%s683 + $0x4a] sm:$0xff]
        %v755 = vld [vmem:[%s683 + $0x52] sm:$0xff]
        %v756 = vld [vmem:[%s683 + $0x62] sm:$0xff]
        %v757 = vld [vmem:[%s683 + $0x6a] sm:$0xff]
        %v758 = vld [vmem:[%s683 + $0x7a] sm:$0xff]
        %v759 = vld [vmem:[%s683 + $0x82] sm:$0xff]
        %v760 = vld [vmem:[%s683 + $0x92] sm:$0xff]
        %v761 = vld [vmem:[%s683 + $0x9a] sm:$0xff]
        %v762 = vld [vmem:[%s683 + $0xaa] sm:$0xff]
        %v763 = vld [vmem:[%s683 + $0xb2] sm:$0xff]
        %v764 = vld [vmem:[%s683 + $0xc2] sm:$0xff]
        %v765 = vld [vmem:[%s683 + $0xca] sm:$0xff]
        %v766 = vld [vmem:[%s683 + $0xda] sm:$0xff]
        %v767 = vld [vmem:[%s683 + $0xe2] sm:$0xff]
        %v768 = vld [vmem:[%s683 + $0xf2] sm:$0xff]
        %v769 = vld [vmem:[%s683 + $0xfa] sm:$0xff]
        %v770 = vld [vmem:[%s683 + $0x10a] sm:$0xff]
        %v771 = vld [vmem:[%s683 + $0x112] sm:$0xff]
        %v772 = vld [vmem:[%s683 + $0x122] sm:$0xff]
        %v773 = vld [vmem:[%s683 + $0x12a] sm:$0xff]
        %v774 = vld [vmem:[%s683 + $0x13a] sm:$0xff]
        %v775 = vld [vmem:[%s683 + $0x142] sm:$0xff]
        %v776 = vld [vmem:[%s683 + $0x152] sm:$0xff]
        %v777 = vld [vmem:[%s683 + $0x15a] sm:$0xff]
        %v778 = vld [vmem:[%s683 + $0x16a] sm:$0xff]
        %v779 = vld [vmem:[%s683 + $0x172] sm:$0xff]
        %812 = vrot.lane.b32.xlu0 %v523, 16
        %v813 = vpop.permute.xlu0 %812
        %814 = vrot.lane.b32.xlu0 %v524, 16
        %v815 = vpop.permute.xlu0 %814
        %816 = vrot.lane.b32.xlu0 %v525, 16
        %v817 = vpop.permute.xlu0 %816
        %818 = vrot.lane.b32.xlu0 %v526, 16
        %v819 = vpop.permute.xlu0 %818
        %820 = vrot.lane.b32.xlu0 %v527, 16
        %v821 = vpop.permute.xlu0 %820
        %822 = vrot.lane.b32.xlu0 %v528, 16
        %v823 = vpop.permute.xlu0 %822
        %824 = vrot.lane.b32.xlu0 %v529, 16
        %v825 = vpop.permute.xlu0 %824
        %826 = vrot.lane.b32.xlu0 %v530, 16
        %v827 = vpop.permute.xlu0 %826
        %828 = vrot.lane.b32.xlu0 %v531, 16
        %v829 = vpop.permute.xlu0 %828
        %830 = vrot.lane.b32.xlu0 %v532, 16
        %v831 = vpop.permute.xlu0 %830
        %832 = vrot.lane.b32.xlu0 %v533, 16
        %v833 = vpop.permute.xlu0 %832
        %834 = vrot.lane.b32.xlu0 %v534, 16
        %v835 = vpop.permute.xlu0 %834
        %836 = vrot.lane.b32.xlu0 %v535, 16
        %v837 = vpop.permute.xlu0 %836
        %838 = vrot.lane.b32.xlu0 %v536, 16
        %v839 = vpop.permute.xlu0 %838
        %840 = vrot.lane.b32.xlu0 %v537, 16
        %v841 = vpop.permute.xlu0 %840
        %842 = vrot.lane.b32.xlu0 %v538, 16
        %v843 = vpop.permute.xlu0 %842
        %844 = vrot.lane.b32.xlu0 %v539, 16
        %v845 = vpop.permute.xlu0 %844
        %846 = vrot.lane.b32.xlu0 %v540, 16
        %v847 = vpop.permute.xlu0 %846
        %848 = vrot.lane.b32.xlu0 %v541, 16
        %v849 = vpop.permute.xlu0 %848
        %850 = vrot.lane.b32.xlu0 %v542, 16
        %v851 = vpop.permute.xlu0 %850
        %852 = vrot.lane.b32.xlu0 %v543, 16
        %v853 = vpop.permute.xlu0 %852
        %854 = vrot.lane.b32.xlu0 %v544, 16
        %v855 = vpop.permute.xlu0 %854
        %856 = vrot.lane.b32.xlu0 %v545, 16
        %v857 = vpop.permute.xlu0 %856
        %858 = vrot.lane.b32.xlu0 %v546, 16
        %v859 = vpop.permute.xlu0 %858
        %860 = vrot.lane.b32.xlu0 %v547, 16
        %v861 = vpop.permute.xlu0 %860
        %862 = vrot.lane.b32.xlu0 %v548, 16
        %v863 = vpop.permute.xlu0 %862
        %864 = vrot.lane.b32.xlu0 %v549, 16
        %v865 = vpop.permute.xlu0 %864
        %866 = vrot.lane.b32.xlu0 %v550, 16
        %v867 = vpop.permute.xlu0 %866
        %868 = vrot.lane.b32.xlu0 %v551, 16
        %v869 = vpop.permute.xlu0 %868
        %870 = vrot.lane.b32.xlu0 %v552, 16
        %v871 = vpop.permute.xlu0 %870
        %872 = vrot.lane.b32.xlu0 %v553, 16
        %v873 = vpop.permute.xlu0 %872
        %874 = vrot.lane.b32.xlu0 %v554, 16
        %v875 = vpop.permute.xlu0 %874
        %940 = vrot.lane.b32.xlu0 %v555, 32
        %v941 = vpop.permute.xlu0 %940
        %942 = vrot.lane.b32.xlu0 %v556, 32
        %v943 = vpop.permute.xlu0 %942
        %944 = vrot.lane.b32.xlu0 %v557, 32
        %v945 = vpop.permute.xlu0 %944
        %946 = vrot.lane.b32.xlu0 %v558, 32
        %v947 = vpop.permute.xlu0 %946
        %948 = vrot.lane.b32.xlu0 %v559, 32
        %v949 = vpop.permute.xlu0 %948
        %950 = vrot.lane.b32.xlu0 %v560, 32
        %v951 = vpop.permute.xlu0 %950
        %952 = vrot.lane.b32.xlu0 %v561, 32
        %v953 = vpop.permute.xlu0 %952
        %954 = vrot.lane.b32.xlu0 %v562, 32
        %v955 = vpop.permute.xlu0 %954
        %956 = vrot.lane.b32.xlu0 %v563, 32
        %v957 = vpop.permute.xlu0 %956
        %958 = vrot.lane.b32.xlu0 %v564, 32
        %v959 = vpop.permute.xlu0 %958
        %960 = vrot.lane.b32.xlu0 %v565, 32
        %v961 = vpop.permute.xlu0 %960
        %962 = vrot.lane.b32.xlu0 %v566, 32
        %v963 = vpop.permute.xlu0 %962
        %964 = vrot.lane.b32.xlu0 %v567, 32
        %v965 = vpop.permute.xlu0 %964
        %966 = vrot.lane.b32.xlu0 %v568, 32
        %v967 = vpop.permute.xlu0 %966
        %968 = vrot.lane.b32.xlu0 %v569, 32
        %v969 = vpop.permute.xlu0 %968
        %970 = vrot.lane.b32.xlu0 %v570, 32
        %v971 = vpop.permute.xlu0 %970
        %972 = vrot.lane.b32.xlu0 %v571, 32
        %v973 = vpop.permute.xlu0 %972
        %974 = vrot.lane.b32.xlu0 %v572, 32
        %v975 = vpop.permute.xlu0 %974
        %976 = vrot.lane.b32.xlu0 %v573, 32
        %v977 = vpop.permute.xlu0 %976
        %978 = vrot.lane.b32.xlu0 %v574, 32
        %v979 = vpop.permute.xlu0 %978
        %980 = vrot.lane.b32.xlu0 %v575, 32
        %v981 = vpop.permute.xlu0 %980
        %982 = vrot.lane.b32.xlu0 %v576, 32
        %v983 = vpop.permute.xlu0 %982
        %984 = vrot.lane.b32.xlu0 %v577, 32
        %v985 = vpop.permute.xlu0 %984
        %986 = vrot.lane.b32.xlu0 %v578, 32
        %v987 = vpop.permute.xlu0 %986
        %988 = vrot.lane.b32.xlu0 %v579, 32
        %v989 = vpop.permute.xlu0 %988
        %990 = vrot.lane.b32.xlu0 %v580, 32
        %v991 = vpop.permute.xlu0 %990
        %992 = vrot.lane.b32.xlu0 %v581, 32
        %v993 = vpop.permute.xlu0 %992
        %994 = vrot.lane.b32.xlu0 %v582, 32
        %v995 = vpop.permute.xlu0 %994
        %996 = vrot.lane.b32.xlu0 %v583, 32
        %v997 = vpop.permute.xlu0 %996
        %998 = vrot.lane.b32.xlu0 %v584, 32
        %v999 = vpop.permute.xlu0 %998
        %1000 = vrot.lane.b32.xlu0 %v585, 32
        %v1001 = vpop.permute.xlu0 %1000
        %1002 = vrot.lane.b32.xlu0 %v586, 32
        %v1003 = vpop.permute.xlu0 %1002
        %1068 = vrot.lane.b32.xlu0 %v587, 48
        %v1069 = vpop.permute.xlu0 %1068
        %1070 = vrot.lane.b32.xlu0 %v588, 48
        %v1071 = vpop.permute.xlu0 %1070
        %1072 = vrot.lane.b32.xlu0 %v589, 48
        %v1073 = vpop.permute.xlu0 %1072
        %1074 = vrot.lane.b32.xlu0 %v590, 48
        %v1075 = vpop.permute.xlu0 %1074
        %1076 = vrot.lane.b32.xlu0 %v591, 48
        %v1077 = vpop.permute.xlu0 %1076
        %1078 = vrot.lane.b32.xlu0 %v592, 48
        %v1079 = vpop.permute.xlu0 %1078
        %1080 = vrot.lane.b32.xlu0 %v593, 48
        %v1081 = vpop.permute.xlu0 %1080
        %1082 = vrot.lane.b32.xlu0 %v594, 48
        %v1083 = vpop.permute.xlu0 %1082
        %1084 = vrot.lane.b32.xlu0 %v595, 48
        %v1085 = vpop.permute.xlu0 %1084
        %1086 = vrot.lane.b32.xlu0 %v596, 48
        %v1087 = vpop.permute.xlu0 %1086
        %1088 = vrot.lane.b32.xlu0 %v597, 48
        %v1089 = vpop.permute.xlu0 %1088
        %1090 = vrot.lane.b32.xlu0 %v598, 48
        %v1091 = vpop.permute.xlu0 %1090
        %1092 = vrot.lane.b32.xlu0 %v599, 48
        %v1093 = vpop.permute.xlu0 %1092
        %1094 = vrot.lane.b32.xlu0 %v600, 48
        %v1095 = vpop.permute.xlu0 %1094
        %1096 = vrot.lane.b32.xlu0 %v601, 48
        %v1097 = vpop.permute.xlu0 %1096
        %1098 = vrot.lane.b32.xlu0 %v602, 48
        %v1099 = vpop.permute.xlu0 %1098
        %1100 = vrot.lane.b32.xlu0 %v603, 48
        %v1101 = vpop.permute.xlu0 %1100
        %1102 = vrot.lane.b32.xlu0 %v604, 48
        %v1103 = vpop.permute.xlu0 %1102
        %1104 = vrot.lane.b32.xlu0 %v605, 48
        %v1105 = vpop.permute.xlu0 %1104
        %1106 = vrot.lane.b32.xlu0 %v606, 48
        %v1107 = vpop.permute.xlu0 %1106
        %1108 = vrot.lane.b32.xlu0 %v607, 48
        %v1109 = vpop.permute.xlu0 %1108
        %1110 = vrot.lane.b32.xlu0 %v608, 48
        %v1111 = vpop.permute.xlu0 %1110
        %1112 = vrot.lane.b32.xlu0 %v609, 48
        %v1113 = vpop.permute.xlu0 %1112
        %1114 = vrot.lane.b32.xlu0 %v610, 48
        %v1115 = vpop.permute.xlu0 %1114
        %1116 = vrot.lane.b32.xlu0 %v611, 48
        %v1117 = vpop.permute.xlu0 %1116
        %1118 = vrot.lane.b32.xlu0 %v612, 48
        %v1119 = vpop.permute.xlu0 %1118
        %1120 = vrot.lane.b32.xlu0 %v613, 48
        %v1121 = vpop.permute.xlu0 %1120
        %1122 = vrot.lane.b32.xlu0 %v614, 48
        %v1123 = vpop.permute.xlu0 %1122
        %1124 = vrot.lane.b32.xlu0 %v615, 48
        %v1125 = vpop.permute.xlu0 %1124
        %1126 = vrot.lane.b32.xlu0 %v616, 48
        %v1127 = vpop.permute.xlu0 %1126
        %1128 = vrot.lane.b32.xlu0 %v617, 48
        %v1129 = vpop.permute.xlu0 %1128
        %1130 = vrot.lane.b32.xlu0 %v618, 48
        %v1131 = vpop.permute.xlu0 %1130
        %1196 = vrot.lane.b32.xlu0 %v619, 64
        %v1197 = vpop.permute.xlu0 %1196
        %1198 = vrot.lane.b32.xlu0 %v620, 64
        %v1199 = vpop.permute.xlu0 %1198
        %1200 = vrot.lane.b32.xlu0 %v621, 64
        %v1201 = vpop.permute.xlu0 %1200
        %1202 = vrot.lane.b32.xlu0 %v622, 64
        %v1203 = vpop.permute.xlu0 %1202
        %1204 = vrot.lane.b32.xlu0 %v623, 64
        %v1205 = vpop.permute.xlu0 %1204
        %1206 = vrot.lane.b32.xlu0 %v624, 64
        %v1207 = vpop.permute.xlu0 %1206
        %1208 = vrot.lane.b32.xlu0 %v625, 64
        %v1209 = vpop.permute.xlu0 %1208
        %1210 = vrot.lane.b32.xlu0 %v626, 64
        %v1211 = vpop.permute.xlu0 %1210
        %1212 = vrot.lane.b32.xlu0 %v627, 64
        %v1213 = vpop.permute.xlu0 %1212
        %1214 = vrot.lane.b32.xlu0 %v628, 64
        %v1215 = vpop.permute.xlu0 %1214
        %1216 = vrot.lane.b32.xlu0 %v629, 64
        %v1217 = vpop.permute.xlu0 %1216
        %1218 = vrot.lane.b32.xlu0 %v630, 64
        %v1219 = vpop.permute.xlu0 %1218
        %1220 = vrot.lane.b32.xlu0 %v631, 64
        %v1221 = vpop.permute.xlu0 %1220
        %1222 = vrot.lane.b32.xlu0 %v632, 64
        %v1223 = vpop.permute.xlu0 %1222
        %1224 = vrot.lane.b32.xlu0 %v633, 64
        %v1225 = vpop.permute.xlu0 %1224
        %1226 = vrot.lane.b32.xlu0 %v634, 64
        %v1227 = vpop.permute.xlu0 %1226
        %1228 = vrot.lane.b32.xlu0 %v635, 64
        %v1229 = vpop.permute.xlu0 %1228
        %1230 = vrot.lane.b32.xlu0 %v636, 64
        %v1231 = vpop.permute.xlu0 %1230
        %1232 = vrot.lane.b32.xlu0 %v637, 64
        %v1233 = vpop.permute.xlu0 %1232
        %1234 = vrot.lane.b32.xlu0 %v638, 64
        %v1235 = vpop.permute.xlu0 %1234
        %1236 = vrot.lane.b32.xlu0 %v639, 64
        %v1237 = vpop.permute.xlu0 %1236
        %1238 = vrot.lane.b32.xlu0 %v640, 64
        %v1239 = vpop.permute.xlu0 %1238
        %1240 = vrot.lane.b32.xlu0 %v641, 64
        %v1241 = vpop.permute.xlu0 %1240
        %1242 = vrot.lane.b32.xlu0 %v642, 64
        %v1243 = vpop.permute.xlu0 %1242
        %1244 = vrot.lane.b32.xlu0 %v643, 64
        %v1245 = vpop.permute.xlu0 %1244
        %1246 = vrot.lane.b32.xlu0 %v644, 64
        %v1247 = vpop.permute.xlu0 %1246
        %1248 = vrot.lane.b32.xlu0 %v645, 64
        %v1249 = vpop.permute.xlu0 %1248
        %1250 = vrot.lane.b32.xlu0 %v646, 64
        %v1251 = vpop.permute.xlu0 %1250
        %1252 = vrot.lane.b32.xlu0 %v647, 64
        %v1253 = vpop.permute.xlu0 %1252
        %1254 = vrot.lane.b32.xlu0 %v648, 64
        %v1255 = vpop.permute.xlu0 %1254
        %1256 = vrot.lane.b32.xlu0 %v649, 64
        %v1257 = vpop.permute.xlu0 %1256
        %1258 = vrot.lane.b32.xlu0 %v650, 64
        %v1259 = vpop.permute.xlu0 %1258
        %1324 = vrot.lane.b32.xlu0 %v651, 80
        %v1325 = vpop.permute.xlu0 %1324
        %1326 = vrot.lane.b32.xlu0 %v652, 80
        %v1327 = vpop.permute.xlu0 %1326
        %1328 = vrot.lane.b32.xlu0 %v653, 80
        %v1329 = vpop.permute.xlu0 %1328
        %1330 = vrot.lane.b32.xlu0 %v654, 80
        %v1331 = vpop.permute.xlu0 %1330
        %1332 = vrot.lane.b32.xlu0 %v655, 80
        %v1333 = vpop.permute.xlu0 %1332
        %1334 = vrot.lane.b32.xlu0 %v656, 80
        %v1335 = vpop.permute.xlu0 %1334
        %1336 = vrot.lane.b32.xlu0 %v657, 80
        %v1337 = vpop.permute.xlu0 %1336
        %1338 = vrot.lane.b32.xlu0 %v658, 80
        %v1339 = vpop.permute.xlu0 %1338
        %1340 = vrot.lane.b32.xlu0 %v659, 80
        %v1341 = vpop.permute.xlu0 %1340
        %1342 = vrot.lane.b32.xlu0 %v660, 80
        %v1343 = vpop.permute.xlu0 %1342
        %1344 = vrot.lane.b32.xlu0 %v661, 80
        %v1345 = vpop.permute.xlu0 %1344
        %1346 = vrot.lane.b32.xlu0 %v662, 80
        %v1347 = vpop.permute.xlu0 %1346
        %1348 = vrot.lane.b32.xlu0 %v663, 80
        %v1349 = vpop.permute.xlu0 %1348
        %1350 = vrot.lane.b32.xlu0 %v664, 80
        %v1351 = vpop.permute.xlu0 %1350
        %1352 = vrot.lane.b32.xlu0 %v665, 80
        %v1353 = vpop.permute.xlu0 %1352
        %1354 = vrot.lane.b32.xlu0 %v666, 80
        %v1355 = vpop.permute.xlu0 %1354
        %1356 = vrot.lane.b32.xlu0 %v667, 80
        %v1357 = vpop.permute.xlu0 %1356
        %1358 = vrot.lane.b32.xlu0 %v668, 80
        %v1359 = vpop.permute.xlu0 %1358
        %1360 = vrot.lane.b32.xlu0 %v669, 80
        %v1361 = vpop.permute.xlu0 %1360
        %1362 = vrot.lane.b32.xlu0 %v670, 80
        %v1363 = vpop.permute.xlu0 %1362
        %1364 = vrot.lane.b32.xlu0 %v671, 80
        %v1365 = vpop.permute.xlu0 %1364
        %1366 = vrot.lane.b32.xlu0 %v672, 80
        %v1367 = vpop.permute.xlu0 %1366
        %1368 = vrot.lane.b32.xlu0 %v673, 80
        %v1369 = vpop.permute.xlu0 %1368
        %1370 = vrot.lane.b32.xlu0 %v674, 80
        %v1371 = vpop.permute.xlu0 %1370
        %1372 = vrot.lane.b32.xlu0 %v675, 80
        %v1373 = vpop.permute.xlu0 %1372
        %1374 = vrot.lane.b32.xlu0 %v676, 80
        %v1375 = vpop.permute.xlu0 %1374
        %1376 = vrot.lane.b32.xlu0 %v677, 80
        %v1377 = vpop.permute.xlu0 %1376
        %1378 = vrot.lane.b32.xlu0 %v678, 80
        %v1379 = vpop.permute.xlu0 %1378
        %1380 = vrot.lane.b32.xlu0 %v679, 80
        %v1381 = vpop.permute.xlu0 %1380
        %1382 = vrot.lane.b32.xlu0 %v680, 80
        %v1383 = vpop.permute.xlu0 %1382
        %1384 = vrot.lane.b32.xlu0 %v681, 80
        %v1385 = vpop.permute.xlu0 %1384
        %1386 = vrot.lane.b32.xlu0 %v682, 80
        %v1387 = vpop.permute.xlu0 %1386
        %1452 = vrot.lane.b32.xlu0 %v684, 96
        %v1453 = vpop.permute.xlu0 %1452
        %1454 = vrot.lane.b32.xlu0 %v685, 96
        %v1455 = vpop.permute.xlu0 %1454
        %1456 = vrot.lane.b32.xlu0 %v686, 96
        %v1457 = vpop.permute.xlu0 %1456
        %1458 = vrot.lane.b32.xlu0 %v687, 96
        %v1459 = vpop.permute.xlu0 %1458
        %1460 = vrot.lane.b32.xlu0 %v688, 96
        %v1461 = vpop.permute.xlu0 %1460
        %1462 = vrot.lane.b32.xlu0 %v689, 96
        %v1463 = vpop.permute.xlu0 %1462
        %1464 = vrot.lane.b32.xlu0 %v690, 96
        %v1465 = vpop.permute.xlu0 %1464
        %1466 = vrot.lane.b32.xlu0 %v691, 96
        %v1467 = vpop.permute.xlu0 %1466
        %1468 = vrot.lane.b32.xlu0 %v692, 96
        %v1469 = vpop.permute.xlu0 %1468
        %1470 = vrot.lane.b32.xlu0 %v693, 96
        %v1471 = vpop.permute.xlu0 %1470
        %1472 = vrot.lane.b32.xlu0 %v694, 96
        %v1473 = vpop.permute.xlu0 %1472
        %1474 = vrot.lane.b32.xlu0 %v695, 96
        %v1475 = vpop.permute.xlu0 %1474
        %1476 = vrot.lane.b32.xlu0 %v696, 96
        %v1477 = vpop.permute.xlu0 %1476
        %1478 = vrot.lane.b32.xlu0 %v697, 96
        %v1479 = vpop.permute.xlu0 %1478
        %1480 = vrot.lane.b32.xlu0 %v698, 96
        %v1481 = vpop.permute.xlu0 %1480
        %1482 = vrot.lane.b32.xlu0 %v699, 96
        %v1483 = vpop.permute.xlu0 %1482
        %1484 = vrot.lane.b32.xlu0 %v700, 96
        %v1485 = vpop.permute.xlu0 %1484
        %1486 = vrot.lane.b32.xlu0 %v701, 96
        %v1487 = vpop.permute.xlu0 %1486
        %1488 = vrot.lane.b32.xlu0 %v702, 96
        %v1489 = vpop.permute.xlu0 %1488
        %1490 = vrot.lane.b32.xlu0 %v703, 96
        %v1491 = vpop.permute.xlu0 %1490
        %1492 = vrot.lane.b32.xlu0 %v704, 96
        %v1493 = vpop.permute.xlu0 %1492
        %1494 = vrot.lane.b32.xlu0 %v705, 96
        %v1495 = vpop.permute.xlu0 %1494
        %1496 = vrot.lane.b32.xlu0 %v706, 96
        %v1497 = vpop.permute.xlu0 %1496
        %1498 = vrot.lane.b32.xlu0 %v707, 96
        %v1499 = vpop.permute.xlu0 %1498
        %1500 = vrot.lane.b32.xlu0 %v708, 96
        %v1501 = vpop.permute.xlu0 %1500
        %1502 = vrot.lane.b32.xlu0 %v709, 96
        %v1503 = vpop.permute.xlu0 %1502
        %1504 = vrot.lane.b32.xlu0 %v710, 96
        %v1505 = vpop.permute.xlu0 %1504
        %1506 = vrot.lane.b32.xlu0 %v711, 96
        %v1507 = vpop.permute.xlu0 %1506
        %1508 = vrot.lane.b32.xlu0 %v712, 96
        %v1509 = vpop.permute.xlu0 %1508
        %1510 = vrot.lane.b32.xlu0 %v713, 96
        %v1511 = vpop.permute.xlu0 %1510
        %1512 = vrot.lane.b32.xlu0 %v714, 96
        %v1513 = vpop.permute.xlu0 %1512
        %1514 = vrot.lane.b32.xlu0 %v715, 96
        %v1515 = vpop.permute.xlu0 %1514
        %1580 = vrot.lane.b32.xlu0 %v716, 112
        %v1581 = vpop.permute.xlu0 %1580
        %1582 = vrot.lane.b32.xlu0 %v717, 112
        %v1583 = vpop.permute.xlu0 %1582
        %1584 = vrot.lane.b32.xlu0 %v718, 112
        %v1585 = vpop.permute.xlu0 %1584
        %1586 = vrot.lane.b32.xlu0 %v719, 112
        %v1587 = vpop.permute.xlu0 %1586
        %1588 = vrot.lane.b32.xlu0 %v720, 112
        %v1589 = vpop.permute.xlu0 %1588
        %1590 = vrot.lane.b32.xlu0 %v721, 112
        %v1591 = vpop.permute.xlu0 %1590
        %1592 = vrot.lane.b32.xlu0 %v722, 112
        %v1593 = vpop.permute.xlu0 %1592
        %1594 = vrot.lane.b32.xlu0 %v723, 112
        %v1595 = vpop.permute.xlu0 %1594
        %1596 = vrot.lane.b32.xlu0 %v724, 112
        %v1597 = vpop.permute.xlu0 %1596
        %1598 = vrot.lane.b32.xlu0 %v725, 112
        %v1599 = vpop.permute.xlu0 %1598
        %1600 = vrot.lane.b32.xlu0 %v726, 112
        %v1601 = vpop.permute.xlu0 %1600
        %1602 = vrot.lane.b32.xlu0 %v727, 112
        %v1603 = vpop.permute.xlu0 %1602
        %1604 = vrot.lane.b32.xlu0 %v728, 112
        %v1605 = vpop.permute.xlu0 %1604
        %1606 = vrot.lane.b32.xlu0 %v729, 112
        %v1607 = vpop.permute.xlu0 %1606
        %1608 = vrot.lane.b32.xlu0 %v730, 112
        %v1609 = vpop.permute.xlu0 %1608
        %1610 = vrot.lane.b32.xlu0 %v731, 112
        %v1611 = vpop.permute.xlu0 %1610
        %1612 = vrot.lane.b32.xlu0 %v732, 112
        %v1613 = vpop.permute.xlu0 %1612
        %1614 = vrot.lane.b32.xlu0 %v733, 112
        %v1615 = vpop.permute.xlu0 %1614
        %1616 = vrot.lane.b32.xlu0 %v734, 112
        %v1617 = vpop.permute.xlu0 %1616
        %1618 = vrot.lane.b32.xlu0 %v735, 112
        %v1619 = vpop.permute.xlu0 %1618
        %1620 = vrot.lane.b32.xlu0 %v736, 112
        %v1621 = vpop.permute.xlu0 %1620
        %1622 = vrot.lane.b32.xlu0 %v737, 112
        %v1623 = vpop.permute.xlu0 %1622
        %1624 = vrot.lane.b32.xlu0 %v738, 112
        %v1625 = vpop.permute.xlu0 %1624
        %1626 = vrot.lane.b32.xlu0 %v739, 112
        %v1627 = vpop.permute.xlu0 %1626
        %1628 = vrot.lane.b32.xlu0 %v740, 112
        %v1629 = vpop.permute.xlu0 %1628
        %1630 = vrot.lane.b32.xlu0 %v741, 112
        %v1631 = vpop.permute.xlu0 %1630
        %1632 = vrot.lane.b32.xlu0 %v742, 112
        %v1633 = vpop.permute.xlu0 %1632
        %1634 = vrot.lane.b32.xlu0 %v743, 112
        %v1635 = vpop.permute.xlu0 %1634
        %1636 = vrot.lane.b32.xlu0 %v744, 112
        %v1637 = vpop.permute.xlu0 %1636
        %1638 = vrot.lane.b32.xlu0 %v745, 112
        %v1639 = vpop.permute.xlu0 %1638
        %1640 = vrot.lane.b32.xlu0 %v746, 112
        %v1641 = vpop.permute.xlu0 %1640
        %1642 = vrot.lane.b32.xlu0 %v747, 112
        %v1643 = vpop.permute.xlu0 %1642
        %v1676 = vsel %vm351, %v491, %v813
        %v1677 = vsel %vm351, %v492, %v815
        %v1678 = vsel %vm351, %v493, %v817
        %v1679 = vsel %vm351, %v494, %v819
        %v1680 = vsel %vm351, %v495, %v821
        %v1681 = vsel %vm351, %v496, %v823
        %v1682 = vsel %vm351, %v497, %v825
        %v1683 = vsel %vm351, %v498, %v827
        %v1684 = vsel %vm351, %v499, %v829
        %v1685 = vsel %vm351, %v500, %v831
        %v1686 = vsel %vm351, %v501, %v833
        %v1687 = vsel %vm351, %v502, %v835
        %v1688 = vsel %vm351, %v503, %v837
        %v1689 = vsel %vm351, %v504, %v839
        %v1690 = vsel %vm351, %v505, %v841
        %v1691 = vsel %vm351, %v506, %v843
        %v1692 = vsel %vm351, %v507, %v845
        %v1693 = vsel %vm351, %v508, %v847
        %v1694 = vsel %vm351, %v509, %v849
        %v1695 = vsel %vm351, %v510, %v851
        %v1696 = vsel %vm351, %v511, %v853
        %v1697 = vsel %vm351, %v512, %v855
        %v1698 = vsel %vm351, %v513, %v857
        %v1699 = vsel %vm351, %v514, %v859
        %v1700 = vsel %vm351, %v515, %v861
        %v1701 = vsel %vm351, %v516, %v863
        %v1702 = vsel %vm351, %v517, %v865
        %v1703 = vsel %vm351, %v518, %v867
        %v1704 = vsel %vm351, %v519, %v869
        %v1705 = vsel %vm351, %v520, %v871
        %v1706 = vsel %vm351, %v521, %v873
        %v1707 = vsel %vm351, %v522, %v875
        %vm1708 = vcmask 261120
        %v1709 = vsel %vm1708, %v1676, %v941
        %v1710 = vsel %vm1708, %v1677, %v943
        %v1711 = vsel %vm1708, %v1678, %v945
        %v1712 = vsel %vm1708, %v1679, %v947
        %v1713 = vsel %vm1708, %v1680, %v949
        %v1714 = vsel %vm1708, %v1681, %v951
        %v1715 = vsel %vm1708, %v1682, %v953
        %v1716 = vsel %vm1708, %v1683, %v955
        %v1717 = vsel %vm1708, %v1684, %v957
        %v1718 = vsel %vm1708, %v1685, %v959
        %v1719 = vsel %vm1708, %v1686, %v961
        %v1720 = vsel %vm1708, %v1687, %v963
        %v1721 = vsel %vm1708, %v1688, %v965
        %v1722 = vsel %vm1708, %v1689, %v967
        %v1723 = vsel %vm1708, %v1690, %v969
        %v1724 = vsel %vm1708, %v1691, %v971
        %v1725 = vsel %vm1708, %v1692, %v973
        %v1726 = vsel %vm1708, %v1693, %v975
        %v1727 = vsel %vm1708, %v1694, %v977
        %v1728 = vsel %vm1708, %v1695, %v979
        %v1729 = vsel %vm1708, %v1696, %v981
        %v1730 = vsel %vm1708, %v1697, %v983
        %v1731 = vsel %vm1708, %v1698, %v985
        %v1732 = vsel %vm1708, %v1699, %v987
        %v1733 = vsel %vm1708, %v1700, %v989
        %v1734 = vsel %vm1708, %v1701, %v991
        %v1735 = vsel %vm1708, %v1702, %v993
        %v1736 = vsel %vm1708, %v1703, %v995
        %v1737 = vsel %vm1708, %v1704, %v997
        %v1738 = vsel %vm1708, %v1705, %v999
        %v1739 = vsel %vm1708, %v1706, %v1001
        %v1740 = vsel %vm1708, %v1707, %v1003
        %vm1741 = vcmask 392192
        %v1742 = vsel %vm1741, %v1709, %v1069
        %v1743 = vsel %vm1741, %v1710, %v1071
        %v1744 = vsel %vm1741, %v1711, %v1073
        %v1745 = vsel %vm1741, %v1712, %v1075
        %v1746 = vsel %vm1741, %v1713, %v1077
        %v1747 = vsel %vm1741, %v1714, %v1079
        %v1748 = vsel %vm1741, %v1715, %v1081
        %v1749 = vsel %vm1741, %v1716, %v1083
        %v1750 = vsel %vm1741, %v1717, %v1085
        %v1751 = vsel %vm1741, %v1718, %v1087
        %v1752 = vsel %vm1741, %v1719, %v1089
        %v1753 = vsel %vm1741, %v1720, %v1091
        %v1754 = vsel %vm1741, %v1721, %v1093
        %v1755 = vsel %vm1741, %v1722, %v1095
        %v1756 = vsel %vm1741, %v1723, %v1097
        %v1757 = vsel %vm1741, %v1724, %v1099
        %v1758 = vsel %vm1741, %v1725, %v1101
        %v1759 = vsel %vm1741, %v1726, %v1103
        %v1760 = vsel %vm1741, %v1727, %v1105
        %v1761 = vsel %vm1741, %v1728, %v1107
        %v1762 = vsel %vm1741, %v1729, %v1109
        %v1763 = vsel %vm1741, %v1730, %v1111
        %v1764 = vsel %vm1741, %v1731, %v1113
        %v1765 = vsel %vm1741, %v1732, %v1115
        %v1766 = vsel %vm1741, %v1733, %v1117
        %v1767 = vsel %vm1741, %v1734, %v1119
        %v1768 = vsel %vm1741, %v1735, %v1121
        %v1769 = vsel %vm1741, %v1736, %v1123
        %v1770 = vsel %vm1741, %v1737, %v1125
        %v1771 = vsel %vm1741, %v1738, %v1127
        %v1772 = vsel %vm1741, %v1739, %v1129
        %v1773 = vsel %vm1741, %v1740, %v1131
        %vm1774 = vcmask 523264
        %v1775 = vsel %vm1774, %v1742, %v1197
        %v1776 = vsel %vm1774, %v1743, %v1199
        %v1777 = vsel %vm1774, %v1744, %v1201
        %v1778 = vsel %vm1774, %v1745, %v1203
        %v1779 = vsel %vm1774, %v1746, %v1205
        %v1780 = vsel %vm1774, %v1747, %v1207
        %v1781 = vsel %vm1774, %v1748, %v1209
        %v1782 = vsel %vm1774, %v1749, %v1211
        %v1783 = vsel %vm1774, %v1750, %v1213
        %v1784 = vsel %vm1774, %v1751, %v1215
        %v1785 = vsel %vm1774, %v1752, %v1217
        %v1786 = vsel %vm1774, %v1753, %v1219
        %v1787 = vsel %vm1774, %v1754, %v1221
        %v1788 = vsel %vm1774, %v1755, %v1223
        %v1789 = vsel %vm1774, %v1756, %v1225
        %v1790 = vsel %vm1774, %v1757, %v1227
        %v1791 = vsel %vm1774, %v1758, %v1229
        %v1792 = vsel %vm1774, %v1759, %v1231
        %v1793 = vsel %vm1774, %v1760, %v1233
        %v1794 = vsel %vm1774, %v1761, %v1235
        %v1795 = vsel %vm1774, %v1762, %v1237
        %v1796 = vsel %vm1774, %v1763, %v1239
        %v1797 = vsel %vm1774, %v1764, %v1241
        %v1798 = vsel %vm1774, %v1765, %v1243
        %v1799 = vsel %vm1774, %v1766, %v1245
        %v1800 = vsel %vm1774, %v1767, %v1247
        %v1801 = vsel %vm1774, %v1768, %v1249
        %v1802 = vsel %vm1774, %v1769, %v1251
        %v1803 = vsel %vm1774, %v1770, %v1253
        %v1804 = vsel %vm1774, %v1771, %v1255
        %v1805 = vsel %vm1774, %v1772, %v1257
        %v1806 = vsel %vm1774, %v1773, %v1259
        %vm1807 = vcmask 654336
        %v1808 = vsel %vm1807, %v1775, %v1325
        %v1809 = vsel %vm1807, %v1776, %v1327
        %v1810 = vsel %vm1807, %v1777, %v1329
        %v1811 = vsel %vm1807, %v1778, %v1331
        %v1812 = vsel %vm1807, %v1779, %v1333
        %v1813 = vsel %vm1807, %v1780, %v1335
        %v1814 = vsel %vm1807, %v1781, %v1337
        %v1815 = vsel %vm1807, %v1782, %v1339
        %v1816 = vsel %vm1807, %v1783, %v1341
        %v1817 = vsel %vm1807, %v1784, %v1343
        %v1818 = vsel %vm1807, %v1785, %v1345
        %v1819 = vsel %vm1807, %v1786, %v1347
        %v1820 = vsel %vm1807, %v1787, %v1349
        %v1821 = vsel %vm1807, %v1788, %v1351
        %v1822 = vsel %vm1807, %v1789, %v1353
        %v1823 = vsel %vm1807, %v1790, %v1355
        %v1824 = vsel %vm1807, %v1791, %v1357
        %v1825 = vsel %vm1807, %v1792, %v1359
        %v1826 = vsel %vm1807, %v1793, %v1361
        %v1827 = vsel %vm1807, %v1794, %v1363
        %v1828 = vsel %vm1807, %v1795, %v1365
        %v1829 = vsel %vm1807, %v1796, %v1367
        %v1830 = vsel %vm1807, %v1797, %v1369
        %v1831 = vsel %vm1807, %v1798, %v1371
        %v1832 = vsel %vm1807, %v1799, %v1373
        %v1833 = vsel %vm1807, %v1800, %v1375
        %v1834 = vsel %vm1807, %v1801, %v1377
        %v1835 = vsel %vm1807, %v1802, %v1379
        %v1836 = vsel %vm1807, %v1803, %v1381
        %v1837 = vsel %vm1807, %v1804, %v1383
        %v1838 = vsel %vm1807, %v1805, %v1385
        %v1839 = vsel %vm1807, %v1806, %v1387
        %vm1840 = vcmask 785408
        %v1841 = vsel %vm1840, %v1808, %v1453
        %v1842 = vsel %vm1840, %v1809, %v1455
        %v1843 = vsel %vm1840, %v1810, %v1457
        %v1844 = vsel %vm1840, %v1811, %v1459
        %v1845 = vsel %vm1840, %v1812, %v1461
        %v1846 = vsel %vm1840, %v1813, %v1463
        %v1847 = vsel %vm1840, %v1814, %v1465
        %v1848 = vsel %vm1840, %v1815, %v1467
        %v1849 = vsel %vm1840, %v1816, %v1469
        %v1850 = vsel %vm1840, %v1817, %v1471
        %v1851 = vsel %vm1840, %v1818, %v1473
        %v1852 = vsel %vm1840, %v1819, %v1475
        %v1853 = vsel %vm1840, %v1820, %v1477
        %v1854 = vsel %vm1840, %v1821, %v1479
        %v1855 = vsel %vm1840, %v1822, %v1481
        %v1856 = vsel %vm1840, %v1823, %v1483
        %v1857 = vsel %vm1840, %v1824, %v1485
        %v1858 = vsel %vm1840, %v1825, %v1487
        %v1859 = vsel %vm1840, %v1826, %v1489
        %v1860 = vsel %vm1840, %v1827, %v1491
        %v1861 = vsel %vm1840, %v1828, %v1493
        %v1862 = vsel %vm1840, %v1829, %v1495
        %v1863 = vsel %vm1840, %v1830, %v1497
        %v1864 = vsel %vm1840, %v1831, %v1499
        %v1865 = vsel %vm1840, %v1832, %v1501
        %v1866 = vsel %vm1840, %v1833, %v1503
        %v1867 = vsel %vm1840, %v1834, %v1505
        %v1868 = vsel %vm1840, %v1835, %v1507
        %v1869 = vsel %vm1840, %v1836, %v1509
        %v1870 = vsel %vm1840, %v1837, %v1511
        %v1871 = vsel %vm1840, %v1838, %v1513
        %v1872 = vsel %vm1840, %v1839, %v1515
        %vm1873 = vcmask 916480
        %v1874 = vsel %vm1873, %v1841, %v1581
        %v1875 = vsel %vm1873, %v1842, %v1583
        %v1876 = vsel %vm1873, %v1843, %v1585
        %v1877 = vsel %vm1873, %v1844, %v1587
        %v1878 = vsel %vm1873, %v1845, %v1589
        %v1879 = vsel %vm1873, %v1846, %v1591
        %v1880 = vsel %vm1873, %v1847, %v1593
        %v1881 = vsel %vm1873, %v1848, %v1595
        %v1882 = vsel %vm1873, %v1849, %v1597
        %v1883 = vsel %vm1873, %v1850, %v1599
        %v1884 = vsel %vm1873, %v1851, %v1601
        %v1885 = vsel %vm1873, %v1852, %v1603
        %v1886 = vsel %vm1873, %v1853, %v1605
        %v1887 = vsel %vm1873, %v1854, %v1607
        %v1888 = vsel %vm1873, %v1855, %v1609
        %v1889 = vsel %vm1873, %v1856, %v1611
        %v1890 = vsel %vm1873, %v1857, %v1613
        %v1891 = vsel %vm1873, %v1858, %v1615
        %v1892 = vsel %vm1873, %v1859, %v1617
        %v1893 = vsel %vm1873, %v1860, %v1619
        %v1894 = vsel %vm1873, %v1861, %v1621
        %v1895 = vsel %vm1873, %v1862, %v1623
        %v1896 = vsel %vm1873, %v1863, %v1625
        %v1897 = vsel %vm1873, %v1864, %v1627
        %v1898 = vsel %vm1873, %v1865, %v1629
        %v1899 = vsel %vm1873, %v1866, %v1631
        %v1900 = vsel %vm1873, %v1867, %v1633
        %v1901 = vsel %vm1873, %v1868, %v1635
        %v1902 = vsel %vm1873, %v1869, %v1637
        %v1903 = vsel %vm1873, %v1870, %v1639
        %v1904 = vsel %vm1873, %v1871, %v1641
        %v1905 = vsel %vm1873, %v1872, %v1643
        %v1907 = vlaneseq
        %v1908 = vshrl.u32 %v1907, 7
        %v1909 = vsub.s32 0, %v1908
        %v1910 = vrot.slane %v457, %v1909
        %v1913 = vsel %vm351, %v748, 0
        %v1916 = vsel %vm351, %v749, 0
        %v1919 = vsel %vm351, %v750, 0
        %v1922 = vsel %vm351, %v751, 0
        %v1925 = vsel %vm351, %v752, 0
        %v1928 = vsel %vm351, %v753, 0
        %v1931 = vsel %vm351, %v754, 0
        %v1934 = vsel %vm351, %v755, 0
        %v1937 = vsel %vm351, %v756, 0
        %v1940 = vsel %vm351, %v757, 0
        %v1943 = vsel %vm351, %v758, 0
        %v1946 = vsel %vm351, %v759, 0
        %v1949 = vsel %vm351, %v760, 0
        %v1952 = vsel %vm351, %v761, 0
        %v1955 = vsel %vm351, %v762, 0
        %v1958 = vsel %vm351, %v763, 0
        %v1961 = vsel %vm351, %v764, 0
        %v1964 = vsel %vm351, %v765, 0
        %v1967 = vsel %vm351, %v766, 0
        %v1970 = vsel %vm351, %v767, 0
        %v1973 = vsel %vm351, %v768, 0
        %v1976 = vsel %vm351, %v769, 0
        %v1979 = vsel %vm351, %v770, 0
        %v1982 = vsel %vm351, %v771, 0
        %v1985 = vsel %vm351, %v772, 0
        %v1988 = vsel %vm351, %v773, 0
        %v1991 = vsel %vm351, %v774, 0
        %v1994 = vsel %vm351, %v775, 0
        %v1997 = vsel %vm351, %v776, 0
        %v2000 = vsel %vm351, %v777, 0
        %v2003 = vsel %vm351, %v778, 0
        %v2006 = vsel %vm351, %v779, 0
        %2008 = vmatprep.subr.mxu0 0.0
        %2009 = vmatpush1.msra.mxu0 %v439
        %2010 = vmatprep.subr.mxu0 0.0
        %2011 = vmatpush1.msra.mxu0 %v440
        %2012 = vmatprep.subr.mxu0 0.0
        %2013 = vmatpush1.msra.mxu0 %v441
        %2014 = vmatprep.subr.mxu0 0.0
        %2015 = vmatpush1.msra.mxu0 %v442
        %2016 = vmatprep.subr.mxu0 0.0
        %2017 = vmatpush1.msra.mxu0 %v443
        %2018 = vmatprep.subr.mxu0 0.0
        %2019 = vmatpush1.msra.mxu0 %v444
        %2020 = vmatprep.subr.mxu0 0.0
        %2021 = vmatpush1.msra.mxu0 %v445
        %2022 = vmatprep.subr.mxu0 0.0
        %2023 = vmatpush1.msra.mxu0 %v446
        %2024 = vmatprep.subr.mxu0 0.0
        %2025 = vmatpush1.msra.mxu0 %v447
        %2026 = vmatprep.subr.mxu0 0.0
        %2027 = vmatpush1.msra.mxu0 %v448
        %2028 = vmatprep.subr.mxu0 0.0
        %2029 = vmatpush1.msra.mxu0 %v449
        %2030 = vmatprep.subr.mxu0 0.0
        %2031 = vmatpush1.msra.mxu0 %v450
        %2032 = vmatprep.subr.mxu0 0.0
        %2033 = vmatpush1.msra.mxu0 %v451
        %2034 = vmatprep.subr.mxu0 0.0
        %2035 = vmatpush1.msra.mxu0 %v452
        %2036 = vmatprep.subr.mxu0 0.0
        %2037 = vmatpush1.msra.mxu0 %v453
        %2038 = vmatprep.subr.mxu0 0.0
        %2039 = vmatpush1.msra.mxu0 %v454
        %2040 = vmatprep.subr.mxu0 0.0
        %2041 = vmatpush1.msra.mxu0 %v455
        %2042 = vmatprep.subr.mxu0 0.0
        %2043 = vmatpush1.msra.mxu0 %v456
        %2044 = vmatprep.subr.mxu0 0.0
        %2045 = vmatpush1.msra.mxu0 0.0
        %2046 = vmatprep.subr.mxu0 0.0
        %2047 = vmatpush1.msra.mxu0 0.0
        %2048 = vmatprep.subr.mxu0 0.0
        %2049 = vmatpush1.msra.mxu0 0.0
        %2050 = vmatprep.subr.mxu0 0.0
        %2051 = vmatpush1.msra.mxu0 0.0
        %2052 = vmatprep.subr.mxu0 0.0
        %2053 = vmatpush1.msra.mxu0 0.0
        %2054 = vmatprep.subr.mxu0 0.0
        %2055 = vmatpush1.msra.mxu0 0.0
        %2056 = vmatprep.subr.mxu0 0.0
        %2057 = vmatpush1.msra.mxu0 0.0
        %2058 = vmatprep.subr.mxu0 0.0
        %2059 = vmatpush1.msra.mxu0 0.0
        %2060 = vmatprep.subr.mxu0 0.0
        %2061 = vmatpush1.msra.mxu0 0.0
        %2062 = vmatprep.subr.mxu0 0.0
        %2063 = vmatpush1.msra.mxu0 0.0
        %2064 = vmatprep.subr.mxu0 0.0
        %2065 = vmatpush1.msra.mxu0 0.0
        %2066 = vmatprep.subr.mxu0 0.0
        %2067 = vmatpush1.msra.mxu0 0.0
        %2068 = vmatprep.subr.mxu0 0.0
        %2069 = vmatpush1.msra.mxu0 0.0
        %2070 = vmatprep.subr.mxu0 0.0
        %2071 = vmatpush1.msra.mxu0 0.0
        %2072 = vmatprep.mubr.f32.mxu0 %v1913
        %2073 = vmatmul.mubr.f32.gmra.mrb[0].mxu0 %v1874
        %v2074 = vpop.f32.mrb[0].mxu0
        %v2075 = vadd.f32 %v1910, %v2074
        %v2076 = vpop.f32.mrb[0].mxu0
        %2077 = vmatprep.mubr.f32.mxu0 %v1916
        %2078 = vmatmul.mubr.f32.gmra.mrb[0].mxu0 %v1875
        %v2079 = vpop.f32.mrb[0].mxu0
        %v2080 = vadd.f32 %v1910, %v2079
        %v2081 = vpop.f32.mrb[0].mxu0
        %2082 = vmatprep.mubr.f32.mxu0 %v1919
        %2083 = vmatmul.mubr.f32.gmra.mrb[0].mxu0 %v1876
        %v2084 = vpop.f32.mrb[0].mxu0
        %v2085 = vadd.f32 %v1910, %v2084
        %v2086 = vpop.f32.mrb[0].mxu0
        %2087 = vmatprep.mubr.f32.mxu0 %v1922
        %2088 = vmatmul.mubr.f32.gmra.mrb[0].mxu0 %v1877
        %v2089 = vpop.f32.mrb[0].mxu0
        %v2090 = vadd.f32 %v1910, %v2089
        %v2091 = vpop.f32.mrb[0].mxu0
        %2092 = vmatprep.mubr.f32.mxu0 %v1925
        %2093 = vmatmul.mubr.f32.gmra.mrb[0].mxu0 %v1878
        %v2094 = vpop.f32.mrb[0].mxu0
        %v2095 = vadd.f32 %v1910, %v2094
        %v2096 = vpop.f32.mrb[0].mxu0
        %2097 = vmatprep.mubr.f32.mxu0 %v1928
        %2098 = vmatmul.mubr.f32.gmra.mrb[0].mxu0 %v1879
        %v2099 = vpop.f32.mrb[0].mxu0
        %v2100 = vadd.f32 %v1910, %v2099
        %v2101 = vpop.f32.mrb[0].mxu0
        %2102 = vmatprep.mubr.f32.mxu0 %v1931
        %2103 = vmatmul.mubr.f32.gmra.mrb[0].mxu0 %v1880
        %v2104 = vpop.f32.mrb[0].mxu0
        %v2105 = vadd.f32 %v1910, %v2104
        %v2106 = vpop.f32.mrb[0].mxu0
        %2107 = vmatprep.mubr.f32.mxu0 %v1934
        %2108 = vmatmul.mubr.f32.gmra.mrb[0].mxu0 %v1881
        %v2109 = vpop.f32.mrb[0].mxu0
        %v2110 = vadd.f32 %v1910, %v2109
        %v2111 = vpop.f32.mrb[0].mxu0
        %2112 = vmatprep.mubr.f32.mxu0 %v1937
        %2113 = vmatmul.mubr.f32.gmra.mrb[0].mxu0 %v1882
        %v2114 = vpop.f32.mrb[0].mxu0
        %v2115 = vadd.f32 %v1910, %v2114
        %v2116 = vpop.f32.mrb[0].mxu0
        %2117 = vmatprep.mubr.f32.mxu0 %v1940
        %2118 = vmatmul.mubr.f32.gmra.mrb[0].mxu0 %v1883
        %v2119 = vpop.f32.mrb[0].mxu0
        %v2120 = vadd.f32 %v1910, %v2119
        %v2121 = vpop.f32.mrb[0].mxu0
        %2122 = vmatprep.mubr.f32.mxu0 %v1943
        %2123 = vmatmul.mubr.f32.gmra.mrb[0].mxu0 %v1884
        %v2124 = vpop.f32.mrb[0].mxu0
        %v2125 = vadd.f32 %v1910, %v2124
        %v2126 = vpop.f32.mrb[0].mxu0
        %2127 = vmatprep.mubr.f32.mxu0 %v1946
        %2128 = vmatmul.mubr.f32.gmra.mrb[0].mxu0 %v1885
        %v2129 = vpop.f32.mrb[0].mxu0
        %v2130 = vadd.f32 %v1910, %v2129
        %v2131 = vpop.f32.mrb[0].mxu0
        %2132 = vmatprep.mubr.f32.mxu0 %v1949
        %2133 = vmatmul.mubr.f32.gmra.mrb[0].mxu0 %v1886
        %v2134 = vpop.f32.mrb[0].mxu0
        %v2135 = vadd.f32 %v1910, %v2134
        %v2136 = vpop.f32.mrb[0].mxu0
        %2137 = vmatprep.mubr.f32.mxu0 %v1952
        %2138 = vmatmul.mubr.f32.gmra.mrb[0].mxu0 %v1887
        %v2139 = vpop.f32.mrb[0].mxu0
        %v2140 = vadd.f32 %v1910, %v2139
        %v2141 = vpop.f32.mrb[0].mxu0
        %2142 = vmatprep.mubr.f32.mxu0 %v1955
        %2143 = vmatmul.mubr.f32.gmra.mrb[0].mxu0 %v1888
        %v2144 = vpop.f32.mrb[0].mxu0
        %v2145 = vadd.f32 %v1910, %v2144
        %v2146 = vpop.f32.mrb[0].mxu0
        %2147 = vmatprep.mubr.f32.mxu0 %v1958
        %2148 = vmatmul.mubr.f32.gmra.mrb[0].mxu0 %v1889
        %v2149 = vpop.f32.mrb[0].mxu0
        %v2150 = vadd.f32 %v1910, %v2149
        %v2151 = vpop.f32.mrb[0].mxu0
        %2152 = vmatprep.mubr.f32.mxu0 %v1961
        %2153 = vmatmul.mubr.f32.gmra.mrb[0].mxu0 %v1890
        %v2154 = vpop.f32.mrb[0].mxu0
        %v2155 = vadd.f32 %v1910, %v2154
        %v2156 = vpop.f32.mrb[0].mxu0
        %2157 = vmatprep.mubr.f32.mxu0 %v1964
        %2158 = vmatmul.mubr.f32.gmra.mrb[0].mxu0 %v1891
        %v2159 = vpop.f32.mrb[0].mxu0
        %v2160 = vadd.f32 %v1910, %v2159
        %v2161 = vpop.f32.mrb[0].mxu0
        %2162 = vmatprep.mubr.f32.mxu0 %v1967
        %2163 = vmatmul.mubr.f32.gmra.mrb[0].mxu0 %v1892
        %v2164 = vpop.f32.mrb[0].mxu0
        %v2165 = vadd.f32 %v1910, %v2164
        %v2166 = vpop.f32.mrb[0].mxu0
        %2167 = vmatprep.mubr.f32.mxu0 %v1970
        %2168 = vmatmul.mubr.f32.gmra.mrb[0].mxu0 %v1893
        %v2169 = vpop.f32.mrb[0].mxu0
        %v2170 = vadd.f32 %v1910, %v2169
        %v2171 = vpop.f32.mrb[0].mxu0
        %2172 = vmatprep.mubr.f32.mxu0 %v1973
        %2173 = vmatmul.mubr.f32.gmra.mrb[0].mxu0 %v1894
        %v2174 = vpop.f32.mrb[0].mxu0
        %v2175 = vadd.f32 %v1910, %v2174
        %v2176 = vpop.f32.mrb[0].mxu0
        %2177 = vmatprep.mubr.f32.mxu0 %v1976
        %2178 = vmatmul.mubr.f32.gmra.mrb[0].mxu0 %v1895
        %v2179 = vpop.f32.mrb[0].mxu0
        %v2180 = vadd.f32 %v1910, %v2179
        %v2181 = vpop.f32.mrb[0].mxu0
        %2182 = vmatprep.mubr.f32.mxu0 %v1979
        %2183 = vmatmul.mubr.f32.gmra.mrb[0].mxu0 %v1896
        %v2184 = vpop.f32.mrb[0].mxu0
        %v2185 = vadd.f32 %v1910, %v2184
        %v2186 = vpop.f32.mrb[0].mxu0
        %2187 = vmatprep.mubr.f32.mxu0 %v1982
        %2188 = vmatmul.mubr.f32.gmra.mrb[0].mxu0 %v1897
        %v2189 = vpop.f32.mrb[0].mxu0
        %v2190 = vadd.f32 %v1910, %v2189
        %v2191 = vpop.f32.mrb[0].mxu0
        %2192 = vmatprep.mubr.f32.mxu0 %v1985
        %2193 = vmatmul.mubr.f32.gmra.mrb[0].mxu0 %v1898
        %v2194 = vpop.f32.mrb[0].mxu0
        %v2195 = vadd.f32 %v1910, %v2194
        %v2196 = vpop.f32.mrb[0].mxu0
        %2197 = vmatprep.mubr.f32.mxu0 %v1988
        %2198 = vmatmul.mubr.f32.gmra.mrb[0].mxu0 %v1899
        %v2199 = vpop.f32.mrb[0].mxu0
        %v2200 = vadd.f32 %v1910, %v2199
        %v2201 = vpop.f32.mrb[0].mxu0
        %2202 = vmatprep.mubr.f32.mxu0 %v1991
        %2203 = vmatmul.mubr.f32.gmra.mrb[0].mxu0 %v1900
        %v2204 = vpop.f32.mrb[0].mxu0
        %v2205 = vadd.f32 %v1910, %v2204
        %v2206 = vpop.f32.mrb[0].mxu0
        %2207 = vmatprep.mubr.f32.mxu0 %v1994
        %2208 = vmatmul.mubr.f32.gmra.mrb[0].mxu0 %v1901
        %v2209 = vpop.f32.mrb[0].mxu0
        %v2210 = vadd.f32 %v1910, %v2209
        %v2211 = vpop.f32.mrb[0].mxu0
        %2212 = vmatprep.mubr.f32.mxu0 %v1997
        %2213 = vmatmul.mubr.f32.gmra.mrb[0].mxu0 %v1902
        %v2214 = vpop.f32.mrb[0].mxu0
        %v2215 = vadd.f32 %v1910, %v2214
        %v2216 = vpop.f32.mrb[0].mxu0
        %2217 = vmatprep.mubr.f32.mxu0 %v2000
        %2218 = vmatmul.mubr.f32.gmra.mrb[0].mxu0 %v1903
        %v2219 = vpop.f32.mrb[0].mxu0
        %v2220 = vadd.f32 %v1910, %v2219
        %v2221 = vpop.f32.mrb[0].mxu0
        %2222 = vmatprep.mubr.f32.mxu0 %v2003
        %2223 = vmatmul.mubr.f32.gmra.mrb[0].mxu0 %v1904
        %v2224 = vpop.f32.mrb[0].mxu0
        %v2225 = vadd.f32 %v1910, %v2224
        %v2226 = vpop.f32.mrb[0].mxu0
        %2227 = vmatprep.mubr.f32.mxu0 %v2006
        %2228 = vmatmul.mubr.f32.gmra.mrb[0].mxu0 %v1905
        %v2229 = vpop.f32.mrb[0].mxu0
        %v2230 = vadd.f32 %v1910, %v2229
        %v2231 = vpop.f32.mrb[0].mxu0
        %2232 = vdwg.mxu0
        %v2233 = vmax.f32 %v2075, 0.0
        %v2234 = vmax.f32 %v2080, 0.0
        %v2235 = vmax.f32 %v2085, 0.0
        %v2236 = vmax.f32 %v2090, 0.0
        %v2237 = vmax.f32 %v2095, 0.0
        %v2238 = vmax.f32 %v2100, 0.0
        %v2239 = vmax.f32 %v2105, 0.0
        %v2240 = vmax.f32 %v2110, 0.0
        %v2241 = vmax.f32 %v2115, 0.0
        %v2242 = vmax.f32 %v2120, 0.0
        %v2243 = vmax.f32 %v2125, 0.0
        %v2244 = vmax.f32 %v2130, 0.0
        %v2245 = vmax.f32 %v2135, 0.0
        %v2246 = vmax.f32 %v2140, 0.0
        %v2247 = vmax.f32 %v2145, 0.0
        %v2248 = vmax.f32 %v2150, 0.0
        %v2249 = vmax.f32 %v2155, 0.0
        %v2250 = vmax.f32 %v2160, 0.0
        %v2251 = vmax.f32 %v2165, 0.0
        %v2252 = vmax.f32 %v2170, 0.0
        %v2253 = vmax.f32 %v2175, 0.0
        %v2254 = vmax.f32 %v2180, 0.0
        %v2255 = vmax.f32 %v2185, 0.0
        %v2256 = vmax.f32 %v2190, 0.0
        %v2257 = vmax.f32 %v2195, 0.0
        %v2258 = vmax.f32 %v2200, 0.0
        %v2259 = vmax.f32 %v2205, 0.0
        %v2260 = vmax.f32 %v2210, 0.0
        %v2261 = vmax.f32 %v2215, 0.0
        %v2262 = vmax.f32 %v2220, 0.0
        %v2263 = vmax.f32 %v2225, 0.0
        %v2264 = vmax.f32 %v2230, 0.0
        %s2265 = scalar_lea.vmem %s1, 144
        %v2266 = vld [vmem:[%s2265] sm:$0xff]
        %v2267 = vld [vmem:[%s2265 + $0x8] sm:$0xff]
        %v2268 = vld [vmem:[%s2265 + $0x10] sm:$0xff]
        %v2269 = vld [vmem:[%s2265 + $0x18] sm:$0xff]
        %v2270 = vld [vmem:[%s2265 + $0x20] sm:$0xff]
        %v2271 = vld [vmem:[%s2265 + $0x28] sm:$0xff]
        %v2272 = vld [vmem:[%s2265 + $0x30] sm:$0xff]
        %v2273 = vld [vmem:[%s2265 + $0x38] sm:$0xff]
        %v2274 = vld [vmem:[%s2265 + $0x40] sm:$0xff]
        %v2275 = vld [vmem:[%s2265 + $0x48] sm:$0xff]
        %v2276 = vld [vmem:[%s2265 + $0x50] sm:$0xff]
        %v2277 = vld [vmem:[%s2265 + $0x58] sm:$0xff]
        %v2278 = vld [vmem:[%s2265 + $0x60] sm:$0xff]
        %v2279 = vld [vmem:[%s2265 + $0x68] sm:$0xff]
        %v2280 = vld [vmem:[%s2265 + $0x70] sm:$0xff]
        %v2281 = vld [vmem:[%s2265 + $0x78] sm:$0xff]
        %v2282 = vld [vmem:[%s2265 + $0x80] sm:$0xff]
        %v2283 = vld [vmem:[%s2265 + $0x88] sm:$0xff]
        %s2284 = scalar_lea.vmem %s2, 1
        %v2285 = vld [vmem:[%s2284] sm:$0x1]
        %2286 = vst.msk [vmem:[%s458 + $0x1] sm:$0xff] %vm351, %v2233
        %2287 = vst.msk [vmem:[%s458 + $0x9] sm:$0xff] %vm351, %v2234
        %2288 = vst.msk [vmem:[%s458 + $0x19] sm:$0xff] %vm351, %v2235
        %2289 = vst.msk [vmem:[%s458 + $0x21] sm:$0xff] %vm351, %v2236
        %2290 = vst.msk [vmem:[%s458 + $0x31] sm:$0xff] %vm351, %v2237
        %2291 = vst.msk [vmem:[%s458 + $0x39] sm:$0xff] %vm351, %v2238
        %2292 = vst.msk [vmem:[%s458 + $0x49] sm:$0xff] %vm351, %v2239
        %2293 = vst.msk [vmem:[%s458 + $0x51] sm:$0xff] %vm351, %v2240
        %2294 = vst.msk [vmem:[%s458 + $0x61] sm:$0xff] %vm351, %v2241
        %2295 = vst.msk [vmem:[%s458 + $0x69] sm:$0xff] %vm351, %v2242
        %2296 = vst.msk [vmem:[%s458 + $0x79] sm:$0xff] %vm351, %v2243
        %2297 = vst.msk [vmem:[%s458 + $0x81] sm:$0xff] %vm351, %v2244
        %2298 = vst.msk [vmem:[%s458 + $0x91] sm:$0xff] %vm351, %v2245
        %2299 = vst.msk [vmem:[%s458 + $0x99] sm:$0xff] %vm351, %v2246
        %2300 = vst.msk [vmem:[%s458 + $0xa9] sm:$0xff] %vm351, %v2247
        %2301 = vst.msk [vmem:[%s458 + $0xb1] sm:$0xff] %vm351, %v2248
        %2302 = vst.msk [vmem:[%s458 + $0xc1] sm:$0xff] %vm351, %v2249
        %2303 = vst.msk [vmem:[%s458 + $0xc9] sm:$0xff] %vm351, %v2250
        %2304 = vst.msk [vmem:[%s458 + $0xd9] sm:$0xff] %vm351, %v2251
        %2305 = vst.msk [vmem:[%s458 + $0xe1] sm:$0xff] %vm351, %v2252
        %2306 = vst.msk [vmem:[%s458 + $0xf1] sm:$0xff] %vm351, %v2253
        %2307 = vst.msk [vmem:[%s458 + $0xf9] sm:$0xff] %vm351, %v2254
        %2308 = vst.msk [vmem:[%s458 + $0x109] sm:$0xff] %vm351, %v2255
        %2309 = vst.msk [vmem:[%s458 + $0x111] sm:$0xff] %vm351, %v2256
        %2310 = vst.msk [vmem:[%s458 + $0x121] sm:$0xff] %vm351, %v2257
        %2311 = vst.msk [vmem:[%s458 + $0x129] sm:$0xff] %vm351, %v2258
        %2312 = vst.msk [vmem:[%s458 + $0x139] sm:$0xff] %vm351, %v2259
        %2313 = vst.msk [vmem:[%s458 + $0x141] sm:$0xff] %vm351, %v2260
        %2314 = vst.msk [vmem:[%s458 + $0x151] sm:$0xff] %vm351, %v2261
        %2315 = vst.msk [vmem:[%s458 + $0x159] sm:$0xff] %vm351, %v2262
        %2316 = vst.msk [vmem:[%s458 + $0x169] sm:$0xff] %vm351, %v2263
        %2317 = vst.msk [vmem:[%s458 + $0x171] sm:$0xff] %vm351, %v2264
        %v2318 = vld [vmem:[#allocation2] sm:$0xff]
        %v2319 = vld [vmem:[#allocation2 + $0x8] sm:$0xff]
        %v2320 = vld [vmem:[#allocation2 + $0x18] sm:$0xff]
        %v2321 = vld [vmem:[#allocation2 + $0x20] sm:$0xff]
        %v2322 = vld [vmem:[#allocation2 + $0x30] sm:$0xff]
        %v2323 = vld [vmem:[#allocation2 + $0x38] sm:$0xff]
        %v2324 = vld [vmem:[#allocation2 + $0x48] sm:$0xff]
        %v2325 = vld [vmem:[#allocation2 + $0x50] sm:$0xff]
        %v2326 = vld [vmem:[#allocation2 + $0x60] sm:$0xff]
        %v2327 = vld [vmem:[#allocation2 + $0x68] sm:$0xff]
        %v2328 = vld [vmem:[#allocation2 + $0x78] sm:$0xff]
        %v2329 = vld [vmem:[#allocation2 + $0x80] sm:$0xff]
        %v2330 = vld [vmem:[#allocation2 + $0x90] sm:$0xff]
        %v2331 = vld [vmem:[#allocation2 + $0x98] sm:$0xff]
        %v2332 = vld [vmem:[#allocation2 + $0xa8] sm:$0xff]
        %v2333 = vld [vmem:[#allocation2 + $0xb0] sm:$0xff]
        %v2334 = vld [vmem:[#allocation2 + $0xc0] sm:$0xff]
        %v2335 = vld [vmem:[#allocation2 + $0xc8] sm:$0xff]
        %v2336 = vld [vmem:[#allocation2 + $0xd8] sm:$0xff]
        %v2337 = vld [vmem:[#allocation2 + $0xe0] sm:$0xff]
        %v2338 = vld [vmem:[#allocation2 + $0xf0] sm:$0xff]
        %v2339 = vld [vmem:[#allocation2 + $0xf8] sm:$0xff]
        %v2340 = vld [vmem:[#allocation2 + $0x108] sm:$0xff]
        %v2341 = vld [vmem:[#allocation2 + $0x110] sm:$0xff]
        %v2342 = vld [vmem:[#allocation2 + $0x120] sm:$0xff]
        %v2343 = vld [vmem:[#allocation2 + $0x128] sm:$0xff]
        %v2344 = vld [vmem:[#allocation2 + $0x138] sm:$0xff]
        %v2345 = vld [vmem:[#allocation2 + $0x140] sm:$0xff]
        %v2346 = vld [vmem:[#allocation2 + $0x150] sm:$0xff]
        %v2347 = vld [vmem:[#allocation2 + $0x158] sm:$0xff]
        %v2348 = vld [vmem:[#allocation2 + $0x168] sm:$0xff]
        %v2349 = vld [vmem:[#allocation2 + $0x170] sm:$0xff]
        %v2350 = vld [vmem:[#allocation2 + $0x1] sm:$0xff]
        %v2351 = vld [vmem:[#allocation2 + $0x9] sm:$0xff]
        %v2352 = vld [vmem:[#allocation2 + $0x19] sm:$0xff]
        %v2353 = vld [vmem:[#allocation2 + $0x21] sm:$0xff]
        %v2354 = vld [vmem:[#allocation2 + $0x31] sm:$0xff]
        %v2355 = vld [vmem:[#allocation2 + $0x39] sm:$0xff]
        %v2356 = vld [vmem:[#allocation2 + $0x49] sm:$0xff]
        %v2357 = vld [vmem:[#allocation2 + $0x51] sm:$0xff]
        %v2358 = vld [vmem:[#allocation2 + $0x61] sm:$0xff]
        %v2359 = vld [vmem:[#allocation2 + $0x69] sm:$0xff]
        %v2360 = vld [vmem:[#allocation2 + $0x79] sm:$0xff]
        %v2361 = vld [vmem:[#allocation2 + $0x81] sm:$0xff]
        %v2362 = vld [vmem:[#allocation2 + $0x91] sm:$0xff]
        %v2363 = vld [vmem:[#allocation2 + $0x99] sm:$0xff]
        %v2364 = vld [vmem:[#allocation2 + $0xa9] sm:$0xff]
        %v2365 = vld [vmem:[#allocation2 + $0xb1] sm:$0xff]
        %v2366 = vld [vmem:[#allocation2 + $0xc1] sm:$0xff]
        %v2367 = vld [vmem:[#allocation2 + $0xc9] sm:$0xff]
        %v2368 = vld [vmem:[#allocation2 + $0xd9] sm:$0xff]
        %v2369 = vld [vmem:[#allocation2 + $0xe1] sm:$0xff]
        %v2370 = vld [vmem:[#allocation2 + $0xf1] sm:$0xff]
        %v2371 = vld [vmem:[#allocation2 + $0xf9] sm:$0xff]
        %v2372 = vld [vmem:[#allocation2 + $0x109] sm:$0xff]
        %v2373 = vld [vmem:[#allocation2 + $0x111] sm:$0xff]
        %v2374 = vld [vmem:[#allocation2 + $0x121] sm:$0xff]
        %v2375 = vld [vmem:[#allocation2 + $0x129] sm:$0xff]
        %v2376 = vld [vmem:[#allocation2 + $0x139] sm:$0xff]
        %v2377 = vld [vmem:[#allocation2 + $0x141] sm:$0xff]
        %v2378 = vld [vmem:[#allocation2 + $0x151] sm:$0xff]
        %v2379 = vld [vmem:[#allocation2 + $0x159] sm:$0xff]
        %v2380 = vld [vmem:[#allocation2 + $0x169] sm:$0xff]
        %v2381 = vld [vmem:[#allocation2 + $0x171] sm:$0xff]
        %v2382 = vld [vmem:[#allocation2 + $0x2] sm:$0xff]
        %v2383 = vld [vmem:[#allocation2 + $0xa] sm:$0xff]
        %v2384 = vld [vmem:[#allocation2 + $0x1a] sm:$0xff]
        %v2385 = vld [vmem:[#allocation2 + $0x22] sm:$0xff]
        %v2386 = vld [vmem:[#allocation2 + $0x32] sm:$0xff]
        %v2387 = vld [vmem:[#allocation2 + $0x3a] sm:$0xff]
        %v2388 = vld [vmem:[#allocation2 + $0x4a] sm:$0xff]
        %v2389 = vld [vmem:[#allocation2 + $0x52] sm:$0xff]
        %v2390 = vld [vmem:[#allocation2 + $0x62] sm:$0xff]
        %v2391 = vld [vmem:[#allocation2 + $0x6a] sm:$0xff]
        %v2392 = vld [vmem:[#allocation2 + $0x7a] sm:$0xff]
        %v2393 = vld [vmem:[#allocation2 + $0x82] sm:$0xff]
        %v2394 = vld [vmem:[#allocation2 + $0x92] sm:$0xff]
        %v2395 = vld [vmem:[#allocation2 + $0x9a] sm:$0xff]
        %v2396 = vld [vmem:[#allocation2 + $0xaa] sm:$0xff]
        %v2397 = vld [vmem:[#allocation2 + $0xb2] sm:$0xff]
        %v2398 = vld [vmem:[#allocation2 + $0xc2] sm:$0xff]
        %v2399 = vld [vmem:[#allocation2 + $0xca] sm:$0xff]
        %v2400 = vld [vmem:[#allocation2 + $0xda] sm:$0xff]
        %v2401 = vld [vmem:[#allocation2 + $0xe2] sm:$0xff]
        %v2402 = vld [vmem:[#allocation2 + $0xf2] sm:$0xff]
        %v2403 = vld [vmem:[#allocation2 + $0xfa] sm:$0xff]
        %v2404 = vld [vmem:[#allocation2 + $0x10a] sm:$0xff]
        %v2405 = vld [vmem:[#allocation2 + $0x112] sm:$0xff]
        %v2406 = vld [vmem:[#allocation2 + $0x122] sm:$0xff]
        %v2407 = vld [vmem:[#allocation2 + $0x12a] sm:$0xff]
        %v2408 = vld [vmem:[#allocation2 + $0x13a] sm:$0xff]
        %v2409 = vld [vmem:[#allocation2 + $0x142] sm:$0xff]
        %v2410 = vld [vmem:[#allocation2 + $0x152] sm:$0xff]
        %v2411 = vld [vmem:[#allocation2 + $0x15a] sm:$0xff]
        %v2412 = vld [vmem:[#allocation2 + $0x16a] sm:$0xff]
        %v2413 = vld [vmem:[#allocation2 + $0x172] sm:$0xff]
        %v2414 = vld [vmem:[%s458] sm:$0xff]
        %v2415 = vld [vmem:[%s458 + $0x8] sm:$0xff]
        %v2416 = vld [vmem:[%s458 + $0x18] sm:$0xff]
        %v2417 = vld [vmem:[%s458 + $0x20] sm:$0xff]
        %v2418 = vld [vmem:[%s458 + $0x30] sm:$0xff]
        %v2419 = vld [vmem:[%s458 + $0x38] sm:$0xff]
        %v2420 = vld [vmem:[%s458 + $0x48] sm:$0xff]
        %v2421 = vld [vmem:[%s458 + $0x50] sm:$0xff]
        %v2422 = vld [vmem:[%s458 + $0x60] sm:$0xff]
        %v2423 = vld [vmem:[%s458 + $0x68] sm:$0xff]
        %v2424 = vld [vmem:[%s458 + $0x78] sm:$0xff]
        %v2425 = vld [vmem:[%s458 + $0x80] sm:$0xff]
        %v2426 = vld [vmem:[%s458 + $0x90] sm:$0xff]
        %v2427 = vld [vmem:[%s458 + $0x98] sm:$0xff]
        %v2428 = vld [vmem:[%s458 + $0xa8] sm:$0xff]
        %v2429 = vld [vmem:[%s458 + $0xb0] sm:$0xff]
        %v2430 = vld [vmem:[%s458 + $0xc0] sm:$0xff]
        %v2431 = vld [vmem:[%s458 + $0xc8] sm:$0xff]
        %v2432 = vld [vmem:[%s458 + $0xd8] sm:$0xff]
        %v2433 = vld [vmem:[%s458 + $0xe0] sm:$0xff]
        %v2434 = vld [vmem:[%s458 + $0xf0] sm:$0xff]
        %v2435 = vld [vmem:[%s458 + $0xf8] sm:$0xff]
        %v2436 = vld [vmem:[%s458 + $0x108] sm:$0xff]
        %v2437 = vld [vmem:[%s458 + $0x110] sm:$0xff]
        %v2438 = vld [vmem:[%s458 + $0x120] sm:$0xff]
        %v2439 = vld [vmem:[%s458 + $0x128] sm:$0xff]
        %v2440 = vld [vmem:[%s458 + $0x138] sm:$0xff]
        %v2441 = vld [vmem:[%s458 + $0x140] sm:$0xff]
        %v2442 = vld [vmem:[%s458 + $0x150] sm:$0xff]
        %v2443 = vld [vmem:[%s458 + $0x158] sm:$0xff]
        %v2444 = vld [vmem:[%s458 + $0x168] sm:$0xff]
        %v2445 = vld [vmem:[%s458 + $0x170] sm:$0xff]
        %v2446 = vld [vmem:[%s458 + $0x1] sm:$0xff]
        %v2447 = vld [vmem:[%s458 + $0x9] sm:$0xff]
        %v2448 = vld [vmem:[%s458 + $0x19] sm:$0xff]
        %v2449 = vld [vmem:[%s458 + $0x21] sm:$0xff]
        %v2450 = vld [vmem:[%s458 + $0x31] sm:$0xff]
        %v2451 = vld [vmem:[%s458 + $0x39] sm:$0xff]
        %v2452 = vld [vmem:[%s458 + $0x49] sm:$0xff]
        %v2453 = vld [vmem:[%s458 + $0x51] sm:$0xff]
        %v2454 = vld [vmem:[%s458 + $0x61] sm:$0xff]
        %v2455 = vld [vmem:[%s458 + $0x69] sm:$0xff]
        %v2456 = vld [vmem:[%s458 + $0x79] sm:$0xff]
        %v2457 = vld [vmem:[%s458 + $0x81] sm:$0xff]
        %v2458 = vld [vmem:[%s458 + $0x91] sm:$0xff]
        %v2459 = vld [vmem:[%s458 + $0x99] sm:$0xff]
        %v2460 = vld [vmem:[%s458 + $0xa9] sm:$0xff]
        %v2461 = vld [vmem:[%s458 + $0xb1] sm:$0xff]
        %v2462 = vld [vmem:[%s458 + $0xc1] sm:$0xff]
        %v2463 = vld [vmem:[%s458 + $0xc9] sm:$0xff]
        %v2464 = vld [vmem:[%s458 + $0xd9] sm:$0xff]
        %v2465 = vld [vmem:[%s458 + $0xe1] sm:$0xff]
        %v2466 = vld [vmem:[%s458 + $0xf1] sm:$0xff]
        %v2467 = vld [vmem:[%s458 + $0xf9] sm:$0xff]
        %v2468 = vld [vmem:[%s458 + $0x109] sm:$0xff]
        %v2469 = vld [vmem:[%s458 + $0x111] sm:$0xff]
        %v2470 = vld [vmem:[%s458 + $0x121] sm:$0xff]
        %v2471 = vld [vmem:[%s458 + $0x129] sm:$0xff]
        %v2472 = vld [vmem:[%s458 + $0x139] sm:$0xff]
        %v2473 = vld [vmem:[%s458 + $0x141] sm:$0xff]
        %v2474 = vld [vmem:[%s458 + $0x151] sm:$0xff]
        %v2475 = vld [vmem:[%s458 + $0x159] sm:$0xff]
        %v2476 = vld [vmem:[%s458 + $0x169] sm:$0xff]
        %v2477 = vld [vmem:[%s458 + $0x171] sm:$0xff]
        %v2478 = vld [vmem:[%s458 + $0x2] sm:$0xff]
        %v2479 = vld [vmem:[%s458 + $0xa] sm:$0xff]
        %v2480 = vld [vmem:[%s458 + $0x1a] sm:$0xff]
        %v2481 = vld [vmem:[%s458 + $0x22] sm:$0xff]
        %v2482 = vld [vmem:[%s458 + $0x32] sm:$0xff]
        %v2483 = vld [vmem:[%s458 + $0x3a] sm:$0xff]
        %v2484 = vld [vmem:[%s458 + $0x4a] sm:$0xff]
        %v2485 = vld [vmem:[%s458 + $0x52] sm:$0xff]
        %v2486 = vld [vmem:[%s458 + $0x62] sm:$0xff]
        %v2487 = vld [vmem:[%s458 + $0x6a] sm:$0xff]
        %v2488 = vld [vmem:[%s458 + $0x7a] sm:$0xff]
        %v2489 = vld [vmem:[%s458 + $0x82] sm:$0xff]
        %v2490 = vld [vmem:[%s458 + $0x92] sm:$0xff]
        %v2491 = vld [vmem:[%s458 + $0x9a] sm:$0xff]
        %v2492 = vld [vmem:[%s458 + $0xaa] sm:$0xff]
        %v2493 = vld [vmem:[%s458 + $0xb2] sm:$0xff]
        %v2494 = vld [vmem:[%s458 + $0xc2] sm:$0xff]
        %v2495 = vld [vmem:[%s458 + $0xca] sm:$0xff]
        %v2496 = vld [vmem:[%s458 + $0xda] sm:$0xff]
        %v2497 = vld [vmem:[%s458 + $0xe2] sm:$0xff]
        %v2498 = vld [vmem:[%s458 + $0xf2] sm:$0xff]
        %v2499 = vld [vmem:[%s458 + $0xfa] sm:$0xff]
        %v2500 = vld [vmem:[%s458 + $0x10a] sm:$0xff]
        %v2501 = vld [vmem:[%s458 + $0x112] sm:$0xff]
        %v2502 = vld [vmem:[%s458 + $0x122] sm:$0xff]
        %v2503 = vld [vmem:[%s458 + $0x12a] sm:$0xff]
        %v2504 = vld [vmem:[%s458 + $0x13a] sm:$0xff]
        %v2505 = vld [vmem:[%s458 + $0x142] sm:$0xff]
        %v2506 = vld [vmem:[%s458 + $0x152] sm:$0xff]
        %v2507 = vld [vmem:[%s458 + $0x15a] sm:$0xff]
        %v2508 = vld [vmem:[%s458 + $0x16a] sm:$0xff]
        %v2509 = vld [vmem:[%s458 + $0x172] sm:$0xff]
        %v2510 = vld [vmem:[%s683] sm:$0xff]
        %v2511 = vld [vmem:[%s683 + $0x8] sm:$0xff]
        %v2512 = vld [vmem:[%s683 + $0x18] sm:$0xff]
        %v2513 = vld [vmem:[%s683 + $0x20] sm:$0xff]
        %v2514 = vld [vmem:[%s683 + $0x30] sm:$0xff]
        %v2515 = vld [vmem:[%s683 + $0x38] sm:$0xff]
        %v2516 = vld [vmem:[%s683 + $0x48] sm:$0xff]
        %v2517 = vld [vmem:[%s683 + $0x50] sm:$0xff]
        %v2518 = vld [vmem:[%s683 + $0x60] sm:$0xff]
        %v2519 = vld [vmem:[%s683 + $0x68] sm:$0xff]
        %v2520 = vld [vmem:[%s683 + $0x78] sm:$0xff]
        %v2521 = vld [vmem:[%s683 + $0x80] sm:$0xff]
        %v2522 = vld [vmem:[%s683 + $0x90] sm:$0xff]
        %v2523 = vld [vmem:[%s683 + $0x98] sm:$0xff]
        %v2524 = vld [vmem:[%s683 + $0xa8] sm:$0xff]
        %v2525 = vld [vmem:[%s683 + $0xb0] sm:$0xff]
        %v2526 = vld [vmem:[%s683 + $0xc0] sm:$0xff]
        %v2527 = vld [vmem:[%s683 + $0xc8] sm:$0xff]
        %v2528 = vld [vmem:[%s683 + $0xd8] sm:$0xff]
        %v2529 = vld [vmem:[%s683 + $0xe0] sm:$0xff]
        %v2530 = vld [vmem:[%s683 + $0xf0] sm:$0xff]
        %v2531 = vld [vmem:[%s683 + $0xf8] sm:$0xff]
        %v2532 = vld [vmem:[%s683 + $0x108] sm:$0xff]
        %v2533 = vld [vmem:[%s683 + $0x110] sm:$0xff]
        %v2534 = vld [vmem:[%s683 + $0x120] sm:$0xff]
        %v2535 = vld [vmem:[%s683 + $0x128] sm:$0xff]
        %v2536 = vld [vmem:[%s683 + $0x138] sm:$0xff]
        %v2537 = vld [vmem:[%s683 + $0x140] sm:$0xff]
        %v2538 = vld [vmem:[%s683 + $0x150] sm:$0xff]
        %v2539 = vld [vmem:[%s683 + $0x158] sm:$0xff]
        %v2540 = vld [vmem:[%s683 + $0x168] sm:$0xff]
        %v2541 = vld [vmem:[%s683 + $0x170] sm:$0xff]
        %v2542 = vld [vmem:[%s683 + $0x1] sm:$0xff]
        %v2543 = vld [vmem:[%s683 + $0x9] sm:$0xff]
        %v2544 = vld [vmem:[%s683 + $0x19] sm:$0xff]
        %v2545 = vld [vmem:[%s683 + $0x21] sm:$0xff]
        %v2546 = vld [vmem:[%s683 + $0x31] sm:$0xff]
        %v2547 = vld [vmem:[%s683 + $0x39] sm:$0xff]
        %v2548 = vld [vmem:[%s683 + $0x49] sm:$0xff]
        %v2549 = vld [vmem:[%s683 + $0x51] sm:$0xff]
        %v2550 = vld [vmem:[%s683 + $0x61] sm:$0xff]
        %v2551 = vld [vmem:[%s683 + $0x69] sm:$0xff]
        %v2552 = vld [vmem:[%s683 + $0x79] sm:$0xff]
        %v2553 = vld [vmem:[%s683 + $0x81] sm:$0xff]
        %v2554 = vld [vmem:[%s683 + $0x91] sm:$0xff]
        %v2555 = vld [vmem:[%s683 + $0x99] sm:$0xff]
        %v2556 = vld [vmem:[%s683 + $0xa9] sm:$0xff]
        %v2557 = vld [vmem:[%s683 + $0xb1] sm:$0xff]
        %v2558 = vld [vmem:[%s683 + $0xc1] sm:$0xff]
        %v2559 = vld [vmem:[%s683 + $0xc9] sm:$0xff]
        %v2560 = vld [vmem:[%s683 + $0xd9] sm:$0xff]
        %v2561 = vld [vmem:[%s683 + $0xe1] sm:$0xff]
        %v2562 = vld [vmem:[%s683 + $0xf1] sm:$0xff]
        %v2563 = vld [vmem:[%s683 + $0xf9] sm:$0xff]
        %v2564 = vld [vmem:[%s683 + $0x109] sm:$0xff]
        %v2565 = vld [vmem:[%s683 + $0x111] sm:$0xff]
        %v2566 = vld [vmem:[%s683 + $0x121] sm:$0xff]
        %v2567 = vld [vmem:[%s683 + $0x129] sm:$0xff]
        %v2568 = vld [vmem:[%s683 + $0x139] sm:$0xff]
        %v2569 = vld [vmem:[%s683 + $0x141] sm:$0xff]
        %v2570 = vld [vmem:[%s683 + $0x151] sm:$0xff]
        %v2571 = vld [vmem:[%s683 + $0x159] sm:$0xff]
        %v2572 = vld [vmem:[%s683 + $0x169] sm:$0xff]
        %v2573 = vld [vmem:[%s683 + $0x171] sm:$0xff]
        %v2574 = vld [vmem:[%s683 + $0x2] sm:$0xff]
        %v2575 = vld [vmem:[%s683 + $0xa] sm:$0xff]
        %v2576 = vld [vmem:[%s683 + $0x1a] sm:$0xff]
        %v2577 = vld [vmem:[%s683 + $0x22] sm:$0xff]
        %v2578 = vld [vmem:[%s683 + $0x32] sm:$0xff]
        %v2579 = vld [vmem:[%s683 + $0x3a] sm:$0xff]
        %v2580 = vld [vmem:[%s683 + $0x4a] sm:$0xff]
        %v2581 = vld [vmem:[%s683 + $0x52] sm:$0xff]
        %v2582 = vld [vmem:[%s683 + $0x62] sm:$0xff]
        %v2583 = vld [vmem:[%s683 + $0x6a] sm:$0xff]
        %v2584 = vld [vmem:[%s683 + $0x7a] sm:$0xff]
        %v2585 = vld [vmem:[%s683 + $0x82] sm:$0xff]
        %v2586 = vld [vmem:[%s683 + $0x92] sm:$0xff]
        %v2587 = vld [vmem:[%s683 + $0x9a] sm:$0xff]
        %v2588 = vld [vmem:[%s683 + $0xaa] sm:$0xff]
        %v2589 = vld [vmem:[%s683 + $0xb2] sm:$0xff]
        %v2590 = vld [vmem:[%s683 + $0xc2] sm:$0xff]
        %v2591 = vld [vmem:[%s683 + $0xca] sm:$0xff]
        %v2592 = vld [vmem:[%s683 + $0xda] sm:$0xff]
        %v2593 = vld [vmem:[%s683 + $0xe2] sm:$0xff]
        %v2594 = vld [vmem:[%s683 + $0xf2] sm:$0xff]
        %v2595 = vld [vmem:[%s683 + $0xfa] sm:$0xff]
        %v2596 = vld [vmem:[%s683 + $0x10a] sm:$0xff]
        %v2597 = vld [vmem:[%s683 + $0x112] sm:$0xff]
        %v2598 = vld [vmem:[%s683 + $0x122] sm:$0xff]
        %v2599 = vld [vmem:[%s683 + $0x12a] sm:$0xff]
        %v2600 = vld [vmem:[%s683 + $0x13a] sm:$0xff]
        %v2601 = vld [vmem:[%s683 + $0x142] sm:$0xff]
        %v2602 = vld [vmem:[%s683 + $0x152] sm:$0xff]
        %v2603 = vld [vmem:[%s683 + $0x15a] sm:$0xff]
        %v2604 = vld [vmem:[%s683 + $0x16a] sm:$0xff]
        %v2605 = vld [vmem:[%s683 + $0x172] sm:$0xff]
        %2638 = vrot.lane.b32.xlu0 %v2350, 16
        %v2639 = vpop.permute.xlu0 %2638
        %2640 = vrot.lane.b32.xlu0 %v2351, 16
        %v2641 = vpop.permute.xlu0 %2640
        %2642 = vrot.lane.b32.xlu0 %v2352, 16
        %v2643 = vpop.permute.xlu0 %2642
        %2644 = vrot.lane.b32.xlu0 %v2353, 16
        %v2645 = vpop.permute.xlu0 %2644
        %2646 = vrot.lane.b32.xlu0 %v2354, 16
        %v2647 = vpop.permute.xlu0 %2646
        %2648 = vrot.lane.b32.xlu0 %v2355, 16
        %v2649 = vpop.permute.xlu0 %2648
        %2650 = vrot.lane.b32.xlu0 %v2356, 16
        %v2651 = vpop.permute.xlu0 %2650
        %2652 = vrot.lane.b32.xlu0 %v2357, 16
        %v2653 = vpop.permute.xlu0 %2652
        %2654 = vrot.lane.b32.xlu0 %v2358, 16
        %v2655 = vpop.permute.xlu0 %2654
        %2656 = vrot.lane.b32.xlu0 %v2359, 16
        %v2657 = vpop.permute.xlu0 %2656
        %2658 = vrot.lane.b32.xlu0 %v2360, 16
        %v2659 = vpop.permute.xlu0 %2658
        %2660 = vrot.lane.b32.xlu0 %v2361, 16
        %v2661 = vpop.permute.xlu0 %2660
        %2662 = vrot.lane.b32.xlu0 %v2362, 16
        %v2663 = vpop.permute.xlu0 %2662
        %2664 = vrot.lane.b32.xlu0 %v2363, 16
        %v2665 = vpop.permute.xlu0 %2664
        %2666 = vrot.lane.b32.xlu0 %v2364, 16
        %v2667 = vpop.permute.xlu0 %2666
        %2668 = vrot.lane.b32.xlu0 %v2365, 16
        %v2669 = vpop.permute.xlu0 %2668
        %2670 = vrot.lane.b32.xlu0 %v2366, 16
        %v2671 = vpop.permute.xlu0 %2670
        %2672 = vrot.lane.b32.xlu0 %v2367, 16
        %v2673 = vpop.permute.xlu0 %2672
        %2674 = vrot.lane.b32.xlu0 %v2368, 16
        %v2675 = vpop.permute.xlu0 %2674
        %2676 = vrot.lane.b32.xlu0 %v2369, 16
        %v2677 = vpop.permute.xlu0 %2676
        %2678 = vrot.lane.b32.xlu0 %v2370, 16
        %v2679 = vpop.permute.xlu0 %2678
        %2680 = vrot.lane.b32.xlu0 %v2371, 16
        %v2681 = vpop.permute.xlu0 %2680
        %2682 = vrot.lane.b32.xlu0 %v2372, 16
        %v2683 = vpop.permute.xlu0 %2682
        %2684 = vrot.lane.b32.xlu0 %v2373, 16
        %v2685 = vpop.permute.xlu0 %2684
        %2686 = vrot.lane.b32.xlu0 %v2374, 16
        %v2687 = vpop.permute.xlu0 %2686
        %2688 = vrot.lane.b32.xlu0 %v2375, 16
        %v2689 = vpop.permute.xlu0 %2688
        %2690 = vrot.lane.b32.xlu0 %v2376, 16
        %v2691 = vpop.permute.xlu0 %2690
        %2692 = vrot.lane.b32.xlu0 %v2377, 16
        %v2693 = vpop.permute.xlu0 %2692
        %2694 = vrot.lane.b32.xlu0 %v2378, 16
        %v2695 = vpop.permute.xlu0 %2694
        %2696 = vrot.lane.b32.xlu0 %v2379, 16
        %v2697 = vpop.permute.xlu0 %2696
        %2698 = vrot.lane.b32.xlu0 %v2380, 16
        %v2699 = vpop.permute.xlu0 %2698
        %2700 = vrot.lane.b32.xlu0 %v2381, 16
        %v2701 = vpop.permute.xlu0 %2700
        %2766 = vrot.lane.b32.xlu0 %v2382, 32
        %v2767 = vpop.permute.xlu0 %2766
        %2768 = vrot.lane.b32.xlu0 %v2383, 32
        %v2769 = vpop.permute.xlu0 %2768
        %2770 = vrot.lane.b32.xlu0 %v2384, 32
        %v2771 = vpop.permute.xlu0 %2770
        %2772 = vrot.lane.b32.xlu0 %v2385, 32
        %v2773 = vpop.permute.xlu0 %2772
        %2774 = vrot.lane.b32.xlu0 %v2386, 32
        %v2775 = vpop.permute.xlu0 %2774
        %2776 = vrot.lane.b32.xlu0 %v2387, 32
        %v2777 = vpop.permute.xlu0 %2776
        %2778 = vrot.lane.b32.xlu0 %v2388, 32
        %v2779 = vpop.permute.xlu0 %2778
        %2780 = vrot.lane.b32.xlu0 %v2389, 32
        %v2781 = vpop.permute.xlu0 %2780
        %2782 = vrot.lane.b32.xlu0 %v2390, 32
        %v2783 = vpop.permute.xlu0 %2782
        %2784 = vrot.lane.b32.xlu0 %v2391, 32
        %v2785 = vpop.permute.xlu0 %2784
        %2786 = vrot.lane.b32.xlu0 %v2392, 32
        %v2787 = vpop.permute.xlu0 %2786
        %2788 = vrot.lane.b32.xlu0 %v2393, 32
        %v2789 = vpop.permute.xlu0 %2788
        %2790 = vrot.lane.b32.xlu0 %v2394, 32
        %v2791 = vpop.permute.xlu0 %2790
        %2792 = vrot.lane.b32.xlu0 %v2395, 32
        %v2793 = vpop.permute.xlu0 %2792
        %2794 = vrot.lane.b32.xlu0 %v2396, 32
        %v2795 = vpop.permute.xlu0 %2794
        %2796 = vrot.lane.b32.xlu0 %v2397, 32
        %v2797 = vpop.permute.xlu0 %2796
        %2798 = vrot.lane.b32.xlu0 %v2398, 32
        %v2799 = vpop.permute.xlu0 %2798
        %2800 = vrot.lane.b32.xlu0 %v2399, 32
        %v2801 = vpop.permute.xlu0 %2800
        %2802 = vrot.lane.b32.xlu0 %v2400, 32
        %v2803 = vpop.permute.xlu0 %2802
        %2804 = vrot.lane.b32.xlu0 %v2401, 32
        %v2805 = vpop.permute.xlu0 %2804
        %2806 = vrot.lane.b32.xlu0 %v2402, 32
        %v2807 = vpop.permute.xlu0 %2806
        %2808 = vrot.lane.b32.xlu0 %v2403, 32
        %v2809 = vpop.permute.xlu0 %2808
        %2810 = vrot.lane.b32.xlu0 %v2404, 32
        %v2811 = vpop.permute.xlu0 %2810
        %2812 = vrot.lane.b32.xlu0 %v2405, 32
        %v2813 = vpop.permute.xlu0 %2812
        %2814 = vrot.lane.b32.xlu0 %v2406, 32
        %v2815 = vpop.permute.xlu0 %2814
        %2816 = vrot.lane.b32.xlu0 %v2407, 32
        %v2817 = vpop.permute.xlu0 %2816
        %2818 = vrot.lane.b32.xlu0 %v2408, 32
        %v2819 = vpop.permute.xlu0 %2818
        %2820 = vrot.lane.b32.xlu0 %v2409, 32
        %v2821 = vpop.permute.xlu0 %2820
        %2822 = vrot.lane.b32.xlu0 %v2410, 32
        %v2823 = vpop.permute.xlu0 %2822
        %2824 = vrot.lane.b32.xlu0 %v2411, 32
        %v2825 = vpop.permute.xlu0 %2824
        %2826 = vrot.lane.b32.xlu0 %v2412, 32
        %v2827 = vpop.permute.xlu0 %2826
        %2828 = vrot.lane.b32.xlu0 %v2413, 32
        %v2829 = vpop.permute.xlu0 %2828
        %2894 = vrot.lane.b32.xlu0 %v2414, 48
        %v2895 = vpop.permute.xlu0 %2894
        %2896 = vrot.lane.b32.xlu0 %v2415, 48
        %v2897 = vpop.permute.xlu0 %2896
        %2898 = vrot.lane.b32.xlu0 %v2416, 48
        %v2899 = vpop.permute.xlu0 %2898
        %2900 = vrot.lane.b32.xlu0 %v2417, 48
        %v2901 = vpop.permute.xlu0 %2900
        %2902 = vrot.lane.b32.xlu0 %v2418, 48
        %v2903 = vpop.permute.xlu0 %2902
        %2904 = vrot.lane.b32.xlu0 %v2419, 48
        %v2905 = vpop.permute.xlu0 %2904
        %2906 = vrot.lane.b32.xlu0 %v2420, 48
        %v2907 = vpop.permute.xlu0 %2906
        %2908 = vrot.lane.b32.xlu0 %v2421, 48
        %v2909 = vpop.permute.xlu0 %2908
        %2910 = vrot.lane.b32.xlu0 %v2422, 48
        %v2911 = vpop.permute.xlu0 %2910
        %2912 = vrot.lane.b32.xlu0 %v2423, 48
        %v2913 = vpop.permute.xlu0 %2912
        %2914 = vrot.lane.b32.xlu0 %v2424, 48
        %v2915 = vpop.permute.xlu0 %2914
        %2916 = vrot.lane.b32.xlu0 %v2425, 48
        %v2917 = vpop.permute.xlu0 %2916
        %2918 = vrot.lane.b32.xlu0 %v2426, 48
        %v2919 = vpop.permute.xlu0 %2918
        %2920 = vrot.lane.b32.xlu0 %v2427, 48
        %v2921 = vpop.permute.xlu0 %2920
        %2922 = vrot.lane.b32.xlu0 %v2428, 48
        %v2923 = vpop.permute.xlu0 %2922
        %2924 = vrot.lane.b32.xlu0 %v2429, 48
        %v2925 = vpop.permute.xlu0 %2924
        %2926 = vrot.lane.b32.xlu0 %v2430, 48
        %v2927 = vpop.permute.xlu0 %2926
        %2928 = vrot.lane.b32.xlu0 %v2431, 48
        %v2929 = vpop.permute.xlu0 %2928
        %2930 = vrot.lane.b32.xlu0 %v2432, 48
        %v2931 = vpop.permute.xlu0 %2930
        %2932 = vrot.lane.b32.xlu0 %v2433, 48
        %v2933 = vpop.permute.xlu0 %2932
        %2934 = vrot.lane.b32.xlu0 %v2434, 48
        %v2935 = vpop.permute.xlu0 %2934
        %2936 = vrot.lane.b32.xlu0 %v2435, 48
        %v2937 = vpop.permute.xlu0 %2936
        %2938 = vrot.lane.b32.xlu0 %v2436, 48
        %v2939 = vpop.permute.xlu0 %2938
        %2940 = vrot.lane.b32.xlu0 %v2437, 48
        %v2941 = vpop.permute.xlu0 %2940
        %2942 = vrot.lane.b32.xlu0 %v2438, 48
        %v2943 = vpop.permute.xlu0 %2942
        %2944 = vrot.lane.b32.xlu0 %v2439, 48
        %v2945 = vpop.permute.xlu0 %2944
        %2946 = vrot.lane.b32.xlu0 %v2440, 48
        %v2947 = vpop.permute.xlu0 %2946
        %2948 = vrot.lane.b32.xlu0 %v2441, 48
        %v2949 = vpop.permute.xlu0 %2948
        %2950 = vrot.lane.b32.xlu0 %v2442, 48
        %v2951 = vpop.permute.xlu0 %2950
        %2952 = vrot.lane.b32.xlu0 %v2443, 48
        %v2953 = vpop.permute.xlu0 %2952
        %2954 = vrot.lane.b32.xlu0 %v2444, 48
        %v2955 = vpop.permute.xlu0 %2954
        %2956 = vrot.lane.b32.xlu0 %v2445, 48
        %v2957 = vpop.permute.xlu0 %2956
        %3022 = vrot.lane.b32.xlu0 %v2446, 64
        %v3023 = vpop.permute.xlu0 %3022
        %3024 = vrot.lane.b32.xlu0 %v2447, 64
        %v3025 = vpop.permute.xlu0 %3024
        %3026 = vrot.lane.b32.xlu0 %v2448, 64
        %v3027 = vpop.permute.xlu0 %3026
        %3028 = vrot.lane.b32.xlu0 %v2449, 64
        %v3029 = vpop.permute.xlu0 %3028
        %3030 = vrot.lane.b32.xlu0 %v2450, 64
        %v3031 = vpop.permute.xlu0 %3030
        %3032 = vrot.lane.b32.xlu0 %v2451, 64
        %v3033 = vpop.permute.xlu0 %3032
        %3034 = vrot.lane.b32.xlu0 %v2452, 64
        %v3035 = vpop.permute.xlu0 %3034
        %3036 = vrot.lane.b32.xlu0 %v2453, 64
        %v3037 = vpop.permute.xlu0 %3036
        %3038 = vrot.lane.b32.xlu0 %v2454, 64
        %v3039 = vpop.permute.xlu0 %3038
        %3040 = vrot.lane.b32.xlu0 %v2455, 64
        %v3041 = vpop.permute.xlu0 %3040
        %3042 = vrot.lane.b32.xlu0 %v2456, 64
        %v3043 = vpop.permute.xlu0 %3042
        %3044 = vrot.lane.b32.xlu0 %v2457, 64
        %v3045 = vpop.permute.xlu0 %3044
        %3046 = vrot.lane.b32.xlu0 %v2458, 64
        %v3047 = vpop.permute.xlu0 %3046
        %3048 = vrot.lane.b32.xlu0 %v2459, 64
        %v3049 = vpop.permute.xlu0 %3048
        %3050 = vrot.lane.b32.xlu0 %v2460, 64
        %v3051 = vpop.permute.xlu0 %3050
        %3052 = vrot.lane.b32.xlu0 %v2461, 64
        %v3053 = vpop.permute.xlu0 %3052
        %3054 = vrot.lane.b32.xlu0 %v2462, 64
        %v3055 = vpop.permute.xlu0 %3054
        %3056 = vrot.lane.b32.xlu0 %v2463, 64
        %v3057 = vpop.permute.xlu0 %3056
        %3058 = vrot.lane.b32.xlu0 %v2464, 64
        %v3059 = vpop.permute.xlu0 %3058
        %3060 = vrot.lane.b32.xlu0 %v2465, 64
        %v3061 = vpop.permute.xlu0 %3060
        %3062 = vrot.lane.b32.xlu0 %v2466, 64
        %v3063 = vpop.permute.xlu0 %3062
        %3064 = vrot.lane.b32.xlu0 %v2467, 64
        %v3065 = vpop.permute.xlu0 %3064
        %3066 = vrot.lane.b32.xlu0 %v2468, 64
        %v3067 = vpop.permute.xlu0 %3066
        %3068 = vrot.lane.b32.xlu0 %v2469, 64
        %v3069 = vpop.permute.xlu0 %3068
        %3070 = vrot.lane.b32.xlu0 %v2470, 64
        %v3071 = vpop.permute.xlu0 %3070
        %3072 = vrot.lane.b32.xlu0 %v2471, 64
        %v3073 = vpop.permute.xlu0 %3072
        %3074 = vrot.lane.b32.xlu0 %v2472, 64
        %v3075 = vpop.permute.xlu0 %3074
        %3076 = vrot.lane.b32.xlu0 %v2473, 64
        %v3077 = vpop.permute.xlu0 %3076
        %3078 = vrot.lane.b32.xlu0 %v2474, 64
        %v3079 = vpop.permute.xlu0 %3078
        %3080 = vrot.lane.b32.xlu0 %v2475, 64
        %v3081 = vpop.permute.xlu0 %3080
        %3082 = vrot.lane.b32.xlu0 %v2476, 64
        %v3083 = vpop.permute.xlu0 %3082
        %3084 = vrot.lane.b32.xlu0 %v2477, 64
        %v3085 = vpop.permute.xlu0 %3084
        %3150 = vrot.lane.b32.xlu0 %v2478, 80
        %v3151 = vpop.permute.xlu0 %3150
        %3152 = vrot.lane.b32.xlu0 %v2479, 80
        %v3153 = vpop.permute.xlu0 %3152
        %3154 = vrot.lane.b32.xlu0 %v2480, 80
        %v3155 = vpop.permute.xlu0 %3154
        %3156 = vrot.lane.b32.xlu0 %v2481, 80
        %v3157 = vpop.permute.xlu0 %3156
        %3158 = vrot.lane.b32.xlu0 %v2482, 80
        %v3159 = vpop.permute.xlu0 %3158
        %3160 = vrot.lane.b32.xlu0 %v2483, 80
        %v3161 = vpop.permute.xlu0 %3160
        %3162 = vrot.lane.b32.xlu0 %v2484, 80
        %v3163 = vpop.permute.xlu0 %3162
        %3164 = vrot.lane.b32.xlu0 %v2485, 80
        %v3165 = vpop.permute.xlu0 %3164
        %3166 = vrot.lane.b32.xlu0 %v2486, 80
        %v3167 = vpop.permute.xlu0 %3166
        %3168 = vrot.lane.b32.xlu0 %v2487, 80
        %v3169 = vpop.permute.xlu0 %3168
        %3170 = vrot.lane.b32.xlu0 %v2488, 80
        %v3171 = vpop.permute.xlu0 %3170
        %3172 = vrot.lane.b32.xlu0 %v2489, 80
        %v3173 = vpop.permute.xlu0 %3172
        %3174 = vrot.lane.b32.xlu0 %v2490, 80
        %v3175 = vpop.permute.xlu0 %3174
        %3176 = vrot.lane.b32.xlu0 %v2491, 80
        %v3177 = vpop.permute.xlu0 %3176
        %3178 = vrot.lane.b32.xlu0 %v2492, 80
        %v3179 = vpop.permute.xlu0 %3178
        %3180 = vrot.lane.b32.xlu0 %v2493, 80
        %v3181 = vpop.permute.xlu0 %3180
        %3182 = vrot.lane.b32.xlu0 %v2494, 80
        %v3183 = vpop.permute.xlu0 %3182
        %3184 = vrot.lane.b32.xlu0 %v2495, 80
        %v3185 = vpop.permute.xlu0 %3184
        %3186 = vrot.lane.b32.xlu0 %v2496, 80
        %v3187 = vpop.permute.xlu0 %3186
        %3188 = vrot.lane.b32.xlu0 %v2497, 80
        %v3189 = vpop.permute.xlu0 %3188
        %3190 = vrot.lane.b32.xlu0 %v2498, 80
        %v3191 = vpop.permute.xlu0 %3190
        %3192 = vrot.lane.b32.xlu0 %v2499, 80
        %v3193 = vpop.permute.xlu0 %3192
        %3194 = vrot.lane.b32.xlu0 %v2500, 80
        %v3195 = vpop.permute.xlu0 %3194
        %3196 = vrot.lane.b32.xlu0 %v2501, 80
        %v3197 = vpop.permute.xlu0 %3196
        %3198 = vrot.lane.b32.xlu0 %v2502, 80
        %v3199 = vpop.permute.xlu0 %3198
        %3200 = vrot.lane.b32.xlu0 %v2503, 80
        %v3201 = vpop.permute.xlu0 %3200
        %3202 = vrot.lane.b32.xlu0 %v2504, 80
        %v3203 = vpop.permute.xlu0 %3202
        %3204 = vrot.lane.b32.xlu0 %v2505, 80
        %v3205 = vpop.permute.xlu0 %3204
        %3206 = vrot.lane.b32.xlu0 %v2506, 80
        %v3207 = vpop.permute.xlu0 %3206
        %3208 = vrot.lane.b32.xlu0 %v2507, 80
        %v3209 = vpop.permute.xlu0 %3208
        %3210 = vrot.lane.b32.xlu0 %v2508, 80
        %v3211 = vpop.permute.xlu0 %3210
        %3212 = vrot.lane.b32.xlu0 %v2509, 80
        %v3213 = vpop.permute.xlu0 %3212
        %3278 = vrot.lane.b32.xlu0 %v2510, 96
        %v3279 = vpop.permute.xlu0 %3278
        %3280 = vrot.lane.b32.xlu0 %v2511, 96
        %v3281 = vpop.permute.xlu0 %3280
        %3282 = vrot.lane.b32.xlu0 %v2512, 96
        %v3283 = vpop.permute.xlu0 %3282
        %3284 = vrot.lane.b32.xlu0 %v2513, 96
        %v3285 = vpop.permute.xlu0 %3284
        %3286 = vrot.lane.b32.xlu0 %v2514, 96
        %v3287 = vpop.permute.xlu0 %3286
        %3288 = vrot.lane.b32.xlu0 %v2515, 96
        %v3289 = vpop.permute.xlu0 %3288
        %3290 = vrot.lane.b32.xlu0 %v2516, 96
        %v3291 = vpop.permute.xlu0 %3290
        %3292 = vrot.lane.b32.xlu0 %v2517, 96
        %v3293 = vpop.permute.xlu0 %3292
        %3294 = vrot.lane.b32.xlu0 %v2518, 96
        %v3295 = vpop.permute.xlu0 %3294
        %3296 = vrot.lane.b32.xlu0 %v2519, 96
        %v3297 = vpop.permute.xlu0 %3296
        %3298 = vrot.lane.b32.xlu0 %v2520, 96
        %v3299 = vpop.permute.xlu0 %3298
        %3300 = vrot.lane.b32.xlu0 %v2521, 96
        %v3301 = vpop.permute.xlu0 %3300
        %3302 = vrot.lane.b32.xlu0 %v2522, 96
        %v3303 = vpop.permute.xlu0 %3302
        %3304 = vrot.lane.b32.xlu0 %v2523, 96
        %v3305 = vpop.permute.xlu0 %3304
        %3306 = vrot.lane.b32.xlu0 %v2524, 96
        %v3307 = vpop.permute.xlu0 %3306
        %3308 = vrot.lane.b32.xlu0 %v2525, 96
        %v3309 = vpop.permute.xlu0 %3308
        %3310 = vrot.lane.b32.xlu0 %v2526, 96
        %v3311 = vpop.permute.xlu0 %3310
        %3312 = vrot.lane.b32.xlu0 %v2527, 96
        %v3313 = vpop.permute.xlu0 %3312
        %3314 = vrot.lane.b32.xlu0 %v2528, 96
        %v3315 = vpop.permute.xlu0 %3314
        %3316 = vrot.lane.b32.xlu0 %v2529, 96
        %v3317 = vpop.permute.xlu0 %3316
        %3318 = vrot.lane.b32.xlu0 %v2530, 96
        %v3319 = vpop.permute.xlu0 %3318
        %3320 = vrot.lane.b32.xlu0 %v2531, 96
        %v3321 = vpop.permute.xlu0 %3320
        %3322 = vrot.lane.b32.xlu0 %v2532, 96
        %v3323 = vpop.permute.xlu0 %3322
        %3324 = vrot.lane.b32.xlu0 %v2533, 96
        %v3325 = vpop.permute.xlu0 %3324
        %3326 = vrot.lane.b32.xlu0 %v2534, 96
        %v3327 = vpop.permute.xlu0 %3326
        %3328 = vrot.lane.b32.xlu0 %v2535, 96
        %v3329 = vpop.permute.xlu0 %3328
        %3330 = vrot.lane.b32.xlu0 %v2536, 96
        %v3331 = vpop.permute.xlu0 %3330
        %3332 = vrot.lane.b32.xlu0 %v2537, 96
        %v3333 = vpop.permute.xlu0 %3332
        %3334 = vrot.lane.b32.xlu0 %v2538, 96
        %v3335 = vpop.permute.xlu0 %3334
        %3336 = vrot.lane.b32.xlu0 %v2539, 96
        %v3337 = vpop.permute.xlu0 %3336
        %3338 = vrot.lane.b32.xlu0 %v2540, 96
        %v3339 = vpop.permute.xlu0 %3338
        %3340 = vrot.lane.b32.xlu0 %v2541, 96
        %v3341 = vpop.permute.xlu0 %3340
        %3406 = vrot.lane.b32.xlu0 %v2542, 112
        %v3407 = vpop.permute.xlu0 %3406
        %3408 = vrot.lane.b32.xlu0 %v2543, 112
        %v3409 = vpop.permute.xlu0 %3408
        %3410 = vrot.lane.b32.xlu0 %v2544, 112
        %v3411 = vpop.permute.xlu0 %3410
        %3412 = vrot.lane.b32.xlu0 %v2545, 112
        %v3413 = vpop.permute.xlu0 %3412
        %3414 = vrot.lane.b32.xlu0 %v2546, 112
        %v3415 = vpop.permute.xlu0 %3414
        %3416 = vrot.lane.b32.xlu0 %v2547, 112
        %v3417 = vpop.permute.xlu0 %3416
        %3418 = vrot.lane.b32.xlu0 %v2548, 112
        %v3419 = vpop.permute.xlu0 %3418
        %3420 = vrot.lane.b32.xlu0 %v2549, 112
        %v3421 = vpop.permute.xlu0 %3420
        %3422 = vrot.lane.b32.xlu0 %v2550, 112
        %v3423 = vpop.permute.xlu0 %3422
        %3424 = vrot.lane.b32.xlu0 %v2551, 112
        %v3425 = vpop.permute.xlu0 %3424
        %3426 = vrot.lane.b32.xlu0 %v2552, 112
        %v3427 = vpop.permute.xlu0 %3426
        %3428 = vrot.lane.b32.xlu0 %v2553, 112
        %v3429 = vpop.permute.xlu0 %3428
        %3430 = vrot.lane.b32.xlu0 %v2554, 112
        %v3431 = vpop.permute.xlu0 %3430
        %3432 = vrot.lane.b32.xlu0 %v2555, 112
        %v3433 = vpop.permute.xlu0 %3432
        %3434 = vrot.lane.b32.xlu0 %v2556, 112
        %v3435 = vpop.permute.xlu0 %3434
        %3436 = vrot.lane.b32.xlu0 %v2557, 112
        %v3437 = vpop.permute.xlu0 %3436
        %3438 = vrot.lane.b32.xlu0 %v2558, 112
        %v3439 = vpop.permute.xlu0 %3438
        %3440 = vrot.lane.b32.xlu0 %v2559, 112
        %v3441 = vpop.permute.xlu0 %3440
        %3442 = vrot.lane.b32.xlu0 %v2560, 112
        %v3443 = vpop.permute.xlu0 %3442
        %3444 = vrot.lane.b32.xlu0 %v2561, 112
        %v3445 = vpop.permute.xlu0 %3444
        %3446 = vrot.lane.b32.xlu0 %v2562, 112
        %v3447 = vpop.permute.xlu0 %3446
        %3448 = vrot.lane.b32.xlu0 %v2563, 112
        %v3449 = vpop.permute.xlu0 %3448
        %3450 = vrot.lane.b32.xlu0 %v2564, 112
        %v3451 = vpop.permute.xlu0 %3450
        %3452 = vrot.lane.b32.xlu0 %v2565, 112
        %v3453 = vpop.permute.xlu0 %3452
        %3454 = vrot.lane.b32.xlu0 %v2566, 112
        %v3455 = vpop.permute.xlu0 %3454
        %3456 = vrot.lane.b32.xlu0 %v2567, 112
        %v3457 = vpop.permute.xlu0 %3456
        %3458 = vrot.lane.b32.xlu0 %v2568, 112
        %v3459 = vpop.permute.xlu0 %3458
        %3460 = vrot.lane.b32.xlu0 %v2569, 112
        %v3461 = vpop.permute.xlu0 %3460
        %3462 = vrot.lane.b32.xlu0 %v2570, 112
        %v3463 = vpop.permute.xlu0 %3462
        %3464 = vrot.lane.b32.xlu0 %v2571, 112
        %v3465 = vpop.permute.xlu0 %3464
        %3466 = vrot.lane.b32.xlu0 %v2572, 112
        %v3467 = vpop.permute.xlu0 %3466
        %3468 = vrot.lane.b32.xlu0 %v2573, 112
        %v3469 = vpop.permute.xlu0 %3468
        %v3502 = vsel %vm351, %v2318, %v2639
        %v3503 = vsel %vm351, %v2319, %v2641
        %v3504 = vsel %vm351, %v2320, %v2643
        %v3505 = vsel %vm351, %v2321, %v2645
        %v3506 = vsel %vm351, %v2322, %v2647
        %v3507 = vsel %vm351, %v2323, %v2649
        %v3508 = vsel %vm351, %v2324, %v2651
        %v3509 = vsel %vm351, %v2325, %v2653
        %v3510 = vsel %vm351, %v2326, %v2655
        %v3511 = vsel %vm351, %v2327, %v2657
        %v3512 = vsel %vm351, %v2328, %v2659
        %v3513 = vsel %vm351, %v2329, %v2661
        %v3514 = vsel %vm351, %v2330, %v2663
        %v3515 = vsel %vm351, %v2331, %v2665
        %v3516 = vsel %vm351, %v2332, %v2667
        %v3517 = vsel %vm351, %v2333, %v2669
        %v3518 = vsel %vm351, %v2334, %v2671
        %v3519 = vsel %vm351, %v2335, %v2673
        %v3520 = vsel %vm351, %v2336, %v2675
        %v3521 = vsel %vm351, %v2337, %v2677
        %v3522 = vsel %vm351, %v2338, %v2679
        %v3523 = vsel %vm351, %v2339, %v2681
        %v3524 = vsel %vm351, %v2340, %v2683
        %v3525 = vsel %vm351, %v2341, %v2685
        %v3526 = vsel %vm351, %v2342, %v2687
        %v3527 = vsel %vm351, %v2343, %v2689
        %v3528 = vsel %vm351, %v2344, %v2691
        %v3529 = vsel %vm351, %v2345, %v2693
        %v3530 = vsel %vm351, %v2346, %v2695
        %v3531 = vsel %vm351, %v2347, %v2697
        %v3532 = vsel %vm351, %v2348, %v2699
        %v3533 = vsel %vm351, %v2349, %v2701
        %v3534 = vsel %vm1708, %v3502, %v2767
        %v3535 = vsel %vm1708, %v3503, %v2769
        %v3536 = vsel %vm1708, %v3504, %v2771
        %v3537 = vsel %vm1708, %v3505, %v2773
        %v3538 = vsel %vm1708, %v3506, %v2775
        %v3539 = vsel %vm1708, %v3507, %v2777
        %v3540 = vsel %vm1708, %v3508, %v2779
        %v3541 = vsel %vm1708, %v3509, %v2781
        %v3542 = vsel %vm1708, %v3510, %v2783
        %v3543 = vsel %vm1708, %v3511, %v2785
        %v3544 = vsel %vm1708, %v3512, %v2787
        %v3545 = vsel %vm1708, %v3513, %v2789
        %v3546 = vsel %vm1708, %v3514, %v2791
        %v3547 = vsel %vm1708, %v3515, %v2793
        %v3548 = vsel %vm1708, %v3516, %v2795
        %v3549 = vsel %vm1708, %v3517, %v2797
        %v3550 = vsel %vm1708, %v3518, %v2799
        %v3551 = vsel %vm1708, %v3519, %v2801
        %v3552 = vsel %vm1708, %v3520, %v2803
        %v3553 = vsel %vm1708, %v3521, %v2805
        %v3554 = vsel %vm1708, %v3522, %v2807
        %v3555 = vsel %vm1708, %v3523, %v2809
        %v3556 = vsel %vm1708, %v3524, %v2811
        %v3557 = vsel %vm1708, %v3525, %v2813
        %v3558 = vsel %vm1708, %v3526, %v2815
        %v3559 = vsel %vm1708, %v3527, %v2817
        %v3560 = vsel %vm1708, %v3528, %v2819
        %v3561 = vsel %vm1708, %v3529, %v2821
        %v3562 = vsel %vm1708, %v3530, %v2823
        %v3563 = vsel %vm1708, %v3531, %v2825
        %v3564 = vsel %vm1708, %v3532, %v2827
        %v3565 = vsel %vm1708, %v3533, %v2829
        %v3566 = vsel %vm1741, %v3534, %v2895
        %v3567 = vsel %vm1741, %v3535, %v2897
        %v3568 = vsel %vm1741, %v3536, %v2899
        %v3569 = vsel %vm1741, %v3537, %v2901
        %v3570 = vsel %vm1741, %v3538, %v2903
        %v3571 = vsel %vm1741, %v3539, %v2905
        %v3572 = vsel %vm1741, %v3540, %v2907
        %v3573 = vsel %vm1741, %v3541, %v2909
        %v3574 = vsel %vm1741, %v3542, %v2911
        %v3575 = vsel %vm1741, %v3543, %v2913
        %v3576 = vsel %vm1741, %v3544, %v2915
        %v3577 = vsel %vm1741, %v3545, %v2917
        %v3578 = vsel %vm1741, %v3546, %v2919
        %v3579 = vsel %vm1741, %v3547, %v2921
        %v3580 = vsel %vm1741, %v3548, %v2923
        %v3581 = vsel %vm1741, %v3549, %v2925
        %v3582 = vsel %vm1741, %v3550, %v2927
        %v3583 = vsel %vm1741, %v3551, %v2929
        %v3584 = vsel %vm1741, %v3552, %v2931
        %v3585 = vsel %vm1741, %v3553, %v2933
        %v3586 = vsel %vm1741, %v3554, %v2935
        %v3587 = vsel %vm1741, %v3555, %v2937
        %v3588 = vsel %vm1741, %v3556, %v2939
        %v3589 = vsel %vm1741, %v3557, %v2941
        %v3590 = vsel %vm1741, %v3558, %v2943
        %v3591 = vsel %vm1741, %v3559, %v2945
        %v3592 = vsel %vm1741, %v3560, %v2947
        %v3593 = vsel %vm1741, %v3561, %v2949
        %v3594 = vsel %vm1741, %v3562, %v2951
        %v3595 = vsel %vm1741, %v3563, %v2953
        %v3596 = vsel %vm1741, %v3564, %v2955
        %v3597 = vsel %vm1741, %v3565, %v2957
        %v3598 = vsel %vm1774, %v3566, %v3023
        %v3599 = vsel %vm1774, %v3567, %v3025
        %v3600 = vsel %vm1774, %v3568, %v3027
        %v3601 = vsel %vm1774, %v3569, %v3029
        %v3602 = vsel %vm1774, %v3570, %v3031
        %v3603 = vsel %vm1774, %v3571, %v3033
        %v3604 = vsel %vm1774, %v3572, %v3035
        %v3605 = vsel %vm1774, %v3573, %v3037
        %v3606 = vsel %vm1774, %v3574, %v3039
        %v3607 = vsel %vm1774, %v3575, %v3041
        %v3608 = vsel %vm1774, %v3576, %v3043
        %v3609 = vsel %vm1774, %v3577, %v3045
        %v3610 = vsel %vm1774, %v3578, %v3047
        %v3611 = vsel %vm1774, %v3579, %v3049
        %v3612 = vsel %vm1774, %v3580, %v3051
        %v3613 = vsel %vm1774, %v3581, %v3053
        %v3614 = vsel %vm1774, %v3582, %v3055
        %v3615 = vsel %vm1774, %v3583, %v3057
        %v3616 = vsel %vm1774, %v3584, %v3059
        %v3617 = vsel %vm1774, %v3585, %v3061
        %v3618 = vsel %vm1774, %v3586, %v3063
        %v3619 = vsel %vm1774, %v3587, %v3065
        %v3620 = vsel %vm1774, %v3588, %v3067
        %v3621 = vsel %vm1774, %v3589, %v3069
        %v3622 = vsel %vm1774, %v3590, %v3071
        %v3623 = vsel %vm1774, %v3591, %v3073
        %v3624 = vsel %vm1774, %v3592, %v3075
        %v3625 = vsel %vm1774, %v3593, %v3077
        %v3626 = vsel %vm1774, %v3594, %v3079
        %v3627 = vsel %vm1774, %v3595, %v3081
        %v3628 = vsel %vm1774, %v3596, %v3083
        %v3629 = vsel %vm1774, %v3597, %v3085
        %v3630 = vsel %vm1807, %v3598, %v3151
        %v3631 = vsel %vm1807, %v3599, %v3153
        %v3632 = vsel %vm1807, %v3600, %v3155
        %v3633 = vsel %vm1807, %v3601, %v3157
        %v3634 = vsel %vm1807, %v3602, %v3159
        %v3635 = vsel %vm1807, %v3603, %v3161
        %v3636 = vsel %vm1807, %v3604, %v3163
        %v3637 = vsel %vm1807, %v3605, %v3165
        %v3638 = vsel %vm1807, %v3606, %v3167
        %v3639 = vsel %vm1807, %v3607, %v3169
        %v3640 = vsel %vm1807, %v3608, %v3171
        %v3641 = vsel %vm1807, %v3609, %v3173
        %v3642 = vsel %vm1807, %v3610, %v3175
        %v3643 = vsel %vm1807, %v3611, %v3177
        %v3644 = vsel %vm1807, %v3612, %v3179
        %v3645 = vsel %vm1807, %v3613, %v3181
        %v3646 = vsel %vm1807, %v3614, %v3183
        %v3647 = vsel %vm1807, %v3615, %v3185
        %v3648 = vsel %vm1807, %v3616, %v3187
        %v3649 = vsel %vm1807, %v3617, %v3189
        %v3650 = vsel %vm1807, %v3618, %v3191
        %v3651 = vsel %vm1807, %v3619, %v3193
        %v3652 = vsel %vm1807, %v3620, %v3195
        %v3653 = vsel %vm1807, %v3621, %v3197
        %v3654 = vsel %vm1807, %v3622, %v3199
        %v3655 = vsel %vm1807, %v3623, %v3201
        %v3656 = vsel %vm1807, %v3624, %v3203
        %v3657 = vsel %vm1807, %v3625, %v3205
        %v3658 = vsel %vm1807, %v3626, %v3207
        %v3659 = vsel %vm1807, %v3627, %v3209
        %v3660 = vsel %vm1807, %v3628, %v3211
        %v3661 = vsel %vm1807, %v3629, %v3213
        %v3662 = vsel %vm1840, %v3630, %v3279
        %v3663 = vsel %vm1840, %v3631, %v3281
        %v3664 = vsel %vm1840, %v3632, %v3283
        %v3665 = vsel %vm1840, %v3633, %v3285
        %v3666 = vsel %vm1840, %v3634, %v3287
        %v3667 = vsel %vm1840, %v3635, %v3289
        %v3668 = vsel %vm1840, %v3636, %v3291
        %v3669 = vsel %vm1840, %v3637, %v3293
        %v3670 = vsel %vm1840, %v3638, %v3295
        %v3671 = vsel %vm1840, %v3639, %v3297
        %v3672 = vsel %vm1840, %v3640, %v3299
        %v3673 = vsel %vm1840, %v3641, %v3301
        %v3674 = vsel %vm1840, %v3642, %v3303
        %v3675 = vsel %vm1840, %v3643, %v3305
        %v3676 = vsel %vm1840, %v3644, %v3307
        %v3677 = vsel %vm1840, %v3645, %v3309
        %v3678 = vsel %vm1840, %v3646, %v3311
        %v3679 = vsel %vm1840, %v3647, %v3313
        %v3680 = vsel %vm1840, %v3648, %v3315
        %v3681 = vsel %vm1840, %v3649, %v3317
        %v3682 = vsel %vm1840, %v3650, %v3319
        %v3683 = vsel %vm1840, %v3651, %v3321
        %v3684 = vsel %vm1840, %v3652, %v3323
        %v3685 = vsel %vm1840, %v3653, %v3325
        %v3686 = vsel %vm1840, %v3654, %v3327
        %v3687 = vsel %vm1840, %v3655, %v3329
        %v3688 = vsel %vm1840, %v3656, %v3331
        %v3689 = vsel %vm1840, %v3657, %v3333
        %v3690 = vsel %vm1840, %v3658, %v3335
        %v3691 = vsel %vm1840, %v3659, %v3337
        %v3692 = vsel %vm1840, %v3660, %v3339
        %v3693 = vsel %vm1840, %v3661, %v3341
        %v3694 = vsel %vm1873, %v3662, %v3407
        %v3695 = vsel %vm1873, %v3663, %v3409
        %v3696 = vsel %vm1873, %v3664, %v3411
        %v3697 = vsel %vm1873, %v3665, %v3413
        %v3698 = vsel %vm1873, %v3666, %v3415
        %v3699 = vsel %vm1873, %v3667, %v3417
        %v3700 = vsel %vm1873, %v3668, %v3419
        %v3701 = vsel %vm1873, %v3669, %v3421
        %v3702 = vsel %vm1873, %v3670, %v3423
        %v3703 = vsel %vm1873, %v3671, %v3425
        %v3704 = vsel %vm1873, %v3672, %v3427
        %v3705 = vsel %vm1873, %v3673, %v3429
        %v3706 = vsel %vm1873, %v3674, %v3431
        %v3707 = vsel %vm1873, %v3675, %v3433
        %v3708 = vsel %vm1873, %v3676, %v3435
        %v3709 = vsel %vm1873, %v3677, %v3437
        %v3710 = vsel %vm1873, %v3678, %v3439
        %v3711 = vsel %vm1873, %v3679, %v3441
        %v3712 = vsel %vm1873, %v3680, %v3443
        %v3713 = vsel %vm1873, %v3681, %v3445
        %v3714 = vsel %vm1873, %v3682, %v3447
        %v3715 = vsel %vm1873, %v3683, %v3449
        %v3716 = vsel %vm1873, %v3684, %v3451
        %v3717 = vsel %vm1873, %v3685, %v3453
        %v3718 = vsel %vm1873, %v3686, %v3455
        %v3719 = vsel %vm1873, %v3687, %v3457
        %v3720 = vsel %vm1873, %v3688, %v3459
        %v3721 = vsel %vm1873, %v3689, %v3461
        %v3722 = vsel %vm1873, %v3690, %v3463
        %v3723 = vsel %vm1873, %v3691, %v3465
        %v3724 = vsel %vm1873, %v3692, %v3467
        %v3725 = vsel %vm1873, %v3693, %v3469
        %v3727 = vlaneseq
        %v3728 = vshrl.u32 %v3727, 7
        %v3729 = vsub.s32 0, %v3728
        %v3730 = vrot.slane %v2285, %v3729
        %v3733 = vsel %vm351, %v2574, 0
        %v3736 = vsel %vm351, %v2575, 0
        %v3739 = vsel %vm351, %v2576, 0
        %v3742 = vsel %vm351, %v2577, 0
        %v3745 = vsel %vm351, %v2578, 0
        %v3748 = vsel %vm351, %v2579, 0
        %v3751 = vsel %vm351, %v2580, 0
        %v3754 = vsel %vm351, %v2581, 0
        %v3757 = vsel %vm351, %v2582, 0
        %v3760 = vsel %vm351, %v2583, 0
        %v3763 = vsel %vm351, %v2584, 0
        %v3766 = vsel %vm351, %v2585, 0
        %v3769 = vsel %vm351, %v2586, 0
        %v3772 = vsel %vm351, %v2587, 0
        %v3775 = vsel %vm351, %v2588, 0
        %v3778 = vsel %vm351, %v2589, 0
        %v3781 = vsel %vm351, %v2590, 0
        %v3784 = vsel %vm351, %v2591, 0
        %v3787 = vsel %vm351, %v2592, 0
        %v3790 = vsel %vm351, %v2593, 0
        %v3793 = vsel %vm351, %v2594, 0
        %v3796 = vsel %vm351, %v2595, 0
        %v3799 = vsel %vm351, %v2596, 0
        %v3802 = vsel %vm351, %v2597, 0
        %v3805 = vsel %vm351, %v2598, 0
        %v3808 = vsel %vm351, %v2599, 0
        %v3811 = vsel %vm351, %v2600, 0
        %v3814 = vsel %vm351, %v2601, 0
        %v3817 = vsel %vm351, %v2602, 0
        %v3820 = vsel %vm351, %v2603, 0
        %v3823 = vsel %vm351, %v2604, 0
        %v3826 = vsel %vm351, %v2605, 0
        %3828 = vmatprep.subr.mxu0 0.0
        %3829 = vmatpush1.msra.mxu0 %v2266
        %3830 = vmatprep.subr.mxu0 0.0
        %3831 = vmatpush1.msra.mxu0 %v2267
        %3832 = vmatprep.subr.mxu0 0.0
        %3833 = vmatpush1.msra.mxu0 %v2268
        %3834 = vmatprep.subr.mxu0 0.0
        %3835 = vmatpush1.msra.mxu0 %v2269
        %3836 = vmatprep.subr.mxu0 0.0
        %3837 = vmatpush1.msra.mxu0 %v2270
        %3838 = vmatprep.subr.mxu0 0.0
        %3839 = vmatpush1.msra.mxu0 %v2271
        %3840 = vmatprep.subr.mxu0 0.0
        %3841 = vmatpush1.msra.mxu0 %v2272
        %3842 = vmatprep.subr.mxu0 0.0
        %3843 = vmatpush1.msra.mxu0 %v2273
        %3844 = vmatprep.subr.mxu0 0.0
        %3845 = vmatpush1.msra.mxu0 %v2274
        %3846 = vmatprep.subr.mxu0 0.0
        %3847 = vmatpush1.msra.mxu0 %v2275
        %3848 = vmatprep.subr.mxu0 0.0
        %3849 = vmatpush1.msra.mxu0 %v2276
        %3850 = vmatprep.subr.mxu0 0.0
        %3851 = vmatpush1.msra.mxu0 %v2277
        %3852 = vmatprep.subr.mxu0 0.0
        %3853 = vmatpush1.msra.mxu0 %v2278
        %3854 = vmatprep.subr.mxu0 0.0
        %3855 = vmatpush1.msra.mxu0 %v2279
        %3856 = vmatprep.subr.mxu0 0.0
        %3857 = vmatpush1.msra.mxu0 %v2280
        %3858 = vmatprep.subr.mxu0 0.0
        %3859 = vmatpush1.msra.mxu0 %v2281
        %3860 = vmatprep.subr.mxu0 0.0
        %3861 = vmatpush1.msra.mxu0 %v2282
        %3862 = vmatprep.subr.mxu0 0.0
        %3863 = vmatpush1.msra.mxu0 %v2283
        %3864 = vmatprep.subr.mxu0 0.0
        %3865 = vmatpush1.msra.mxu0 0.0
        %3866 = vmatprep.subr.mxu0 0.0
        %3867 = vmatpush1.msra.mxu0 0.0
        %3868 = vmatprep.subr.mxu0 0.0
        %3869 = vmatpush1.msra.mxu0 0.0
        %3870 = vmatprep.subr.mxu0 0.0
        %3871 = vmatpush1.msra.mxu0 0.0
        %3872 = vmatprep.subr.mxu0 0.0
        %3873 = vmatpush1.msra.mxu0 0.0
        %3874 = vmatprep.subr.mxu0 0.0
        %3875 = vmatpush1.msra.mxu0 0.0
        %3876 = vmatprep.subr.mxu0 0.0
        %3877 = vmatpush1.msra.mxu0 0.0
        %3878 = vmatprep.subr.mxu0 0.0
        %3879 = vmatpush1.msra.mxu0 0.0
        %3880 = vmatprep.subr.mxu0 0.0
        %3881 = vmatpush1.msra.mxu0 0.0
        %3882 = vmatprep.subr.mxu0 0.0
        %3883 = vmatpush1.msra.mxu0 0.0
        %3884 = vmatprep.subr.mxu0 0.0
        %3885 = vmatpush1.msra.mxu0 0.0
        %3886 = vmatprep.subr.mxu0 0.0
        %3887 = vmatpush1.msra.mxu0 0.0
        %3888 = vmatprep.subr.mxu0 0.0
        %3889 = vmatpush1.msra.mxu0 0.0
        %3890 = vmatprep.subr.mxu0 0.0
        %3891 = vmatpush1.msra.mxu0 0.0
        %3892 = vmatprep.mubr.f32.mxu0 %v3733
        %3893 = vmatmul.mubr.f32.gmra.mrb[0].mxu0 %v3694
        %v3894 = vpop.f32.mrb[0].mxu0
        %v3895 = vadd.f32 %v3730, %v3894
        %v3896 = vpop.f32.mrb[0].mxu0
        %3897 = vmatprep.mubr.f32.mxu0 %v3736
        %3898 = vmatmul.mubr.f32.gmra.mrb[0].mxu0 %v3695
        %v3899 = vpop.f32.mrb[0].mxu0
        %v3900 = vadd.f32 %v3730, %v3899
        %v3901 = vpop.f32.mrb[0].mxu0
        %3902 = vmatprep.mubr.f32.mxu0 %v3739
        %3903 = vmatmul.mubr.f32.gmra.mrb[0].mxu0 %v3696
        %v3904 = vpop.f32.mrb[0].mxu0
        %v3905 = vadd.f32 %v3730, %v3904
        %v3906 = vpop.f32.mrb[0].mxu0
        %3907 = vmatprep.mubr.f32.mxu0 %v3742
        %3908 = vmatmul.mubr.f32.gmra.mrb[0].mxu0 %v3697
        %v3909 = vpop.f32.mrb[0].mxu0
        %v3910 = vadd.f32 %v3730, %v3909
        %v3911 = vpop.f32.mrb[0].mxu0
        %3912 = vmatprep.mubr.f32.mxu0 %v3745
        %3913 = vmatmul.mubr.f32.gmra.mrb[0].mxu0 %v3698
        %v3914 = vpop.f32.mrb[0].mxu0
        %v3915 = vadd.f32 %v3730, %v3914
        %v3916 = vpop.f32.mrb[0].mxu0
        %3917 = vmatprep.mubr.f32.mxu0 %v3748
        %3918 = vmatmul.mubr.f32.gmra.mrb[0].mxu0 %v3699
        %v3919 = vpop.f32.mrb[0].mxu0
        %v3920 = vadd.f32 %v3730, %v3919
        %v3921 = vpop.f32.mrb[0].mxu0
        %3922 = vmatprep.mubr.f32.mxu0 %v3751
        %3923 = vmatmul.mubr.f32.gmra.mrb[0].mxu0 %v3700
        %v3924 = vpop.f32.mrb[0].mxu0
        %v3925 = vadd.f32 %v3730, %v3924
        %v3926 = vpop.f32.mrb[0].mxu0
        %3927 = vmatprep.mubr.f32.mxu0 %v3754
        %3928 = vmatmul.mubr.f32.gmra.mrb[0].mxu0 %v3701
        %v3929 = vpop.f32.mrb[0].mxu0
        %v3930 = vadd.f32 %v3730, %v3929
        %v3931 = vpop.f32.mrb[0].mxu0
        %3932 = vmatprep.mubr.f32.mxu0 %v3757
        %3933 = vmatmul.mubr.f32.gmra.mrb[0].mxu0 %v3702
        %v3934 = vpop.f32.mrb[0].mxu0
        %v3935 = vadd.f32 %v3730, %v3934
        %v3936 = vpop.f32.mrb[0].mxu0
        %3937 = vmatprep.mubr.f32.mxu0 %v3760
        %3938 = vmatmul.mubr.f32.gmra.mrb[0].mxu0 %v3703
        %v3939 = vpop.f32.mrb[0].mxu0
        %v3940 = vadd.f32 %v3730, %v3939
        %v3941 = vpop.f32.mrb[0].mxu0
        %3942 = vmatprep.mubr.f32.mxu0 %v3763
        %3943 = vmatmul.mubr.f32.gmra.mrb[0].mxu0 %v3704
        %v3944 = vpop.f32.mrb[0].mxu0
        %v3945 = vadd.f32 %v3730, %v3944
        %v3946 = vpop.f32.mrb[0].mxu0
        %3947 = vmatprep.mubr.f32.mxu0 %v3766
        %3948 = vmatmul.mubr.f32.gmra.mrb[0].mxu0 %v3705
        %v3949 = vpop.f32.mrb[0].mxu0
        %v3950 = vadd.f32 %v3730, %v3949
        %v3951 = vpop.f32.mrb[0].mxu0
        %3952 = vmatprep.mubr.f32.mxu0 %v3769
        %3953 = vmatmul.mubr.f32.gmra.mrb[0].mxu0 %v3706
        %v3954 = vpop.f32.mrb[0].mxu0
        %v3955 = vadd.f32 %v3730, %v3954
        %v3956 = vpop.f32.mrb[0].mxu0
        %3957 = vmatprep.mubr.f32.mxu0 %v3772
        %3958 = vmatmul.mubr.f32.gmra.mrb[0].mxu0 %v3707
        %v3959 = vpop.f32.mrb[0].mxu0
        %v3960 = vadd.f32 %v3730, %v3959
        %v3961 = vpop.f32.mrb[0].mxu0
        %3962 = vmatprep.mubr.f32.mxu0 %v3775
        %3963 = vmatmul.mubr.f32.gmra.mrb[0].mxu0 %v3708
        %v3964 = vpop.f32.mrb[0].mxu0
        %v3965 = vadd.f32 %v3730, %v3964
        %v3966 = vpop.f32.mrb[0].mxu0
        %3967 = vmatprep.mubr.f32.mxu0 %v3778
        %3968 = vmatmul.mubr.f32.gmra.mrb[0].mxu0 %v3709
        %v3969 = vpop.f32.mrb[0].mxu0
        %v3970 = vadd.f32 %v3730, %v3969
        %v3971 = vpop.f32.mrb[0].mxu0
        %3972 = vmatprep.mubr.f32.mxu0 %v3781
        %3973 = vmatmul.mubr.f32.gmra.mrb[0].mxu0 %v3710
        %v3974 = vpop.f32.mrb[0].mxu0
        %v3975 = vadd.f32 %v3730, %v3974
        %v3976 = vpop.f32.mrb[0].mxu0
        %3977 = vmatprep.mubr.f32.mxu0 %v3784
        %3978 = vmatmul.mubr.f32.gmra.mrb[0].mxu0 %v3711
        %v3979 = vpop.f32.mrb[0].mxu0
        %v3980 = vadd.f32 %v3730, %v3979
        %v3981 = vpop.f32.mrb[0].mxu0
        %3982 = vmatprep.mubr.f32.mxu0 %v3787
        %3983 = vmatmul.mubr.f32.gmra.mrb[0].mxu0 %v3712
        %v3984 = vpop.f32.mrb[0].mxu0
        %v3985 = vadd.f32 %v3730, %v3984
        %v3986 = vpop.f32.mrb[0].mxu0
        %3987 = vmatprep.mubr.f32.mxu0 %v3790
        %3988 = vmatmul.mubr.f32.gmra.mrb[0].mxu0 %v3713
        %v3989 = vpop.f32.mrb[0].mxu0
        %v3990 = vadd.f32 %v3730, %v3989
        %v3991 = vpop.f32.mrb[0].mxu0
        %3992 = vmatprep.mubr.f32.mxu0 %v3793
        %3993 = vmatmul.mubr.f32.gmra.mrb[0].mxu0 %v3714
        %v3994 = vpop.f32.mrb[0].mxu0
        %v3995 = vadd.f32 %v3730, %v3994
        %v3996 = vpop.f32.mrb[0].mxu0
        %3997 = vmatprep.mubr.f32.mxu0 %v3796
        %3998 = vmatmul.mubr.f32.gmra.mrb[0].mxu0 %v3715
        %v3999 = vpop.f32.mrb[0].mxu0
        %v4000 = vadd.f32 %v3730, %v3999
        %v4001 = vpop.f32.mrb[0].mxu0
        %4002 = vmatprep.mubr.f32.mxu0 %v3799
        %4003 = vmatmul.mubr.f32.gmra.mrb[0].mxu0 %v3716
        %v4004 = vpop.f32.mrb[0].mxu0
        %v4005 = vadd.f32 %v3730, %v4004
        %v4006 = vpop.f32.mrb[0].mxu0
        %4007 = vmatprep.mubr.f32.mxu0 %v3802
        %4008 = vmatmul.mubr.f32.gmra.mrb[0].mxu0 %v3717
        %v4009 = vpop.f32.mrb[0].mxu0
        %v4010 = vadd.f32 %v3730, %v4009
        %v4011 = vpop.f32.mrb[0].mxu0
        %4012 = vmatprep.mubr.f32.mxu0 %v3805
        %4013 = vmatmul.mubr.f32.gmra.mrb[0].mxu0 %v3718
        %v4014 = vpop.f32.mrb[0].mxu0
        %v4015 = vadd.f32 %v3730, %v4014
        %v4016 = vpop.f32.mrb[0].mxu0
        %4017 = vmatprep.mubr.f32.mxu0 %v3808
        %4018 = vmatmul.mubr.f32.gmra.mrb[0].mxu0 %v3719
        %v4019 = vpop.f32.mrb[0].mxu0
        %v4020 = vadd.f32 %v3730, %v4019
        %v4021 = vpop.f32.mrb[0].mxu0
        %4022 = vmatprep.mubr.f32.mxu0 %v3811
        %4023 = vmatmul.mubr.f32.gmra.mrb[0].mxu0 %v3720
        %v4024 = vpop.f32.mrb[0].mxu0
        %v4025 = vadd.f32 %v3730, %v4024
        %v4026 = vpop.f32.mrb[0].mxu0
        %4027 = vmatprep.mubr.f32.mxu0 %v3814
        %4028 = vmatmul.mubr.f32.gmra.mrb[0].mxu0 %v3721
        %v4029 = vpop.f32.mrb[0].mxu0
        %v4030 = vadd.f32 %v3730, %v4029
        %v4031 = vpop.f32.mrb[0].mxu0
        %4032 = vmatprep.mubr.f32.mxu0 %v3817
        %4033 = vmatmul.mubr.f32.gmra.mrb[0].mxu0 %v3722
        %v4034 = vpop.f32.mrb[0].mxu0
        %v4035 = vadd.f32 %v3730, %v4034
        %v4036 = vpop.f32.mrb[0].mxu0
        %4037 = vmatprep.mubr.f32.mxu0 %v3820
        %4038 = vmatmul.mubr.f32.gmra.mrb[0].mxu0 %v3723
        %v4039 = vpop.f32.mrb[0].mxu0
        %v4040 = vadd.f32 %v3730, %v4039
        %v4041 = vpop.f32.mrb[0].mxu0
        %4042 = vmatprep.mubr.f32.mxu0 %v3823
        %4043 = vmatmul.mubr.f32.gmra.mrb[0].mxu0 %v3724
        %v4044 = vpop.f32.mrb[0].mxu0
        %v4045 = vadd.f32 %v3730, %v4044
        %v4046 = vpop.f32.mrb[0].mxu0
        %4047 = vmatprep.mubr.f32.mxu0 %v3826
        %4048 = vmatmul.mubr.f32.gmra.mrb[0].mxu0 %v3725
        %v4049 = vpop.f32.mrb[0].mxu0
        %v4050 = vadd.f32 %v3730, %v4049
        %v4051 = vpop.f32.mrb[0].mxu0
        %4052 = vdwg.mxu0
        %v4053 = vsel %vm351, %v3895, 0.0
        %v4054 = vsel %vm351, %v3900, 0.0
        %v4055 = vadd.f32 %v4053, %v4054
        %v4056 = vsel %vm351, %v3905, 0.0
        %v4057 = vadd.f32 %v4055, %v4056
        %v4058 = vsel %vm351, %v3910, 0.0
        %v4059 = vadd.f32 %v4057, %v4058
        %v4060 = vsel %vm351, %v3915, 0.0
        %v4061 = vadd.f32 %v4059, %v4060
        %v4062 = vsel %vm351, %v3920, 0.0
        %v4063 = vadd.f32 %v4061, %v4062
        %v4064 = vsel %vm351, %v3925, 0.0
        %v4065 = vadd.f32 %v4063, %v4064
        %v4066 = vsel %vm351, %v3930, 0.0
        %v4067 = vadd.f32 %v4065, %v4066
        %v4068 = vsel %vm351, %v3935, 0.0
        %v4069 = vadd.f32 %v4067, %v4068
        %v4070 = vsel %vm351, %v3940, 0.0
        %v4071 = vadd.f32 %v4069, %v4070
        %v4072 = vsel %vm351, %v3945, 0.0
        %v4073 = vadd.f32 %v4071, %v4072
        %v4074 = vsel %vm351, %v3950, 0.0
        %v4075 = vadd.f32 %v4073, %v4074
        %v4076 = vsel %vm351, %v3955, 0.0
        %v4077 = vadd.f32 %v4075, %v4076
        %v4078 = vsel %vm351, %v3960, 0.0
        %v4079 = vadd.f32 %v4077, %v4078
        %v4080 = vsel %vm351, %v3965, 0.0
        %v4081 = vadd.f32 %v4079, %v4080
        %v4082 = vsel %vm351, %v3970, 0.0
        %v4083 = vadd.f32 %v4081, %v4082
        %v4084 = vsel %vm351, %v3975, 0.0
        %v4085 = vadd.f32 %v4083, %v4084
        %v4086 = vsel %vm351, %v3980, 0.0
        %v4087 = vadd.f32 %v4085, %v4086
        %v4088 = vsel %vm351, %v3985, 0.0
        %v4089 = vadd.f32 %v4087, %v4088
        %v4090 = vsel %vm351, %v3990, 0.0
        %v4091 = vadd.f32 %v4089, %v4090
        %v4092 = vsel %vm351, %v3995, 0.0
        %v4093 = vadd.f32 %v4091, %v4092
        %v4094 = vsel %vm351, %v4000, 0.0
        %v4095 = vadd.f32 %v4093, %v4094
        %v4096 = vsel %vm351, %v4005, 0.0
        %v4097 = vadd.f32 %v4095, %v4096
        %v4098 = vsel %vm351, %v4010, 0.0
        %v4099 = vadd.f32 %v4097, %v4098
        %v4100 = vsel %vm351, %v4015, 0.0
        %v4101 = vadd.f32 %v4099, %v4100
        %v4102 = vsel %vm351, %v4020, 0.0
        %v4103 = vadd.f32 %v4101, %v4102
        %v4104 = vsel %vm351, %v4025, 0.0
        %v4105 = vadd.f32 %v4103, %v4104
        %v4106 = vsel %vm351, %v4030, 0.0
        %v4107 = vadd.f32 %v4105, %v4106
        %v4108 = vsel %vm351, %v4035, 0.0
        %v4109 = vadd.f32 %v4107, %v4108
        %v4110 = vsel %vm351, %v4040, 0.0
        %v4111 = vadd.f32 %v4109, %v4110
        %v4112 = vsel %vm351, %v4045, 0.0
        %v4113 = vadd.f32 %v4111, %v4112
        %v4114 = vsel %vm351, %v4050, 0.0
        %v4115 = vadd.f32 %v4113, %v4114
        %v4116 = vrot.slane %v4115, 4
        %v4117 = vadd.f32 %v4115, %v4116
        %v4118 = vrot.slane %v4117, 2
        %v4119 = vadd.f32 %v4117, %v4118
        %v4120 = vrot.slane %v4119, 1
        %v4121 = vadd.f32 %v4119, %v4120
        %v4122 = vrcp.pop 256.0
        %v4123 = vmul.f32 %v4121, %v4122
        %v4124 = vld [vmem:[%s3] sm:$0xff]
        %v4125 = vld [vmem:[%s3 + $0x8] sm:$0xff]
        %v4126 = vld [vmem:[%s4] sm:$0x1]
        %v4128 = vsel %vm351, %v4123, 0
        %4130 = vmatprep.subr.mxu0 0.0
        %4131 = vmatpush1.msra.mxu0 %v4124
        %4132 = vmatprep.subr.mxu0 0.0
        %4133 = vmatpush1.msra.mxu0 %v4125
        %4134 = vmatprep.subr.mxu0 0.0
        %4135 = vmatpush1.msra.mxu0 0.0
        %4136 = vmatprep.subr.mxu0 0.0
        %4137 = vmatpush1.msra.mxu0 0.0
        %4138 = vmatprep.subr.mxu0 0.0
        %4139 = vmatpush1.msra.mxu0 0.0
        %4140 = vmatprep.subr.mxu0 0.0
        %4141 = vmatpush1.msra.mxu0 0.0
        %4142 = vmatprep.subr.mxu0 0.0
        %4143 = vmatpush1.msra.mxu0 0.0
        %4144 = vmatprep.subr.mxu0 0.0
        %4145 = vmatpush1.msra.mxu0 0.0
        %4146 = vmatprep.subr.mxu0 0.0
        %4147 = vmatpush1.msra.mxu0 0.0
        %4148 = vmatprep.subr.mxu0 0.0
        %4149 = vmatpush1.msra.mxu0 0.0
        %4150 = vmatprep.subr.mxu0 0.0
        %4151 = vmatpush1.msra.mxu0 0.0
        %4152 = vmatprep.subr.mxu0 0.0
        %4153 = vmatpush1.msra.mxu0 0.0
        %4154 = vmatprep.subr.mxu0 0.0
        %4155 = vmatpush1.msra.mxu0 0.0
        %4156 = vmatprep.subr.mxu0 0.0
        %4157 = vmatpush1.msra.mxu0 0.0
        %4158 = vmatprep.subr.mxu0 0.0
        %4159 = vmatpush1.msra.mxu0 0.0
        %4160 = vmatprep.subr.mxu0 0.0
        %4161 = vmatpush1.msra.mxu0 0.0
        %4162 = vmatprep.subr.mxu0 0.0
        %4163 = vmatpush1.msra.mxu0 0.0
        %4164 = vmatprep.subr.mxu0 0.0
        %4165 = vmatpush1.msra.mxu0 0.0
        %4166 = vmatprep.subr.mxu0 0.0
        %4167 = vmatpush1.msra.mxu0 0.0
        %4168 = vmatprep.subr.mxu0 0.0
        %4169 = vmatpush1.msra.mxu0 0.0
        %4170 = vmatprep.subr.mxu0 0.0
        %4171 = vmatpush1.msra.mxu0 0.0
        %4172 = vmatprep.subr.mxu0 0.0
        %4173 = vmatpush1.msra.mxu0 0.0
        %4174 = vmatprep.subr.mxu0 0.0
        %4175 = vmatpush1.msra.mxu0 0.0
        %4176 = vmatprep.subr.mxu0 0.0
        %4177 = vmatpush1.msra.mxu0 0.0
        %4178 = vmatprep.subr.mxu0 0.0
        %4179 = vmatpush1.msra.mxu0 0.0
        %4180 = vmatprep.subr.mxu0 0.0
        %4181 = vmatpush1.msra.mxu0 0.0
        %4182 = vmatprep.subr.mxu0 0.0
        %4183 = vmatpush1.msra.mxu0 0.0
        %4184 = vmatprep.subr.mxu0 0.0
        %4185 = vmatpush1.msra.mxu0 0.0
        %4186 = vmatprep.subr.mxu0 0.0
        %4187 = vmatpush1.msra.mxu0 0.0
        %4188 = vmatprep.subr.mxu0 0.0
        %4189 = vmatpush1.msra.mxu0 0.0
        %4190 = vmatprep.subr.mxu0 0.0
        %4191 = vmatpush1.msra.mxu0 0.0
        %4192 = vmatprep.subr.mxu0 0.0
        %4193 = vmatpush1.msra.mxu0 0.0
        %4194 = vmatprep.mubr.f32.mxu0 0.0
        %4195 = vmatmul.mubr.f32.gmra.mrb[0].mxu0 %v4128
        %v4196 = vpop.f32.mrb[0].mxu0
        %v4197 = vadd.f32 %v4126, %v4196
        %v4198 = vpop.f32.mrb[0].mxu0
        %4199 = vdwg.mxu0
        %v4200 = vmax.f32 %v4197, 0.0
        %v4201 = vld [vmem:[%s5] sm:$0xf]
        %v4202 = vld [vmem:[%s6] sm:$0x1]
        %vm4203 = vcmask 31744
        %v4205 = vsel %vm4203, %v4200, 0
        %vm4207 = vcmask 1043456
        %v4209 = vsel %vm4207, %v4201, 0
        %4211 = vmatprep.subr.mxu0 0.0
        %4212 = vmatpush1.msra.mxu0 %v4209
        %4213 = vmatprep.subr.mxu0 0.0
        %4214 = vmatpush1.msra.mxu0 0.0
        %4215 = vmatprep.subr.mxu0 0.0
        %4216 = vmatpush1.msra.mxu0 0.0
        %4217 = vmatprep.subr.mxu0 0.0
        %4218 = vmatpush1.msra.mxu0 0.0
        %4219 = vmatprep.subr.mxu0 0.0
        %4220 = vmatpush1.msra.mxu0 0.0
        %4221 = vmatprep.subr.mxu0 0.0
        %4222 = vmatpush1.msra.mxu0 0.0
        %4223 = vmatprep.subr.mxu0 0.0
        %4224 = vmatpush1.msra.mxu0 0.0
        %4225 = vmatprep.subr.mxu0 0.0
        %4226 = vmatpush1.msra.mxu0 0.0
        %4227 = vmatprep.subr.mxu0 0.0
        %4228 = vmatpush1.msra.mxu0 0.0
        %4229 = vmatprep.subr.mxu0 0.0
        %4230 = vmatpush1.msra.mxu0 0.0
        %4231 = vmatprep.subr.mxu0 0.0
        %4232 = vmatpush1.msra.mxu0 0.0
        %4233 = vmatprep.subr.mxu0 0.0
        %4234 = vmatpush1.msra.mxu0 0.0
        %4235 = vmatprep.subr.mxu0 0.0
        %4236 = vmatpush1.msra.mxu0 0.0
        %4237 = vmatprep.subr.mxu0 0.0
        %4238 = vmatpush1.msra.mxu0 0.0
        %4239 = vmatprep.subr.mxu0 0.0
        %4240 = vmatpush1.msra.mxu0 0.0
        %4241 = vmatprep.subr.mxu0 0.0
        %4242 = vmatpush1.msra.mxu0 0.0
        %4243 = vmatprep.subr.mxu0 0.0
        %4244 = vmatpush1.msra.mxu0 0.0
        %4245 = vmatprep.subr.mxu0 0.0
        %4246 = vmatpush1.msra.mxu0 0.0
        %4247 = vmatprep.subr.mxu0 0.0
        %4248 = vmatpush1.msra.mxu0 0.0
        %4249 = vmatprep.subr.mxu0 0.0
        %4250 = vmatpush1.msra.mxu0 0.0
        %4251 = vmatprep.subr.mxu0 0.0
        %4252 = vmatpush1.msra.mxu0 0.0
        %4253 = vmatprep.subr.mxu0 0.0
        %4254 = vmatpush1.msra.mxu0 0.0
        %4255 = vmatprep.subr.mxu0 0.0
        %4256 = vmatpush1.msra.mxu0 0.0
        %4257 = vmatprep.subr.mxu0 0.0
        %4258 = vmatpush1.msra.mxu0 0.0
        %4259 = vmatprep.subr.mxu0 0.0
        %4260 = vmatpush1.msra.mxu0 0.0
        %4261 = vmatprep.subr.mxu0 0.0
        %4262 = vmatpush1.msra.mxu0 0.0
        %4263 = vmatprep.subr.mxu0 0.0
        %4264 = vmatpush1.msra.mxu0 0.0
        %4265 = vmatprep.subr.mxu0 0.0
        %4266 = vmatpush1.msra.mxu0 0.0
        %4267 = vmatprep.subr.mxu0 0.0
        %4268 = vmatpush1.msra.mxu0 0.0
        %4269 = vmatprep.subr.mxu0 0.0
        %4270 = vmatpush1.msra.mxu0 0.0
        %4271 = vmatprep.subr.mxu0 0.0
        %4272 = vmatpush1.msra.mxu0 0.0
        %4273 = vmatprep.subr.mxu0 0.0
        %4274 = vmatpush1.msra.mxu0 0.0
        %4275 = vmatprep.mubr.f32.mxu0 0.0
        %4276 = vmatmul.mubr.f32.gmra.mrb[0].mxu0 %v4205
        %v4277 = vpop.f32.mrb[0].mxu0
        %v4278 = vadd.f32 %v4202, %v4277
        %v4279 = vpop.f32.mrb[0].mxu0
        %4280 = vdwg.mxu0
        %v4281 = vsub.f32 0.0, %v4278
        %v4282 = vmul.f32 %v4281, 1.442695
        %v4283 = vpow.pop %v4282
        %v4284 = vadd.f32 %v4283, 1.0
        %v4285 = vrcp.pop %v4284
        %v4286 = vmul.f32 1.0, %v4285
        %v4287 = vlaneseq
        %v4288 = vshrl.u32 %v4287, 7
        %v4289 = vsub.s32 0, %v4288
        %v4290 = vrot.slane %v4286, %v4289
        %v4291 = vmul.f32 %v3895, %v4290
        %v4292 = vmul.f32 %v3900, %v4290
        %v4293 = vmul.f32 %v3905, %v4290
        %v4294 = vmul.f32 %v3910, %v4290
        %v4295 = vmul.f32 %v3915, %v4290
        %v4296 = vmul.f32 %v3920, %v4290
        %v4297 = vmul.f32 %v3925, %v4290
        %v4298 = vmul.f32 %v3930, %v4290
        %v4299 = vmul.f32 %v3935, %v4290
        %v4300 = vmul.f32 %v3940, %v4290
        %v4301 = vmul.f32 %v3945, %v4290
        %v4302 = vmul.f32 %v3950, %v4290
        %v4303 = vmul.f32 %v3955, %v4290
        %v4304 = vmul.f32 %v3960, %v4290
        %v4305 = vmul.f32 %v3965, %v4290
        %v4306 = vmul.f32 %v3970, %v4290
        %v4307 = vmul.f32 %v3975, %v4290
        %v4308 = vmul.f32 %v3980, %v4290
        %v4309 = vmul.f32 %v3985, %v4290
        %v4310 = vmul.f32 %v3990, %v4290
        %v4311 = vmul.f32 %v3995, %v4290
        %v4312 = vmul.f32 %v4000, %v4290
        %v4313 = vmul.f32 %v4005, %v4290
        %v4314 = vmul.f32 %v4010, %v4290
        %v4315 = vmul.f32 %v4015, %v4290
        %v4316 = vmul.f32 %v4020, %v4290
        %v4317 = vmul.f32 %v4025, %v4290
        %v4318 = vmul.f32 %v4030, %v4290
        %v4319 = vmul.f32 %v4035, %v4290
        %v4320 = vmul.f32 %v4040, %v4290
        %v4321 = vmul.f32 %v4045, %v4290
        %v4322 = vmul.f32 %v4050, %v4290
        %v4323 = vadd.f32 %v4291, %v407
        %v4324 = vadd.f32 %v4292, %v408
        %v4325 = vadd.f32 %v4293, %v409
        %v4326 = vadd.f32 %v4294, %v410
        %v4327 = vadd.f32 %v4295, %v411
        %v4328 = vadd.f32 %v4296, %v412
        %v4329 = vadd.f32 %v4297, %v413
        %v4330 = vadd.f32 %v4298, %v414
        %v4331 = vadd.f32 %v4299, %v415
        %v4332 = vadd.f32 %v4300, %v416
        %v4333 = vadd.f32 %v4301, %v417
        %v4334 = vadd.f32 %v4302, %v418
        %v4335 = vadd.f32 %v4303, %v419
        %v4336 = vadd.f32 %v4304, %v420
        %v4337 = vadd.f32 %v4305, %v421
        %v4338 = vadd.f32 %v4306, %v422
        %v4339 = vadd.f32 %v4307, %v423
        %v4340 = vadd.f32 %v4308, %v424
        %v4341 = vadd.f32 %v4309, %v425
        %v4342 = vadd.f32 %v4310, %v426
        %v4343 = vadd.f32 %v4311, %v427
        %v4344 = vadd.f32 %v4312, %v428
        %v4345 = vadd.f32 %v4313, %v429
        %v4346 = vadd.f32 %v4314, %v430
        %v4347 = vadd.f32 %v4315, %v431
        %v4348 = vadd.f32 %v4316, %v432
        %v4349 = vadd.f32 %v4317, %v433
        %v4350 = vadd.f32 %v4318, %v434
        %v4351 = vadd.f32 %v4319, %v435
        %v4352 = vadd.f32 %v4320, %v436
        %v4353 = vadd.f32 %v4321, %v437
        %v4354 = vadd.f32 %v4322, %v438
        %s4355 = scalar_lea.vmem %s1, 288
        %v4356 = vld [vmem:[%s4355] sm:$0xff]
        %v4357 = vld [vmem:[%s4355 + $0x8] sm:$0xff]
        %v4358 = vld [vmem:[%s4355 + $0x10] sm:$0xff]
        %v4359 = vld [vmem:[%s4355 + $0x18] sm:$0xff]
        %v4360 = vld [vmem:[%s4355 + $0x20] sm:$0xff]
        %v4361 = vld [vmem:[%s4355 + $0x28] sm:$0xff]
        %v4362 = vld [vmem:[%s4355 + $0x30] sm:$0xff]
        %v4363 = vld [vmem:[%s4355 + $0x38] sm:$0xff]
        %v4364 = vld [vmem:[%s4355 + $0x40] sm:$0xff]
        %v4365 = vld [vmem:[%s4355 + $0x48] sm:$0xff]
        %v4366 = vld [vmem:[%s4355 + $0x50] sm:$0xff]
        %v4367 = vld [vmem:[%s4355 + $0x58] sm:$0xff]
        %v4368 = vld [vmem:[%s4355 + $0x60] sm:$0xff]
        %v4369 = vld [vmem:[%s4355 + $0x68] sm:$0xff]
        %v4370 = vld [vmem:[%s4355 + $0x70] sm:$0xff]
        %v4371 = vld [vmem:[%s4355 + $0x78] sm:$0xff]
        %v4372 = vld [vmem:[%s4355 + $0x80] sm:$0xff]
        %v4373 = vld [vmem:[%s4355 + $0x88] sm:$0xff]
        %s4374 = scalar_lea.vmem %s2, 2
        %v4375 = vld [vmem:[%s4374] sm:$0x1]
        %4376 = vst.msk [vmem:[%s458 + $0x1] sm:$0xff] %vm351, %v4323
        %4377 = vst.msk [vmem:[%s458 + $0x9] sm:$0xff] %vm351, %v4324
        %4378 = vst.msk [vmem:[%s458 + $0x19] sm:$0xff] %vm351, %v4325
        %4379 = vst.msk [vmem:[%s458 + $0x21] sm:$0xff] %vm351, %v4326
        %4380 = vst.msk [vmem:[%s458 + $0x31] sm:$0xff] %vm351, %v4327
        %4381 = vst.msk [vmem:[%s458 + $0x39] sm:$0xff] %vm351, %v4328
        %4382 = vst.msk [vmem:[%s458 + $0x49] sm:$0xff] %vm351, %v4329
        %4383 = vst.msk [vmem:[%s458 + $0x51] sm:$0xff] %vm351, %v4330
        %4384 = vst.msk [vmem:[%s458 + $0x61] sm:$0xff] %vm351, %v4331
        %4385 = vst.msk [vmem:[%s458 + $0x69] sm:$0xff] %vm351, %v4332
        %4386 = vst.msk [vmem:[%s458 + $0x79] sm:$0xff] %vm351, %v4333
        %4387 = vst.msk [vmem:[%s458 + $0x81] sm:$0xff] %vm351, %v4334
        %4388 = vst.msk [vmem:[%s458 + $0x91] sm:$0xff] %vm351, %v4335
        %4389 = vst.msk [vmem:[%s458 + $0x99] sm:$0xff] %vm351, %v4336
        %4390 = vst.msk [vmem:[%s458 + $0xa9] sm:$0xff] %vm351, %v4337
        %4391 = vst.msk [vmem:[%s458 + $0xb1] sm:$0xff] %vm351, %v4338
        %4392 = vst.msk [vmem:[%s458 + $0xc1] sm:$0xff] %vm351, %v4339
        %4393 = vst.msk [vmem:[%s458 + $0xc9] sm:$0xff] %vm351, %v4340
        %4394 = vst.msk [vmem:[%s458 + $0xd9] sm:$0xff] %vm351, %v4341
        %4395 = vst.msk [vmem:[%s458 + $0xe1] sm:$0xff] %vm351, %v4342
        %4396 = vst.msk [vmem:[%s458 + $0xf1] sm:$0xff] %vm351, %v4343
        %4397 = vst.msk [vmem:[%s458 + $0xf9] sm:$0xff] %vm351, %v4344
        %4398 = vst.msk [vmem:[%s458 + $0x109] sm:$0xff] %vm351, %v4345
        %4399 = vst.msk [vmem:[%s458 + $0x111] sm:$0xff] %vm351, %v4346
        %4400 = vst.msk [vmem:[%s458 + $0x121] sm:$0xff] %vm351, %v4347
        %4401 = vst.msk [vmem:[%s458 + $0x129] sm:$0xff] %vm351, %v4348
        %4402 = vst.msk [vmem:[%s458 + $0x139] sm:$0xff] %vm351, %v4349
        %4403 = vst.msk [vmem:[%s458 + $0x141] sm:$0xff] %vm351, %v4350
        %4404 = vst.msk [vmem:[%s458 + $0x151] sm:$0xff] %vm351, %v4351
        %4405 = vst.msk [vmem:[%s458 + $0x159] sm:$0xff] %vm351, %v4352
        %4406 = vst.msk [vmem:[%s458 + $0x169] sm:$0xff] %vm351, %v4353
        %4407 = vst.msk [vmem:[%s458 + $0x171] sm:$0xff] %vm351, %v4354
        %v4408 = vld [vmem:[#allocation2] sm:$0xff]
        %v4409 = vld [vmem:[#allocation2 + $0x8] sm:$0xff]
        %v4410 = vld [vmem:[#allocation2 + $0x18] sm:$0xff]
        %v4411 = vld [vmem:[#allocation2 + $0x20] sm:$0xff]
        %v4412 = vld [vmem:[#allocation2 + $0x30] sm:$0xff]
        %v4413 = vld [vmem:[#allocation2 + $0x38] sm:$0xff]
        %v4414 = vld [vmem:[#allocation2 + $0x48] sm:$0xff]
        %v4415 = vld [vmem:[#allocation2 + $0x50] sm:$0xff]
        %v4416 = vld [vmem:[#allocation2 + $0x60] sm:$0xff]
        %v4417 = vld [vmem:[#allocation2 + $0x68] sm:$0xff]
        %v4418 = vld [vmem:[#allocation2 + $0x78] sm:$0xff]
        %v4419 = vld [vmem:[#allocation2 + $0x80] sm:$0xff]
        %v4420 = vld [vmem:[#allocation2 + $0x90] sm:$0xff]
        %v4421 = vld [vmem:[#allocation2 + $0x98] sm:$0xff]
        %v4422 = vld [vmem:[#allocation2 + $0xa8] sm:$0xff]
        %v4423 = vld [vmem:[#allocation2 + $0xb0] sm:$0xff]
        %v4424 = vld [vmem:[#allocation2 + $0xc0] sm:$0xff]
        %v4425 = vld [vmem:[#allocation2 + $0xc8] sm:$0xff]
        %v4426 = vld [vmem:[#allocation2 + $0xd8] sm:$0xff]
        %v4427 = vld [vmem:[#allocation2 + $0xe0] sm:$0xff]
        %v4428 = vld [vmem:[#allocation2 + $0xf0] sm:$0xff]
        %v4429 = vld [vmem:[#allocation2 + $0xf8] sm:$0xff]
        %v4430 = vld [vmem:[#allocation2 + $0x108] sm:$0xff]
        %v4431 = vld [vmem:[#allocation2 + $0x110] sm:$0xff]
        %v4432 = vld [vmem:[#allocation2 + $0x120] sm:$0xff]
        %v4433 = vld [vmem:[#allocation2 + $0x128] sm:$0xff]
        %v4434 = vld [vmem:[#allocation2 + $0x138] sm:$0xff]
        %v4435 = vld [vmem:[#allocation2 + $0x140] sm:$0xff]
        %v4436 = vld [vmem:[#allocation2 + $0x150] sm:$0xff]
        %v4437 = vld [vmem:[#allocation2 + $0x158] sm:$0xff]
        %v4438 = vld [vmem:[#allocation2 + $0x168] sm:$0xff]
        %v4439 = vld [vmem:[#allocation2 + $0x170] sm:$0xff]
        %v4440 = vld [vmem:[#allocation2 + $0x1] sm:$0xff]
        %v4441 = vld [vmem:[#allocation2 + $0x9] sm:$0xff]
        %v4442 = vld [vmem:[#allocation2 + $0x19] sm:$0xff]
        %v4443 = vld [vmem:[#allocation2 + $0x21] sm:$0xff]
        %v4444 = vld [vmem:[#allocation2 + $0x31] sm:$0xff]
        %v4445 = vld [vmem:[#allocation2 + $0x39] sm:$0xff]
        %v4446 = vld [vmem:[#allocation2 + $0x49] sm:$0xff]
        %v4447 = vld [vmem:[#allocation2 + $0x51] sm:$0xff]
        %v4448 = vld [vmem:[#allocation2 + $0x61] sm:$0xff]
        %v4449 = vld [vmem:[#allocation2 + $0x69] sm:$0xff]
        %v4450 = vld [vmem:[#allocation2 + $0x79] sm:$0xff]
        %v4451 = vld [vmem:[#allocation2 + $0x81] sm:$0xff]
        %v4452 = vld [vmem:[#allocation2 + $0x91] sm:$0xff]
        %v4453 = vld [vmem:[#allocation2 + $0x99] sm:$0xff]
        %v4454 = vld [vmem:[#allocation2 + $0xa9] sm:$0xff]
        %v4455 = vld [vmem:[#allocation2 + $0xb1] sm:$0xff]
        %v4456 = vld [vmem:[#allocation2 + $0xc1] sm:$0xff]
        %v4457 = vld [vmem:[#allocation2 + $0xc9] sm:$0xff]
        %v4458 = vld [vmem:[#allocation2 + $0xd9] sm:$0xff]
        %v4459 = vld [vmem:[#allocation2 + $0xe1] sm:$0xff]
        %v4460 = vld [vmem:[#allocation2 + $0xf1] sm:$0xff]
        %v4461 = vld [vmem:[#allocation2 + $0xf9] sm:$0xff]
        %v4462 = vld [vmem:[#allocation2 + $0x109] sm:$0xff]
        %v4463 = vld [vmem:[#allocation2 + $0x111] sm:$0xff]
        %v4464 = vld [vmem:[#allocation2 + $0x121] sm:$0xff]
        %v4465 = vld [vmem:[#allocation2 + $0x129] sm:$0xff]
        %v4466 = vld [vmem:[#allocation2 + $0x139] sm:$0xff]
        %v4467 = vld [vmem:[#allocation2 + $0x141] sm:$0xff]
        %v4468 = vld [vmem:[#allocation2 + $0x151] sm:$0xff]
        %v4469 = vld [vmem:[#allocation2 + $0x159] sm:$0xff]
        %v4470 = vld [vmem:[#allocation2 + $0x169] sm:$0xff]
        %v4471 = vld [vmem:[#allocation2 + $0x171] sm:$0xff]
        %v4472 = vld [vmem:[#allocation2 + $0x2] sm:$0xff]
        %v4473 = vld [vmem:[#allocation2 + $0xa] sm:$0xff]
        %v4474 = vld [vmem:[#allocation2 + $0x1a] sm:$0xff]
        %v4475 = vld [vmem:[#allocation2 + $0x22] sm:$0xff]
        %v4476 = vld [vmem:[#allocation2 + $0x32] sm:$0xff]
        %v4477 = vld [vmem:[#allocation2 + $0x3a] sm:$0xff]
        %v4478 = vld [vmem:[#allocation2 + $0x4a] sm:$0xff]
        %v4479 = vld [vmem:[#allocation2 + $0x52] sm:$0xff]
        %v4480 = vld [vmem:[#allocation2 + $0x62] sm:$0xff]
        %v4481 = vld [vmem:[#allocation2 + $0x6a] sm:$0xff]
        %v4482 = vld [vmem:[#allocation2 + $0x7a] sm:$0xff]
        %v4483 = vld [vmem:[#allocation2 + $0x82] sm:$0xff]
        %v4484 = vld [vmem:[#allocation2 + $0x92] sm:$0xff]
        %v4485 = vld [vmem:[#allocation2 + $0x9a] sm:$0xff]
        %v4486 = vld [vmem:[#allocation2 + $0xaa] sm:$0xff]
        %v4487 = vld [vmem:[#allocation2 + $0xb2] sm:$0xff]
        %v4488 = vld [vmem:[#allocation2 + $0xc2] sm:$0xff]
        %v4489 = vld [vmem:[#allocation2 + $0xca] sm:$0xff]
        %v4490 = vld [vmem:[#allocation2 + $0xda] sm:$0xff]
        %v4491 = vld [vmem:[#allocation2 + $0xe2] sm:$0xff]
        %v4492 = vld [vmem:[#allocation2 + $0xf2] sm:$0xff]
        %v4493 = vld [vmem:[#allocation2 + $0xfa] sm:$0xff]
        %v4494 = vld [vmem:[#allocation2 + $0x10a] sm:$0xff]
        %v4495 = vld [vmem:[#allocation2 + $0x112] sm:$0xff]
        %v4496 = vld [vmem:[#allocation2 + $0x122] sm:$0xff]
        %v4497 = vld [vmem:[#allocation2 + $0x12a] sm:$0xff]
        %v4498 = vld [vmem:[#allocation2 + $0x13a] sm:$0xff]
        %v4499 = vld [vmem:[#allocation2 + $0x142] sm:$0xff]
        %v4500 = vld [vmem:[#allocation2 + $0x152] sm:$0xff]
        %v4501 = vld [vmem:[#allocation2 + $0x15a] sm:$0xff]
        %v4502 = vld [vmem:[#allocation2 + $0x16a] sm:$0xff]
        %v4503 = vld [vmem:[#allocation2 + $0x172] sm:$0xff]
        %v4504 = vld [vmem:[%s458] sm:$0xff]
        %v4505 = vld [vmem:[%s458 + $0x8] sm:$0xff]
        %v4506 = vld [vmem:[%s458 + $0x18] sm:$0xff]
        %v4507 = vld [vmem:[%s458 + $0x20] sm:$0xff]
        %v4508 = vld [vmem:[%s458 + $0x30] sm:$0xff]
        %v4509 = vld [vmem:[%s458 + $0x38] sm:$0xff]
        %v4510 = vld [vmem:[%s458 + $0x48] sm:$0xff]
        %v4511 = vld [vmem:[%s458 + $0x50] sm:$0xff]
        %v4512 = vld [vmem:[%s458 + $0x60] sm:$0xff]
        %v4513 = vld [vmem:[%s458 + $0x68] sm:$0xff]
        %v4514 = vld [vmem:[%s458 + $0x78] sm:$0xff]
        %v4515 = vld [vmem:[%s458 + $0x80] sm:$0xff]
        %v4516 = vld [vmem:[%s458 + $0x90] sm:$0xff]
        %v4517 = vld [vmem:[%s458 + $0x98] sm:$0xff]
        %v4518 = vld [vmem:[%s458 + $0xa8] sm:$0xff]
        %v4519 = vld [vmem:[%s458 + $0xb0] sm:$0xff]
        %v4520 = vld [vmem:[%s458 + $0xc0] sm:$0xff]
        %v4521 = vld [vmem:[%s458 + $0xc8] sm:$0xff]
        %v4522 = vld [vmem:[%s458 + $0xd8] sm:$0xff]
        %v4523 = vld [vmem:[%s458 + $0xe0] sm:$0xff]
        %v4524 = vld [vmem:[%s458 + $0xf0] sm:$0xff]
        %v4525 = vld [vmem:[%s458 + $0xf8] sm:$0xff]
        %v4526 = vld [vmem:[%s458 + $0x108] sm:$0xff]
        %v4527 = vld [vmem:[%s458 + $0x110] sm:$0xff]
        %v4528 = vld [vmem:[%s458 + $0x120] sm:$0xff]
        %v4529 = vld [vmem:[%s458 + $0x128] sm:$0xff]
        %v4530 = vld [vmem:[%s458 + $0x138] sm:$0xff]
        %v4531 = vld [vmem:[%s458 + $0x140] sm:$0xff]
        %v4532 = vld [vmem:[%s458 + $0x150] sm:$0xff]
        %v4533 = vld [vmem:[%s458 + $0x158] sm:$0xff]
        %v4534 = vld [vmem:[%s458 + $0x168] sm:$0xff]
        %v4535 = vld [vmem:[%s458 + $0x170] sm:$0xff]
        %v4536 = vld [vmem:[%s458 + $0x1] sm:$0xff]
        %v4537 = vld [vmem:[%s458 + $0x9] sm:$0xff]
        %v4538 = vld [vmem:[%s458 + $0x19] sm:$0xff]
        %v4539 = vld [vmem:[%s458 + $0x21] sm:$0xff]
        %v4540 = vld [vmem:[%s458 + $0x31] sm:$0xff]
        %v4541 = vld [vmem:[%s458 + $0x39] sm:$0xff]
        %v4542 = vld [vmem:[%s458 + $0x49] sm:$0xff]
        %v4543 = vld [vmem:[%s458 + $0x51] sm:$0xff]
        %v4544 = vld [vmem:[%s458 + $0x61] sm:$0xff]
        %v4545 = vld [vmem:[%s458 + $0x69] sm:$0xff]
        %v4546 = vld [vmem:[%s458 + $0x79] sm:$0xff]
        %v4547 = vld [vmem:[%s458 + $0x81] sm:$0xff]
        %v4548 = vld [vmem:[%s458 + $0x91] sm:$0xff]
        %v4549 = vld [vmem:[%s458 + $0x99] sm:$0xff]
        %v4550 = vld [vmem:[%s458 + $0xa9] sm:$0xff]
        %v4551 = vld [vmem:[%s458 + $0xb1] sm:$0xff]
        %v4552 = vld [vmem:[%s458 + $0xc1] sm:$0xff]
        %v4553 = vld [vmem:[%s458 + $0xc9] sm:$0xff]
        %v4554 = vld [vmem:[%s458 + $0xd9] sm:$0xff]
        %v4555 = vld [vmem:[%s458 + $0xe1] sm:$0xff]
        %v4556 = vld [vmem:[%s458 + $0xf1] sm:$0xff]
        %v4557 = vld [vmem:[%s458 + $0xf9] sm:$0xff]
        %v4558 = vld [vmem:[%s458 + $0x109] sm:$0xff]
        %v4559 = vld [vmem:[%s458 + $0x111] sm:$0xff]
        %v4560 = vld [vmem:[%s458 + $0x121] sm:$0xff]
        %v4561 = vld [vmem:[%s458 + $0x129] sm:$0xff]
        %v4562 = vld [vmem:[%s458 + $0x139] sm:$0xff]
        %v4563 = vld [vmem:[%s458 + $0x141] sm:$0xff]
        %v4564 = vld [vmem:[%s458 + $0x151] sm:$0xff]
        %v4565 = vld [vmem:[%s458 + $0x159] sm:$0xff]
        %v4566 = vld [vmem:[%s458 + $0x169] sm:$0xff]
        %v4567 = vld [vmem:[%s458 + $0x171] sm:$0xff]
        %v4568 = vld [vmem:[%s458 + $0x2] sm:$0xff]
        %v4569 = vld [vmem:[%s458 + $0xa] sm:$0xff]
        %v4570 = vld [vmem:[%s458 + $0x1a] sm:$0xff]
        %v4571 = vld [vmem:[%s458 + $0x22] sm:$0xff]
        %v4572 = vld [vmem:[%s458 + $0x32] sm:$0xff]
        %v4573 = vld [vmem:[%s458 + $0x3a] sm:$0xff]
        %v4574 = vld [vmem:[%s458 + $0x4a] sm:$0xff]
        %v4575 = vld [vmem:[%s458 + $0x52] sm:$0xff]
        %v4576 = vld [vmem:[%s458 + $0x62] sm:$0xff]
        %v4577 = vld [vmem:[%s458 + $0x6a] sm:$0xff]
        %v4578 = vld [vmem:[%s458 + $0x7a] sm:$0xff]
        %v4579 = vld [vmem:[%s458 + $0x82] sm:$0xff]
        %v4580 = vld [vmem:[%s458 + $0x92] sm:$0xff]
        %v4581 = vld [vmem:[%s458 + $0x9a] sm:$0xff]
        %v4582 = vld [vmem:[%s458 + $0xaa] sm:$0xff]
        %v4583 = vld [vmem:[%s458 + $0xb2] sm:$0xff]
        %v4584 = vld [vmem:[%s458 + $0xc2] sm:$0xff]
        %v4585 = vld [vmem:[%s458 + $0xca] sm:$0xff]
        %v4586 = vld [vmem:[%s458 + $0xda] sm:$0xff]
        %v4587 = vld [vmem:[%s458 + $0xe2] sm:$0xff]
        %v4588 = vld [vmem:[%s458 + $0xf2] sm:$0xff]
        %v4589 = vld [vmem:[%s458 + $0xfa] sm:$0xff]
        %v4590 = vld [vmem:[%s458 + $0x10a] sm:$0xff]
        %v4591 = vld [vmem:[%s458 + $0x112] sm:$0xff]
        %v4592 = vld [vmem:[%s458 + $0x122] sm:$0xff]
        %v4593 = vld [vmem:[%s458 + $0x12a] sm:$0xff]
        %v4594 = vld [vmem:[%s458 + $0x13a] sm:$0xff]
        %v4595 = vld [vmem:[%s458 + $0x142] sm:$0xff]
        %v4596 = vld [vmem:[%s458 + $0x152] sm:$0xff]
        %v4597 = vld [vmem:[%s458 + $0x15a] sm:$0xff]
        %v4598 = vld [vmem:[%s458 + $0x16a] sm:$0xff]
        %v4599 = vld [vmem:[%s458 + $0x172] sm:$0xff]
        %v4600 = vld [vmem:[%s683] sm:$0xff]
        %v4601 = vld [vmem:[%s683 + $0x8] sm:$0xff]
        %v4602 = vld [vmem:[%s683 + $0x18] sm:$0xff]
        %v4603 = vld [vmem:[%s683 + $0x20] sm:$0xff]
        %v4604 = vld [vmem:[%s683 + $0x30] sm:$0xff]
        %v4605 = vld [vmem:[%s683 + $0x38] sm:$0xff]
        %v4606 = vld [vmem:[%s683 + $0x48] sm:$0xff]
        %v4607 = vld [vmem:[%s683 + $0x50] sm:$0xff]
        %v4608 = vld [vmem:[%s683 + $0x60] sm:$0xff]
        %v4609 = vld [vmem:[%s683 + $0x68] sm:$0xff]
        %v4610 = vld [vmem:[%s683 + $0x78] sm:$0xff]
        %v4611 = vld [vmem:[%s683 + $0x80] sm:$0xff]
        %v4612 = vld [vmem:[%s683 + $0x90] sm:$0xff]
        %v4613 = vld [vmem:[%s683 + $0x98] sm:$0xff]
        %v4614 = vld [vmem:[%s683 + $0xa8] sm:$0xff]
        %v4615 = vld [vmem:[%s683 + $0xb0] sm:$0xff]
        %v4616 = vld [vmem:[%s683 + $0xc0] sm:$0xff]
        %v4617 = vld [vmem:[%s683 + $0xc8] sm:$0xff]
        %v4618 = vld [vmem:[%s683 + $0xd8] sm:$0xff]
        %v4619 = vld [vmem:[%s683 + $0xe0] sm:$0xff]
        %v4620 = vld [vmem:[%s683 + $0xf0] sm:$0xff]
        %v4621 = vld [vmem:[%s683 + $0xf8] sm:$0xff]
        %v4622 = vld [vmem:[%s683 + $0x108] sm:$0xff]
        %v4623 = vld [vmem:[%s683 + $0x110] sm:$0xff]
        %v4624 = vld [vmem:[%s683 + $0x120] sm:$0xff]
        %v4625 = vld [vmem:[%s683 + $0x128] sm:$0xff]
        %v4626 = vld [vmem:[%s683 + $0x138] sm:$0xff]
        %v4627 = vld [vmem:[%s683 + $0x140] sm:$0xff]
        %v4628 = vld [vmem:[%s683 + $0x150] sm:$0xff]
        %v4629 = vld [vmem:[%s683 + $0x158] sm:$0xff]
        %v4630 = vld [vmem:[%s683 + $0x168] sm:$0xff]
        %v4631 = vld [vmem:[%s683 + $0x170] sm:$0xff]
        %v4632 = vld [vmem:[%s683 + $0x1] sm:$0xff]
        %v4633 = vld [vmem:[%s683 + $0x9] sm:$0xff]
        %v4634 = vld [vmem:[%s683 + $0x19] sm:$0xff]
        %v4635 = vld [vmem:[%s683 + $0x21] sm:$0xff]
        %v4636 = vld [vmem:[%s683 + $0x31] sm:$0xff]
        %v4637 = vld [vmem:[%s683 + $0x39] sm:$0xff]
        %v4638 = vld [vmem:[%s683 + $0x49] sm:$0xff]
        %v4639 = vld [vmem:[%s683 + $0x51] sm:$0xff]
        %v4640 = vld [vmem:[%s683 + $0x61] sm:$0xff]
        %v4641 = vld [vmem:[%s683 + $0x69] sm:$0xff]
        %v4642 = vld [vmem:[%s683 + $0x79] sm:$0xff]
        %v4643 = vld [vmem:[%s683 + $0x81] sm:$0xff]
        %v4644 = vld [vmem:[%s683 + $0x91] sm:$0xff]
        %v4645 = vld [vmem:[%s683 + $0x99] sm:$0xff]
        %v4646 = vld [vmem:[%s683 + $0xa9] sm:$0xff]
        %v4647 = vld [vmem:[%s683 + $0xb1] sm:$0xff]
        %v4648 = vld [vmem:[%s683 + $0xc1] sm:$0xff]
        %v4649 = vld [vmem:[%s683 + $0xc9] sm:$0xff]
        %v4650 = vld [vmem:[%s683 + $0xd9] sm:$0xff]
        %v4651 = vld [vmem:[%s683 + $0xe1] sm:$0xff]
        %v4652 = vld [vmem:[%s683 + $0xf1] sm:$0xff]
        %v4653 = vld [vmem:[%s683 + $0xf9] sm:$0xff]
        %v4654 = vld [vmem:[%s683 + $0x109] sm:$0xff]
        %v4655 = vld [vmem:[%s683 + $0x111] sm:$0xff]
        %v4656 = vld [vmem:[%s683 + $0x121] sm:$0xff]
        %v4657 = vld [vmem:[%s683 + $0x129] sm:$0xff]
        %v4658 = vld [vmem:[%s683 + $0x139] sm:$0xff]
        %v4659 = vld [vmem:[%s683 + $0x141] sm:$0xff]
        %v4660 = vld [vmem:[%s683 + $0x151] sm:$0xff]
        %v4661 = vld [vmem:[%s683 + $0x159] sm:$0xff]
        %v4662 = vld [vmem:[%s683 + $0x169] sm:$0xff]
        %v4663 = vld [vmem:[%s683 + $0x171] sm:$0xff]
        %v4664 = vld [vmem:[%s683 + $0x2] sm:$0xff]
        %v4665 = vld [vmem:[%s683 + $0xa] sm:$0xff]
        %v4666 = vld [vmem:[%s683 + $0x1a] sm:$0xff]
        %v4667 = vld [vmem:[%s683 + $0x22] sm:$0xff]
        %v4668 = vld [vmem:[%s683 + $0x32] sm:$0xff]
        %v4669 = vld [vmem:[%s683 + $0x3a] sm:$0xff]
        %v4670 = vld [vmem:[%s683 + $0x4a] sm:$0xff]
        %v4671 = vld [vmem:[%s683 + $0x52] sm:$0xff]
        %v4672 = vld [vmem:[%s683 + $0x62] sm:$0xff]
        %v4673 = vld [vmem:[%s683 + $0x6a] sm:$0xff]
        %v4674 = vld [vmem:[%s683 + $0x7a] sm:$0xff]
        %v4675 = vld [vmem:[%s683 + $0x82] sm:$0xff]
        %v4676 = vld [vmem:[%s683 + $0x92] sm:$0xff]
        %v4677 = vld [vmem:[%s683 + $0x9a] sm:$0xff]
        %v4678 = vld [vmem:[%s683 + $0xaa] sm:$0xff]
        %v4679 = vld [vmem:[%s683 + $0xb2] sm:$0xff]
        %v4680 = vld [vmem:[%s683 + $0xc2] sm:$0xff]
        %v4681 = vld [vmem:[%s683 + $0xca] sm:$0xff]
        %v4682 = vld [vmem:[%s683 + $0xda] sm:$0xff]
        %v4683 = vld [vmem:[%s683 + $0xe2] sm:$0xff]
        %v4684 = vld [vmem:[%s683 + $0xf2] sm:$0xff]
        %v4685 = vld [vmem:[%s683 + $0xfa] sm:$0xff]
        %v4686 = vld [vmem:[%s683 + $0x10a] sm:$0xff]
        %v4687 = vld [vmem:[%s683 + $0x112] sm:$0xff]
        %v4688 = vld [vmem:[%s683 + $0x122] sm:$0xff]
        %v4689 = vld [vmem:[%s683 + $0x12a] sm:$0xff]
        %v4690 = vld [vmem:[%s683 + $0x13a] sm:$0xff]
        %v4691 = vld [vmem:[%s683 + $0x142] sm:$0xff]
        %v4692 = vld [vmem:[%s683 + $0x152] sm:$0xff]
        %v4693 = vld [vmem:[%s683 + $0x15a] sm:$0xff]
        %v4694 = vld [vmem:[%s683 + $0x16a] sm:$0xff]
        %v4695 = vld [vmem:[%s683 + $0x172] sm:$0xff]
        %4728 = vrot.lane.b32.xlu0 %v4440, 16
        %v4729 = vpop.permute.xlu0 %4728
        %4730 = vrot.lane.b32.xlu0 %v4441, 16
        %v4731 = vpop.permute.xlu0 %4730
        %4732 = vrot.lane.b32.xlu0 %v4442, 16
        %v4733 = vpop.permute.xlu0 %4732
        %4734 = vrot.lane.b32.xlu0 %v4443, 16
        %v4735 = vpop.permute.xlu0 %4734
        %4736 = vrot.lane.b32.xlu0 %v4444, 16
        %v4737 = vpop.permute.xlu0 %4736
        %4738 = vrot.lane.b32.xlu0 %v4445, 16
        %v4739 = vpop.permute.xlu0 %4738
        %4740 = vrot.lane.b32.xlu0 %v4446, 16
        %v4741 = vpop.permute.xlu0 %4740
        %4742 = vrot.lane.b32.xlu0 %v4447, 16
        %v4743 = vpop.permute.xlu0 %4742
        %4744 = vrot.lane.b32.xlu0 %v4448, 16
        %v4745 = vpop.permute.xlu0 %4744
        %4746 = vrot.lane.b32.xlu0 %v4449, 16
        %v4747 = vpop.permute.xlu0 %4746
        %4748 = vrot.lane.b32.xlu0 %v4450, 16
        %v4749 = vpop.permute.xlu0 %4748
        %4750 = vrot.lane.b32.xlu0 %v4451, 16
        %v4751 = vpop.permute.xlu0 %4750
        %4752 = vrot.lane.b32.xlu0 %v4452, 16
        %v4753 = vpop.permute.xlu0 %4752
        %4754 = vrot.lane.b32.xlu0 %v4453, 16
        %v4755 = vpop.permute.xlu0 %4754
        %4756 = vrot.lane.b32.xlu0 %v4454, 16
        %v4757 = vpop.permute.xlu0 %4756
        %4758 = vrot.lane.b32.xlu0 %v4455, 16
        %v4759 = vpop.permute.xlu0 %4758
        %4760 = vrot.lane.b32.xlu0 %v4456, 16
        %v4761 = vpop.permute.xlu0 %4760
        %4762 = vrot.lane.b32.xlu0 %v4457, 16
        %v4763 = vpop.permute.xlu0 %4762
        %4764 = vrot.lane.b32.xlu0 %v4458, 16
        %v4765 = vpop.permute.xlu0 %4764
        %4766 = vrot.lane.b32.xlu0 %v4459, 16
        %v4767 = vpop.permute.xlu0 %4766
        %4768 = vrot.lane.b32.xlu0 %v4460, 16
        %v4769 = vpop.permute.xlu0 %4768
        %4770 = vrot.lane.b32.xlu0 %v4461, 16
        %v4771 = vpop.permute.xlu0 %4770
        %4772 = vrot.lane.b32.xlu0 %v4462, 16
        %v4773 = vpop.permute.xlu0 %4772
        %4774 = vrot.lane.b32.xlu0 %v4463, 16
        %v4775 = vpop.permute.xlu0 %4774
        %4776 = vrot.lane.b32.xlu0 %v4464, 16
        %v4777 = vpop.permute.xlu0 %4776
        %4778 = vrot.lane.b32.xlu0 %v4465, 16
        %v4779 = vpop.permute.xlu0 %4778
        %4780 = vrot.lane.b32.xlu0 %v4466, 16
        %v4781 = vpop.permute.xlu0 %4780
        %4782 = vrot.lane.b32.xlu0 %v4467, 16
        %v4783 = vpop.permute.xlu0 %4782
        %4784 = vrot.lane.b32.xlu0 %v4468, 16
        %v4785 = vpop.permute.xlu0 %4784
        %4786 = vrot.lane.b32.xlu0 %v4469, 16
        %v4787 = vpop.permute.xlu0 %4786
        %4788 = vrot.lane.b32.xlu0 %v4470, 16
        %v4789 = vpop.permute.xlu0 %4788
        %4790 = vrot.lane.b32.xlu0 %v4471, 16
        %v4791 = vpop.permute.xlu0 %4790
        %4856 = vrot.lane.b32.xlu0 %v4472, 32
        %v4857 = vpop.permute.xlu0 %4856
        %4858 = vrot.lane.b32.xlu0 %v4473, 32
        %v4859 = vpop.permute.xlu0 %4858
        %4860 = vrot.lane.b32.xlu0 %v4474, 32
        %v4861 = vpop.permute.xlu0 %4860
        %4862 = vrot.lane.b32.xlu0 %v4475, 32
        %v4863 = vpop.permute.xlu0 %4862
        %4864 = vrot.lane.b32.xlu0 %v4476, 32
        %v4865 = vpop.permute.xlu0 %4864
        %4866 = vrot.lane.b32.xlu0 %v4477, 32
        %v4867 = vpop.permute.xlu0 %4866
        %4868 = vrot.lane.b32.xlu0 %v4478, 32
        %v4869 = vpop.permute.xlu0 %4868
        %4870 = vrot.lane.b32.xlu0 %v4479, 32
        %v4871 = vpop.permute.xlu0 %4870
        %4872 = vrot.lane.b32.xlu0 %v4480, 32
        %v4873 = vpop.permute.xlu0 %4872
        %4874 = vrot.lane.b32.xlu0 %v4481, 32
        %v4875 = vpop.permute.xlu0 %4874
        %4876 = vrot.lane.b32.xlu0 %v4482, 32
        %v4877 = vpop.permute.xlu0 %4876
        %4878 = vrot.lane.b32.xlu0 %v4483, 32
        %v4879 = vpop.permute.xlu0 %4878
        %4880 = vrot.lane.b32.xlu0 %v4484, 32
        %v4881 = vpop.permute.xlu0 %4880
        %4882 = vrot.lane.b32.xlu0 %v4485, 32
        %v4883 = vpop.permute.xlu0 %4882
        %4884 = vrot.lane.b32.xlu0 %v4486, 32
        %v4885 = vpop.permute.xlu0 %4884
        %4886 = vrot.lane.b32.xlu0 %v4487, 32
        %v4887 = vpop.permute.xlu0 %4886
        %4888 = vrot.lane.b32.xlu0 %v4488, 32
        %v4889 = vpop.permute.xlu0 %4888
        %4890 = vrot.lane.b32.xlu0 %v4489, 32
        %v4891 = vpop.permute.xlu0 %4890
        %4892 = vrot.lane.b32.xlu0 %v4490, 32
        %v4893 = vpop.permute.xlu0 %4892
        %4894 = vrot.lane.b32.xlu0 %v4491, 32
        %v4895 = vpop.permute.xlu0 %4894
        %4896 = vrot.lane.b32.xlu0 %v4492, 32
        %v4897 = vpop.permute.xlu0 %4896
        %4898 = vrot.lane.b32.xlu0 %v4493, 32
        %v4899 = vpop.permute.xlu0 %4898
        %4900 = vrot.lane.b32.xlu0 %v4494, 32
        %v4901 = vpop.permute.xlu0 %4900
        %4902 = vrot.lane.b32.xlu0 %v4495, 32
        %v4903 = vpop.permute.xlu0 %4902
        %4904 = vrot.lane.b32.xlu0 %v4496, 32
        %v4905 = vpop.permute.xlu0 %4904
        %4906 = vrot.lane.b32.xlu0 %v4497, 32
        %v4907 = vpop.permute.xlu0 %4906
        %4908 = vrot.lane.b32.xlu0 %v4498, 32
        %v4909 = vpop.permute.xlu0 %4908
        %4910 = vrot.lane.b32.xlu0 %v4499, 32
        %v4911 = vpop.permute.xlu0 %4910
        %4912 = vrot.lane.b32.xlu0 %v4500, 32
        %v4913 = vpop.permute.xlu0 %4912
        %4914 = vrot.lane.b32.xlu0 %v4501, 32
        %v4915 = vpop.permute.xlu0 %4914
        %4916 = vrot.lane.b32.xlu0 %v4502, 32
        %v4917 = vpop.permute.xlu0 %4916
        %4918 = vrot.lane.b32.xlu0 %v4503, 32
        %v4919 = vpop.permute.xlu0 %4918
        %4984 = vrot.lane.b32.xlu0 %v4504, 48
        %v4985 = vpop.permute.xlu0 %4984
        %4986 = vrot.lane.b32.xlu0 %v4505, 48
        %v4987 = vpop.permute.xlu0 %4986
        %4988 = vrot.lane.b32.xlu0 %v4506, 48
        %v4989 = vpop.permute.xlu0 %4988
        %4990 = vrot.lane.b32.xlu0 %v4507, 48
        %v4991 = vpop.permute.xlu0 %4990
        %4992 = vrot.lane.b32.xlu0 %v4508, 48
        %v4993 = vpop.permute.xlu0 %4992
        %4994 = vrot.lane.b32.xlu0 %v4509, 48
        %v4995 = vpop.permute.xlu0 %4994
        %4996 = vrot.lane.b32.xlu0 %v4510, 48
        %v4997 = vpop.permute.xlu0 %4996
        %4998 = vrot.lane.b32.xlu0 %v4511, 48
        %v4999 = vpop.permute.xlu0 %4998
        %5000 = vrot.lane.b32.xlu0 %v4512, 48
        %v5001 = vpop.permute.xlu0 %5000
        %5002 = vrot.lane.b32.xlu0 %v4513, 48
        %v5003 = vpop.permute.xlu0 %5002
        %5004 = vrot.lane.b32.xlu0 %v4514, 48
        %v5005 = vpop.permute.xlu0 %5004
        %5006 = vrot.lane.b32.xlu0 %v4515, 48
        %v5007 = vpop.permute.xlu0 %5006
        %5008 = vrot.lane.b32.xlu0 %v4516, 48
        %v5009 = vpop.permute.xlu0 %5008
        %5010 = vrot.lane.b32.xlu0 %v4517, 48
        %v5011 = vpop.permute.xlu0 %5010
        %5012 = vrot.lane.b32.xlu0 %v4518, 48
        %v5013 = vpop.permute.xlu0 %5012
        %5014 = vrot.lane.b32.xlu0 %v4519, 48
        %v5015 = vpop.permute.xlu0 %5014
        %5016 = vrot.lane.b32.xlu0 %v4520, 48
        %v5017 = vpop.permute.xlu0 %5016
        %5018 = vrot.lane.b32.xlu0 %v4521, 48
        %v5019 = vpop.permute.xlu0 %5018
        %5020 = vrot.lane.b32.xlu0 %v4522, 48
        %v5021 = vpop.permute.xlu0 %5020
        %5022 = vrot.lane.b32.xlu0 %v4523, 48
        %v5023 = vpop.permute.xlu0 %5022
        %5024 = vrot.lane.b32.xlu0 %v4524, 48
        %v5025 = vpop.permute.xlu0 %5024
        %5026 = vrot.lane.b32.xlu0 %v4525, 48
        %v5027 = vpop.permute.xlu0 %5026
        %5028 = vrot.lane.b32.xlu0 %v4526, 48
        %v5029 = vpop.permute.xlu0 %5028
        %5030 = vrot.lane.b32.xlu0 %v4527, 48
        %v5031 = vpop.permute.xlu0 %5030
        %5032 = vrot.lane.b32.xlu0 %v4528, 48
        %v5033 = vpop.permute.xlu0 %5032
        %5034 = vrot.lane.b32.xlu0 %v4529, 48
        %v5035 = vpop.permute.xlu0 %5034
        %5036 = vrot.lane.b32.xlu0 %v4530, 48
        %v5037 = vpop.permute.xlu0 %5036
        %5038 = vrot.lane.b32.xlu0 %v4531, 48
        %v5039 = vpop.permute.xlu0 %5038
        %5040 = vrot.lane.b32.xlu0 %v4532, 48
        %v5041 = vpop.permute.xlu0 %5040
        %5042 = vrot.lane.b32.xlu0 %v4533, 48
        %v5043 = vpop.permute.xlu0 %5042
        %5044 = vrot.lane.b32.xlu0 %v4534, 48
        %v5045 = vpop.permute.xlu0 %5044
        %5046 = vrot.lane.b32.xlu0 %v4535, 48
        %v5047 = vpop.permute.xlu0 %5046
        %5112 = vrot.lane.b32.xlu0 %v4536, 64
        %v5113 = vpop.permute.xlu0 %5112
        %5114 = vrot.lane.b32.xlu0 %v4537, 64
        %v5115 = vpop.permute.xlu0 %5114
        %5116 = vrot.lane.b32.xlu0 %v4538, 64
        %v5117 = vpop.permute.xlu0 %5116
        %5118 = vrot.lane.b32.xlu0 %v4539, 64
        %v5119 = vpop.permute.xlu0 %5118
        %5120 = vrot.lane.b32.xlu0 %v4540, 64
        %v5121 = vpop.permute.xlu0 %5120
        %5122 = vrot.lane.b32.xlu0 %v4541, 64
        %v5123 = vpop.permute.xlu0 %5122
        %5124 = vrot.lane.b32.xlu0 %v4542, 64
        %v5125 = vpop.permute.xlu0 %5124
        %5126 = vrot.lane.b32.xlu0 %v4543, 64
        %v5127 = vpop.permute.xlu0 %5126
        %5128 = vrot.lane.b32.xlu0 %v4544, 64
        %v5129 = vpop.permute.xlu0 %5128
        %5130 = vrot.lane.b32.xlu0 %v4545, 64
        %v5131 = vpop.permute.xlu0 %5130
        %5132 = vrot.lane.b32.xlu0 %v4546, 64
        %v5133 = vpop.permute.xlu0 %5132
        %5134 = vrot.lane.b32.xlu0 %v4547, 64
        %v5135 = vpop.permute.xlu0 %5134
        %5136 = vrot.lane.b32.xlu0 %v4548, 64
        %v5137 = vpop.permute.xlu0 %5136
        %5138 = vrot.lane.b32.xlu0 %v4549, 64
        %v5139 = vpop.permute.xlu0 %5138
        %5140 = vrot.lane.b32.xlu0 %v4550, 64
        %v5141 = vpop.permute.xlu0 %5140
        %5142 = vrot.lane.b32.xlu0 %v4551, 64
        %v5143 = vpop.permute.xlu0 %5142
        %5144 = vrot.lane.b32.xlu0 %v4552, 64
        %v5145 = vpop.permute.xlu0 %5144
        %5146 = vrot.lane.b32.xlu0 %v4553, 64
        %v5147 = vpop.permute.xlu0 %5146
        %5148 = vrot.lane.b32.xlu0 %v4554, 64
        %v5149 = vpop.permute.xlu0 %5148
        %5150 = vrot.lane.b32.xlu0 %v4555, 64
        %v5151 = vpop.permute.xlu0 %5150
        %5152 = vrot.lane.b32.xlu0 %v4556, 64
        %v5153 = vpop.permute.xlu0 %5152
        %5154 = vrot.lane.b32.xlu0 %v4557, 64
        %v5155 = vpop.permute.xlu0 %5154
        %5156 = vrot.lane.b32.xlu0 %v4558, 64
        %v5157 = vpop.permute.xlu0 %5156
        %5158 = vrot.lane.b32.xlu0 %v4559, 64
        %v5159 = vpop.permute.xlu0 %5158
        %5160 = vrot.lane.b32.xlu0 %v4560, 64
        %v5161 = vpop.permute.xlu0 %5160
        %5162 = vrot.lane.b32.xlu0 %v4561, 64
        %v5163 = vpop.permute.xlu0 %5162
        %5164 = vrot.lane.b32.xlu0 %v4562, 64
        %v5165 = vpop.permute.xlu0 %5164
        %5166 = vrot.lane.b32.xlu0 %v4563, 64
        %v5167 = vpop.permute.xlu0 %5166
        %5168 = vrot.lane.b32.xlu0 %v4564, 64
        %v5169 = vpop.permute.xlu0 %5168
        %5170 = vrot.lane.b32.xlu0 %v4565, 64
        %v5171 = vpop.permute.xlu0 %5170
        %5172 = vrot.lane.b32.xlu0 %v4566, 64
        %v5173 = vpop.permute.xlu0 %5172
        %5174 = vrot.lane.b32.xlu0 %v4567, 64
        %v5175 = vpop.permute.xlu0 %5174
        %5240 = vrot.lane.b32.xlu0 %v4568, 80
        %v5241 = vpop.permute.xlu0 %5240
        %5242 = vrot.lane.b32.xlu0 %v4569, 80
        %v5243 = vpop.permute.xlu0 %5242
        %5244 = vrot.lane.b32.xlu0 %v4570, 80
        %v5245 = vpop.permute.xlu0 %5244
        %5246 = vrot.lane.b32.xlu0 %v4571, 80
        %v5247 = vpop.permute.xlu0 %5246
        %5248 = vrot.lane.b32.xlu0 %v4572, 80
        %v5249 = vpop.permute.xlu0 %5248
        %5250 = vrot.lane.b32.xlu0 %v4573, 80
        %v5251 = vpop.permute.xlu0 %5250
        %5252 = vrot.lane.b32.xlu0 %v4574, 80
        %v5253 = vpop.permute.xlu0 %5252
        %5254 = vrot.lane.b32.xlu0 %v4575, 80
        %v5255 = vpop.permute.xlu0 %5254
        %5256 = vrot.lane.b32.xlu0 %v4576, 80
        %v5257 = vpop.permute.xlu0 %5256
        %5258 = vrot.lane.b32.xlu0 %v4577, 80
        %v5259 = vpop.permute.xlu0 %5258
        %5260 = vrot.lane.b32.xlu0 %v4578, 80
        %v5261 = vpop.permute.xlu0 %5260
        %5262 = vrot.lane.b32.xlu0 %v4579, 80
        %v5263 = vpop.permute.xlu0 %5262
        %5264 = vrot.lane.b32.xlu0 %v4580, 80
        %v5265 = vpop.permute.xlu0 %5264
        %5266 = vrot.lane.b32.xlu0 %v4581, 80
        %v5267 = vpop.permute.xlu0 %5266
        %5268 = vrot.lane.b32.xlu0 %v4582, 80
        %v5269 = vpop.permute.xlu0 %5268
        %5270 = vrot.lane.b32.xlu0 %v4583, 80
        %v5271 = vpop.permute.xlu0 %5270
        %5272 = vrot.lane.b32.xlu0 %v4584, 80
        %v5273 = vpop.permute.xlu0 %5272
        %5274 = vrot.lane.b32.xlu0 %v4585, 80
        %v5275 = vpop.permute.xlu0 %5274
        %5276 = vrot.lane.b32.xlu0 %v4586, 80
        %v5277 = vpop.permute.xlu0 %5276
        %5278 = vrot.lane.b32.xlu0 %v4587, 80
        %v5279 = vpop.permute.xlu0 %5278
        %5280 = vrot.lane.b32.xlu0 %v4588, 80
        %v5281 = vpop.permute.xlu0 %5280
        %5282 = vrot.lane.b32.xlu0 %v4589, 80
        %v5283 = vpop.permute.xlu0 %5282
        %5284 = vrot.lane.b32.xlu0 %v4590, 80
        %v5285 = vpop.permute.xlu0 %5284
        %5286 = vrot.lane.b32.xlu0 %v4591, 80
        %v5287 = vpop.permute.xlu0 %5286
        %5288 = vrot.lane.b32.xlu0 %v4592, 80
        %v5289 = vpop.permute.xlu0 %5288
        %5290 = vrot.lane.b32.xlu0 %v4593, 80
        %v5291 = vpop.permute.xlu0 %5290
        %5292 = vrot.lane.b32.xlu0 %v4594, 80
        %v5293 = vpop.permute.xlu0 %5292
        %5294 = vrot.lane.b32.xlu0 %v4595, 80
        %v5295 = vpop.permute.xlu0 %5294
        %5296 = vrot.lane.b32.xlu0 %v4596, 80
        %v5297 = vpop.permute.xlu0 %5296
        %5298 = vrot.lane.b32.xlu0 %v4597, 80
        %v5299 = vpop.permute.xlu0 %5298
        %5300 = vrot.lane.b32.xlu0 %v4598, 80
        %v5301 = vpop.permute.xlu0 %5300
        %5302 = vrot.lane.b32.xlu0 %v4599, 80
        %v5303 = vpop.permute.xlu0 %5302
        %5368 = vrot.lane.b32.xlu0 %v4600, 96
        %v5369 = vpop.permute.xlu0 %5368
        %5370 = vrot.lane.b32.xlu0 %v4601, 96
        %v5371 = vpop.permute.xlu0 %5370
        %5372 = vrot.lane.b32.xlu0 %v4602, 96
        %v5373 = vpop.permute.xlu0 %5372
        %5374 = vrot.lane.b32.xlu0 %v4603, 96
        %v5375 = vpop.permute.xlu0 %5374
        %5376 = vrot.lane.b32.xlu0 %v4604, 96
        %v5377 = vpop.permute.xlu0 %5376
        %5378 = vrot.lane.b32.xlu0 %v4605, 96
        %v5379 = vpop.permute.xlu0 %5378
        %5380 = vrot.lane.b32.xlu0 %v4606, 96
        %v5381 = vpop.permute.xlu0 %5380
        %5382 = vrot.lane.b32.xlu0 %v4607, 96
        %v5383 = vpop.permute.xlu0 %5382
        %5384 = vrot.lane.b32.xlu0 %v4608, 96
        %v5385 = vpop.permute.xlu0 %5384
        %5386 = vrot.lane.b32.xlu0 %v4609, 96
        %v5387 = vpop.permute.xlu0 %5386
        %5388 = vrot.lane.b32.xlu0 %v4610, 96
        %v5389 = vpop.permute.xlu0 %5388
        %5390 = vrot.lane.b32.xlu0 %v4611, 96
        %v5391 = vpop.permute.xlu0 %5390
        %5392 = vrot.lane.b32.xlu0 %v4612, 96
        %v5393 = vpop.permute.xlu0 %5392
        %5394 = vrot.lane.b32.xlu0 %v4613, 96
        %v5395 = vpop.permute.xlu0 %5394
        %5396 = vrot.lane.b32.xlu0 %v4614, 96
        %v5397 = vpop.permute.xlu0 %5396
        %5398 = vrot.lane.b32.xlu0 %v4615, 96
        %v5399 = vpop.permute.xlu0 %5398
        %5400 = vrot.lane.b32.xlu0 %v4616, 96
        %v5401 = vpop.permute.xlu0 %5400
        %5402 = vrot.lane.b32.xlu0 %v4617, 96
        %v5403 = vpop.permute.xlu0 %5402
        %5404 = vrot.lane.b32.xlu0 %v4618, 96
        %v5405 = vpop.permute.xlu0 %5404
        %5406 = vrot.lane.b32.xlu0 %v4619, 96
        %v5407 = vpop.permute.xlu0 %5406
        %5408 = vrot.lane.b32.xlu0 %v4620, 96
        %v5409 = vpop.permute.xlu0 %5408
        %5410 = vrot.lane.b32.xlu0 %v4621, 96
        %v5411 = vpop.permute.xlu0 %5410
        %5412 = vrot.lane.b32.xlu0 %v4622, 96
        %v5413 = vpop.permute.xlu0 %5412
        %5414 = vrot.lane.b32.xlu0 %v4623, 96
        %v5415 = vpop.permute.xlu0 %5414
        %5416 = vrot.lane.b32.xlu0 %v4624, 96
        %v5417 = vpop.permute.xlu0 %5416
        %5418 = vrot.lane.b32.xlu0 %v4625, 96
        %v5419 = vpop.permute.xlu0 %5418
        %5420 = vrot.lane.b32.xlu0 %v4626, 96
        %v5421 = vpop.permute.xlu0 %5420
        %5422 = vrot.lane.b32.xlu0 %v4627, 96
        %v5423 = vpop.permute.xlu0 %5422
        %5424 = vrot.lane.b32.xlu0 %v4628, 96
        %v5425 = vpop.permute.xlu0 %5424
        %5426 = vrot.lane.b32.xlu0 %v4629, 96
        %v5427 = vpop.permute.xlu0 %5426
        %5428 = vrot.lane.b32.xlu0 %v4630, 96
        %v5429 = vpop.permute.xlu0 %5428
        %5430 = vrot.lane.b32.xlu0 %v4631, 96
        %v5431 = vpop.permute.xlu0 %5430
        %5496 = vrot.lane.b32.xlu0 %v4632, 112
        %v5497 = vpop.permute.xlu0 %5496
        %5498 = vrot.lane.b32.xlu0 %v4633, 112
        %v5499 = vpop.permute.xlu0 %5498
        %5500 = vrot.lane.b32.xlu0 %v4634, 112
        %v5501 = vpop.permute.xlu0 %5500
        %5502 = vrot.lane.b32.xlu0 %v4635, 112
        %v5503 = vpop.permute.xlu0 %5502
        %5504 = vrot.lane.b32.xlu0 %v4636, 112
        %v5505 = vpop.permute.xlu0 %5504
        %5506 = vrot.lane.b32.xlu0 %v4637, 112
        %v5507 = vpop.permute.xlu0 %5506
        %5508 = vrot.lane.b32.xlu0 %v4638, 112
        %v5509 = vpop.permute.xlu0 %5508
        %5510 = vrot.lane.b32.xlu0 %v4639, 112
        %v5511 = vpop.permute.xlu0 %5510
        %5512 = vrot.lane.b32.xlu0 %v4640, 112
        %v5513 = vpop.permute.xlu0 %5512
        %5514 = vrot.lane.b32.xlu0 %v4641, 112
        %v5515 = vpop.permute.xlu0 %5514
        %5516 = vrot.lane.b32.xlu0 %v4642, 112
        %v5517 = vpop.permute.xlu0 %5516
        %5518 = vrot.lane.b32.xlu0 %v4643, 112
        %v5519 = vpop.permute.xlu0 %5518
        %5520 = vrot.lane.b32.xlu0 %v4644, 112
        %v5521 = vpop.permute.xlu0 %5520
        %5522 = vrot.lane.b32.xlu0 %v4645, 112
        %v5523 = vpop.permute.xlu0 %5522
        %5524 = vrot.lane.b32.xlu0 %v4646, 112
        %v5525 = vpop.permute.xlu0 %5524
        %5526 = vrot.lane.b32.xlu0 %v4647, 112
        %v5527 = vpop.permute.xlu0 %5526
        %5528 = vrot.lane.b32.xlu0 %v4648, 112
        %v5529 = vpop.permute.xlu0 %5528
        %5530 = vrot.lane.b32.xlu0 %v4649, 112
        %v5531 = vpop.permute.xlu0 %5530
        %5532 = vrot.lane.b32.xlu0 %v4650, 112
        %v5533 = vpop.permute.xlu0 %5532
        %5534 = vrot.lane.b32.xlu0 %v4651, 112
        %v5535 = vpop.permute.xlu0 %5534
        %5536 = vrot.lane.b32.xlu0 %v4652, 112
        %v5537 = vpop.permute.xlu0 %5536
        %5538 = vrot.lane.b32.xlu0 %v4653, 112
        %v5539 = vpop.permute.xlu0 %5538
        %5540 = vrot.lane.b32.xlu0 %v4654, 112
        %v5541 = vpop.permute.xlu0 %5540
        %5542 = vrot.lane.b32.xlu0 %v4655, 112
        %v5543 = vpop.permute.xlu0 %5542
        %5544 = vrot.lane.b32.xlu0 %v4656, 112
        %v5545 = vpop.permute.xlu0 %5544
        %5546 = vrot.lane.b32.xlu0 %v4657, 112
        %v5547 = vpop.permute.xlu0 %5546
        %5548 = vrot.lane.b32.xlu0 %v4658, 112
        %v5549 = vpop.permute.xlu0 %5548
        %5550 = vrot.lane.b32.xlu0 %v4659, 112
        %v5551 = vpop.permute.xlu0 %5550
        %5552 = vrot.lane.b32.xlu0 %v4660, 112
        %v5553 = vpop.permute.xlu0 %5552
        %5554 = vrot.lane.b32.xlu0 %v4661, 112
        %v5555 = vpop.permute.xlu0 %5554
        %5556 = vrot.lane.b32.xlu0 %v4662, 112
        %v5557 = vpop.permute.xlu0 %5556
        %5558 = vrot.lane.b32.xlu0 %v4663, 112
        %v5559 = vpop.permute.xlu0 %5558
        %v5592 = vsel %vm351, %v4408, %v4729
        %v5593 = vsel %vm351, %v4409, %v4731
        %v5594 = vsel %vm351, %v4410, %v4733
        %v5595 = vsel %vm351, %v4411, %v4735
        %v5596 = vsel %vm351, %v4412, %v4737
        %v5597 = vsel %vm351, %v4413, %v4739
        %v5598 = vsel %vm351, %v4414, %v4741
        %v5599 = vsel %vm351, %v4415, %v4743
        %v5600 = vsel %vm351, %v4416, %v4745
        %v5601 = vsel %vm351, %v4417, %v4747
        %v5602 = vsel %vm351, %v4418, %v4749
        %v5603 = vsel %vm351, %v4419, %v4751
        %v5604 = vsel %vm351, %v4420, %v4753
        %v5605 = vsel %vm351, %v4421, %v4755
        %v5606 = vsel %vm351, %v4422, %v4757
        %v5607 = vsel %vm351, %v4423, %v4759
        %v5608 = vsel %vm351, %v4424, %v4761
        %v5609 = vsel %vm351, %v4425, %v4763
        %v5610 = vsel %vm351, %v4426, %v4765
        %v5611 = vsel %vm351, %v4427, %v4767
        %v5612 = vsel %vm351, %v4428, %v4769
        %v5613 = vsel %vm351, %v4429, %v4771
        %v5614 = vsel %vm351, %v4430, %v4773
        %v5615 = vsel %vm351, %v4431, %v4775
        %v5616 = vsel %vm351, %v4432, %v4777
        %v5617 = vsel %vm351, %v4433, %v4779
        %v5618 = vsel %vm351, %v4434, %v4781
        %v5619 = vsel %vm351, %v4435, %v4783
        %v5620 = vsel %vm351, %v4436, %v4785
        %v5621 = vsel %vm351, %v4437, %v4787
        %v5622 = vsel %vm351, %v4438, %v4789
        %v5623 = vsel %vm351, %v4439, %v4791
        %v5624 = vsel %vm1708, %v5592, %v4857
        %v5625 = vsel %vm1708, %v5593, %v4859
        %v5626 = vsel %vm1708, %v5594, %v4861
        %v5627 = vsel %vm1708, %v5595, %v4863
        %v5628 = vsel %vm1708, %v5596, %v4865
        %v5629 = vsel %vm1708, %v5597, %v4867
        %v5630 = vsel %vm1708, %v5598, %v4869
        %v5631 = vsel %vm1708, %v5599, %v4871
        %v5632 = vsel %vm1708, %v5600, %v4873
        %v5633 = vsel %vm1708, %v5601, %v4875
        %v5634 = vsel %vm1708, %v5602, %v4877
        %v5635 = vsel %vm1708, %v5603, %v4879
        %v5636 = vsel %vm1708, %v5604, %v4881
        %v5637 = vsel %vm1708, %v5605, %v4883
        %v5638 = vsel %vm1708, %v5606, %v4885
        %v5639 = vsel %vm1708, %v5607, %v4887
        %v5640 = vsel %vm1708, %v5608, %v4889
        %v5641 = vsel %vm1708, %v5609, %v4891
        %v5642 = vsel %vm1708, %v5610, %v4893
        %v5643 = vsel %vm1708, %v5611, %v4895
        %v5644 = vsel %vm1708, %v5612, %v4897
        %v5645 = vsel %vm1708, %v5613, %v4899
        %v5646 = vsel %vm1708, %v5614, %v4901
        %v5647 = vsel %vm1708, %v5615, %v4903
        %v5648 = vsel %vm1708, %v5616, %v4905
        %v5649 = vsel %vm1708, %v5617, %v4907
        %v5650 = vsel %vm1708, %v5618, %v4909
        %v5651 = vsel %vm1708, %v5619, %v4911
        %v5652 = vsel %vm1708, %v5620, %v4913
        %v5653 = vsel %vm1708, %v5621, %v4915
        %v5654 = vsel %vm1708, %v5622, %v4917
        %v5655 = vsel %vm1708, %v5623, %v4919
        %v5656 = vsel %vm1741, %v5624, %v4985
        %v5657 = vsel %vm1741, %v5625, %v4987
        %v5658 = vsel %vm1741, %v5626, %v4989
        %v5659 = vsel %vm1741, %v5627, %v4991
        %v5660 = vsel %vm1741, %v5628, %v4993
        %v5661 = vsel %vm1741, %v5629, %v4995
        %v5662 = vsel %vm1741, %v5630, %v4997
        %v5663 = vsel %vm1741, %v5631, %v4999
        %v5664 = vsel %vm1741, %v5632, %v5001
        %v5665 = vsel %vm1741, %v5633, %v5003
        %v5666 = vsel %vm1741, %v5634, %v5005
        %v5667 = vsel %vm1741, %v5635, %v5007
        %v5668 = vsel %vm1741, %v5636, %v5009
        %v5669 = vsel %vm1741, %v5637, %v5011
        %v5670 = vsel %vm1741, %v5638, %v5013
        %v5671 = vsel %vm1741, %v5639, %v5015
        %v5672 = vsel %vm1741, %v5640, %v5017
        %v5673 = vsel %vm1741, %v5641, %v5019
        %v5674 = vsel %vm1741, %v5642, %v5021
        %v5675 = vsel %vm1741, %v5643, %v5023
        %v5676 = vsel %vm1741, %v5644, %v5025
        %v5677 = vsel %vm1741, %v5645, %v5027
        %v5678 = vsel %vm1741, %v5646, %v5029
        %v5679 = vsel %vm1741, %v5647, %v5031
        %v5680 = vsel %vm1741, %v5648, %v5033
        %v5681 = vsel %vm1741, %v5649, %v5035
        %v5682 = vsel %vm1741, %v5650, %v5037
        %v5683 = vsel %vm1741, %v5651, %v5039
        %v5684 = vsel %vm1741, %v5652, %v5041
        %v5685 = vsel %vm1741, %v5653, %v5043
        %v5686 = vsel %vm1741, %v5654, %v5045
        %v5687 = vsel %vm1741, %v5655, %v5047
        %v5688 = vsel %vm1774, %v5656, %v5113
        %v5689 = vsel %vm1774, %v5657, %v5115
        %v5690 = vsel %vm1774, %v5658, %v5117
        %v5691 = vsel %vm1774, %v5659, %v5119
        %v5692 = vsel %vm1774, %v5660, %v5121
        %v5693 = vsel %vm1774, %v5661, %v5123
        %v5694 = vsel %vm1774, %v5662, %v5125
        %v5695 = vsel %vm1774, %v5663, %v5127
        %v5696 = vsel %vm1774, %v5664, %v5129
        %v5697 = vsel %vm1774, %v5665, %v5131
        %v5698 = vsel %vm1774, %v5666, %v5133
        %v5699 = vsel %vm1774, %v5667, %v5135
        %v5700 = vsel %vm1774, %v5668, %v5137
        %v5701 = vsel %vm1774, %v5669, %v5139
        %v5702 = vsel %vm1774, %v5670, %v5141
        %v5703 = vsel %vm1774, %v5671, %v5143
        %v5704 = vsel %vm1774, %v5672, %v5145
        %v5705 = vsel %vm1774, %v5673, %v5147
        %v5706 = vsel %vm1774, %v5674, %v5149
        %v5707 = vsel %vm1774, %v5675, %v5151
        %v5708 = vsel %vm1774, %v5676, %v5153
        %v5709 = vsel %vm1774, %v5677, %v5155
        %v5710 = vsel %vm1774, %v5678, %v5157
        %v5711 = vsel %vm1774, %v5679, %v5159
        %v5712 = vsel %vm1774, %v5680, %v5161
        %v5713 = vsel %vm1774, %v5681, %v5163
        %v5714 = vsel %vm1774, %v5682, %v5165
        %v5715 = vsel %vm1774, %v5683, %v5167
        %v5716 = vsel %vm1774, %v5684, %v5169
        %v5717 = vsel %vm1774, %v5685, %v5171
        %v5718 = vsel %vm1774, %v5686, %v5173
        %v5719 = vsel %vm1774, %v5687, %v5175
        %v5720 = vsel %vm1807, %v5688, %v5241
        %v5721 = vsel %vm1807, %v5689, %v5243
        %v5722 = vsel %vm1807, %v5690, %v5245
        %v5723 = vsel %vm1807, %v5691, %v5247
        %v5724 = vsel %vm1807, %v5692, %v5249
        %v5725 = vsel %vm1807, %v5693, %v5251
        %v5726 = vsel %vm1807, %v5694, %v5253
        %v5727 = vsel %vm1807, %v5695, %v5255
        %v5728 = vsel %vm1807, %v5696, %v5257
        %v5729 = vsel %vm1807, %v5697, %v5259
        %v5730 = vsel %vm1807, %v5698, %v5261
        %v5731 = vsel %vm1807, %v5699, %v5263
        %v5732 = vsel %vm1807, %v5700, %v5265
        %v5733 = vsel %vm1807, %v5701, %v5267
        %v5734 = vsel %vm1807, %v5702, %v5269
        %v5735 = vsel %vm1807, %v5703, %v5271
        %v5736 = vsel %vm1807, %v5704, %v5273
        %v5737 = vsel %vm1807, %v5705, %v5275
        %v5738 = vsel %vm1807, %v5706, %v5277
        %v5739 = vsel %vm1807, %v5707, %v5279
        %v5740 = vsel %vm1807, %v5708, %v5281
        %v5741 = vsel %vm1807, %v5709, %v5283
        %v5742 = vsel %vm1807, %v5710, %v5285
        %v5743 = vsel %vm1807, %v5711, %v5287
        %v5744 = vsel %vm1807, %v5712, %v5289
        %v5745 = vsel %vm1807, %v5713, %v5291
        %v5746 = vsel %vm1807, %v5714, %v5293
        %v5747 = vsel %vm1807, %v5715, %v5295
        %v5748 = vsel %vm1807, %v5716, %v5297
        %v5749 = vsel %vm1807, %v5717, %v5299
        %v5750 = vsel %vm1807, %v5718, %v5301
        %v5751 = vsel %vm1807, %v5719, %v5303
        %v5752 = vsel %vm1840, %v5720, %v5369
        %v5753 = vsel %vm1840, %v5721, %v5371
        %v5754 = vsel %vm1840, %v5722, %v5373
        %v5755 = vsel %vm1840, %v5723, %v5375
        %v5756 = vsel %vm1840, %v5724, %v5377
        %v5757 = vsel %vm1840, %v5725, %v5379
        %v5758 = vsel %vm1840, %v5726, %v5381
        %v5759 = vsel %vm1840, %v5727, %v5383
        %v5760 = vsel %vm1840, %v5728, %v5385
        %v5761 = vsel %vm1840, %v5729, %v5387
        %v5762 = vsel %vm1840, %v5730, %v5389
        %v5763 = vsel %vm1840, %v5731, %v5391
        %v5764 = vsel %vm1840, %v5732, %v5393
        %v5765 = vsel %vm1840, %v5733, %v5395
        %v5766 = vsel %vm1840, %v5734, %v5397
        %v5767 = vsel %vm1840, %v5735, %v5399
        %v5768 = vsel %vm1840, %v5736, %v5401
        %v5769 = vsel %vm1840, %v5737, %v5403
        %v5770 = vsel %vm1840, %v5738, %v5405
        %v5771 = vsel %vm1840, %v5739, %v5407
        %v5772 = vsel %vm1840, %v5740, %v5409
        %v5773 = vsel %vm1840, %v5741, %v5411
        %v5774 = vsel %vm1840, %v5742, %v5413
        %v5775 = vsel %vm1840, %v5743, %v5415
        %v5776 = vsel %vm1840, %v5744, %v5417
        %v5777 = vsel %vm1840, %v5745, %v5419
        %v5778 = vsel %vm1840, %v5746, %v5421
        %v5779 = vsel %vm1840, %v5747, %v5423
        %v5780 = vsel %vm1840, %v5748, %v5425
        %v5781 = vsel %vm1840, %v5749, %v5427
        %v5782 = vsel %vm1840, %v5750, %v5429
        %v5783 = vsel %vm1840, %v5751, %v5431
        %v5784 = vsel %vm1873, %v5752, %v5497
        %v5785 = vsel %vm1873, %v5753, %v5499
        %v5786 = vsel %vm1873, %v5754, %v5501
        %v5787 = vsel %vm1873, %v5755, %v5503
        %v5788 = vsel %vm1873, %v5756, %v5505
        %v5789 = vsel %vm1873, %v5757, %v5507
        %v5790 = vsel %vm1873, %v5758, %v5509
        %v5791 = vsel %vm1873, %v5759, %v5511
        %v5792 = vsel %vm1873, %v5760, %v5513
        %v5793 = vsel %vm1873, %v5761, %v5515
        %v5794 = vsel %vm1873, %v5762, %v5517
        %v5795 = vsel %vm1873, %v5763, %v5519
        %v5796 = vsel %vm1873, %v5764, %v5521
        %v5797 = vsel %vm1873, %v5765, %v5523
        %v5798 = vsel %vm1873, %v5766, %v5525
        %v5799 = vsel %vm1873, %v5767, %v5527
        %v5800 = vsel %vm1873, %v5768, %v5529
        %v5801 = vsel %vm1873, %v5769, %v5531
        %v5802 = vsel %vm1873, %v5770, %v5533
        %v5803 = vsel %vm1873, %v5771, %v5535
        %v5804 = vsel %vm1873, %v5772, %v5537
        %v5805 = vsel %vm1873, %v5773, %v5539
        %v5806 = vsel %vm1873, %v5774, %v5541
        %v5807 = vsel %vm1873, %v5775, %v5543
        %v5808 = vsel %vm1873, %v5776, %v5545
        %v5809 = vsel %vm1873, %v5777, %v5547
        %v5810 = vsel %vm1873, %v5778, %v5549
        %v5811 = vsel %vm1873, %v5779, %v5551
        %v5812 = vsel %vm1873, %v5780, %v5553
        %v5813 = vsel %vm1873, %v5781, %v5555
        %v5814 = vsel %vm1873, %v5782, %v5557
        %v5815 = vsel %vm1873, %v5783, %v5559
        %v5817 = vlaneseq
        %v5818 = vshrl.u32 %v5817, 7
        %v5819 = vsub.s32 0, %v5818
        %v5820 = vrot.slane %v4375, %v5819
        %v5823 = vsel %vm351, %v4664, 0
        %v5826 = vsel %vm351, %v4665, 0
        %v5829 = vsel %vm351, %v4666, 0
        %v5832 = vsel %vm351, %v4667, 0
        %v5835 = vsel %vm351, %v4668, 0
        %v5838 = vsel %vm351, %v4669, 0
        %v5841 = vsel %vm351, %v4670, 0
        %v5844 = vsel %vm351, %v4671, 0
        %v5847 = vsel %vm351, %v4672, 0
        %v5850 = vsel %vm351, %v4673, 0
        %v5853 = vsel %vm351, %v4674, 0
        %v5856 = vsel %vm351, %v4675, 0
        %v5859 = vsel %vm351, %v4676, 0
        %v5862 = vsel %vm351, %v4677, 0
        %v5865 = vsel %vm351, %v4678, 0
        %v5868 = vsel %vm351, %v4679, 0
        %v5871 = vsel %vm351, %v4680, 0
        %v5874 = vsel %vm351, %v4681, 0
        %v5877 = vsel %vm351, %v4682, 0
        %v5880 = vsel %vm351, %v4683, 0
        %v5883 = vsel %vm351, %v4684, 0
        %v5886 = vsel %vm351, %v4685, 0
        %v5889 = vsel %vm351, %v4686, 0
        %v5892 = vsel %vm351, %v4687, 0
        %v5895 = vsel %vm351, %v4688, 0
        %v5898 = vsel %vm351, %v4689, 0
        %v5901 = vsel %vm351, %v4690, 0
        %v5904 = vsel %vm351, %v4691, 0
        %v5907 = vsel %vm351, %v4692, 0
        %v5910 = vsel %vm351, %v4693, 0
        %v5913 = vsel %vm351, %v4694, 0
        %v5916 = vsel %vm351, %v4695, 0
        %5918 = vmatprep.subr.mxu0 0.0
        %5919 = vmatpush1.msra.mxu0 %v4356
        %5920 = vmatprep.subr.mxu0 0.0
        %5921 = vmatpush1.msra.mxu0 %v4357
        %5922 = vmatprep.subr.mxu0 0.0
        %5923 = vmatpush1.msra.mxu0 %v4358
        %5924 = vmatprep.subr.mxu0 0.0
        %5925 = vmatpush1.msra.mxu0 %v4359
        %5926 = vmatprep.subr.mxu0 0.0
        %5927 = vmatpush1.msra.mxu0 %v4360
        %5928 = vmatprep.subr.mxu0 0.0
        %5929 = vmatpush1.msra.mxu0 %v4361
        %5930 = vmatprep.subr.mxu0 0.0
        %5931 = vmatpush1.msra.mxu0 %v4362
        %5932 = vmatprep.subr.mxu0 0.0
        %5933 = vmatpush1.msra.mxu0 %v4363
        %5934 = vmatprep.subr.mxu0 0.0
        %5935 = vmatpush1.msra.mxu0 %v4364
        %5936 = vmatprep.subr.mxu0 0.0
        %5937 = vmatpush1.msra.mxu0 %v4365
        %5938 = vmatprep.subr.mxu0 0.0
        %5939 = vmatpush1.msra.mxu0 %v4366
        %5940 = vmatprep.subr.mxu0 0.0
        %5941 = vmatpush1.msra.mxu0 %v4367
        %5942 = vmatprep.subr.mxu0 0.0
        %5943 = vmatpush1.msra.mxu0 %v4368
        %5944 = vmatprep.subr.mxu0 0.0
        %5945 = vmatpush1.msra.mxu0 %v4369
        %5946 = vmatprep.subr.mxu0 0.0
        %5947 = vmatpush1.msra.mxu0 %v4370
        %5948 = vmatprep.subr.mxu0 0.0
        %5949 = vmatpush1.msra.mxu0 %v4371
        %5950 = vmatprep.subr.mxu0 0.0
        %5951 = vmatpush1.msra.mxu0 %v4372
        %5952 = vmatprep.subr.mxu0 0.0
        %5953 = vmatpush1.msra.mxu0 %v4373
        %5954 = vmatprep.subr.mxu0 0.0
        %5955 = vmatpush1.msra.mxu0 0.0
        %5956 = vmatprep.subr.mxu0 0.0
        %5957 = vmatpush1.msra.mxu0 0.0
        %5958 = vmatprep.subr.mxu0 0.0
        %5959 = vmatpush1.msra.mxu0 0.0
        %5960 = vmatprep.subr.mxu0 0.0
        %5961 = vmatpush1.msra.mxu0 0.0
        %5962 = vmatprep.subr.mxu0 0.0
        %5963 = vmatpush1.msra.mxu0 0.0
        %5964 = vmatprep.subr.mxu0 0.0
        %5965 = vmatpush1.msra.mxu0 0.0
        %5966 = vmatprep.subr.mxu0 0.0
        %5967 = vmatpush1.msra.mxu0 0.0
        %5968 = vmatprep.subr.mxu0 0.0
        %5969 = vmatpush1.msra.mxu0 0.0
        %5970 = vmatprep.subr.mxu0 0.0
        %5971 = vmatpush1.msra.mxu0 0.0
        %5972 = vmatprep.subr.mxu0 0.0
        %5973 = vmatpush1.msra.mxu0 0.0
        %5974 = vmatprep.subr.mxu0 0.0
        %5975 = vmatpush1.msra.mxu0 0.0
        %5976 = vmatprep.subr.mxu0 0.0
        %5977 = vmatpush1.msra.mxu0 0.0
        %5978 = vmatprep.subr.mxu0 0.0
        %5979 = vmatpush1.msra.mxu0 0.0
        %5980 = vmatprep.subr.mxu0 0.0
        %5981 = vmatpush1.msra.mxu0 0.0
        %5982 = vmatprep.mubr.f32.mxu0 %v5823
        %5983 = vmatmul.mubr.f32.gmra.mrb[0].mxu0 %v5784
        %v5984 = vpop.f32.mrb[0].mxu0
        %v5985 = vadd.f32 %v5820, %v5984
        %v5986 = vpop.f32.mrb[0].mxu0
        %5987 = vmatprep.mubr.f32.mxu0 %v5826
        %5988 = vmatmul.mubr.f32.gmra.mrb[0].mxu0 %v5785
        %v5989 = vpop.f32.mrb[0].mxu0
        %v5990 = vadd.f32 %v5820, %v5989
        %v5991 = vpop.f32.mrb[0].mxu0
        %5992 = vmatprep.mubr.f32.mxu0 %v5829
        %5993 = vmatmul.mubr.f32.gmra.mrb[0].mxu0 %v5786
        %v5994 = vpop.f32.mrb[0].mxu0
        %v5995 = vadd.f32 %v5820, %v5994
        %v5996 = vpop.f32.mrb[0].mxu0
        %5997 = vmatprep.mubr.f32.mxu0 %v5832
        %5998 = vmatmul.mubr.f32.gmra.mrb[0].mxu0 %v5787
        %v5999 = vpop.f32.mrb[0].mxu0
        %v6000 = vadd.f32 %v5820, %v5999
        %v6001 = vpop.f32.mrb[0].mxu0
        %6002 = vmatprep.mubr.f32.mxu0 %v5835
        %6003 = vmatmul.mubr.f32.gmra.mrb[0].mxu0 %v5788
        %v6004 = vpop.f32.mrb[0].mxu0
        %v6005 = vadd.f32 %v5820, %v6004
        %v6006 = vpop.f32.mrb[0].mxu0
        %6007 = vmatprep.mubr.f32.mxu0 %v5838
        %6008 = vmatmul.mubr.f32.gmra.mrb[0].mxu0 %v5789
        %v6009 = vpop.f32.mrb[0].mxu0
        %v6010 = vadd.f32 %v5820, %v6009
        %v6011 = vpop.f32.mrb[0].mxu0
        %6012 = vmatprep.mubr.f32.mxu0 %v5841
        %6013 = vmatmul.mubr.f32.gmra.mrb[0].mxu0 %v5790
        %v6014 = vpop.f32.mrb[0].mxu0
        %v6015 = vadd.f32 %v5820, %v6014
        %v6016 = vpop.f32.mrb[0].mxu0
        %6017 = vmatprep.mubr.f32.mxu0 %v5844
        %6018 = vmatmul.mubr.f32.gmra.mrb[0].mxu0 %v5791
        %v6019 = vpop.f32.mrb[0].mxu0
        %v6020 = vadd.f32 %v5820, %v6019
        %v6021 = vpop.f32.mrb[0].mxu0
        %6022 = vmatprep.mubr.f32.mxu0 %v5847
        %6023 = vmatmul.mubr.f32.gmra.mrb[0].mxu0 %v5792
        %v6024 = vpop.f32.mrb[0].mxu0
        %v6025 = vadd.f32 %v5820, %v6024
        %v6026 = vpop.f32.mrb[0].mxu0
        %6027 = vmatprep.mubr.f32.mxu0 %v5850
        %6028 = vmatmul.mubr.f32.gmra.mrb[0].mxu0 %v5793
        %v6029 = vpop.f32.mrb[0].mxu0
        %v6030 = vadd.f32 %v5820, %v6029
        %v6031 = vpop.f32.mrb[0].mxu0
        %6032 = vmatprep.mubr.f32.mxu0 %v5853
        %6033 = vmatmul.mubr.f32.gmra.mrb[0].mxu0 %v5794
        %v6034 = vpop.f32.mrb[0].mxu0
        %v6035 = vadd.f32 %v5820, %v6034
        %v6036 = vpop.f32.mrb[0].mxu0
        %6037 = vmatprep.mubr.f32.mxu0 %v5856
        %6038 = vmatmul.mubr.f32.gmra.mrb[0].mxu0 %v5795
        %v6039 = vpop.f32.mrb[0].mxu0
        %v6040 = vadd.f32 %v5820, %v6039
        %v6041 = vpop.f32.mrb[0].mxu0
        %6042 = vmatprep.mubr.f32.mxu0 %v5859
        %6043 = vmatmul.mubr.f32.gmra.mrb[0].mxu0 %v5796
        %v6044 = vpop.f32.mrb[0].mxu0
        %v6045 = vadd.f32 %v5820, %v6044
        %v6046 = vpop.f32.mrb[0].mxu0
        %6047 = vmatprep.mubr.f32.mxu0 %v5862
        %6048 = vmatmul.mubr.f32.gmra.mrb[0].mxu0 %v5797
        %v6049 = vpop.f32.mrb[0].mxu0
        %v6050 = vadd.f32 %v5820, %v6049
        %v6051 = vpop.f32.mrb[0].mxu0
        %6052 = vmatprep.mubr.f32.mxu0 %v5865
        %6053 = vmatmul.mubr.f32.gmra.mrb[0].mxu0 %v5798
        %v6054 = vpop.f32.mrb[0].mxu0
        %v6055 = vadd.f32 %v5820, %v6054
        %v6056 = vpop.f32.mrb[0].mxu0
        %6057 = vmatprep.mubr.f32.mxu0 %v5868
        %6058 = vmatmul.mubr.f32.gmra.mrb[0].mxu0 %v5799
        %v6059 = vpop.f32.mrb[0].mxu0
        %v6060 = vadd.f32 %v5820, %v6059
        %v6061 = vpop.f32.mrb[0].mxu0
        %6062 = vmatprep.mubr.f32.mxu0 %v5871
        %6063 = vmatmul.mubr.f32.gmra.mrb[0].mxu0 %v5800
        %v6064 = vpop.f32.mrb[0].mxu0
        %v6065 = vadd.f32 %v5820, %v6064
        %v6066 = vpop.f32.mrb[0].mxu0
        %6067 = vmatprep.mubr.f32.mxu0 %v5874
        %6068 = vmatmul.mubr.f32.gmra.mrb[0].mxu0 %v5801
        %v6069 = vpop.f32.mrb[0].mxu0
        %v6070 = vadd.f32 %v5820, %v6069
        %v6071 = vpop.f32.mrb[0].mxu0
        %6072 = vmatprep.mubr.f32.mxu0 %v5877
        %6073 = vmatmul.mubr.f32.gmra.mrb[0].mxu0 %v5802
        %v6074 = vpop.f32.mrb[0].mxu0
        %v6075 = vadd.f32 %v5820, %v6074
        %v6076 = vpop.f32.mrb[0].mxu0
        %6077 = vmatprep.mubr.f32.mxu0 %v5880
        %6078 = vmatmul.mubr.f32.gmra.mrb[0].mxu0 %v5803
        %v6079 = vpop.f32.mrb[0].mxu0
        %v6080 = vadd.f32 %v5820, %v6079
        %v6081 = vpop.f32.mrb[0].mxu0
        %6082 = vmatprep.mubr.f32.mxu0 %v5883
        %6083 = vmatmul.mubr.f32.gmra.mrb[0].mxu0 %v5804
        %v6084 = vpop.f32.mrb[0].mxu0
        %v6085 = vadd.f32 %v5820, %v6084
        %v6086 = vpop.f32.mrb[0].mxu0
        %6087 = vmatprep.mubr.f32.mxu0 %v5886
        %6088 = vmatmul.mubr.f32.gmra.mrb[0].mxu0 %v5805
        %v6089 = vpop.f32.mrb[0].mxu0
        %v6090 = vadd.f32 %v5820, %v6089
        %v6091 = vpop.f32.mrb[0].mxu0
        %6092 = vmatprep.mubr.f32.mxu0 %v5889
        %6093 = vmatmul.mubr.f32.gmra.mrb[0].mxu0 %v5806
        %v6094 = vpop.f32.mrb[0].mxu0
        %v6095 = vadd.f32 %v5820, %v6094
        %v6096 = vpop.f32.mrb[0].mxu0
        %6097 = vmatprep.mubr.f32.mxu0 %v5892
        %6098 = vmatmul.mubr.f32.gmra.mrb[0].mxu0 %v5807
        %v6099 = vpop.f32.mrb[0].mxu0
        %v6100 = vadd.f32 %v5820, %v6099
        %v6101 = vpop.f32.mrb[0].mxu0
        %6102 = vmatprep.mubr.f32.mxu0 %v5895
        %6103 = vmatmul.mubr.f32.gmra.mrb[0].mxu0 %v5808
        %v6104 = vpop.f32.mrb[0].mxu0
        %v6105 = vadd.f32 %v5820, %v6104
        %v6106 = vpop.f32.mrb[0].mxu0
        %6107 = vmatprep.mubr.f32.mxu0 %v5898
        %6108 = vmatmul.mubr.f32.gmra.mrb[0].mxu0 %v5809
        %v6109 = vpop.f32.mrb[0].mxu0
        %v6110 = vadd.f32 %v5820, %v6109
        %v6111 = vpop.f32.mrb[0].mxu0
        %6112 = vmatprep.mubr.f32.mxu0 %v5901
        %6113 = vmatmul.mubr.f32.gmra.mrb[0].mxu0 %v5810
        %v6114 = vpop.f32.mrb[0].mxu0
        %v6115 = vadd.f32 %v5820, %v6114
        %v6116 = vpop.f32.mrb[0].mxu0
        %6117 = vmatprep.mubr.f32.mxu0 %v5904
        %6118 = vmatmul.mubr.f32.gmra.mrb[0].mxu0 %v5811
        %v6119 = vpop.f32.mrb[0].mxu0
        %v6120 = vadd.f32 %v5820, %v6119
        %v6121 = vpop.f32.mrb[0].mxu0
        %6122 = vmatprep.mubr.f32.mxu0 %v5907
        %6123 = vmatmul.mubr.f32.gmra.mrb[0].mxu0 %v5812
        %v6124 = vpop.f32.mrb[0].mxu0
        %v6125 = vadd.f32 %v5820, %v6124
        %v6126 = vpop.f32.mrb[0].mxu0
        %6127 = vmatprep.mubr.f32.mxu0 %v5910
        %6128 = vmatmul.mubr.f32.gmra.mrb[0].mxu0 %v5813
        %v6129 = vpop.f32.mrb[0].mxu0
        %v6130 = vadd.f32 %v5820, %v6129
        %v6131 = vpop.f32.mrb[0].mxu0
        %6132 = vmatprep.mubr.f32.mxu0 %v5913
        %6133 = vmatmul.mubr.f32.gmra.mrb[0].mxu0 %v5814
        %v6134 = vpop.f32.mrb[0].mxu0
        %v6135 = vadd.f32 %v5820, %v6134
        %v6136 = vpop.f32.mrb[0].mxu0
        %6137 = vmatprep.mubr.f32.mxu0 %v5916
        %6138 = vmatmul.mubr.f32.gmra.mrb[0].mxu0 %v5815
        %v6139 = vpop.f32.mrb[0].mxu0
        %v6140 = vadd.f32 %v5820, %v6139
        %v6141 = vpop.f32.mrb[0].mxu0
        %6142 = vdwg.mxu0
        %v6143 = vmax.f32 %v5985, 0.0
        %v6144 = vmax.f32 %v5990, 0.0
        %v6145 = vmax.f32 %v5995, 0.0
        %v6146 = vmax.f32 %v6000, 0.0
        %v6147 = vmax.f32 %v6005, 0.0
        %v6148 = vmax.f32 %v6010, 0.0
        %v6149 = vmax.f32 %v6015, 0.0
        %v6150 = vmax.f32 %v6020, 0.0
        %v6151 = vmax.f32 %v6025, 0.0
        %v6152 = vmax.f32 %v6030, 0.0
        %v6153 = vmax.f32 %v6035, 0.0
        %v6154 = vmax.f32 %v6040, 0.0
        %v6155 = vmax.f32 %v6045, 0.0
        %v6156 = vmax.f32 %v6050, 0.0
        %v6157 = vmax.f32 %v6055, 0.0
        %v6158 = vmax.f32 %v6060, 0.0
        %v6159 = vmax.f32 %v6065, 0.0
        %v6160 = vmax.f32 %v6070, 0.0
        %v6161 = vmax.f32 %v6075, 0.0
        %v6162 = vmax.f32 %v6080, 0.0
        %v6163 = vmax.f32 %v6085, 0.0
        %v6164 = vmax.f32 %v6090, 0.0
        %v6165 = vmax.f32 %v6095, 0.0
        %v6166 = vmax.f32 %v6100, 0.0
        %v6167 = vmax.f32 %v6105, 0.0
        %v6168 = vmax.f32 %v6110, 0.0
        %v6169 = vmax.f32 %v6115, 0.0
        %v6170 = vmax.f32 %v6120, 0.0
        %v6171 = vmax.f32 %v6125, 0.0
        %v6172 = vmax.f32 %v6130, 0.0
        %v6173 = vmax.f32 %v6135, 0.0
        %v6174 = vmax.f32 %v6140, 0.0
        %s6175 = scalar_lea.vmem %s1, 432
        %v6176 = vld [vmem:[%s6175] sm:$0xff]
        %v6177 = vld [vmem:[%s6175 + $0x8] sm:$0xff]
        %v6178 = vld [vmem:[%s6175 + $0x10] sm:$0xff]
        %v6179 = vld [vmem:[%s6175 + $0x18] sm:$0xff]
        %v6180 = vld [vmem:[%s6175 + $0x20] sm:$0xff]
        %v6181 = vld [vmem:[%s6175 + $0x28] sm:$0xff]
        %v6182 = vld [vmem:[%s6175 + $0x30] sm:$0xff]
        %v6183 = vld [vmem:[%s6175 + $0x38] sm:$0xff]
        %v6184 = vld [vmem:[%s6175 + $0x40] sm:$0xff]
        %v6185 = vld [vmem:[%s6175 + $0x48] sm:$0xff]
        %v6186 = vld [vmem:[%s6175 + $0x50] sm:$0xff]
        %v6187 = vld [vmem:[%s6175 + $0x58] sm:$0xff]
        %v6188 = vld [vmem:[%s6175 + $0x60] sm:$0xff]
        %v6189 = vld [vmem:[%s6175 + $0x68] sm:$0xff]
        %v6190 = vld [vmem:[%s6175 + $0x70] sm:$0xff]
        %v6191 = vld [vmem:[%s6175 + $0x78] sm:$0xff]
        %v6192 = vld [vmem:[%s6175 + $0x80] sm:$0xff]
        %v6193 = vld [vmem:[%s6175 + $0x88] sm:$0xff]
        %s6194 = scalar_lea.vmem %s2, 3
        %v6195 = vld [vmem:[%s6194] sm:$0x1]
        %6196 = vst.msk [vmem:[%s458 + $0x1] sm:$0xff] %vm351, %v6143
        %6197 = vst.msk [vmem:[%s458 + $0x9] sm:$0xff] %vm351, %v6144
        %6198 = vst.msk [vmem:[%s458 + $0x19] sm:$0xff] %vm351, %v6145
        %6199 = vst.msk [vmem:[%s458 + $0x21] sm:$0xff] %vm351, %v6146
        %6200 = vst.msk [vmem:[%s458 + $0x31] sm:$0xff] %vm351, %v6147
        %6201 = vst.msk [vmem:[%s458 + $0x39] sm:$0xff] %vm351, %v6148
        %6202 = vst.msk [vmem:[%s458 + $0x49] sm:$0xff] %vm351, %v6149
        %6203 = vst.msk [vmem:[%s458 + $0x51] sm:$0xff] %vm351, %v6150
        %6204 = vst.msk [vmem:[%s458 + $0x61] sm:$0xff] %vm351, %v6151
        %6205 = vst.msk [vmem:[%s458 + $0x69] sm:$0xff] %vm351, %v6152
        %6206 = vst.msk [vmem:[%s458 + $0x79] sm:$0xff] %vm351, %v6153
        %6207 = vst.msk [vmem:[%s458 + $0x81] sm:$0xff] %vm351, %v6154
        %6208 = vst.msk [vmem:[%s458 + $0x91] sm:$0xff] %vm351, %v6155
        %6209 = vst.msk [vmem:[%s458 + $0x99] sm:$0xff] %vm351, %v6156
        %6210 = vst.msk [vmem:[%s458 + $0xa9] sm:$0xff] %vm351, %v6157
        %6211 = vst.msk [vmem:[%s458 + $0xb1] sm:$0xff] %vm351, %v6158
        %6212 = vst.msk [vmem:[%s458 + $0xc1] sm:$0xff] %vm351, %v6159
        %6213 = vst.msk [vmem:[%s458 + $0xc9] sm:$0xff] %vm351, %v6160
        %6214 = vst.msk [vmem:[%s458 + $0xd9] sm:$0xff] %vm351, %v6161
        %6215 = vst.msk [vmem:[%s458 + $0xe1] sm:$0xff] %vm351, %v6162
        %6216 = vst.msk [vmem:[%s458 + $0xf1] sm:$0xff] %vm351, %v6163
        %6217 = vst.msk [vmem:[%s458 + $0xf9] sm:$0xff] %vm351, %v6164
        %6218 = vst.msk [vmem:[%s458 + $0x109] sm:$0xff] %vm351, %v6165
        %6219 = vst.msk [vmem:[%s458 + $0x111] sm:$0xff] %vm351, %v6166
        %6220 = vst.msk [vmem:[%s458 + $0x121] sm:$0xff] %vm351, %v6167
        %6221 = vst.msk [vmem:[%s458 + $0x129] sm:$0xff] %vm351, %v6168
        %6222 = vst.msk [vmem:[%s458 + $0x139] sm:$0xff] %vm351, %v6169
        %6223 = vst.msk [vmem:[%s458 + $0x141] sm:$0xff] %vm351, %v6170
        %6224 = vst.msk [vmem:[%s458 + $0x151] sm:$0xff] %vm351, %v6171
        %6225 = vst.msk [vmem:[%s458 + $0x159] sm:$0xff] %vm351, %v6172
        %6226 = vst.msk [vmem:[%s458 + $0x169] sm:$0xff] %vm351, %v6173
        %6227 = vst.msk [vmem:[%s458 + $0x171] sm:$0xff] %vm351, %v6174
        %v6228 = vld [vmem:[#allocation2] sm:$0xff]
        %v6229 = vld [vmem:[#allocation2 + $0x8] sm:$0xff]
        %v6230 = vld [vmem:[#allocation2 + $0x18] sm:$0xff]
        %v6231 = vld [vmem:[#allocation2 + $0x20] sm:$0xff]
        %v6232 = vld [vmem:[#allocation2 + $0x30] sm:$0xff]
        %v6233 = vld [vmem:[#allocation2 + $0x38] sm:$0xff]
        %v6234 = vld [vmem:[#allocation2 + $0x48] sm:$0xff]
        %v6235 = vld [vmem:[#allocation2 + $0x50] sm:$0xff]
        %v6236 = vld [vmem:[#allocation2 + $0x60] sm:$0xff]
        %v6237 = vld [vmem:[#allocation2 + $0x68] sm:$0xff]
        %v6238 = vld [vmem:[#allocation2 + $0x78] sm:$0xff]
        %v6239 = vld [vmem:[#allocation2 + $0x80] sm:$0xff]
        %v6240 = vld [vmem:[#allocation2 + $0x90] sm:$0xff]
        %v6241 = vld [vmem:[#allocation2 + $0x98] sm:$0xff]
        %v6242 = vld [vmem:[#allocation2 + $0xa8] sm:$0xff]
        %v6243 = vld [vmem:[#allocation2 + $0xb0] sm:$0xff]
        %v6244 = vld [vmem:[#allocation2 + $0xc0] sm:$0xff]
        %v6245 = vld [vmem:[#allocation2 + $0xc8] sm:$0xff]
        %v6246 = vld [vmem:[#allocation2 + $0xd8] sm:$0xff]
        %v6247 = vld [vmem:[#allocation2 + $0xe0] sm:$0xff]
        %v6248 = vld [vmem:[#allocation2 + $0xf0] sm:$0xff]
        %v6249 = vld [vmem:[#allocation2 + $0xf8] sm:$0xff]
        %v6250 = vld [vmem:[#allocation2 + $0x108] sm:$0xff]
        %v6251 = vld [vmem:[#allocation2 + $0x110] sm:$0xff]
        %v6252 = vld [vmem:[#allocation2 + $0x120] sm:$0xff]
        %v6253 = vld [vmem:[#allocation2 + $0x128] sm:$0xff]
        %v6254 = vld [vmem:[#allocation2 + $0x138] sm:$0xff]
        %v6255 = vld [vmem:[#allocation2 + $0x140] sm:$0xff]
        %v6256 = vld [vmem:[#allocation2 + $0x150] sm:$0xff]
        %v6257 = vld [vmem:[#allocation2 + $0x158] sm:$0xff]
        %v6258 = vld [vmem:[#allocation2 + $0x168] sm:$0xff]
        %v6259 = vld [vmem:[#allocation2 + $0x170] sm:$0xff]
        %v6260 = vld [vmem:[#allocation2 + $0x1] sm:$0xff]
        %v6261 = vld [vmem:[#allocation2 + $0x9] sm:$0xff]
        %v6262 = vld [vmem:[#allocation2 + $0x19] sm:$0xff]
        %v6263 = vld [vmem:[#allocation2 + $0x21] sm:$0xff]
        %v6264 = vld [vmem:[#allocation2 + $0x31] sm:$0xff]
        %v6265 = vld [vmem:[#allocation2 + $0x39] sm:$0xff]
        %v6266 = vld [vmem:[#allocation2 + $0x49] sm:$0xff]
        %v6267 = vld [vmem:[#allocation2 + $0x51] sm:$0xff]
        %v6268 = vld [vmem:[#allocation2 + $0x61] sm:$0xff]
        %v6269 = vld [vmem:[#allocation2 + $0x69] sm:$0xff]
        %v6270 = vld [vmem:[#allocation2 + $0x79] sm:$0xff]
        %v6271 = vld [vmem:[#allocation2 + $0x81] sm:$0xff]
        %v6272 = vld [vmem:[#allocation2 + $0x91] sm:$0xff]
        %v6273 = vld [vmem:[#allocation2 + $0x99] sm:$0xff]
        %v6274 = vld [vmem:[#allocation2 + $0xa9] sm:$0xff]
        %v6275 = vld [vmem:[#allocation2 + $0xb1] sm:$0xff]
        %v6276 = vld [vmem:[#allocation2 + $0xc1] sm:$0xff]
        %v6277 = vld [vmem:[#allocation2 + $0xc9] sm:$0xff]
        %v6278 = vld [vmem:[#allocation2 + $0xd9] sm:$0xff]
        %v6279 = vld [vmem:[#allocation2 + $0xe1] sm:$0xff]
        %v6280 = vld [vmem:[#allocation2 + $0xf1] sm:$0xff]
        %v6281 = vld [vmem:[#allocation2 + $0xf9] sm:$0xff]
        %v6282 = vld [vmem:[#allocation2 + $0x109] sm:$0xff]
        %v6283 = vld [vmem:[#allocation2 + $0x111] sm:$0xff]
        %v6284 = vld [vmem:[#allocation2 + $0x121] sm:$0xff]
        %v6285 = vld [vmem:[#allocation2 + $0x129] sm:$0xff]
        %v6286 = vld [vmem:[#allocation2 + $0x139] sm:$0xff]
        %v6287 = vld [vmem:[#allocation2 + $0x141] sm:$0xff]
        %v6288 = vld [vmem:[#allocation2 + $0x151] sm:$0xff]
        %v6289 = vld [vmem:[#allocation2 + $0x159] sm:$0xff]
        %v6290 = vld [vmem:[#allocation2 + $0x169] sm:$0xff]
        %v6291 = vld [vmem:[#allocation2 + $0x171] sm:$0xff]
        %v6292 = vld [vmem:[#allocation2 + $0x2] sm:$0xff]
        %v6293 = vld [vmem:[#allocation2 + $0xa] sm:$0xff]
        %v6294 = vld [vmem:[#allocation2 + $0x1a] sm:$0xff]
        %v6295 = vld [vmem:[#allocation2 + $0x22] sm:$0xff]
        %v6296 = vld [vmem:[#allocation2 + $0x32] sm:$0xff]
        %v6297 = vld [vmem:[#allocation2 + $0x3a] sm:$0xff]
        %v6298 = vld [vmem:[#allocation2 + $0x4a] sm:$0xff]
        %v6299 = vld [vmem:[#allocation2 + $0x52] sm:$0xff]
        %v6300 = vld [vmem:[#allocation2 + $0x62] sm:$0xff]
        %v6301 = vld [vmem:[#allocation2 + $0x6a] sm:$0xff]
        %v6302 = vld [vmem:[#allocation2 + $0x7a] sm:$0xff]
        %v6303 = vld [vmem:[#allocation2 + $0x82] sm:$0xff]
        %v6304 = vld [vmem:[#allocation2 + $0x92] sm:$0xff]
        %v6305 = vld [vmem:[#allocation2 + $0x9a] sm:$0xff]
        %v6306 = vld [vmem:[#allocation2 + $0xaa] sm:$0xff]
        %v6307 = vld [vmem:[#allocation2 + $0xb2] sm:$0xff]
        %v6308 = vld [vmem:[#allocation2 + $0xc2] sm:$0xff]
        %v6309 = vld [vmem:[#allocation2 + $0xca] sm:$0xff]
        %v6310 = vld [vmem:[#allocation2 + $0xda] sm:$0xff]
        %v6311 = vld [vmem:[#allocation2 + $0xe2] sm:$0xff]
        %v6312 = vld [vmem:[#allocation2 + $0xf2] sm:$0xff]
        %v6313 = vld [vmem:[#allocation2 + $0xfa] sm:$0xff]
        %v6314 = vld [vmem:[#allocation2 + $0x10a] sm:$0xff]
        %v6315 = vld [vmem:[#allocation2 + $0x112] sm:$0xff]
        %v6316 = vld [vmem:[#allocation2 + $0x122] sm:$0xff]
        %v6317 = vld [vmem:[#allocation2 + $0x12a] sm:$0xff]
        %v6318 = vld [vmem:[#allocation2 + $0x13a] sm:$0xff]
        %v6319 = vld [vmem:[#allocation2 + $0x142] sm:$0xff]
        %v6320 = vld [vmem:[#allocation2 + $0x152] sm:$0xff]
        %v6321 = vld [vmem:[#allocation2 + $0x15a] sm:$0xff]
        %v6322 = vld [vmem:[#allocation2 + $0x16a] sm:$0xff]
        %v6323 = vld [vmem:[#allocation2 + $0x172] sm:$0xff]
        %v6324 = vld [vmem:[%s458] sm:$0xff]
        %v6325 = vld [vmem:[%s458 + $0x8] sm:$0xff]
        %v6326 = vld [vmem:[%s458 + $0x18] sm:$0xff]
        %v6327 = vld [vmem:[%s458 + $0x20] sm:$0xff]
        %v6328 = vld [vmem:[%s458 + $0x30] sm:$0xff]
        %v6329 = vld [vmem:[%s458 + $0x38] sm:$0xff]
        %v6330 = vld [vmem:[%s458 + $0x48] sm:$0xff]
        %v6331 = vld [vmem:[%s458 + $0x50] sm:$0xff]
        %v6332 = vld [vmem:[%s458 + $0x60] sm:$0xff]
        %v6333 = vld [vmem:[%s458 + $0x68] sm:$0xff]
        %v6334 = vld [vmem:[%s458 + $0x78] sm:$0xff]
        %v6335 = vld [vmem:[%s458 + $0x80] sm:$0xff]
        %v6336 = vld [vmem:[%s458 + $0x90] sm:$0xff]
        %v6337 = vld [vmem:[%s458 + $0x98] sm:$0xff]
        %v6338 = vld [vmem:[%s458 + $0xa8] sm:$0xff]
        %v6339 = vld [vmem:[%s458 + $0xb0] sm:$0xff]
        %v6340 = vld [vmem:[%s458 + $0xc0] sm:$0xff]
        %v6341 = vld [vmem:[%s458 + $0xc8] sm:$0xff]
        %v6342 = vld [vmem:[%s458 + $0xd8] sm:$0xff]
        %v6343 = vld [vmem:[%s458 + $0xe0] sm:$0xff]
        %v6344 = vld [vmem:[%s458 + $0xf0] sm:$0xff]
        %v6345 = vld [vmem:[%s458 + $0xf8] sm:$0xff]
        %v6346 = vld [vmem:[%s458 + $0x108] sm:$0xff]
        %v6347 = vld [vmem:[%s458 + $0x110] sm:$0xff]
        %v6348 = vld [vmem:[%s458 + $0x120] sm:$0xff]
        %v6349 = vld [vmem:[%s458 + $0x128] sm:$0xff]
        %v6350 = vld [vmem:[%s458 + $0x138] sm:$0xff]
        %v6351 = vld [vmem:[%s458 + $0x140] sm:$0xff]
        %v6352 = vld [vmem:[%s458 + $0x150] sm:$0xff]
        %v6353 = vld [vmem:[%s458 + $0x158] sm:$0xff]
        %v6354 = vld [vmem:[%s458 + $0x168] sm:$0xff]
        %v6355 = vld [vmem:[%s458 + $0x170] sm:$0xff]
        %v6356 = vld [vmem:[%s458 + $0x1] sm:$0xff]
        %v6357 = vld [vmem:[%s458 + $0x9] sm:$0xff]
        %v6358 = vld [vmem:[%s458 + $0x19] sm:$0xff]
        %v6359 = vld [vmem:[%s458 + $0x21] sm:$0xff]
        %v6360 = vld [vmem:[%s458 + $0x31] sm:$0xff]
        %v6361 = vld [vmem:[%s458 + $0x39] sm:$0xff]
        %v6362 = vld [vmem:[%s458 + $0x49] sm:$0xff]
        %v6363 = vld [vmem:[%s458 + $0x51] sm:$0xff]
        %v6364 = vld [vmem:[%s458 + $0x61] sm:$0xff]
        %v6365 = vld [vmem:[%s458 + $0x69] sm:$0xff]
        %v6366 = vld [vmem:[%s458 + $0x79] sm:$0xff]
        %v6367 = vld [vmem:[%s458 + $0x81] sm:$0xff]
        %v6368 = vld [vmem:[%s458 + $0x91] sm:$0xff]
        %v6369 = vld [vmem:[%s458 + $0x99] sm:$0xff]
        %v6370 = vld [vmem:[%s458 + $0xa9] sm:$0xff]
        %v6371 = vld [vmem:[%s458 + $0xb1] sm:$0xff]
        %v6372 = vld [vmem:[%s458 + $0xc1] sm:$0xff]
        %v6373 = vld [vmem:[%s458 + $0xc9] sm:$0xff]
        %v6374 = vld [vmem:[%s458 + $0xd9] sm:$0xff]
        %v6375 = vld [vmem:[%s458 + $0xe1] sm:$0xff]
        %v6376 = vld [vmem:[%s458 + $0xf1] sm:$0xff]
        %v6377 = vld [vmem:[%s458 + $0xf9] sm:$0xff]
        %v6378 = vld [vmem:[%s458 + $0x109] sm:$0xff]
        %v6379 = vld [vmem:[%s458 + $0x111] sm:$0xff]
        %v6380 = vld [vmem:[%s458 + $0x121] sm:$0xff]
        %v6381 = vld [vmem:[%s458 + $0x129] sm:$0xff]
        %v6382 = vld [vmem:[%s458 + $0x139] sm:$0xff]
        %v6383 = vld [vmem:[%s458 + $0x141] sm:$0xff]
        %v6384 = vld [vmem:[%s458 + $0x151] sm:$0xff]
        %v6385 = vld [vmem:[%s458 + $0x159] sm:$0xff]
        %v6386 = vld [vmem:[%s458 + $0x169] sm:$0xff]
        %v6387 = vld [vmem:[%s458 + $0x171] sm:$0xff]
        %v6388 = vld [vmem:[%s458 + $0x2] sm:$0xff]
        %v6389 = vld [vmem:[%s458 + $0xa] sm:$0xff]
        %v6390 = vld [vmem:[%s458 + $0x1a] sm:$0xff]
        %v6391 = vld [vmem:[%s458 + $0x22] sm:$0xff]
        %v6392 = vld [vmem:[%s458 + $0x32] sm:$0xff]
        %v6393 = vld [vmem:[%s458 + $0x3a] sm:$0xff]
        %v6394 = vld [vmem:[%s458 + $0x4a] sm:$0xff]
        %v6395 = vld [vmem:[%s458 + $0x52] sm:$0xff]
        %v6396 = vld [vmem:[%s458 + $0x62] sm:$0xff]
        %v6397 = vld [vmem:[%s458 + $0x6a] sm:$0xff]
        %v6398 = vld [vmem:[%s458 + $0x7a] sm:$0xff]
        %v6399 = vld [vmem:[%s458 + $0x82] sm:$0xff]
        %v6400 = vld [vmem:[%s458 + $0x92] sm:$0xff]
        %v6401 = vld [vmem:[%s458 + $0x9a] sm:$0xff]
        %v6402 = vld [vmem:[%s458 + $0xaa] sm:$0xff]
        %v6403 = vld [vmem:[%s458 + $0xb2] sm:$0xff]
        %v6404 = vld [vmem:[%s458 + $0xc2] sm:$0xff]
        %v6405 = vld [vmem:[%s458 + $0xca] sm:$0xff]
        %v6406 = vld [vmem:[%s458 + $0xda] sm:$0xff]
        %v6407 = vld [vmem:[%s458 + $0xe2] sm:$0xff]
        %v6408 = vld [vmem:[%s458 + $0xf2] sm:$0xff]
        %v6409 = vld [vmem:[%s458 + $0xfa] sm:$0xff]
        %v6410 = vld [vmem:[%s458 + $0x10a] sm:$0xff]
        %v6411 = vld [vmem:[%s458 + $0x112] sm:$0xff]
        %v6412 = vld [vmem:[%s458 + $0x122] sm:$0xff]
        %v6413 = vld [vmem:[%s458 + $0x12a] sm:$0xff]
        %v6414 = vld [vmem:[%s458 + $0x13a] sm:$0xff]
        %v6415 = vld [vmem:[%s458 + $0x142] sm:$0xff]
        %v6416 = vld [vmem:[%s458 + $0x152] sm:$0xff]
        %v6417 = vld [vmem:[%s458 + $0x15a] sm:$0xff]
        %v6418 = vld [vmem:[%s458 + $0x16a] sm:$0xff]
        %v6419 = vld [vmem:[%s458 + $0x172] sm:$0xff]
        %v6420 = vld [vmem:[%s683] sm:$0xff]
        %v6421 = vld [vmem:[%s683 + $0x8] sm:$0xff]
        %v6422 = vld [vmem:[%s683 + $0x18] sm:$0xff]
        %v6423 = vld [vmem:[%s683 + $0x20] sm:$0xff]
        %v6424 = vld [vmem:[%s683 + $0x30] sm:$0xff]
        %v6425 = vld [vmem:[%s683 + $0x38] sm:$0xff]
        %v6426 = vld [vmem:[%s683 + $0x48] sm:$0xff]
        %v6427 = vld [vmem:[%s683 + $0x50] sm:$0xff]
        %v6428 = vld [vmem:[%s683 + $0x60] sm:$0xff]
        %v6429 = vld [vmem:[%s683 + $0x68] sm:$0xff]
        %v6430 = vld [vmem:[%s683 + $0x78] sm:$0xff]
        %v6431 = vld [vmem:[%s683 + $0x80] sm:$0xff]
        %v6432 = vld [vmem:[%s683 + $0x90] sm:$0xff]
        %v6433 = vld [vmem:[%s683 + $0x98] sm:$0xff]
        %v6434 = vld [vmem:[%s683 + $0xa8] sm:$0xff]
        %v6435 = vld [vmem:[%s683 + $0xb0] sm:$0xff]
        %v6436 = vld [vmem:[%s683 + $0xc0] sm:$0xff]
        %v6437 = vld [vmem:[%s683 + $0xc8] sm:$0xff]
        %v6438 = vld [vmem:[%s683 + $0xd8] sm:$0xff]
        %v6439 = vld [vmem:[%s683 + $0xe0] sm:$0xff]
        %v6440 = vld [vmem:[%s683 + $0xf0] sm:$0xff]
        %v6441 = vld [vmem:[%s683 + $0xf8] sm:$0xff]
        %v6442 = vld [vmem:[%s683 + $0x108] sm:$0xff]
        %v6443 = vld [vmem:[%s683 + $0x110] sm:$0xff]
        %v6444 = vld [vmem:[%s683 + $0x120] sm:$0xff]
        %v6445 = vld [vmem:[%s683 + $0x128] sm:$0xff]
        %v6446 = vld [vmem:[%s683 + $0x138] sm:$0xff]
        %v6447 = vld [vmem:[%s683 + $0x140] sm:$0xff]
        %v6448 = vld [vmem:[%s683 + $0x150] sm:$0xff]
        %v6449 = vld [vmem:[%s683 + $0x158] sm:$0xff]
        %v6450 = vld [vmem:[%s683 + $0x168] sm:$0xff]
        %v6451 = vld [vmem:[%s683 + $0x170] sm:$0xff]
        %v6452 = vld [vmem:[%s683 + $0x1] sm:$0xff]
        %v6453 = vld [vmem:[%s683 + $0x9] sm:$0xff]
        %v6454 = vld [vmem:[%s683 + $0x19] sm:$0xff]
        %v6455 = vld [vmem:[%s683 + $0x21] sm:$0xff]
        %v6456 = vld [vmem:[%s683 + $0x31] sm:$0xff]
        %v6457 = vld [vmem:[%s683 + $0x39] sm:$0xff]
        %v6458 = vld [vmem:[%s683 + $0x49] sm:$0xff]
        %v6459 = vld [vmem:[%s683 + $0x51] sm:$0xff]
        %v6460 = vld [vmem:[%s683 + $0x61] sm:$0xff]
        %v6461 = vld [vmem:[%s683 + $0x69] sm:$0xff]
        %v6462 = vld [vmem:[%s683 + $0x79] sm:$0xff]
        %v6463 = vld [vmem:[%s683 + $0x81] sm:$0xff]
        %v6464 = vld [vmem:[%s683 + $0x91] sm:$0xff]
        %v6465 = vld [vmem:[%s683 + $0x99] sm:$0xff]
        %v6466 = vld [vmem:[%s683 + $0xa9] sm:$0xff]
        %v6467 = vld [vmem:[%s683 + $0xb1] sm:$0xff]
        %v6468 = vld [vmem:[%s683 + $0xc1] sm:$0xff]
        %v6469 = vld [vmem:[%s683 + $0xc9] sm:$0xff]
        %v6470 = vld [vmem:[%s683 + $0xd9] sm:$0xff]
        %v6471 = vld [vmem:[%s683 + $0xe1] sm:$0xff]
        %v6472 = vld [vmem:[%s683 + $0xf1] sm:$0xff]
        %v6473 = vld [vmem:[%s683 + $0xf9] sm:$0xff]
        %v6474 = vld [vmem:[%s683 + $0x109] sm:$0xff]
        %v6475 = vld [vmem:[%s683 + $0x111] sm:$0xff]
        %v6476 = vld [vmem:[%s683 + $0x121] sm:$0xff]
        %v6477 = vld [vmem:[%s683 + $0x129] sm:$0xff]
        %v6478 = vld [vmem:[%s683 + $0x139] sm:$0xff]
        %v6479 = vld [vmem:[%s683 + $0x141] sm:$0xff]
        %v6480 = vld [vmem:[%s683 + $0x151] sm:$0xff]
        %v6481 = vld [vmem:[%s683 + $0x159] sm:$0xff]
        %v6482 = vld [vmem:[%s683 + $0x169] sm:$0xff]
        %v6483 = vld [vmem:[%s683 + $0x171] sm:$0xff]
        %v6484 = vld [vmem:[%s683 + $0x2] sm:$0xff]
        %v6485 = vld [vmem:[%s683 + $0xa] sm:$0xff]
        %v6486 = vld [vmem:[%s683 + $0x1a] sm:$0xff]
        %v6487 = vld [vmem:[%s683 + $0x22] sm:$0xff]
        %v6488 = vld [vmem:[%s683 + $0x32] sm:$0xff]
        %v6489 = vld [vmem:[%s683 + $0x3a] sm:$0xff]
        %v6490 = vld [vmem:[%s683 + $0x4a] sm:$0xff]
        %v6491 = vld [vmem:[%s683 + $0x52] sm:$0xff]
        %v6492 = vld [vmem:[%s683 + $0x62] sm:$0xff]
        %v6493 = vld [vmem:[%s683 + $0x6a] sm:$0xff]
        %v6494 = vld [vmem:[%s683 + $0x7a] sm:$0xff]
        %v6495 = vld [vmem:[%s683 + $0x82] sm:$0xff]
        %v6496 = vld [vmem:[%s683 + $0x92] sm:$0xff]
        %v6497 = vld [vmem:[%s683 + $0x9a] sm:$0xff]
        %v6498 = vld [vmem:[%s683 + $0xaa] sm:$0xff]
        %v6499 = vld [vmem:[%s683 + $0xb2] sm:$0xff]
        %v6500 = vld [vmem:[%s683 + $0xc2] sm:$0xff]
        %v6501 = vld [vmem:[%s683 + $0xca] sm:$0xff]
        %v6502 = vld [vmem:[%s683 + $0xda] sm:$0xff]
        %v6503 = vld [vmem:[%s683 + $0xe2] sm:$0xff]
        %v6504 = vld [vmem:[%s683 + $0xf2] sm:$0xff]
        %v6505 = vld [vmem:[%s683 + $0xfa] sm:$0xff]
        %v6506 = vld [vmem:[%s683 + $0x10a] sm:$0xff]
        %v6507 = vld [vmem:[%s683 + $0x112] sm:$0xff]
        %v6508 = vld [vmem:[%s683 + $0x122] sm:$0xff]
        %v6509 = vld [vmem:[%s683 + $0x12a] sm:$0xff]
        %v6510 = vld [vmem:[%s683 + $0x13a] sm:$0xff]
        %v6511 = vld [vmem:[%s683 + $0x142] sm:$0xff]
        %v6512 = vld [vmem:[%s683 + $0x152] sm:$0xff]
        %v6513 = vld [vmem:[%s683 + $0x15a] sm:$0xff]
        %v6514 = vld [vmem:[%s683 + $0x16a] sm:$0xff]
        %v6515 = vld [vmem:[%s683 + $0x172] sm:$0xff]
        %6548 = vrot.lane.b32.xlu0 %v6260, 16
        %v6549 = vpop.permute.xlu0 %6548
        %6550 = vrot.lane.b32.xlu0 %v6261, 16
        %v6551 = vpop.permute.xlu0 %6550
        %6552 = vrot.lane.b32.xlu0 %v6262, 16
        %v6553 = vpop.permute.xlu0 %6552
        %6554 = vrot.lane.b32.xlu0 %v6263, 16
        %v6555 = vpop.permute.xlu0 %6554
        %6556 = vrot.lane.b32.xlu0 %v6264, 16
        %v6557 = vpop.permute.xlu0 %6556
        %6558 = vrot.lane.b32.xlu0 %v6265, 16
        %v6559 = vpop.permute.xlu0 %6558
        %6560 = vrot.lane.b32.xlu0 %v6266, 16
        %v6561 = vpop.permute.xlu0 %6560
        %6562 = vrot.lane.b32.xlu0 %v6267, 16
        %v6563 = vpop.permute.xlu0 %6562
        %6564 = vrot.lane.b32.xlu0 %v6268, 16
        %v6565 = vpop.permute.xlu0 %6564
        %6566 = vrot.lane.b32.xlu0 %v6269, 16
        %v6567 = vpop.permute.xlu0 %6566
        %6568 = vrot.lane.b32.xlu0 %v6270, 16
        %v6569 = vpop.permute.xlu0 %6568
        %6570 = vrot.lane.b32.xlu0 %v6271, 16
        %v6571 = vpop.permute.xlu0 %6570
        %6572 = vrot.lane.b32.xlu0 %v6272, 16
        %v6573 = vpop.permute.xlu0 %6572
        %6574 = vrot.lane.b32.xlu0 %v6273, 16
        %v6575 = vpop.permute.xlu0 %6574
        %6576 = vrot.lane.b32.xlu0 %v6274, 16
        %v6577 = vpop.permute.xlu0 %6576
        %6578 = vrot.lane.b32.xlu0 %v6275, 16
        %v6579 = vpop.permute.xlu0 %6578
        %6580 = vrot.lane.b32.xlu0 %v6276, 16
        %v6581 = vpop.permute.xlu0 %6580
        %6582 = vrot.lane.b32.xlu0 %v6277, 16
        %v6583 = vpop.permute.xlu0 %6582
        %6584 = vrot.lane.b32.xlu0 %v6278, 16
        %v6585 = vpop.permute.xlu0 %6584
        %6586 = vrot.lane.b32.xlu0 %v6279, 16
        %v6587 = vpop.permute.xlu0 %6586
        %6588 = vrot.lane.b32.xlu0 %v6280, 16
        %v6589 = vpop.permute.xlu0 %6588
        %6590 = vrot.lane.b32.xlu0 %v6281, 16
        %v6591 = vpop.permute.xlu0 %6590
        %6592 = vrot.lane.b32.xlu0 %v6282, 16
        %v6593 = vpop.permute.xlu0 %6592
        %6594 = vrot.lane.b32.xlu0 %v6283, 16
        %v6595 = vpop.permute.xlu0 %6594
        %6596 = vrot.lane.b32.xlu0 %v6284, 16
        %v6597 = vpop.permute.xlu0 %6596
        %6598 = vrot.lane.b32.xlu0 %v6285, 16
        %v6599 = vpop.permute.xlu0 %6598
        %6600 = vrot.lane.b32.xlu0 %v6286, 16
        %v6601 = vpop.permute.xlu0 %6600
        %6602 = vrot.lane.b32.xlu0 %v6287, 16
        %v6603 = vpop.permute.xlu0 %6602
        %6604 = vrot.lane.b32.xlu0 %v6288, 16
        %v6605 = vpop.permute.xlu0 %6604
        %6606 = vrot.lane.b32.xlu0 %v6289, 16
        %v6607 = vpop.permute.xlu0 %6606
        %6608 = vrot.lane.b32.xlu0 %v6290, 16
        %v6609 = vpop.permute.xlu0 %6608
        %6610 = vrot.lane.b32.xlu0 %v6291, 16
        %v6611 = vpop.permute.xlu0 %6610
        %6676 = vrot.lane.b32.xlu0 %v6292, 32
        %v6677 = vpop.permute.xlu0 %6676
        %6678 = vrot.lane.b32.xlu0 %v6293, 32
        %v6679 = vpop.permute.xlu0 %6678
        %6680 = vrot.lane.b32.xlu0 %v6294, 32
        %v6681 = vpop.permute.xlu0 %6680
        %6682 = vrot.lane.b32.xlu0 %v6295, 32
        %v6683 = vpop.permute.xlu0 %6682
        %6684 = vrot.lane.b32.xlu0 %v6296, 32
        %v6685 = vpop.permute.xlu0 %6684
        %6686 = vrot.lane.b32.xlu0 %v6297, 32
        %v6687 = vpop.permute.xlu0 %6686
        %6688 = vrot.lane.b32.xlu0 %v6298, 32
        %v6689 = vpop.permute.xlu0 %6688
        %6690 = vrot.lane.b32.xlu0 %v6299, 32
        %v6691 = vpop.permute.xlu0 %6690
        %6692 = vrot.lane.b32.xlu0 %v6300, 32
        %v6693 = vpop.permute.xlu0 %6692
        %6694 = vrot.lane.b32.xlu0 %v6301, 32
        %v6695 = vpop.permute.xlu0 %6694
        %6696 = vrot.lane.b32.xlu0 %v6302, 32
        %v6697 = vpop.permute.xlu0 %6696
        %6698 = vrot.lane.b32.xlu0 %v6303, 32
        %v6699 = vpop.permute.xlu0 %6698
        %6700 = vrot.lane.b32.xlu0 %v6304, 32
        %v6701 = vpop.permute.xlu0 %6700
        %6702 = vrot.lane.b32.xlu0 %v6305, 32
        %v6703 = vpop.permute.xlu0 %6702
        %6704 = vrot.lane.b32.xlu0 %v6306, 32
        %v6705 = vpop.permute.xlu0 %6704
        %6706 = vrot.lane.b32.xlu0 %v6307, 32
        %v6707 = vpop.permute.xlu0 %6706
        %6708 = vrot.lane.b32.xlu0 %v6308, 32
        %v6709 = vpop.permute.xlu0 %6708
        %6710 = vrot.lane.b32.xlu0 %v6309, 32
        %v6711 = vpop.permute.xlu0 %6710
        %6712 = vrot.lane.b32.xlu0 %v6310, 32
        %v6713 = vpop.permute.xlu0 %6712
        %6714 = vrot.lane.b32.xlu0 %v6311, 32
        %v6715 = vpop.permute.xlu0 %6714
        %6716 = vrot.lane.b32.xlu0 %v6312, 32
        %v6717 = vpop.permute.xlu0 %6716
        %6718 = vrot.lane.b32.xlu0 %v6313, 32
        %v6719 = vpop.permute.xlu0 %6718
        %6720 = vrot.lane.b32.xlu0 %v6314, 32
        %v6721 = vpop.permute.xlu0 %6720
        %6722 = vrot.lane.b32.xlu0 %v6315, 32
        %v6723 = vpop.permute.xlu0 %6722
        %6724 = vrot.lane.b32.xlu0 %v6316, 32
        %v6725 = vpop.permute.xlu0 %6724
        %6726 = vrot.lane.b32.xlu0 %v6317, 32
        %v6727 = vpop.permute.xlu0 %6726
        %6728 = vrot.lane.b32.xlu0 %v6318, 32
        %v6729 = vpop.permute.xlu0 %6728
        %6730 = vrot.lane.b32.xlu0 %v6319, 32
        %v6731 = vpop.permute.xlu0 %6730
        %6732 = vrot.lane.b32.xlu0 %v6320, 32
        %v6733 = vpop.permute.xlu0 %6732
        %6734 = vrot.lane.b32.xlu0 %v6321, 32
        %v6735 = vpop.permute.xlu0 %6734
        %6736 = vrot.lane.b32.xlu0 %v6322, 32
        %v6737 = vpop.permute.xlu0 %6736
        %6738 = vrot.lane.b32.xlu0 %v6323, 32
        %v6739 = vpop.permute.xlu0 %6738
        %6804 = vrot.lane.b32.xlu0 %v6324, 48
        %v6805 = vpop.permute.xlu0 %6804
        %6806 = vrot.lane.b32.xlu0 %v6325, 48
        %v6807 = vpop.permute.xlu0 %6806
        %6808 = vrot.lane.b32.xlu0 %v6326, 48
        %v6809 = vpop.permute.xlu0 %6808
        %6810 = vrot.lane.b32.xlu0 %v6327, 48
        %v6811 = vpop.permute.xlu0 %6810
        %6812 = vrot.lane.b32.xlu0 %v6328, 48
        %v6813 = vpop.permute.xlu0 %6812
        %6814 = vrot.lane.b32.xlu0 %v6329, 48
        %v6815 = vpop.permute.xlu0 %6814
        %6816 = vrot.lane.b32.xlu0 %v6330, 48
        %v6817 = vpop.permute.xlu0 %6816
        %6818 = vrot.lane.b32.xlu0 %v6331, 48
        %v6819 = vpop.permute.xlu0 %6818
        %6820 = vrot.lane.b32.xlu0 %v6332, 48
        %v6821 = vpop.permute.xlu0 %6820
        %6822 = vrot.lane.b32.xlu0 %v6333, 48
        %v6823 = vpop.permute.xlu0 %6822
        %6824 = vrot.lane.b32.xlu0 %v6334, 48
        %v6825 = vpop.permute.xlu0 %6824
        %6826 = vrot.lane.b32.xlu0 %v6335, 48
        %v6827 = vpop.permute.xlu0 %6826
        %6828 = vrot.lane.b32.xlu0 %v6336, 48
        %v6829 = vpop.permute.xlu0 %6828
        %6830 = vrot.lane.b32.xlu0 %v6337, 48
        %v6831 = vpop.permute.xlu0 %6830
        %6832 = vrot.lane.b32.xlu0 %v6338, 48
        %v6833 = vpop.permute.xlu0 %6832
        %6834 = vrot.lane.b32.xlu0 %v6339, 48
        %v6835 = vpop.permute.xlu0 %6834
        %6836 = vrot.lane.b32.xlu0 %v6340, 48
        %v6837 = vpop.permute.xlu0 %6836
        %6838 = vrot.lane.b32.xlu0 %v6341, 48
        %v6839 = vpop.permute.xlu0 %6838
        %6840 = vrot.lane.b32.xlu0 %v6342, 48
        %v6841 = vpop.permute.xlu0 %6840
        %6842 = vrot.lane.b32.xlu0 %v6343, 48
        %v6843 = vpop.permute.xlu0 %6842
        %6844 = vrot.lane.b32.xlu0 %v6344, 48
        %v6845 = vpop.permute.xlu0 %6844
        %6846 = vrot.lane.b32.xlu0 %v6345, 48
        %v6847 = vpop.permute.xlu0 %6846
        %6848 = vrot.lane.b32.xlu0 %v6346, 48
        %v6849 = vpop.permute.xlu0 %6848
        %6850 = vrot.lane.b32.xlu0 %v6347, 48
        %v6851 = vpop.permute.xlu0 %6850
        %6852 = vrot.lane.b32.xlu0 %v6348, 48
        %v6853 = vpop.permute.xlu0 %6852
        %6854 = vrot.lane.b32.xlu0 %v6349, 48
        %v6855 = vpop.permute.xlu0 %6854
        %6856 = vrot.lane.b32.xlu0 %v6350, 48
        %v6857 = vpop.permute.xlu0 %6856
        %6858 = vrot.lane.b32.xlu0 %v6351, 48
        %v6859 = vpop.permute.xlu0 %6858
        %6860 = vrot.lane.b32.xlu0 %v6352, 48
        %v6861 = vpop.permute.xlu0 %6860
        %6862 = vrot.lane.b32.xlu0 %v6353, 48
        %v6863 = vpop.permute.xlu0 %6862
        %6864 = vrot.lane.b32.xlu0 %v6354, 48
        %v6865 = vpop.permute.xlu0 %6864
        %6866 = vrot.lane.b32.xlu0 %v6355, 48
        %v6867 = vpop.permute.xlu0 %6866
        %6932 = vrot.lane.b32.xlu0 %v6356, 64
        %v6933 = vpop.permute.xlu0 %6932
        %6934 = vrot.lane.b32.xlu0 %v6357, 64
        %v6935 = vpop.permute.xlu0 %6934
        %6936 = vrot.lane.b32.xlu0 %v6358, 64
        %v6937 = vpop.permute.xlu0 %6936
        %6938 = vrot.lane.b32.xlu0 %v6359, 64
        %v6939 = vpop.permute.xlu0 %6938
        %6940 = vrot.lane.b32.xlu0 %v6360, 64
        %v6941 = vpop.permute.xlu0 %6940
        %6942 = vrot.lane.b32.xlu0 %v6361, 64
        %v6943 = vpop.permute.xlu0 %6942
        %6944 = vrot.lane.b32.xlu0 %v6362, 64
        %v6945 = vpop.permute.xlu0 %6944
        %6946 = vrot.lane.b32.xlu0 %v6363, 64
        %v6947 = vpop.permute.xlu0 %6946
        %6948 = vrot.lane.b32.xlu0 %v6364, 64
        %v6949 = vpop.permute.xlu0 %6948
        %6950 = vrot.lane.b32.xlu0 %v6365, 64
        %v6951 = vpop.permute.xlu0 %6950
        %6952 = vrot.lane.b32.xlu0 %v6366, 64
        %v6953 = vpop.permute.xlu0 %6952
        %6954 = vrot.lane.b32.xlu0 %v6367, 64
        %v6955 = vpop.permute.xlu0 %6954
        %6956 = vrot.lane.b32.xlu0 %v6368, 64
        %v6957 = vpop.permute.xlu0 %6956
        %6958 = vrot.lane.b32.xlu0 %v6369, 64
        %v6959 = vpop.permute.xlu0 %6958
        %6960 = vrot.lane.b32.xlu0 %v6370, 64
        %v6961 = vpop.permute.xlu0 %6960
        %6962 = vrot.lane.b32.xlu0 %v6371, 64
        %v6963 = vpop.permute.xlu0 %6962
        %6964 = vrot.lane.b32.xlu0 %v6372, 64
        %v6965 = vpop.permute.xlu0 %6964
        %6966 = vrot.lane.b32.xlu0 %v6373, 64
        %v6967 = vpop.permute.xlu0 %6966
        %6968 = vrot.lane.b32.xlu0 %v6374, 64
        %v6969 = vpop.permute.xlu0 %6968
        %6970 = vrot.lane.b32.xlu0 %v6375, 64
        %v6971 = vpop.permute.xlu0 %6970
        %6972 = vrot.lane.b32.xlu0 %v6376, 64
        %v6973 = vpop.permute.xlu0 %6972
        %6974 = vrot.lane.b32.xlu0 %v6377, 64
        %v6975 = vpop.permute.xlu0 %6974
        %6976 = vrot.lane.b32.xlu0 %v6378, 64
        %v6977 = vpop.permute.xlu0 %6976
        %6978 = vrot.lane.b32.xlu0 %v6379, 64
        %v6979 = vpop.permute.xlu0 %6978
        %6980 = vrot.lane.b32.xlu0 %v6380, 64
        %v6981 = vpop.permute.xlu0 %6980
        %6982 = vrot.lane.b32.xlu0 %v6381, 64
        %v6983 = vpop.permute.xlu0 %6982
        %6984 = vrot.lane.b32.xlu0 %v6382, 64
        %v6985 = vpop.permute.xlu0 %6984
        %6986 = vrot.lane.b32.xlu0 %v6383, 64
        %v6987 = vpop.permute.xlu0 %6986
        %6988 = vrot.lane.b32.xlu0 %v6384, 64
        %v6989 = vpop.permute.xlu0 %6988
        %6990 = vrot.lane.b32.xlu0 %v6385, 64
        %v6991 = vpop.permute.xlu0 %6990
        %6992 = vrot.lane.b32.xlu0 %v6386, 64
        %v6993 = vpop.permute.xlu0 %6992
        %6994 = vrot.lane.b32.xlu0 %v6387, 64
        %v6995 = vpop.permute.xlu0 %6994
        %7060 = vrot.lane.b32.xlu0 %v6388, 80
        %v7061 = vpop.permute.xlu0 %7060
        %7062 = vrot.lane.b32.xlu0 %v6389, 80
        %v7063 = vpop.permute.xlu0 %7062
        %7064 = vrot.lane.b32.xlu0 %v6390, 80
        %v7065 = vpop.permute.xlu0 %7064
        %7066 = vrot.lane.b32.xlu0 %v6391, 80
        %v7067 = vpop.permute.xlu0 %7066
        %7068 = vrot.lane.b32.xlu0 %v6392, 80
        %v7069 = vpop.permute.xlu0 %7068
        %7070 = vrot.lane.b32.xlu0 %v6393, 80
        %v7071 = vpop.permute.xlu0 %7070
        %7072 = vrot.lane.b32.xlu0 %v6394, 80
        %v7073 = vpop.permute.xlu0 %7072
        %7074 = vrot.lane.b32.xlu0 %v6395, 80
        %v7075 = vpop.permute.xlu0 %7074
        %7076 = vrot.lane.b32.xlu0 %v6396, 80
        %v7077 = vpop.permute.xlu0 %7076
        %7078 = vrot.lane.b32.xlu0 %v6397, 80
        %v7079 = vpop.permute.xlu0 %7078
        %7080 = vrot.lane.b32.xlu0 %v6398, 80
        %v7081 = vpop.permute.xlu0 %7080
        %7082 = vrot.lane.b32.xlu0 %v6399, 80
        %v7083 = vpop.permute.xlu0 %7082
        %7084 = vrot.lane.b32.xlu0 %v6400, 80
        %v7085 = vpop.permute.xlu0 %7084
        %7086 = vrot.lane.b32.xlu0 %v6401, 80
        %v7087 = vpop.permute.xlu0 %7086
        %7088 = vrot.lane.b32.xlu0 %v6402, 80
        %v7089 = vpop.permute.xlu0 %7088
        %7090 = vrot.lane.b32.xlu0 %v6403, 80
        %v7091 = vpop.permute.xlu0 %7090
        %7092 = vrot.lane.b32.xlu0 %v6404, 80
        %v7093 = vpop.permute.xlu0 %7092
        %7094 = vrot.lane.b32.xlu0 %v6405, 80
        %v7095 = vpop.permute.xlu0 %7094
        %7096 = vrot.lane.b32.xlu0 %v6406, 80
        %v7097 = vpop.permute.xlu0 %7096
        %7098 = vrot.lane.b32.xlu0 %v6407, 80
        %v7099 = vpop.permute.xlu0 %7098
        %7100 = vrot.lane.b32.xlu0 %v6408, 80
        %v7101 = vpop.permute.xlu0 %7100
        %7102 = vrot.lane.b32.xlu0 %v6409, 80
        %v7103 = vpop.permute.xlu0 %7102
        %7104 = vrot.lane.b32.xlu0 %v6410, 80
        %v7105 = vpop.permute.xlu0 %7104
        %7106 = vrot.lane.b32.xlu0 %v6411, 80
        %v7107 = vpop.permute.xlu0 %7106
        %7108 = vrot.lane.b32.xlu0 %v6412, 80
        %v7109 = vpop.permute.xlu0 %7108
        %7110 = vrot.lane.b32.xlu0 %v6413, 80
        %v7111 = vpop.permute.xlu0 %7110
        %7112 = vrot.lane.b32.xlu0 %v6414, 80
        %v7113 = vpop.permute.xlu0 %7112
        %7114 = vrot.lane.b32.xlu0 %v6415, 80
        %v7115 = vpop.permute.xlu0 %7114
        %7116 = vrot.lane.b32.xlu0 %v6416, 80
        %v7117 = vpop.permute.xlu0 %7116
        %7118 = vrot.lane.b32.xlu0 %v6417, 80
        %v7119 = vpop.permute.xlu0 %7118
        %7120 = vrot.lane.b32.xlu0 %v6418, 80
        %v7121 = vpop.permute.xlu0 %7120
        %7122 = vrot.lane.b32.xlu0 %v6419, 80
        %v7123 = vpop.permute.xlu0 %7122
        %7188 = vrot.lane.b32.xlu0 %v6420, 96
        %v7189 = vpop.permute.xlu0 %7188
        %7190 = vrot.lane.b32.xlu0 %v6421, 96
        %v7191 = vpop.permute.xlu0 %7190
        %7192 = vrot.lane.b32.xlu0 %v6422, 96
        %v7193 = vpop.permute.xlu0 %7192
        %7194 = vrot.lane.b32.xlu0 %v6423, 96
        %v7195 = vpop.permute.xlu0 %7194
        %7196 = vrot.lane.b32.xlu0 %v6424, 96
        %v7197 = vpop.permute.xlu0 %7196
        %7198 = vrot.lane.b32.xlu0 %v6425, 96
        %v7199 = vpop.permute.xlu0 %7198
        %7200 = vrot.lane.b32.xlu0 %v6426, 96
        %v7201 = vpop.permute.xlu0 %7200
        %7202 = vrot.lane.b32.xlu0 %v6427, 96
        %v7203 = vpop.permute.xlu0 %7202
        %7204 = vrot.lane.b32.xlu0 %v6428, 96
        %v7205 = vpop.permute.xlu0 %7204
        %7206 = vrot.lane.b32.xlu0 %v6429, 96
        %v7207 = vpop.permute.xlu0 %7206
        %7208 = vrot.lane.b32.xlu0 %v6430, 96
        %v7209 = vpop.permute.xlu0 %7208
        %7210 = vrot.lane.b32.xlu0 %v6431, 96
        %v7211 = vpop.permute.xlu0 %7210
        %7212 = vrot.lane.b32.xlu0 %v6432, 96
        %v7213 = vpop.permute.xlu0 %7212
        %7214 = vrot.lane.b32.xlu0 %v6433, 96
        %v7215 = vpop.permute.xlu0 %7214
        %7216 = vrot.lane.b32.xlu0 %v6434, 96
        %v7217 = vpop.permute.xlu0 %7216
        %7218 = vrot.lane.b32.xlu0 %v6435, 96
        %v7219 = vpop.permute.xlu0 %7218
        %7220 = vrot.lane.b32.xlu0 %v6436, 96
        %v7221 = vpop.permute.xlu0 %7220
        %7222 = vrot.lane.b32.xlu0 %v6437, 96
        %v7223 = vpop.permute.xlu0 %7222
        %7224 = vrot.lane.b32.xlu0 %v6438, 96
        %v7225 = vpop.permute.xlu0 %7224
        %7226 = vrot.lane.b32.xlu0 %v6439, 96
        %v7227 = vpop.permute.xlu0 %7226
        %7228 = vrot.lane.b32.xlu0 %v6440, 96
        %v7229 = vpop.permute.xlu0 %7228
        %7230 = vrot.lane.b32.xlu0 %v6441, 96
        %v7231 = vpop.permute.xlu0 %7230
        %7232 = vrot.lane.b32.xlu0 %v6442, 96
        %v7233 = vpop.permute.xlu0 %7232
        %7234 = vrot.lane.b32.xlu0 %v6443, 96
        %v7235 = vpop.permute.xlu0 %7234
        %7236 = vrot.lane.b32.xlu0 %v6444, 96
        %v7237 = vpop.permute.xlu0 %7236
        %7238 = vrot.lane.b32.xlu0 %v6445, 96
        %v7239 = vpop.permute.xlu0 %7238
        %7240 = vrot.lane.b32.xlu0 %v6446, 96
        %v7241 = vpop.permute.xlu0 %7240
        %7242 = vrot.lane.b32.xlu0 %v6447, 96
        %v7243 = vpop.permute.xlu0 %7242
        %7244 = vrot.lane.b32.xlu0 %v6448, 96
        %v7245 = vpop.permute.xlu0 %7244
        %7246 = vrot.lane.b32.xlu0 %v6449, 96
        %v7247 = vpop.permute.xlu0 %7246
        %7248 = vrot.lane.b32.xlu0 %v6450, 96
        %v7249 = vpop.permute.xlu0 %7248
        %7250 = vrot.lane.b32.xlu0 %v6451, 96
        %v7251 = vpop.permute.xlu0 %7250
        %7316 = vrot.lane.b32.xlu0 %v6452, 112
        %v7317 = vpop.permute.xlu0 %7316
        %7318 = vrot.lane.b32.xlu0 %v6453, 112
        %v7319 = vpop.permute.xlu0 %7318
        %7320 = vrot.lane.b32.xlu0 %v6454, 112
        %v7321 = vpop.permute.xlu0 %7320
        %7322 = vrot.lane.b32.xlu0 %v6455, 112
        %v7323 = vpop.permute.xlu0 %7322
        %7324 = vrot.lane.b32.xlu0 %v6456, 112
        %v7325 = vpop.permute.xlu0 %7324
        %7326 = vrot.lane.b32.xlu0 %v6457, 112
        %v7327 = vpop.permute.xlu0 %7326
        %7328 = vrot.lane.b32.xlu0 %v6458, 112
        %v7329 = vpop.permute.xlu0 %7328
        %7330 = vrot.lane.b32.xlu0 %v6459, 112
        %v7331 = vpop.permute.xlu0 %7330
        %7332 = vrot.lane.b32.xlu0 %v6460, 112
        %v7333 = vpop.permute.xlu0 %7332
        %7334 = vrot.lane.b32.xlu0 %v6461, 112
        %v7335 = vpop.permute.xlu0 %7334
        %7336 = vrot.lane.b32.xlu0 %v6462, 112
        %v7337 = vpop.permute.xlu0 %7336
        %7338 = vrot.lane.b32.xlu0 %v6463, 112
        %v7339 = vpop.permute.xlu0 %7338
        %7340 = vrot.lane.b32.xlu0 %v6464, 112
        %v7341 = vpop.permute.xlu0 %7340
        %7342 = vrot.lane.b32.xlu0 %v6465, 112
        %v7343 = vpop.permute.xlu0 %7342
        %7344 = vrot.lane.b32.xlu0 %v6466, 112
        %v7345 = vpop.permute.xlu0 %7344
        %7346 = vrot.lane.b32.xlu0 %v6467, 112
        %v7347 = vpop.permute.xlu0 %7346
        %7348 = vrot.lane.b32.xlu0 %v6468, 112
        %v7349 = vpop.permute.xlu0 %7348
        %7350 = vrot.lane.b32.xlu0 %v6469, 112
        %v7351 = vpop.permute.xlu0 %7350
        %7352 = vrot.lane.b32.xlu0 %v6470, 112
        %v7353 = vpop.permute.xlu0 %7352
        %7354 = vrot.lane.b32.xlu0 %v6471, 112
        %v7355 = vpop.permute.xlu0 %7354
        %7356 = vrot.lane.b32.xlu0 %v6472, 112
        %v7357 = vpop.permute.xlu0 %7356
        %7358 = vrot.lane.b32.xlu0 %v6473, 112
        %v7359 = vpop.permute.xlu0 %7358
        %7360 = vrot.lane.b32.xlu0 %v6474, 112
        %v7361 = vpop.permute.xlu0 %7360
        %7362 = vrot.lane.b32.xlu0 %v6475, 112
        %v7363 = vpop.permute.xlu0 %7362
        %7364 = vrot.lane.b32.xlu0 %v6476, 112
        %v7365 = vpop.permute.xlu0 %7364
        %7366 = vrot.lane.b32.xlu0 %v6477, 112
        %v7367 = vpop.permute.xlu0 %7366
        %7368 = vrot.lane.b32.xlu0 %v6478, 112
        %v7369 = vpop.permute.xlu0 %7368
        %7370 = vrot.lane.b32.xlu0 %v6479, 112
        %v7371 = vpop.permute.xlu0 %7370
        %7372 = vrot.lane.b32.xlu0 %v6480, 112
        %v7373 = vpop.permute.xlu0 %7372
        %7374 = vrot.lane.b32.xlu0 %v6481, 112
        %v7375 = vpop.permute.xlu0 %7374
        %7376 = vrot.lane.b32.xlu0 %v6482, 112
        %v7377 = vpop.permute.xlu0 %7376
        %7378 = vrot.lane.b32.xlu0 %v6483, 112
        %v7379 = vpop.permute.xlu0 %7378
        %v7412 = vsel %vm351, %v6228, %v6549
        %v7413 = vsel %vm351, %v6229, %v6551
        %v7414 = vsel %vm351, %v6230, %v6553
        %v7415 = vsel %vm351, %v6231, %v6555
        %v7416 = vsel %vm351, %v6232, %v6557
        %v7417 = vsel %vm351, %v6233, %v6559
        %v7418 = vsel %vm351, %v6234, %v6561
        %v7419 = vsel %vm351, %v6235, %v6563
        %v7420 = vsel %vm351, %v6236, %v6565
        %v7421 = vsel %vm351, %v6237, %v6567
        %v7422 = vsel %vm351, %v6238, %v6569
        %v7423 = vsel %vm351, %v6239, %v6571
        %v7424 = vsel %vm351, %v6240, %v6573
        %v7425 = vsel %vm351, %v6241, %v6575
        %v7426 = vsel %vm351, %v6242, %v6577
        %v7427 = vsel %vm351, %v6243, %v6579
        %v7428 = vsel %vm351, %v6244, %v6581
        %v7429 = vsel %vm351, %v6245, %v6583
        %v7430 = vsel %vm351, %v6246, %v6585
        %v7431 = vsel %vm351, %v6247, %v6587
        %v7432 = vsel %vm351, %v6248, %v6589
        %v7433 = vsel %vm351, %v6249, %v6591
        %v7434 = vsel %vm351, %v6250, %v6593
        %v7435 = vsel %vm351, %v6251, %v6595
        %v7436 = vsel %vm351, %v6252, %v6597
        %v7437 = vsel %vm351, %v6253, %v6599
        %v7438 = vsel %vm351, %v6254, %v6601
        %v7439 = vsel %vm351, %v6255, %v6603
        %v7440 = vsel %vm351, %v6256, %v6605
        %v7441 = vsel %vm351, %v6257, %v6607
        %v7442 = vsel %vm351, %v6258, %v6609
        %v7443 = vsel %vm351, %v6259, %v6611
        %v7444 = vsel %vm1708, %v7412, %v6677
        %v7445 = vsel %vm1708, %v7413, %v6679
        %v7446 = vsel %vm1708, %v7414, %v6681
        %v7447 = vsel %vm1708, %v7415, %v6683
        %v7448 = vsel %vm1708, %v7416, %v6685
        %v7449 = vsel %vm1708, %v7417, %v6687
        %v7450 = vsel %vm1708, %v7418, %v6689
        %v7451 = vsel %vm1708, %v7419, %v6691
        %v7452 = vsel %vm1708, %v7420, %v6693
        %v7453 = vsel %vm1708, %v7421, %v6695
        %v7454 = vsel %vm1708, %v7422, %v6697
        %v7455 = vsel %vm1708, %v7423, %v6699
        %v7456 = vsel %vm1708, %v7424, %v6701
        %v7457 = vsel %vm1708, %v7425, %v6703
        %v7458 = vsel %vm1708, %v7426, %v6705
        %v7459 = vsel %vm1708, %v7427, %v6707
        %v7460 = vsel %vm1708, %v7428, %v6709
        %v7461 = vsel %vm1708, %v7429, %v6711
        %v7462 = vsel %vm1708, %v7430, %v6713
        %v7463 = vsel %vm1708, %v7431, %v6715
        %v7464 = vsel %vm1708, %v7432, %v6717
        %v7465 = vsel %vm1708, %v7433, %v6719
        %v7466 = vsel %vm1708, %v7434, %v6721
        %v7467 = vsel %vm1708, %v7435, %v6723
        %v7468 = vsel %vm1708, %v7436, %v6725
        %v7469 = vsel %vm1708, %v7437, %v6727
        %v7470 = vsel %vm1708, %v7438, %v6729
        %v7471 = vsel %vm1708, %v7439, %v6731
        %v7472 = vsel %vm1708, %v7440, %v6733
        %v7473 = vsel %vm1708, %v7441, %v6735
        %v7474 = vsel %vm1708, %v7442, %v6737
        %v7475 = vsel %vm1708, %v7443, %v6739
        %v7476 = vsel %vm1741, %v7444, %v6805
        %v7477 = vsel %vm1741, %v7445, %v6807
        %v7478 = vsel %vm1741, %v7446, %v6809
        %v7479 = vsel %vm1741, %v7447, %v6811
        %v7480 = vsel %vm1741, %v7448, %v6813
        %v7481 = vsel %vm1741, %v7449, %v6815
        %v7482 = vsel %vm1741, %v7450, %v6817
        %v7483 = vsel %vm1741, %v7451, %v6819
        %v7484 = vsel %vm1741, %v7452, %v6821
        %v7485 = vsel %vm1741, %v7453, %v6823
        %v7486 = vsel %vm1741, %v7454, %v6825
        %v7487 = vsel %vm1741, %v7455, %v6827
        %v7488 = vsel %vm1741, %v7456, %v6829
        %v7489 = vsel %vm1741, %v7457, %v6831
        %v7490 = vsel %vm1741, %v7458, %v6833
        %v7491 = vsel %vm1741, %v7459, %v6835
        %v7492 = vsel %vm1741, %v7460, %v6837
        %v7493 = vsel %vm1741, %v7461, %v6839
        %v7494 = vsel %vm1741, %v7462, %v6841
        %v7495 = vsel %vm1741, %v7463, %v6843
        %v7496 = vsel %vm1741, %v7464, %v6845
        %v7497 = vsel %vm1741, %v7465, %v6847
        %v7498 = vsel %vm1741, %v7466, %v6849
        %v7499 = vsel %vm1741, %v7467, %v6851
        %v7500 = vsel %vm1741, %v7468, %v6853
        %v7501 = vsel %vm1741, %v7469, %v6855
        %v7502 = vsel %vm1741, %v7470, %v6857
        %v7503 = vsel %vm1741, %v7471, %v6859
        %v7504 = vsel %vm1741, %v7472, %v6861
        %v7505 = vsel %vm1741, %v7473, %v6863
        %v7506 = vsel %vm1741, %v7474, %v6865
        %v7507 = vsel %vm1741, %v7475, %v6867
        %v7508 = vsel %vm1774, %v7476, %v6933
        %v7509 = vsel %vm1774, %v7477, %v6935
        %v7510 = vsel %vm1774, %v7478, %v6937
        %v7511 = vsel %vm1774, %v7479, %v6939
        %v7512 = vsel %vm1774, %v7480, %v6941
        %v7513 = vsel %vm1774, %v7481, %v6943
        %v7514 = vsel %vm1774, %v7482, %v6945
        %v7515 = vsel %vm1774, %v7483, %v6947
        %v7516 = vsel %vm1774, %v7484, %v6949
        %v7517 = vsel %vm1774, %v7485, %v6951
        %v7518 = vsel %vm1774, %v7486, %v6953
        %v7519 = vsel %vm1774, %v7487, %v6955
        %v7520 = vsel %vm1774, %v7488, %v6957
        %v7521 = vsel %vm1774, %v7489, %v6959
        %v7522 = vsel %vm1774, %v7490, %v6961
        %v7523 = vsel %vm1774, %v7491, %v6963
        %v7524 = vsel %vm1774, %v7492, %v6965
        %v7525 = vsel %vm1774, %v7493, %v6967
        %v7526 = vsel %vm1774, %v7494, %v6969
        %v7527 = vsel %vm1774, %v7495, %v6971
        %v7528 = vsel %vm1774, %v7496, %v6973
        %v7529 = vsel %vm1774, %v7497, %v6975
        %v7530 = vsel %vm1774, %v7498, %v6977
        %v7531 = vsel %vm1774, %v7499, %v6979
        %v7532 = vsel %vm1774, %v7500, %v6981
        %v7533 = vsel %vm1774, %v7501, %v6983
        %v7534 = vsel %vm1774, %v7502, %v6985
        %v7535 = vsel %vm1774, %v7503, %v6987
        %v7536 = vsel %vm1774, %v7504, %v6989
        %v7537 = vsel %vm1774, %v7505, %v6991
        %v7538 = vsel %vm1774, %v7506, %v6993
        %v7539 = vsel %vm1774, %v7507, %v6995
        %v7540 = vsel %vm1807, %v7508, %v7061
        %v7541 = vsel %vm1807, %v7509, %v7063
        %v7542 = vsel %vm1807, %v7510, %v7065
        %v7543 = vsel %vm1807, %v7511, %v7067
        %v7544 = vsel %vm1807, %v7512, %v7069
        %v7545 = vsel %vm1807, %v7513, %v7071
        %v7546 = vsel %vm1807, %v7514, %v7073
        %v7547 = vsel %vm1807, %v7515, %v7075
        %v7548 = vsel %vm1807, %v7516, %v7077
        %v7549 = vsel %vm1807, %v7517, %v7079
        %v7550 = vsel %vm1807, %v7518, %v7081
        %v7551 = vsel %vm1807, %v7519, %v7083
        %v7552 = vsel %vm1807, %v7520, %v7085
        %v7553 = vsel %vm1807, %v7521, %v7087
        %v7554 = vsel %vm1807, %v7522, %v7089
        %v7555 = vsel %vm1807, %v7523, %v7091
        %v7556 = vsel %vm1807, %v7524, %v7093
        %v7557 = vsel %vm1807, %v7525, %v7095
        %v7558 = vsel %vm1807, %v7526, %v7097
        %v7559 = vsel %vm1807, %v7527, %v7099
        %v7560 = vsel %vm1807, %v7528, %v7101
        %v7561 = vsel %vm1807, %v7529, %v7103
        %v7562 = vsel %vm1807, %v7530, %v7105
        %v7563 = vsel %vm1807, %v7531, %v7107
        %v7564 = vsel %vm1807, %v7532, %v7109
        %v7565 = vsel %vm1807, %v7533, %v7111
        %v7566 = vsel %vm1807, %v7534, %v7113
        %v7567 = vsel %vm1807, %v7535, %v7115
        %v7568 = vsel %vm1807, %v7536, %v7117
        %v7569 = vsel %vm1807, %v7537, %v7119
        %v7570 = vsel %vm1807, %v7538, %v7121
        %v7571 = vsel %vm1807, %v7539, %v7123
        %v7572 = vsel %vm1840, %v7540, %v7189
        %v7573 = vsel %vm1840, %v7541, %v7191
        %v7574 = vsel %vm1840, %v7542, %v7193
        %v7575 = vsel %vm1840, %v7543, %v7195
        %v7576 = vsel %vm1840, %v7544, %v7197
        %v7577 = vsel %vm1840, %v7545, %v7199
        %v7578 = vsel %vm1840, %v7546, %v7201
        %v7579 = vsel %vm1840, %v7547, %v7203
        %v7580 = vsel %vm1840, %v7548, %v7205
        %v7581 = vsel %vm1840, %v7549, %v7207
        %v7582 = vsel %vm1840, %v7550, %v7209
        %v7583 = vsel %vm1840, %v7551, %v7211
        %v7584 = vsel %vm1840, %v7552, %v7213
        %v7585 = vsel %vm1840, %v7553, %v7215
        %v7586 = vsel %vm1840, %v7554, %v7217
        %v7587 = vsel %vm1840, %v7555, %v7219
        %v7588 = vsel %vm1840, %v7556, %v7221
        %v7589 = vsel %vm1840, %v7557, %v7223
        %v7590 = vsel %vm1840, %v7558, %v7225
        %v7591 = vsel %vm1840, %v7559, %v7227
        %v7592 = vsel %vm1840, %v7560, %v7229
        %v7593 = vsel %vm1840, %v7561, %v7231
        %v7594 = vsel %vm1840, %v7562, %v7233
        %v7595 = vsel %vm1840, %v7563, %v7235
        %v7596 = vsel %vm1840, %v7564, %v7237
        %v7597 = vsel %vm1840, %v7565, %v7239
        %v7598 = vsel %vm1840, %v7566, %v7241
        %v7599 = vsel %vm1840, %v7567, %v7243
        %v7600 = vsel %vm1840, %v7568, %v7245
        %v7601 = vsel %vm1840, %v7569, %v7247
        %v7602 = vsel %vm1840, %v7570, %v7249
        %v7603 = vsel %vm1840, %v7571, %v7251
        %v7604 = vsel %vm1873, %v7572, %v7317
        %v7605 = vsel %vm1873, %v7573, %v7319
        %v7606 = vsel %vm1873, %v7574, %v7321
        %v7607 = vsel %vm1873, %v7575, %v7323
        %v7608 = vsel %vm1873, %v7576, %v7325
        %v7609 = vsel %vm1873, %v7577, %v7327
        %v7610 = vsel %vm1873, %v7578, %v7329
        %v7611 = vsel %vm1873, %v7579, %v7331
        %v7612 = vsel %vm1873, %v7580, %v7333
        %v7613 = vsel %vm1873, %v7581, %v7335
        %v7614 = vsel %vm1873, %v7582, %v7337
        %v7615 = vsel %vm1873, %v7583, %v7339
        %v7616 = vsel %vm1873, %v7584, %v7341
        %v7617 = vsel %vm1873, %v7585, %v7343
        %v7618 = vsel %vm1873, %v7586, %v7345
        %v7619 = vsel %vm1873, %v7587, %v7347
        %v7620 = vsel %vm1873, %v7588, %v7349
        %v7621 = vsel %vm1873, %v7589, %v7351
        %v7622 = vsel %vm1873, %v7590, %v7353
        %v7623 = vsel %vm1873, %v7591, %v7355
        %v7624 = vsel %vm1873, %v7592, %v7357
        %v7625 = vsel %vm1873, %v7593, %v7359
        %v7626 = vsel %vm1873, %v7594, %v7361
        %v7627 = vsel %vm1873, %v7595, %v7363
        %v7628 = vsel %vm1873, %v7596, %v7365
        %v7629 = vsel %vm1873, %v7597, %v7367
        %v7630 = vsel %vm1873, %v7598, %v7369
        %v7631 = vsel %vm1873, %v7599, %v7371
        %v7632 = vsel %vm1873, %v7600, %v7373
        %v7633 = vsel %vm1873, %v7601, %v7375
        %v7634 = vsel %vm1873, %v7602, %v7377
        %v7635 = vsel %vm1873, %v7603, %v7379
        %v7637 = vlaneseq
        %v7638 = vshrl.u32 %v7637, 7
        %v7639 = vsub.s32 0, %v7638
        %v7640 = vrot.slane %v6195, %v7639
        %v7643 = vsel %vm351, %v6484, 0
        %v7646 = vsel %vm351, %v6485, 0
        %v7649 = vsel %vm351, %v6486, 0
        %v7652 = vsel %vm351, %v6487, 0
        %v7655 = vsel %vm351, %v6488, 0
        %v7658 = vsel %vm351, %v6489, 0
        %v7661 = vsel %vm351, %v6490, 0
        %v7664 = vsel %vm351, %v6491, 0
        %v7667 = vsel %vm351, %v6492, 0
        %v7670 = vsel %vm351, %v6493, 0
        %v7673 = vsel %vm351, %v6494, 0
        %v7676 = vsel %vm351, %v6495, 0
        %v7679 = vsel %vm351, %v6496, 0
        %v7682 = vsel %vm351, %v6497, 0
        %v7685 = vsel %vm351, %v6498, 0
        %v7688 = vsel %vm351, %v6499, 0
        %v7691 = vsel %vm351, %v6500, 0
        %v7694 = vsel %vm351, %v6501, 0
        %v7697 = vsel %vm351, %v6502, 0
        %v7700 = vsel %vm351, %v6503, 0
        %v7703 = vsel %vm351, %v6504, 0
        %v7706 = vsel %vm351, %v6505, 0
        %v7709 = vsel %vm351, %v6506, 0
        %v7712 = vsel %vm351, %v6507, 0
        %v7715 = vsel %vm351, %v6508, 0
        %v7718 = vsel %vm351, %v6509, 0
        %v7721 = vsel %vm351, %v6510, 0
        %v7724 = vsel %vm351, %v6511, 0
        %v7727 = vsel %vm351, %v6512, 0
        %v7730 = vsel %vm351, %v6513, 0
        %v7733 = vsel %vm351, %v6514, 0
        %v7736 = vsel %vm351, %v6515, 0
        %7738 = vmatprep.subr.mxu0 0.0
        %7739 = vmatpush1.msra.mxu0 %v6176
        %7740 = vmatprep.subr.mxu0 0.0
        %7741 = vmatpush1.msra.mxu0 %v6177
        %7742 = vmatprep.subr.mxu0 0.0
        %7743 = vmatpush1.msra.mxu0 %v6178
        %7744 = vmatprep.subr.mxu0 0.0
        %7745 = vmatpush1.msra.mxu0 %v6179
        %7746 = vmatprep.subr.mxu0 0.0
        %7747 = vmatpush1.msra.mxu0 %v6180
        %7748 = vmatprep.subr.mxu0 0.0
        %7749 = vmatpush1.msra.mxu0 %v6181
        %7750 = vmatprep.subr.mxu0 0.0
        %7751 = vmatpush1.msra.mxu0 %v6182
        %7752 = vmatprep.subr.mxu0 0.0
        %7753 = vmatpush1.msra.mxu0 %v6183
        %7754 = vmatprep.subr.mxu0 0.0
        %7755 = vmatpush1.msra.mxu0 %v6184
        %7756 = vmatprep.subr.mxu0 0.0
        %7757 = vmatpush1.msra.mxu0 %v6185
        %7758 = vmatprep.subr.mxu0 0.0
        %7759 = vmatpush1.msra.mxu0 %v6186
        %7760 = vmatprep.subr.mxu0 0.0
        %7761 = vmatpush1.msra.mxu0 %v6187
        %7762 = vmatprep.subr.mxu0 0.0
        %7763 = vmatpush1.msra.mxu0 %v6188
        %7764 = vmatprep.subr.mxu0 0.0
        %7765 = vmatpush1.msra.mxu0 %v6189
        %7766 = vmatprep.subr.mxu0 0.0
        %7767 = vmatpush1.msra.mxu0 %v6190
        %7768 = vmatprep.subr.mxu0 0.0
        %7769 = vmatpush1.msra.mxu0 %v6191
        %7770 = vmatprep.subr.mxu0 0.0
        %7771 = vmatpush1.msra.mxu0 %v6192
        %7772 = vmatprep.subr.mxu0 0.0
        %7773 = vmatpush1.msra.mxu0 %v6193
        %7774 = vmatprep.subr.mxu0 0.0
        %7775 = vmatpush1.msra.mxu0 0.0
        %7776 = vmatprep.subr.mxu0 0.0
        %7777 = vmatpush1.msra.mxu0 0.0
        %7778 = vmatprep.subr.mxu0 0.0
        %7779 = vmatpush1.msra.mxu0 0.0
        %7780 = vmatprep.subr.mxu0 0.0
        %7781 = vmatpush1.msra.mxu0 0.0
        %7782 = vmatprep.subr.mxu0 0.0
        %7783 = vmatpush1.msra.mxu0 0.0
        %7784 = vmatprep.subr.mxu0 0.0
        %7785 = vmatpush1.msra.mxu0 0.0
        %7786 = vmatprep.subr.mxu0 0.0
        %7787 = vmatpush1.msra.mxu0 0.0
        %7788 = vmatprep.subr.mxu0 0.0
        %7789 = vmatpush1.msra.mxu0 0.0
        %7790 = vmatprep.subr.mxu0 0.0
        %7791 = vmatpush1.msra.mxu0 0.0
        %7792 = vmatprep.subr.mxu0 0.0
        %7793 = vmatpush1.msra.mxu0 0.0
        %7794 = vmatprep.subr.mxu0 0.0
        %7795 = vmatpush1.msra.mxu0 0.0
        %7796 = vmatprep.subr.mxu0 0.0
        %7797 = vmatpush1.msra.mxu0 0.0
        %7798 = vmatprep.subr.mxu0 0.0
        %7799 = vmatpush1.msra.mxu0 0.0
        %7800 = vmatprep.subr.mxu0 0.0
        %7801 = vmatpush1.msra.mxu0 0.0
        %7802 = vmatprep.mubr.f32.mxu0 %v7643
        %7803 = vmatmul.mubr.f32.gmra.mrb[0].mxu0 %v7604
        %v7804 = vpop.f32.mrb[0].mxu0
        %v7805 = vadd.f32 %v7640, %v7804
        %v7806 = vpop.f32.mrb[0].mxu0
        %7807 = vmatprep.mubr.f32.mxu0 %v7646
        %7808 = vmatmul.mubr.f32.gmra.mrb[0].mxu0 %v7605
        %v7809 = vpop.f32.mrb[0].mxu0
        %v7810 = vadd.f32 %v7640, %v7809
        %v7811 = vpop.f32.mrb[0].mxu0
        %7812 = vmatprep.mubr.f32.mxu0 %v7649
        %7813 = vmatmul.mubr.f32.gmra.mrb[0].mxu0 %v7606
        %v7814 = vpop.f32.mrb[0].mxu0
        %v7815 = vadd.f32 %v7640, %v7814
        %v7816 = vpop.f32.mrb[0].mxu0
        %7817 = vmatprep.mubr.f32.mxu0 %v7652
        %7818 = vmatmul.mubr.f32.gmra.mrb[0].mxu0 %v7607
        %v7819 = vpop.f32.mrb[0].mxu0
        %v7820 = vadd.f32 %v7640, %v7819
        %v7821 = vpop.f32.mrb[0].mxu0
        %7822 = vmatprep.mubr.f32.mxu0 %v7655
        %7823 = vmatmul.mubr.f32.gmra.mrb[0].mxu0 %v7608
        %v7824 = vpop.f32.mrb[0].mxu0
        %v7825 = vadd.f32 %v7640, %v7824
        %v7826 = vpop.f32.mrb[0].mxu0
        %7827 = vmatprep.mubr.f32.mxu0 %v7658
        %7828 = vmatmul.mubr.f32.gmra.mrb[0].mxu0 %v7609
        %v7829 = vpop.f32.mrb[0].mxu0
        %v7830 = vadd.f32 %v7640, %v7829
        %v7831 = vpop.f32.mrb[0].mxu0
        %7832 = vmatprep.mubr.f32.mxu0 %v7661
        %7833 = vmatmul.mubr.f32.gmra.mrb[0].mxu0 %v7610
        %v7834 = vpop.f32.mrb[0].mxu0
        %v7835 = vadd.f32 %v7640, %v7834
        %v7836 = vpop.f32.mrb[0].mxu0
        %7837 = vmatprep.mubr.f32.mxu0 %v7664
        %7838 = vmatmul.mubr.f32.gmra.mrb[0].mxu0 %v7611
        %v7839 = vpop.f32.mrb[0].mxu0
        %v7840 = vadd.f32 %v7640, %v7839
        %v7841 = vpop.f32.mrb[0].mxu0
        %7842 = vmatprep.mubr.f32.mxu0 %v7667
        %7843 = vmatmul.mubr.f32.gmra.mrb[0].mxu0 %v7612
        %v7844 = vpop.f32.mrb[0].mxu0
        %v7845 = vadd.f32 %v7640, %v7844
        %v7846 = vpop.f32.mrb[0].mxu0
        %7847 = vmatprep.mubr.f32.mxu0 %v7670
        %7848 = vmatmul.mubr.f32.gmra.mrb[0].mxu0 %v7613
        %v7849 = vpop.f32.mrb[0].mxu0
        %v7850 = vadd.f32 %v7640, %v7849
        %v7851 = vpop.f32.mrb[0].mxu0
        %7852 = vmatprep.mubr.f32.mxu0 %v7673
        %7853 = vmatmul.mubr.f32.gmra.mrb[0].mxu0 %v7614
        %v7854 = vpop.f32.mrb[0].mxu0
        %v7855 = vadd.f32 %v7640, %v7854
        %v7856 = vpop.f32.mrb[0].mxu0
        %7857 = vmatprep.mubr.f32.mxu0 %v7676
        %7858 = vmatmul.mubr.f32.gmra.mrb[0].mxu0 %v7615
        %v7859 = vpop.f32.mrb[0].mxu0
        %v7860 = vadd.f32 %v7640, %v7859
        %v7861 = vpop.f32.mrb[0].mxu0
        %7862 = vmatprep.mubr.f32.mxu0 %v7679
        %7863 = vmatmul.mubr.f32.gmra.mrb[0].mxu0 %v7616
        %v7864 = vpop.f32.mrb[0].mxu0
        %v7865 = vadd.f32 %v7640, %v7864
        %v7866 = vpop.f32.mrb[0].mxu0
        %7867 = vmatprep.mubr.f32.mxu0 %v7682
        %7868 = vmatmul.mubr.f32.gmra.mrb[0].mxu0 %v7617
        %v7869 = vpop.f32.mrb[0].mxu0
        %v7870 = vadd.f32 %v7640, %v7869
        %v7871 = vpop.f32.mrb[0].mxu0
        %7872 = vmatprep.mubr.f32.mxu0 %v7685
        %7873 = vmatmul.mubr.f32.gmra.mrb[0].mxu0 %v7618
        %v7874 = vpop.f32.mrb[0].mxu0
        %v7875 = vadd.f32 %v7640, %v7874
        %v7876 = vpop.f32.mrb[0].mxu0
        %7877 = vmatprep.mubr.f32.mxu0 %v7688
        %7878 = vmatmul.mubr.f32.gmra.mrb[0].mxu0 %v7619
        %v7879 = vpop.f32.mrb[0].mxu0
        %v7880 = vadd.f32 %v7640, %v7879
        %v7881 = vpop.f32.mrb[0].mxu0
        %7882 = vmatprep.mubr.f32.mxu0 %v7691
        %7883 = vmatmul.mubr.f32.gmra.mrb[0].mxu0 %v7620
        %v7884 = vpop.f32.mrb[0].mxu0
        %v7885 = vadd.f32 %v7640, %v7884
        %v7886 = vpop.f32.mrb[0].mxu0
        %7887 = vmatprep.mubr.f32.mxu0 %v7694
        %7888 = vmatmul.mubr.f32.gmra.mrb[0].mxu0 %v7621
        %v7889 = vpop.f32.mrb[0].mxu0
        %v7890 = vadd.f32 %v7640, %v7889
        %v7891 = vpop.f32.mrb[0].mxu0
        %7892 = vmatprep.mubr.f32.mxu0 %v7697
        %7893 = vmatmul.mubr.f32.gmra.mrb[0].mxu0 %v7622
        %v7894 = vpop.f32.mrb[0].mxu0
        %v7895 = vadd.f32 %v7640, %v7894
        %v7896 = vpop.f32.mrb[0].mxu0
        %7897 = vmatprep.mubr.f32.mxu0 %v7700
        %7898 = vmatmul.mubr.f32.gmra.mrb[0].mxu0 %v7623
        %v7899 = vpop.f32.mrb[0].mxu0
        %v7900 = vadd.f32 %v7640, %v7899
        %v7901 = vpop.f32.mrb[0].mxu0
        %7902 = vmatprep.mubr.f32.mxu0 %v7703
        %7903 = vmatmul.mubr.f32.gmra.mrb[0].mxu0 %v7624
        %v7904 = vpop.f32.mrb[0].mxu0
        %v7905 = vadd.f32 %v7640, %v7904
        %v7906 = vpop.f32.mrb[0].mxu0
        %7907 = vmatprep.mubr.f32.mxu0 %v7706
        %7908 = vmatmul.mubr.f32.gmra.mrb[0].mxu0 %v7625
        %v7909 = vpop.f32.mrb[0].mxu0
        %v7910 = vadd.f32 %v7640, %v7909
        %v7911 = vpop.f32.mrb[0].mxu0
        %7912 = vmatprep.mubr.f32.mxu0 %v7709
        %7913 = vmatmul.mubr.f32.gmra.mrb[0].mxu0 %v7626
        %v7914 = vpop.f32.mrb[0].mxu0
        %v7915 = vadd.f32 %v7640, %v7914
        %v7916 = vpop.f32.mrb[0].mxu0
        %7917 = vmatprep.mubr.f32.mxu0 %v7712
        %7918 = vmatmul.mubr.f32.gmra.mrb[0].mxu0 %v7627
        %v7919 = vpop.f32.mrb[0].mxu0
        %v7920 = vadd.f32 %v7640, %v7919
        %v7921 = vpop.f32.mrb[0].mxu0
        %7922 = vmatprep.mubr.f32.mxu0 %v7715
        %7923 = vmatmul.mubr.f32.gmra.mrb[0].mxu0 %v7628
        %v7924 = vpop.f32.mrb[0].mxu0
        %v7925 = vadd.f32 %v7640, %v7924
        %v7926 = vpop.f32.mrb[0].mxu0
        %7927 = vmatprep.mubr.f32.mxu0 %v7718
        %7928 = vmatmul.mubr.f32.gmra.mrb[0].mxu0 %v7629
        %v7929 = vpop.f32.mrb[0].mxu0
        %v7930 = vadd.f32 %v7640, %v7929
        %v7931 = vpop.f32.mrb[0].mxu0
        %7932 = vmatprep.mubr.f32.mxu0 %v7721
        %7933 = vmatmul.mubr.f32.gmra.mrb[0].mxu0 %v7630
        %v7934 = vpop.f32.mrb[0].mxu0
        %v7935 = vadd.f32 %v7640, %v7934
        %v7936 = vpop.f32.mrb[0].mxu0
        %7937 = vmatprep.mubr.f32.mxu0 %v7724
        %7938 = vmatmul.mubr.f32.gmra.mrb[0].mxu0 %v7631
        %v7939 = vpop.f32.mrb[0].mxu0
        %v7940 = vadd.f32 %v7640, %v7939
        %v7941 = vpop.f32.mrb[0].mxu0
        %7942 = vmatprep.mubr.f32.mxu0 %v7727
        %7943 = vmatmul.mubr.f32.gmra.mrb[0].mxu0 %v7632
        %v7944 = vpop.f32.mrb[0].mxu0
        %v7945 = vadd.f32 %v7640, %v7944
        %v7946 = vpop.f32.mrb[0].mxu0
        %7947 = vmatprep.mubr.f32.mxu0 %v7730
        %7948 = vmatmul.mubr.f32.gmra.mrb[0].mxu0 %v7633
        %v7949 = vpop.f32.mrb[0].mxu0
        %v7950 = vadd.f32 %v7640, %v7949
        %v7951 = vpop.f32.mrb[0].mxu0
        %7952 = vmatprep.mubr.f32.mxu0 %v7733
        %7953 = vmatmul.mubr.f32.gmra.mrb[0].mxu0 %v7634
        %v7954 = vpop.f32.mrb[0].mxu0
        %v7955 = vadd.f32 %v7640, %v7954
        %v7956 = vpop.f32.mrb[0].mxu0
        %7957 = vmatprep.mubr.f32.mxu0 %v7736
        %7958 = vmatmul.mubr.f32.gmra.mrb[0].mxu0 %v7635
        %v7959 = vpop.f32.mrb[0].mxu0
        %v7960 = vadd.f32 %v7640, %v7959
        %v7961 = vpop.f32.mrb[0].mxu0
        %7962 = vdwg.mxu0
        %v7963 = vsel %vm351, %v7805, 0.0
        %v7964 = vsel %vm351, %v7810, 0.0
        %v7965 = vadd.f32 %v7963, %v7964
        %v7966 = vsel %vm351, %v7815, 0.0
        %v7967 = vadd.f32 %v7965, %v7966
        %v7968 = vsel %vm351, %v7820, 0.0
        %v7969 = vadd.f32 %v7967, %v7968
        %v7970 = vsel %vm351, %v7825, 0.0
        %v7971 = vadd.f32 %v7969, %v7970
        %v7972 = vsel %vm351, %v7830, 0.0
        %v7973 = vadd.f32 %v7971, %v7972
        %v7974 = vsel %vm351, %v7835, 0.0
        %v7975 = vadd.f32 %v7973, %v7974
        %v7976 = vsel %vm351, %v7840, 0.0
        %v7977 = vadd.f32 %v7975, %v7976
        %v7978 = vsel %vm351, %v7845, 0.0
        %v7979 = vadd.f32 %v7977, %v7978
        %v7980 = vsel %vm351, %v7850, 0.0
        %v7981 = vadd.f32 %v7979, %v7980
        %v7982 = vsel %vm351, %v7855, 0.0
        %v7983 = vadd.f32 %v7981, %v7982
        %v7984 = vsel %vm351, %v7860, 0.0
        %v7985 = vadd.f32 %v7983, %v7984
        %v7986 = vsel %vm351, %v7865, 0.0
        %v7987 = vadd.f32 %v7985, %v7986
        %v7988 = vsel %vm351, %v7870, 0.0
        %v7989 = vadd.f32 %v7987, %v7988
        %v7990 = vsel %vm351, %v7875, 0.0
        %v7991 = vadd.f32 %v7989, %v7990
        %v7992 = vsel %vm351, %v7880, 0.0
        %v7993 = vadd.f32 %v7991, %v7992
        %v7994 = vsel %vm351, %v7885, 0.0
        %v7995 = vadd.f32 %v7993, %v7994
        %v7996 = vsel %vm351, %v7890, 0.0
        %v7997 = vadd.f32 %v7995, %v7996
        %v7998 = vsel %vm351, %v7895, 0.0
        %v7999 = vadd.f32 %v7997, %v7998
        %v8000 = vsel %vm351, %v7900, 0.0
        %v8001 = vadd.f32 %v7999, %v8000
        %v8002 = vsel %vm351, %v7905, 0.0
        %v8003 = vadd.f32 %v8001, %v8002
        %v8004 = vsel %vm351, %v7910, 0.0
        %v8005 = vadd.f32 %v8003, %v8004
        %v8006 = vsel %vm351, %v7915, 0.0
        %v8007 = vadd.f32 %v8005, %v8006
        %v8008 = vsel %vm351, %v7920, 0.0
        %v8009 = vadd.f32 %v8007, %v8008
        %v8010 = vsel %vm351, %v7925, 0.0
        %v8011 = vadd.f32 %v8009, %v8010
        %v8012 = vsel %vm351, %v7930, 0.0
        %v8013 = vadd.f32 %v8011, %v8012
        %v8014 = vsel %vm351, %v7935, 0.0
        %v8015 = vadd.f32 %v8013, %v8014
        %v8016 = vsel %vm351, %v7940, 0.0
        %v8017 = vadd.f32 %v8015, %v8016
        %v8018 = vsel %vm351, %v7945, 0.0
        %v8019 = vadd.f32 %v8017, %v8018
        %v8020 = vsel %vm351, %v7950, 0.0
        %v8021 = vadd.f32 %v8019, %v8020
        %v8022 = vsel %vm351, %v7955, 0.0
        %v8023 = vadd.f32 %v8021, %v8022
        %v8024 = vsel %vm351, %v7960, 0.0
        %v8025 = vadd.f32 %v8023, %v8024
        %v8026 = vrot.slane %v8025, 4
        %v8027 = vadd.f32 %v8025, %v8026
        %v8028 = vrot.slane %v8027, 2
        %v8029 = vadd.f32 %v8027, %v8028
        %v8030 = vrot.slane %v8029, 1
        %v8031 = vadd.f32 %v8029, %v8030
        %v8032 = vmul.f32 %v8031, %v4122
        %s8033 = scalar_lea.vmem %s3, 16
        %v8034 = vld [vmem:[%s8033] sm:$0xff]
        %v8035 = vld [vmem:[%s8033 + $0x8] sm:$0xff]
        %s8036 = scalar_lea.vmem %s4, 1
        %v8037 = vld [vmem:[%s8036] sm:$0x1]
        %v8039 = vsel %vm351, %v8032, 0
        %8041 = vmatprep.subr.mxu0 0.0
        %8042 = vmatpush1.msra.mxu0 %v8034
        %8043 = vmatprep.subr.mxu0 0.0
        %8044 = vmatpush1.msra.mxu0 %v8035
        %8045 = vmatprep.subr.mxu0 0.0
        %8046 = vmatpush1.msra.mxu0 0.0
        %8047 = vmatprep.subr.mxu0 0.0
        %8048 = vmatpush1.msra.mxu0 0.0
        %8049 = vmatprep.subr.mxu0 0.0
        %8050 = vmatpush1.msra.mxu0 0.0
        %8051 = vmatprep.subr.mxu0 0.0
        %8052 = vmatpush1.msra.mxu0 0.0
        %8053 = vmatprep.subr.mxu0 0.0
        %8054 = vmatpush1.msra.mxu0 0.0
        %8055 = vmatprep.subr.mxu0 0.0
        %8056 = vmatpush1.msra.mxu0 0.0
        %8057 = vmatprep.subr.mxu0 0.0
        %8058 = vmatpush1.msra.mxu0 0.0
        %8059 = vmatprep.subr.mxu0 0.0
        %8060 = vmatpush1.msra.mxu0 0.0
        %8061 = vmatprep.subr.mxu0 0.0
        %8062 = vmatpush1.msra.mxu0 0.0
        %8063 = vmatprep.subr.mxu0 0.0
        %8064 = vmatpush1.msra.mxu0 0.0
        %8065 = vmatprep.subr.mxu0 0.0
        %8066 = vmatpush1.msra.mxu0 0.0
        %8067 = vmatprep.subr.mxu0 0.0
        %8068 = vmatpush1.msra.mxu0 0.0
        %8069 = vmatprep.subr.mxu0 0.0
        %8070 = vmatpush1.msra.mxu0 0.0
        %8071 = vmatprep.subr.mxu0 0.0
        %8072 = vmatpush1.msra.mxu0 0.0
        %8073 = vmatprep.subr.mxu0 0.0
        %8074 = vmatpush1.msra.mxu0 0.0
        %8075 = vmatprep.subr.mxu0 0.0
        %8076 = vmatpush1.msra.mxu0 0.0
        %8077 = vmatprep.subr.mxu0 0.0
        %8078 = vmatpush1.msra.mxu0 0.0
        %8079 = vmatprep.subr.mxu0 0.0
        %8080 = vmatpush1.msra.mxu0 0.0
        %8081 = vmatprep.subr.mxu0 0.0
        %8082 = vmatpush1.msra.mxu0 0.0
        %8083 = vmatprep.subr.mxu0 0.0
        %8084 = vmatpush1.msra.mxu0 0.0
        %8085 = vmatprep.subr.mxu0 0.0
        %8086 = vmatpush1.msra.mxu0 0.0
        %8087 = vmatprep.subr.mxu0 0.0
        %8088 = vmatpush1.msra.mxu0 0.0
        %8089 = vmatprep.subr.mxu0 0.0
        %8090 = vmatpush1.msra.mxu0 0.0
        %8091 = vmatprep.subr.mxu0 0.0
        %8092 = vmatpush1.msra.mxu0 0.0
        %8093 = vmatprep.subr.mxu0 0.0
        %8094 = vmatpush1.msra.mxu0 0.0
        %8095 = vmatprep.subr.mxu0 0.0
        %8096 = vmatpush1.msra.mxu0 0.0
        %8097 = vmatprep.subr.mxu0 0.0
        %8098 = vmatpush1.msra.mxu0 0.0
        %8099 = vmatprep.subr.mxu0 0.0
        %8100 = vmatpush1.msra.mxu0 0.0
        %8101 = vmatprep.subr.mxu0 0.0
        %8102 = vmatpush1.msra.mxu0 0.0
        %8103 = vmatprep.subr.mxu0 0.0
        %8104 = vmatpush1.msra.mxu0 0.0
        %8105 = vmatprep.mubr.f32.mxu0 0.0
        %8106 = vmatmul.mubr.f32.gmra.mrb[0].mxu0 %v8039
        %v8107 = vpop.f32.mrb[0].mxu0
        %v8108 = vadd.f32 %v8037, %v8107
        %v8109 = vpop.f32.mrb[0].mxu0
        %8110 = vdwg.mxu0
        %v8111 = vmax.f32 %v8108, 0.0
        %s8112 = scalar_lea.vmem %s5, 4
        %v8113 = vld [vmem:[%s8112] sm:$0xf]
        %s8114 = scalar_lea.vmem %s6, 1
        %v8115 = vld [vmem:[%s8114] sm:$0x1]
        %v8117 = vsel %vm4203, %v8111, 0
        %v8120 = vsel %vm4207, %v8113, 0
        %8122 = vmatprep.subr.mxu0 0.0
        %8123 = vmatpush1.msra.mxu0 %v8120
        %8124 = vmatprep.subr.mxu0 0.0
        %8125 = vmatpush1.msra.mxu0 0.0
        %8126 = vmatprep.subr.mxu0 0.0
        %8127 = vmatpush1.msra.mxu0 0.0
        %8128 = vmatprep.subr.mxu0 0.0
        %8129 = vmatpush1.msra.mxu0 0.0
        %8130 = vmatprep.subr.mxu0 0.0
        %8131 = vmatpush1.msra.mxu0 0.0
        %8132 = vmatprep.subr.mxu0 0.0
        %8133 = vmatpush1.msra.mxu0 0.0
        %8134 = vmatprep.subr.mxu0 0.0
        %8135 = vmatpush1.msra.mxu0 0.0
        %8136 = vmatprep.subr.mxu0 0.0
        %8137 = vmatpush1.msra.mxu0 0.0
        %8138 = vmatprep.subr.mxu0 0.0
        %8139 = vmatpush1.msra.mxu0 0.0
        %8140 = vmatprep.subr.mxu0 0.0
        %8141 = vmatpush1.msra.mxu0 0.0
        %8142 = vmatprep.subr.mxu0 0.0
        %8143 = vmatpush1.msra.mxu0 0.0
        %8144 = vmatprep.subr.mxu0 0.0
        %8145 = vmatpush1.msra.mxu0 0.0
        %8146 = vmatprep.subr.mxu0 0.0
        %8147 = vmatpush1.msra.mxu0 0.0
        %8148 = vmatprep.subr.mxu0 0.0
        %8149 = vmatpush1.msra.mxu0 0.0
        %8150 = vmatprep.subr.mxu0 0.0
        %8151 = vmatpush1.msra.mxu0 0.0
        %8152 = vmatprep.subr.mxu0 0.0
        %8153 = vmatpush1.msra.mxu0 0.0
        %8154 = vmatprep.subr.mxu0 0.0
        %8155 = vmatpush1.msra.mxu0 0.0
        %8156 = vmatprep.subr.mxu0 0.0
        %8157 = vmatpush1.msra.mxu0 0.0
        %8158 = vmatprep.subr.mxu0 0.0
        %8159 = vmatpush1.msra.mxu0 0.0
        %8160 = vmatprep.subr.mxu0 0.0
        %8161 = vmatpush1.msra.mxu0 0.0
        %8162 = vmatprep.subr.mxu0 0.0
        %8163 = vmatpush1.msra.mxu0 0.0
        %8164 = vmatprep.subr.mxu0 0.0
        %8165 = vmatpush1.msra.mxu0 0.0
        %8166 = vmatprep.subr.mxu0 0.0
        %8167 = vmatpush1.msra.mxu0 0.0
        %8168 = vmatprep.subr.mxu0 0.0
        %8169 = vmatpush1.msra.mxu0 0.0
        %8170 = vmatprep.subr.mxu0 0.0
        %8171 = vmatpush1.msra.mxu0 0.0
        %8172 = vmatprep.subr.mxu0 0.0
        %8173 = vmatpush1.msra.mxu0 0.0
        %8174 = vmatprep.subr.mxu0 0.0
        %8175 = vmatpush1.msra.mxu0 0.0
        %8176 = vmatprep.subr.mxu0 0.0
        %8177 = vmatpush1.msra.mxu0 0.0
        %8178 = vmatprep.subr.mxu0 0.0
        %8179 = vmatpush1.msra.mxu0 0.0
        %8180 = vmatprep.subr.mxu0 0.0
        %8181 = vmatpush1.msra.mxu0 0.0
        %8182 = vmatprep.subr.mxu0 0.0
        %8183 = vmatpush1.msra.mxu0 0.0
        %8184 = vmatprep.subr.mxu0 0.0
        %8185 = vmatpush1.msra.mxu0 0.0
        %8186 = vmatprep.mubr.f32.mxu0 0.0
        %8187 = vmatmul.mubr.f32.gmra.mrb[0].mxu0 %v8117
        %v8188 = vpop.f32.mrb[0].mxu0
        %v8189 = vadd.f32 %v8115, %v8188
        %v8190 = vpop.f32.mrb[0].mxu0
        %8191 = vdwg.mxu0
        %v8192 = vsub.f32 0.0, %v8189
        %v8193 = vmul.f32 %v8192, 1.442695
        %v8194 = vpow.pop %v8193
        %v8195 = vadd.f32 %v8194, 1.0
        %v8196 = vrcp.pop %v8195
        %v8197 = vmul.f32 1.0, %v8196
        %v8198 = vlaneseq
        %v8199 = vshrl.u32 %v8198, 7
        %v8200 = vsub.s32 0, %v8199
        %v8201 = vrot.slane %v8197, %v8200
        %v8202 = vmul.f32 %v7805, %v8201
        %v8203 = vmul.f32 %v7810, %v8201
        %v8204 = vmul.f32 %v7815, %v8201
        %v8205 = vmul.f32 %v7820, %v8201
        %v8206 = vmul.f32 %v7825, %v8201
        %v8207 = vmul.f32 %v7830, %v8201
        %v8208 = vmul.f32 %v7835, %v8201
        %v8209 = vmul.f32 %v7840, %v8201
        %v8210 = vmul.f32 %v7845, %v8201
        %v8211 = vmul.f32 %v7850, %v8201
        %v8212 = vmul.f32 %v7855, %v8201
        %v8213 = vmul.f32 %v7860, %v8201
        %v8214 = vmul.f32 %v7865, %v8201
        %v8215 = vmul.f32 %v7870, %v8201
        %v8216 = vmul.f32 %v7875, %v8201
        %v8217 = vmul.f32 %v7880, %v8201
        %v8218 = vmul.f32 %v7885, %v8201
        %v8219 = vmul.f32 %v7890, %v8201
        %v8220 = vmul.f32 %v7895, %v8201
        %v8221 = vmul.f32 %v7900, %v8201
        %v8222 = vmul.f32 %v7905, %v8201
        %v8223 = vmul.f32 %v7910, %v8201
        %v8224 = vmul.f32 %v7915, %v8201
        %v8225 = vmul.f32 %v7920, %v8201
        %v8226 = vmul.f32 %v7925, %v8201
        %v8227 = vmul.f32 %v7930, %v8201
        %v8228 = vmul.f32 %v7935, %v8201
        %v8229 = vmul.f32 %v7940, %v8201
        %v8230 = vmul.f32 %v7945, %v8201
        %v8231 = vmul.f32 %v7950, %v8201
        %v8232 = vmul.f32 %v7955, %v8201
        %v8233 = vmul.f32 %v7960, %v8201
        %v8234 = vadd.f32 %v8202, %v4323
        %v8235 = vadd.f32 %v8203, %v4324
        %v8236 = vadd.f32 %v8204, %v4325
        %v8237 = vadd.f32 %v8205, %v4326
        %v8238 = vadd.f32 %v8206, %v4327
        %v8239 = vadd.f32 %v8207, %v4328
        %v8240 = vadd.f32 %v8208, %v4329
        %v8241 = vadd.f32 %v8209, %v4330
        %v8242 = vadd.f32 %v8210, %v4331
        %v8243 = vadd.f32 %v8211, %v4332
        %v8244 = vadd.f32 %v8212, %v4333
        %v8245 = vadd.f32 %v8213, %v4334
        %v8246 = vadd.f32 %v8214, %v4335
        %v8247 = vadd.f32 %v8215, %v4336
        %v8248 = vadd.f32 %v8216, %v4337
        %v8249 = vadd.f32 %v8217, %v4338
        %v8250 = vadd.f32 %v8218, %v4339
        %v8251 = vadd.f32 %v8219, %v4340
        %v8252 = vadd.f32 %v8220, %v4341
        %v8253 = vadd.f32 %v8221, %v4342
        %v8254 = vadd.f32 %v8222, %v4343
        %v8255 = vadd.f32 %v8223, %v4344
        %v8256 = vadd.f32 %v8224, %v4345
        %v8257 = vadd.f32 %v8225, %v4346
        %v8258 = vadd.f32 %v8226, %v4347
        %v8259 = vadd.f32 %v8227, %v4348
        %v8260 = vadd.f32 %v8228, %v4349
        %v8261 = vadd.f32 %v8229, %v4350
        %v8262 = vadd.f32 %v8230, %v4351
        %v8263 = vadd.f32 %v8231, %v4352
        %v8264 = vadd.f32 %v8232, %v4353
        %v8265 = vadd.f32 %v8233, %v4354
        %v8266 = vld [vmem:[%s7] sm:$0xff]
        %v8267 = vld [vmem:[%s7 + $0x8] sm:$0xff]
        %v8268 = vld [vmem:[%s7 + $0x10] sm:$0xff]
        %v8269 = vld [vmem:[%s7 + $0x18] sm:$0xff]
        %v8270 = vld [vmem:[%s7 + $0x20] sm:$0xff]
        %v8271 = vld [vmem:[%s7 + $0x28] sm:$0xff]
        %v8272 = vld [vmem:[%s7 + $0x30] sm:$0xff]
        %v8273 = vld [vmem:[%s7 + $0x38] sm:$0xff]
        %v8274 = vld [vmem:[%s7 + $0x40] sm:$0xff]
        %v8275 = vld [vmem:[%s7 + $0x48] sm:$0xff]
        %v8276 = vld [vmem:[%s7 + $0x50] sm:$0xff]
        %v8277 = vld [vmem:[%s7 + $0x58] sm:$0xff]
        %v8278 = vld [vmem:[%s7 + $0x60] sm:$0xff]
        %v8279 = vld [vmem:[%s7 + $0x68] sm:$0xff]
        %v8280 = vld [vmem:[%s7 + $0x70] sm:$0xff]
        %v8281 = vld [vmem:[%s7 + $0x78] sm:$0xff]
        %v8282 = vld [vmem:[%s7 + $0x80] sm:$0xff]
        %v8283 = vld [vmem:[%s7 + $0x88] sm:$0xff]
        %v8284 = vld [vmem:[%s8] sm:$0x1]
        %8285 = vst.msk [vmem:[%s458 + $0x1] sm:$0xff] %vm351, %v8234
        %8286 = vst.msk [vmem:[%s458 + $0x9] sm:$0xff] %vm351, %v8235
        %8287 = vst.msk [vmem:[%s458 + $0x19] sm:$0xff] %vm351, %v8236
        %8288 = vst.msk [vmem:[%s458 + $0x21] sm:$0xff] %vm351, %v8237
        %8289 = vst.msk [vmem:[%s458 + $0x31] sm:$0xff] %vm351, %v8238
        %8290 = vst.msk [vmem:[%s458 + $0x39] sm:$0xff] %vm351, %v8239
        %8291 = vst.msk [vmem:[%s458 + $0x49] sm:$0xff] %vm351, %v8240
        %8292 = vst.msk [vmem:[%s458 + $0x51] sm:$0xff] %vm351, %v8241
        %8293 = vst.msk [vmem:[%s458 + $0x61] sm:$0xff] %vm351, %v8242
        %8294 = vst.msk [vmem:[%s458 + $0x69] sm:$0xff] %vm351, %v8243
        %8295 = vst.msk [vmem:[%s458 + $0x79] sm:$0xff] %vm351, %v8244
        %8296 = vst.msk [vmem:[%s458 + $0x81] sm:$0xff] %vm351, %v8245
        %8297 = vst.msk [vmem:[%s458 + $0x91] sm:$0xff] %vm351, %v8246
        %8298 = vst.msk [vmem:[%s458 + $0x99] sm:$0xff] %vm351, %v8247
        %8299 = vst.msk [vmem:[%s458 + $0xa9] sm:$0xff] %vm351, %v8248
        %8300 = vst.msk [vmem:[%s458 + $0xb1] sm:$0xff] %vm351, %v8249
        %8301 = vst.msk [vmem:[%s458 + $0xc1] sm:$0xff] %vm351, %v8250
        %8302 = vst.msk [vmem:[%s458 + $0xc9] sm:$0xff] %vm351, %v8251
        %8303 = vst.msk [vmem:[%s458 + $0xd9] sm:$0xff] %vm351, %v8252
        %8304 = vst.msk [vmem:[%s458 + $0xe1] sm:$0xff] %vm351, %v8253
        %8305 = vst.msk [vmem:[%s458 + $0xf1] sm:$0xff] %vm351, %v8254
        %8306 = vst.msk [vmem:[%s458 + $0xf9] sm:$0xff] %vm351, %v8255
        %8307 = vst.msk [vmem:[%s458 + $0x109] sm:$0xff] %vm351, %v8256
        %8308 = vst.msk [vmem:[%s458 + $0x111] sm:$0xff] %vm351, %v8257
        %8309 = vst.msk [vmem:[%s458 + $0x121] sm:$0xff] %vm351, %v8258
        %8310 = vst.msk [vmem:[%s458 + $0x129] sm:$0xff] %vm351, %v8259
        %8311 = vst.msk [vmem:[%s458 + $0x139] sm:$0xff] %vm351, %v8260
        %8312 = vst.msk [vmem:[%s458 + $0x141] sm:$0xff] %vm351, %v8261
        %8313 = vst.msk [vmem:[%s458 + $0x151] sm:$0xff] %vm351, %v8262
        %8314 = vst.msk [vmem:[%s458 + $0x159] sm:$0xff] %vm351, %v8263
        %8315 = vst.msk [vmem:[%s458 + $0x169] sm:$0xff] %vm351, %v8264
        %8316 = vst.msk [vmem:[%s458 + $0x171] sm:$0xff] %vm351, %v8265
        %v8317 = vld [vmem:[#allocation2] sm:$0xff]
        %v8318 = vld [vmem:[#allocation2 + $0x8] sm:$0xff]
        %v8319 = vld [vmem:[#allocation2 + $0x18] sm:$0xff]
        %v8320 = vld [vmem:[#allocation2 + $0x20] sm:$0xff]
        %v8321 = vld [vmem:[#allocation2 + $0x30] sm:$0xff]
        %v8322 = vld [vmem:[#allocation2 + $0x38] sm:$0xff]
        %v8323 = vld [vmem:[#allocation2 + $0x48] sm:$0xff]
        %v8324 = vld [vmem:[#allocation2 + $0x50] sm:$0xff]
        %v8325 = vld [vmem:[#allocation2 + $0x60] sm:$0xff]
        %v8326 = vld [vmem:[#allocation2 + $0x68] sm:$0xff]
        %v8327 = vld [vmem:[#allocation2 + $0x78] sm:$0xff]
        %v8328 = vld [vmem:[#allocation2 + $0x80] sm:$0xff]
        %v8329 = vld [vmem:[#allocation2 + $0x90] sm:$0xff]
        %v8330 = vld [vmem:[#allocation2 + $0x98] sm:$0xff]
        %v8331 = vld [vmem:[#allocation2 + $0xa8] sm:$0xff]
        %v8332 = vld [vmem:[#allocation2 + $0xb0] sm:$0xff]
        %v8333 = vld [vmem:[#allocation2 + $0xc0] sm:$0xff]
        %v8334 = vld [vmem:[#allocation2 + $0xc8] sm:$0xff]
        %v8335 = vld [vmem:[#allocation2 + $0xd8] sm:$0xff]
        %v8336 = vld [vmem:[#allocation2 + $0xe0] sm:$0xff]
        %v8337 = vld [vmem:[#allocation2 + $0xf0] sm:$0xff]
        %v8338 = vld [vmem:[#allocation2 + $0xf8] sm:$0xff]
        %v8339 = vld [vmem:[#allocation2 + $0x108] sm:$0xff]
        %v8340 = vld [vmem:[#allocation2 + $0x110] sm:$0xff]
        %v8341 = vld [vmem:[#allocation2 + $0x120] sm:$0xff]
        %v8342 = vld [vmem:[#allocation2 + $0x128] sm:$0xff]
        %v8343 = vld [vmem:[#allocation2 + $0x138] sm:$0xff]
        %v8344 = vld [vmem:[#allocation2 + $0x140] sm:$0xff]
        %v8345 = vld [vmem:[#allocation2 + $0x150] sm:$0xff]
        %v8346 = vld [vmem:[#allocation2 + $0x158] sm:$0xff]
        %v8347 = vld [vmem:[#allocation2 + $0x168] sm:$0xff]
        %v8348 = vld [vmem:[#allocation2 + $0x170] sm:$0xff]
        %v8349 = vld [vmem:[#allocation2 + $0x1] sm:$0xff]
        %v8350 = vld [vmem:[#allocation2 + $0x9] sm:$0xff]
        %v8351 = vld [vmem:[#allocation2 + $0x19] sm:$0xff]
        %v8352 = vld [vmem:[#allocation2 + $0x21] sm:$0xff]
        %v8353 = vld [vmem:[#allocation2 + $0x31] sm:$0xff]
        %v8354 = vld [vmem:[#allocation2 + $0x39] sm:$0xff]
        %v8355 = vld [vmem:[#allocation2 + $0x49] sm:$0xff]
        %v8356 = vld [vmem:[#allocation2 + $0x51] sm:$0xff]
        %v8357 = vld [vmem:[#allocation2 + $0x61] sm:$0xff]
        %v8358 = vld [vmem:[#allocation2 + $0x69] sm:$0xff]
        %v8359 = vld [vmem:[#allocation2 + $0x79] sm:$0xff]
        %v8360 = vld [vmem:[#allocation2 + $0x81] sm:$0xff]
        %v8361 = vld [vmem:[#allocation2 + $0x91] sm:$0xff]
        %v8362 = vld [vmem:[#allocation2 + $0x99] sm:$0xff]
        %v8363 = vld [vmem:[#allocation2 + $0xa9] sm:$0xff]
        %v8364 = vld [vmem:[#allocation2 + $0xb1] sm:$0xff]
        %v8365 = vld [vmem:[#allocation2 + $0xc1] sm:$0xff]
        %v8366 = vld [vmem:[#allocation2 + $0xc9] sm:$0xff]
        %v8367 = vld [vmem:[#allocation2 + $0xd9] sm:$0xff]
        %v8368 = vld [vmem:[#allocation2 + $0xe1] sm:$0xff]
        %v8369 = vld [vmem:[#allocation2 + $0xf1] sm:$0xff]
        %v8370 = vld [vmem:[#allocation2 + $0xf9] sm:$0xff]
        %v8371 = vld [vmem:[#allocation2 + $0x109] sm:$0xff]
        %v8372 = vld [vmem:[#allocation2 + $0x111] sm:$0xff]
        %v8373 = vld [vmem:[#allocation2 + $0x121] sm:$0xff]
        %v8374 = vld [vmem:[#allocation2 + $0x129] sm:$0xff]
        %v8375 = vld [vmem:[#allocation2 + $0x139] sm:$0xff]
        %v8376 = vld [vmem:[#allocation2 + $0x141] sm:$0xff]
        %v8377 = vld [vmem:[#allocation2 + $0x151] sm:$0xff]
        %v8378 = vld [vmem:[#allocation2 + $0x159] sm:$0xff]
        %v8379 = vld [vmem:[#allocation2 + $0x169] sm:$0xff]
        %v8380 = vld [vmem:[#allocation2 + $0x171] sm:$0xff]
        %v8381 = vld [vmem:[#allocation2 + $0x2] sm:$0xff]
        %v8382 = vld [vmem:[#allocation2 + $0xa] sm:$0xff]
        %v8383 = vld [vmem:[#allocation2 + $0x1a] sm:$0xff]
        %v8384 = vld [vmem:[#allocation2 + $0x22] sm:$0xff]
        %v8385 = vld [vmem:[#allocation2 + $0x32] sm:$0xff]
        %v8386 = vld [vmem:[#allocation2 + $0x3a] sm:$0xff]
        %v8387 = vld [vmem:[#allocation2 + $0x4a] sm:$0xff]
        %v8388 = vld [vmem:[#allocation2 + $0x52] sm:$0xff]
        %v8389 = vld [vmem:[#allocation2 + $0x62] sm:$0xff]
        %v8390 = vld [vmem:[#allocation2 + $0x6a] sm:$0xff]
        %v8391 = vld [vmem:[#allocation2 + $0x7a] sm:$0xff]
        %v8392 = vld [vmem:[#allocation2 + $0x82] sm:$0xff]
        %v8393 = vld [vmem:[#allocation2 + $0x92] sm:$0xff]
        %v8394 = vld [vmem:[#allocation2 + $0x9a] sm:$0xff]
        %v8395 = vld [vmem:[#allocation2 + $0xaa] sm:$0xff]
        %v8396 = vld [vmem:[#allocation2 + $0xb2] sm:$0xff]
        %v8397 = vld [vmem:[#allocation2 + $0xc2] sm:$0xff]
        %v8398 = vld [vmem:[#allocation2 + $0xca] sm:$0xff]
        %v8399 = vld [vmem:[#allocation2 + $0xda] sm:$0xff]
        %v8400 = vld [vmem:[#allocation2 + $0xe2] sm:$0xff]
        %v8401 = vld [vmem:[#allocation2 + $0xf2] sm:$0xff]
        %v8402 = vld [vmem:[#allocation2 + $0xfa] sm:$0xff]
        %v8403 = vld [vmem:[#allocation2 + $0x10a] sm:$0xff]
        %v8404 = vld [vmem:[#allocation2 + $0x112] sm:$0xff]
        %v8405 = vld [vmem:[#allocation2 + $0x122] sm:$0xff]
        %v8406 = vld [vmem:[#allocation2 + $0x12a] sm:$0xff]
        %v8407 = vld [vmem:[#allocation2 + $0x13a] sm:$0xff]
        %v8408 = vld [vmem:[#allocation2 + $0x142] sm:$0xff]
        %v8409 = vld [vmem:[#allocation2 + $0x152] sm:$0xff]
        %v8410 = vld [vmem:[#allocation2 + $0x15a] sm:$0xff]
        %v8411 = vld [vmem:[#allocation2 + $0x16a] sm:$0xff]
        %v8412 = vld [vmem:[#allocation2 + $0x172] sm:$0xff]
        %v8413 = vld [vmem:[%s458] sm:$0xff]
        %v8414 = vld [vmem:[%s458 + $0x8] sm:$0xff]
        %v8415 = vld [vmem:[%s458 + $0x18] sm:$0xff]
        %v8416 = vld [vmem:[%s458 + $0x20] sm:$0xff]
        %v8417 = vld [vmem:[%s458 + $0x30] sm:$0xff]
        %v8418 = vld [vmem:[%s458 + $0x38] sm:$0xff]
        %v8419 = vld [vmem:[%s458 + $0x48] sm:$0xff]
        %v8420 = vld [vmem:[%s458 + $0x50] sm:$0xff]
        %v8421 = vld [vmem:[%s458 + $0x60] sm:$0xff]
        %v8422 = vld [vmem:[%s458 + $0x68] sm:$0xff]
        %v8423 = vld [vmem:[%s458 + $0x78] sm:$0xff]
        %v8424 = vld [vmem:[%s458 + $0x80] sm:$0xff]
        %v8425 = vld [vmem:[%s458 + $0x90] sm:$0xff]
        %v8426 = vld [vmem:[%s458 + $0x98] sm:$0xff]
        %v8427 = vld [vmem:[%s458 + $0xa8] sm:$0xff]
        %v8428 = vld [vmem:[%s458 + $0xb0] sm:$0xff]
        %v8429 = vld [vmem:[%s458 + $0xc0] sm:$0xff]
        %v8430 = vld [vmem:[%s458 + $0xc8] sm:$0xff]
        %v8431 = vld [vmem:[%s458 + $0xd8] sm:$0xff]
        %v8432 = vld [vmem:[%s458 + $0xe0] sm:$0xff]
        %v8433 = vld [vmem:[%s458 + $0xf0] sm:$0xff]
        %v8434 = vld [vmem:[%s458 + $0xf8] sm:$0xff]
        %v8435 = vld [vmem:[%s458 + $0x108] sm:$0xff]
        %v8436 = vld [vmem:[%s458 + $0x110] sm:$0xff]
        %v8437 = vld [vmem:[%s458 + $0x120] sm:$0xff]
        %v8438 = vld [vmem:[%s458 + $0x128] sm:$0xff]
        %v8439 = vld [vmem:[%s458 + $0x138] sm:$0xff]
        %v8440 = vld [vmem:[%s458 + $0x140] sm:$0xff]
        %v8441 = vld [vmem:[%s458 + $0x150] sm:$0xff]
        %v8442 = vld [vmem:[%s458 + $0x158] sm:$0xff]
        %v8443 = vld [vmem:[%s458 + $0x168] sm:$0xff]
        %v8444 = vld [vmem:[%s458 + $0x170] sm:$0xff]
        %v8445 = vld [vmem:[%s458 + $0x1] sm:$0xff]
        %v8446 = vld [vmem:[%s458 + $0x9] sm:$0xff]
        %v8447 = vld [vmem:[%s458 + $0x19] sm:$0xff]
        %v8448 = vld [vmem:[%s458 + $0x21] sm:$0xff]
        %v8449 = vld [vmem:[%s458 + $0x31] sm:$0xff]
        %v8450 = vld [vmem:[%s458 + $0x39] sm:$0xff]
        %v8451 = vld [vmem:[%s458 + $0x49] sm:$0xff]
        %v8452 = vld [vmem:[%s458 + $0x51] sm:$0xff]
        %v8453 = vld [vmem:[%s458 + $0x61] sm:$0xff]
        %v8454 = vld [vmem:[%s458 + $0x69] sm:$0xff]
        %v8455 = vld [vmem:[%s458 + $0x79] sm:$0xff]
        %v8456 = vld [vmem:[%s458 + $0x81] sm:$0xff]
        %v8457 = vld [vmem:[%s458 + $0x91] sm:$0xff]
        %v8458 = vld [vmem:[%s458 + $0x99] sm:$0xff]
        %v8459 = vld [vmem:[%s458 + $0xa9] sm:$0xff]
        %v8460 = vld [vmem:[%s458 + $0xb1] sm:$0xff]
        %v8461 = vld [vmem:[%s458 + $0xc1] sm:$0xff]
        %v8462 = vld [vmem:[%s458 + $0xc9] sm:$0xff]
        %v8463 = vld [vmem:[%s458 + $0xd9] sm:$0xff]
        %v8464 = vld [vmem:[%s458 + $0xe1] sm:$0xff]
        %v8465 = vld [vmem:[%s458 + $0xf1] sm:$0xff]
        %v8466 = vld [vmem:[%s458 + $0xf9] sm:$0xff]
        %v8467 = vld [vmem:[%s458 + $0x109] sm:$0xff]
        %v8468 = vld [vmem:[%s458 + $0x111] sm:$0xff]
        %v8469 = vld [vmem:[%s458 + $0x121] sm:$0xff]
        %v8470 = vld [vmem:[%s458 + $0x129] sm:$0xff]
        %v8471 = vld [vmem:[%s458 + $0x139] sm:$0xff]
        %v8472 = vld [vmem:[%s458 + $0x141] sm:$0xff]
        %v8473 = vld [vmem:[%s458 + $0x151] sm:$0xff]
        %v8474 = vld [vmem:[%s458 + $0x159] sm:$0xff]
        %v8475 = vld [vmem:[%s458 + $0x169] sm:$0xff]
        %v8476 = vld [vmem:[%s458 + $0x171] sm:$0xff]
        %v8477 = vld [vmem:[%s458 + $0x2] sm:$0xff]
        %v8478 = vld [vmem:[%s458 + $0xa] sm:$0xff]
        %v8479 = vld [vmem:[%s458 + $0x1a] sm:$0xff]
        %v8480 = vld [vmem:[%s458 + $0x22] sm:$0xff]
        %v8481 = vld [vmem:[%s458 + $0x32] sm:$0xff]
        %v8482 = vld [vmem:[%s458 + $0x3a] sm:$0xff]
        %v8483 = vld [vmem:[%s458 + $0x4a] sm:$0xff]
        %v8484 = vld [vmem:[%s458 + $0x52] sm:$0xff]
        %v8485 = vld [vmem:[%s458 + $0x62] sm:$0xff]
        %v8486 = vld [vmem:[%s458 + $0x6a] sm:$0xff]
        %v8487 = vld [vmem:[%s458 + $0x7a] sm:$0xff]
        %v8488 = vld [vmem:[%s458 + $0x82] sm:$0xff]
        %v8489 = vld [vmem:[%s458 + $0x92] sm:$0xff]
        %v8490 = vld [vmem:[%s458 + $0x9a] sm:$0xff]
        %v8491 = vld [vmem:[%s458 + $0xaa] sm:$0xff]
        %v8492 = vld [vmem:[%s458 + $0xb2] sm:$0xff]
        %v8493 = vld [vmem:[%s458 + $0xc2] sm:$0xff]
        %v8494 = vld [vmem:[%s458 + $0xca] sm:$0xff]
        %v8495 = vld [vmem:[%s458 + $0xda] sm:$0xff]
        %v8496 = vld [vmem:[%s458 + $0xe2] sm:$0xff]
        %v8497 = vld [vmem:[%s458 + $0xf2] sm:$0xff]
        %v8498 = vld [vmem:[%s458 + $0xfa] sm:$0xff]
        %v8499 = vld [vmem:[%s458 + $0x10a] sm:$0xff]
        %v8500 = vld [vmem:[%s458 + $0x112] sm:$0xff]
        %v8501 = vld [vmem:[%s458 + $0x122] sm:$0xff]
        %v8502 = vld [vmem:[%s458 + $0x12a] sm:$0xff]
        %v8503 = vld [vmem:[%s458 + $0x13a] sm:$0xff]
        %v8504 = vld [vmem:[%s458 + $0x142] sm:$0xff]
        %v8505 = vld [vmem:[%s458 + $0x152] sm:$0xff]
        %v8506 = vld [vmem:[%s458 + $0x15a] sm:$0xff]
        %v8507 = vld [vmem:[%s458 + $0x16a] sm:$0xff]
        %v8508 = vld [vmem:[%s458 + $0x172] sm:$0xff]
        %v8509 = vld [vmem:[%s683] sm:$0xff]
        %v8510 = vld [vmem:[%s683 + $0x8] sm:$0xff]
        %v8511 = vld [vmem:[%s683 + $0x18] sm:$0xff]
        %v8512 = vld [vmem:[%s683 + $0x20] sm:$0xff]
        %v8513 = vld [vmem:[%s683 + $0x30] sm:$0xff]
        %v8514 = vld [vmem:[%s683 + $0x38] sm:$0xff]
        %v8515 = vld [vmem:[%s683 + $0x48] sm:$0xff]
        %v8516 = vld [vmem:[%s683 + $0x50] sm:$0xff]
        %v8517 = vld [vmem:[%s683 + $0x60] sm:$0xff]
        %v8518 = vld [vmem:[%s683 + $0x68] sm:$0xff]
        %v8519 = vld [vmem:[%s683 + $0x78] sm:$0xff]
        %v8520 = vld [vmem:[%s683 + $0x80] sm:$0xff]
        %v8521 = vld [vmem:[%s683 + $0x90] sm:$0xff]
        %v8522 = vld [vmem:[%s683 + $0x98] sm:$0xff]
        %v8523 = vld [vmem:[%s683 + $0xa8] sm:$0xff]
        %v8524 = vld [vmem:[%s683 + $0xb0] sm:$0xff]
        %v8525 = vld [vmem:[%s683 + $0xc0] sm:$0xff]
        %v8526 = vld [vmem:[%s683 + $0xc8] sm:$0xff]
        %v8527 = vld [vmem:[%s683 + $0xd8] sm:$0xff]
        %v8528 = vld [vmem:[%s683 + $0xe0] sm:$0xff]
        %v8529 = vld [vmem:[%s683 + $0xf0] sm:$0xff]
        %v8530 = vld [vmem:[%s683 + $0xf8] sm:$0xff]
        %v8531 = vld [vmem:[%s683 + $0x108] sm:$0xff]
        %v8532 = vld [vmem:[%s683 + $0x110] sm:$0xff]
        %v8533 = vld [vmem:[%s683 + $0x120] sm:$0xff]
        %v8534 = vld [vmem:[%s683 + $0x128] sm:$0xff]
        %v8535 = vld [vmem:[%s683 + $0x138] sm:$0xff]
        %v8536 = vld [vmem:[%s683 + $0x140] sm:$0xff]
        %v8537 = vld [vmem:[%s683 + $0x150] sm:$0xff]
        %v8538 = vld [vmem:[%s683 + $0x158] sm:$0xff]
        %v8539 = vld [vmem:[%s683 + $0x168] sm:$0xff]
        %v8540 = vld [vmem:[%s683 + $0x170] sm:$0xff]
        %v8541 = vld [vmem:[%s683 + $0x1] sm:$0xff]
        %v8542 = vld [vmem:[%s683 + $0x9] sm:$0xff]
        %v8543 = vld [vmem:[%s683 + $0x19] sm:$0xff]
        %v8544 = vld [vmem:[%s683 + $0x21] sm:$0xff]
        %v8545 = vld [vmem:[%s683 + $0x31] sm:$0xff]
        %v8546 = vld [vmem:[%s683 + $0x39] sm:$0xff]
        %v8547 = vld [vmem:[%s683 + $0x49] sm:$0xff]
        %v8548 = vld [vmem:[%s683 + $0x51] sm:$0xff]
        %v8549 = vld [vmem:[%s683 + $0x61] sm:$0xff]
        %v8550 = vld [vmem:[%s683 + $0x69] sm:$0xff]
        %v8551 = vld [vmem:[%s683 + $0x79] sm:$0xff]
        %v8552 = vld [vmem:[%s683 + $0x81] sm:$0xff]
        %v8553 = vld [vmem:[%s683 + $0x91] sm:$0xff]
        %v8554 = vld [vmem:[%s683 + $0x99] sm:$0xff]
        %v8555 = vld [vmem:[%s683 + $0xa9] sm:$0xff]
        %v8556 = vld [vmem:[%s683 + $0xb1] sm:$0xff]
        %v8557 = vld [vmem:[%s683 + $0xc1] sm:$0xff]
        %v8558 = vld [vmem:[%s683 + $0xc9] sm:$0xff]
        %v8559 = vld [vmem:[%s683 + $0xd9] sm:$0xff]
        %v8560 = vld [vmem:[%s683 + $0xe1] sm:$0xff]
        %v8561 = vld [vmem:[%s683 + $0xf1] sm:$0xff]
        %v8562 = vld [vmem:[%s683 + $0xf9] sm:$0xff]
        %v8563 = vld [vmem:[%s683 + $0x109] sm:$0xff]
        %v8564 = vld [vmem:[%s683 + $0x111] sm:$0xff]
        %v8565 = vld [vmem:[%s683 + $0x121] sm:$0xff]
        %v8566 = vld [vmem:[%s683 + $0x129] sm:$0xff]
        %v8567 = vld [vmem:[%s683 + $0x139] sm:$0xff]
        %v8568 = vld [vmem:[%s683 + $0x141] sm:$0xff]
        %v8569 = vld [vmem:[%s683 + $0x151] sm:$0xff]
        %v8570 = vld [vmem:[%s683 + $0x159] sm:$0xff]
        %v8571 = vld [vmem:[%s683 + $0x169] sm:$0xff]
        %v8572 = vld [vmem:[%s683 + $0x171] sm:$0xff]
        %v8573 = vld [vmem:[%s683 + $0x2] sm:$0xff]
        %v8574 = vld [vmem:[%s683 + $0xa] sm:$0xff]
        %v8575 = vld [vmem:[%s683 + $0x1a] sm:$0xff]
        %v8576 = vld [vmem:[%s683 + $0x22] sm:$0xff]
        %v8577 = vld [vmem:[%s683 + $0x32] sm:$0xff]
        %v8578 = vld [vmem:[%s683 + $0x3a] sm:$0xff]
        %v8579 = vld [vmem:[%s683 + $0x4a] sm:$0xff]
        %v8580 = vld [vmem:[%s683 + $0x52] sm:$0xff]
        %v8581 = vld [vmem:[%s683 + $0x62] sm:$0xff]
        %v8582 = vld [vmem:[%s683 + $0x6a] sm:$0xff]
        %v8583 = vld [vmem:[%s683 + $0x7a] sm:$0xff]
        %v8584 = vld [vmem:[%s683 + $0x82] sm:$0xff]
        %v8585 = vld [vmem:[%s683 + $0x92] sm:$0xff]
        %v8586 = vld [vmem:[%s683 + $0x9a] sm:$0xff]
        %v8587 = vld [vmem:[%s683 + $0xaa] sm:$0xff]
        %v8588 = vld [vmem:[%s683 + $0xb2] sm:$0xff]
        %v8589 = vld [vmem:[%s683 + $0xc2] sm:$0xff]
        %v8590 = vld [vmem:[%s683 + $0xca] sm:$0xff]
        %v8591 = vld [vmem:[%s683 + $0xda] sm:$0xff]
        %v8592 = vld [vmem:[%s683 + $0xe2] sm:$0xff]
        %v8593 = vld [vmem:[%s683 + $0xf2] sm:$0xff]
        %v8594 = vld [vmem:[%s683 + $0xfa] sm:$0xff]
        %v8595 = vld [vmem:[%s683 + $0x10a] sm:$0xff]
        %v8596 = vld [vmem:[%s683 + $0x112] sm:$0xff]
        %v8597 = vld [vmem:[%s683 + $0x122] sm:$0xff]
        %v8598 = vld [vmem:[%s683 + $0x12a] sm:$0xff]
        %v8599 = vld [vmem:[%s683 + $0x13a] sm:$0xff]
        %v8600 = vld [vmem:[%s683 + $0x142] sm:$0xff]
        %v8601 = vld [vmem:[%s683 + $0x152] sm:$0xff]
        %v8602 = vld [vmem:[%s683 + $0x15a] sm:$0xff]
        %v8603 = vld [vmem:[%s683 + $0x16a] sm:$0xff]
        %v8604 = vld [vmem:[%s683 + $0x172] sm:$0xff]
        %8637 = vrot.lane.b32.xlu0 %v8349, 16
        %v8638 = vpop.permute.xlu0 %8637
        %8639 = vrot.lane.b32.xlu0 %v8350, 16
        %v8640 = vpop.permute.xlu0 %8639
        %8641 = vrot.lane.b32.xlu0 %v8351, 16
        %v8642 = vpop.permute.xlu0 %8641
        %8643 = vrot.lane.b32.xlu0 %v8352, 16
        %v8644 = vpop.permute.xlu0 %8643
        %8645 = vrot.lane.b32.xlu0 %v8353, 16
        %v8646 = vpop.permute.xlu0 %8645
        %8647 = vrot.lane.b32.xlu0 %v8354, 16
        %v8648 = vpop.permute.xlu0 %8647
        %8649 = vrot.lane.b32.xlu0 %v8355, 16
        %v8650 = vpop.permute.xlu0 %8649
        %8651 = vrot.lane.b32.xlu0 %v8356, 16
        %v8652 = vpop.permute.xlu0 %8651
        %8653 = vrot.lane.b32.xlu0 %v8357, 16
        %v8654 = vpop.permute.xlu0 %8653
        %8655 = vrot.lane.b32.xlu0 %v8358, 16
        %v8656 = vpop.permute.xlu0 %8655
        %8657 = vrot.lane.b32.xlu0 %v8359, 16
        %v8658 = vpop.permute.xlu0 %8657
        %8659 = vrot.lane.b32.xlu0 %v8360, 16
        %v8660 = vpop.permute.xlu0 %8659
        %8661 = vrot.lane.b32.xlu0 %v8361, 16
        %v8662 = vpop.permute.xlu0 %8661
        %8663 = vrot.lane.b32.xlu0 %v8362, 16
        %v8664 = vpop.permute.xlu0 %8663
        %8665 = vrot.lane.b32.xlu0 %v8363, 16
        %v8666 = vpop.permute.xlu0 %8665
        %8667 = vrot.lane.b32.xlu0 %v8364, 16
        %v8668 = vpop.permute.xlu0 %8667
        %8669 = vrot.lane.b32.xlu0 %v8365, 16
        %v8670 = vpop.permute.xlu0 %8669
        %8671 = vrot.lane.b32.xlu0 %v8366, 16
        %v8672 = vpop.permute.xlu0 %8671
        %8673 = vrot.lane.b32.xlu0 %v8367, 16
        %v8674 = vpop.permute.xlu0 %8673
        %8675 = vrot.lane.b32.xlu0 %v8368, 16
        %v8676 = vpop.permute.xlu0 %8675
        %8677 = vrot.lane.b32.xlu0 %v8369, 16
        %v8678 = vpop.permute.xlu0 %8677
        %8679 = vrot.lane.b32.xlu0 %v8370, 16
        %v8680 = vpop.permute.xlu0 %8679
        %8681 = vrot.lane.b32.xlu0 %v8371, 16
        %v8682 = vpop.permute.xlu0 %8681
        %8683 = vrot.lane.b32.xlu0 %v8372, 16
        %v8684 = vpop.permute.xlu0 %8683
        %8685 = vrot.lane.b32.xlu0 %v8373, 16
        %v8686 = vpop.permute.xlu0 %8685
        %8687 = vrot.lane.b32.xlu0 %v8374, 16
        %v8688 = vpop.permute.xlu0 %8687
        %8689 = vrot.lane.b32.xlu0 %v8375, 16
        %v8690 = vpop.permute.xlu0 %8689
        %8691 = vrot.lane.b32.xlu0 %v8376, 16
        %v8692 = vpop.permute.xlu0 %8691
        %8693 = vrot.lane.b32.xlu0 %v8377, 16
        %v8694 = vpop.permute.xlu0 %8693
        %8695 = vrot.lane.b32.xlu0 %v8378, 16
        %v8696 = vpop.permute.xlu0 %8695
        %8697 = vrot.lane.b32.xlu0 %v8379, 16
        %v8698 = vpop.permute.xlu0 %8697
        %8699 = vrot.lane.b32.xlu0 %v8380, 16
        %v8700 = vpop.permute.xlu0 %8699
        %8765 = vrot.lane.b32.xlu0 %v8381, 32
        %v8766 = vpop.permute.xlu0 %8765
        %8767 = vrot.lane.b32.xlu0 %v8382, 32
        %v8768 = vpop.permute.xlu0 %8767
        %8769 = vrot.lane.b32.xlu0 %v8383, 32
        %v8770 = vpop.permute.xlu0 %8769
        %8771 = vrot.lane.b32.xlu0 %v8384, 32
        %v8772 = vpop.permute.xlu0 %8771
        %8773 = vrot.lane.b32.xlu0 %v8385, 32
        %v8774 = vpop.permute.xlu0 %8773
        %8775 = vrot.lane.b32.xlu0 %v8386, 32
        %v8776 = vpop.permute.xlu0 %8775
        %8777 = vrot.lane.b32.xlu0 %v8387, 32
        %v8778 = vpop.permute.xlu0 %8777
        %8779 = vrot.lane.b32.xlu0 %v8388, 32
        %v8780 = vpop.permute.xlu0 %8779
        %8781 = vrot.lane.b32.xlu0 %v8389, 32
        %v8782 = vpop.permute.xlu0 %8781
        %8783 = vrot.lane.b32.xlu0 %v8390, 32
        %v8784 = vpop.permute.xlu0 %8783
        %8785 = vrot.lane.b32.xlu0 %v8391, 32
        %v8786 = vpop.permute.xlu0 %8785
        %8787 = vrot.lane.b32.xlu0 %v8392, 32
        %v8788 = vpop.permute.xlu0 %8787
        %8789 = vrot.lane.b32.xlu0 %v8393, 32
        %v8790 = vpop.permute.xlu0 %8789
        %8791 = vrot.lane.b32.xlu0 %v8394, 32
        %v8792 = vpop.permute.xlu0 %8791
        %8793 = vrot.lane.b32.xlu0 %v8395, 32
        %v8794 = vpop.permute.xlu0 %8793
        %8795 = vrot.lane.b32.xlu0 %v8396, 32
        %v8796 = vpop.permute.xlu0 %8795
        %8797 = vrot.lane.b32.xlu0 %v8397, 32
        %v8798 = vpop.permute.xlu0 %8797
        %8799 = vrot.lane.b32.xlu0 %v8398, 32
        %v8800 = vpop.permute.xlu0 %8799
        %8801 = vrot.lane.b32.xlu0 %v8399, 32
        %v8802 = vpop.permute.xlu0 %8801
        %8803 = vrot.lane.b32.xlu0 %v8400, 32
        %v8804 = vpop.permute.xlu0 %8803
        %8805 = vrot.lane.b32.xlu0 %v8401, 32
        %v8806 = vpop.permute.xlu0 %8805
        %8807 = vrot.lane.b32.xlu0 %v8402, 32
        %v8808 = vpop.permute.xlu0 %8807
        %8809 = vrot.lane.b32.xlu0 %v8403, 32
        %v8810 = vpop.permute.xlu0 %8809
        %8811 = vrot.lane.b32.xlu0 %v8404, 32
        %v8812 = vpop.permute.xlu0 %8811
        %8813 = vrot.lane.b32.xlu0 %v8405, 32
        %v8814 = vpop.permute.xlu0 %8813
        %8815 = vrot.lane.b32.xlu0 %v8406, 32
        %v8816 = vpop.permute.xlu0 %8815
        %8817 = vrot.lane.b32.xlu0 %v8407, 32
        %v8818 = vpop.permute.xlu0 %8817
        %8819 = vrot.lane.b32.xlu0 %v8408, 32
        %v8820 = vpop.permute.xlu0 %8819
        %8821 = vrot.lane.b32.xlu0 %v8409, 32
        %v8822 = vpop.permute.xlu0 %8821
        %8823 = vrot.lane.b32.xlu0 %v8410, 32
        %v8824 = vpop.permute.xlu0 %8823
        %8825 = vrot.lane.b32.xlu0 %v8411, 32
        %v8826 = vpop.permute.xlu0 %8825
        %8827 = vrot.lane.b32.xlu0 %v8412, 32
        %v8828 = vpop.permute.xlu0 %8827
        %8893 = vrot.lane.b32.xlu0 %v8413, 48
        %v8894 = vpop.permute.xlu0 %8893
        %8895 = vrot.lane.b32.xlu0 %v8414, 48
        %v8896 = vpop.permute.xlu0 %8895
        %8897 = vrot.lane.b32.xlu0 %v8415, 48
        %v8898 = vpop.permute.xlu0 %8897
        %8899 = vrot.lane.b32.xlu0 %v8416, 48
        %v8900 = vpop.permute.xlu0 %8899
        %8901 = vrot.lane.b32.xlu0 %v8417, 48
        %v8902 = vpop.permute.xlu0 %8901
        %8903 = vrot.lane.b32.xlu0 %v8418, 48
        %v8904 = vpop.permute.xlu0 %8903
        %8905 = vrot.lane.b32.xlu0 %v8419, 48
        %v8906 = vpop.permute.xlu0 %8905
        %8907 = vrot.lane.b32.xlu0 %v8420, 48
        %v8908 = vpop.permute.xlu0 %8907
        %8909 = vrot.lane.b32.xlu0 %v8421, 48
        %v8910 = vpop.permute.xlu0 %8909
        %8911 = vrot.lane.b32.xlu0 %v8422, 48
        %v8912 = vpop.permute.xlu0 %8911
        %8913 = vrot.lane.b32.xlu0 %v8423, 48
        %v8914 = vpop.permute.xlu0 %8913
        %8915 = vrot.lane.b32.xlu0 %v8424, 48
        %v8916 = vpop.permute.xlu0 %8915
        %8917 = vrot.lane.b32.xlu0 %v8425, 48
        %v8918 = vpop.permute.xlu0 %8917
        %8919 = vrot.lane.b32.xlu0 %v8426, 48
        %v8920 = vpop.permute.xlu0 %8919
        %8921 = vrot.lane.b32.xlu0 %v8427, 48
        %v8922 = vpop.permute.xlu0 %8921
        %8923 = vrot.lane.b32.xlu0 %v8428, 48
        %v8924 = vpop.permute.xlu0 %8923
        %8925 = vrot.lane.b32.xlu0 %v8429, 48
        %v8926 = vpop.permute.xlu0 %8925
        %8927 = vrot.lane.b32.xlu0 %v8430, 48
        %v8928 = vpop.permute.xlu0 %8927
        %8929 = vrot.lane.b32.xlu0 %v8431, 48
        %v8930 = vpop.permute.xlu0 %8929
        %8931 = vrot.lane.b32.xlu0 %v8432, 48
        %v8932 = vpop.permute.xlu0 %8931
        %8933 = vrot.lane.b32.xlu0 %v8433, 48
        %v8934 = vpop.permute.xlu0 %8933
        %8935 = vrot.lane.b32.xlu0 %v8434, 48
        %v8936 = vpop.permute.xlu0 %8935
        %8937 = vrot.lane.b32.xlu0 %v8435, 48
        %v8938 = vpop.permute.xlu0 %8937
        %8939 = vrot.lane.b32.xlu0 %v8436, 48
        %v8940 = vpop.permute.xlu0 %8939
        %8941 = vrot.lane.b32.xlu0 %v8437, 48
        %v8942 = vpop.permute.xlu0 %8941
        %8943 = vrot.lane.b32.xlu0 %v8438, 48
        %v8944 = vpop.permute.xlu0 %8943
        %8945 = vrot.lane.b32.xlu0 %v8439, 48
        %v8946 = vpop.permute.xlu0 %8945
        %8947 = vrot.lane.b32.xlu0 %v8440, 48
        %v8948 = vpop.permute.xlu0 %8947
        %8949 = vrot.lane.b32.xlu0 %v8441, 48
        %v8950 = vpop.permute.xlu0 %8949
        %8951 = vrot.lane.b32.xlu0 %v8442, 48
        %v8952 = vpop.permute.xlu0 %8951
        %8953 = vrot.lane.b32.xlu0 %v8443, 48
        %v8954 = vpop.permute.xlu0 %8953
        %8955 = vrot.lane.b32.xlu0 %v8444, 48
        %v8956 = vpop.permute.xlu0 %8955
        %9021 = vrot.lane.b32.xlu0 %v8445, 64
        %v9022 = vpop.permute.xlu0 %9021
        %9023 = vrot.lane.b32.xlu0 %v8446, 64
        %v9024 = vpop.permute.xlu0 %9023
        %9025 = vrot.lane.b32.xlu0 %v8447, 64
        %v9026 = vpop.permute.xlu0 %9025
        %9027 = vrot.lane.b32.xlu0 %v8448, 64
        %v9028 = vpop.permute.xlu0 %9027
        %9029 = vrot.lane.b32.xlu0 %v8449, 64
        %v9030 = vpop.permute.xlu0 %9029
        %9031 = vrot.lane.b32.xlu0 %v8450, 64
        %v9032 = vpop.permute.xlu0 %9031
        %9033 = vrot.lane.b32.xlu0 %v8451, 64
        %v9034 = vpop.permute.xlu0 %9033
        %9035 = vrot.lane.b32.xlu0 %v8452, 64
        %v9036 = vpop.permute.xlu0 %9035
        %9037 = vrot.lane.b32.xlu0 %v8453, 64
        %v9038 = vpop.permute.xlu0 %9037
        %9039 = vrot.lane.b32.xlu0 %v8454, 64
        %v9040 = vpop.permute.xlu0 %9039
        %9041 = vrot.lane.b32.xlu0 %v8455, 64
        %v9042 = vpop.permute.xlu0 %9041
        %9043 = vrot.lane.b32.xlu0 %v8456, 64
        %v9044 = vpop.permute.xlu0 %9043
        %9045 = vrot.lane.b32.xlu0 %v8457, 64
        %v9046 = vpop.permute.xlu0 %9045
        %9047 = vrot.lane.b32.xlu0 %v8458, 64
        %v9048 = vpop.permute.xlu0 %9047
        %9049 = vrot.lane.b32.xlu0 %v8459, 64
        %v9050 = vpop.permute.xlu0 %9049
        %9051 = vrot.lane.b32.xlu0 %v8460, 64
        %v9052 = vpop.permute.xlu0 %9051
        %9053 = vrot.lane.b32.xlu0 %v8461, 64
        %v9054 = vpop.permute.xlu0 %9053
        %9055 = vrot.lane.b32.xlu0 %v8462, 64
        %v9056 = vpop.permute.xlu0 %9055
        %9057 = vrot.lane.b32.xlu0 %v8463, 64
        %v9058 = vpop.permute.xlu0 %9057
        %9059 = vrot.lane.b32.xlu0 %v8464, 64
        %v9060 = vpop.permute.xlu0 %9059
        %9061 = vrot.lane.b32.xlu0 %v8465, 64
        %v9062 = vpop.permute.xlu0 %9061
        %9063 = vrot.lane.b32.xlu0 %v8466, 64
        %v9064 = vpop.permute.xlu0 %9063
        %9065 = vrot.lane.b32.xlu0 %v8467, 64
        %v9066 = vpop.permute.xlu0 %9065
        %9067 = vrot.lane.b32.xlu0 %v8468, 64
        %v9068 = vpop.permute.xlu0 %9067
        %9069 = vrot.lane.b32.xlu0 %v8469, 64
        %v9070 = vpop.permute.xlu0 %9069
        %9071 = vrot.lane.b32.xlu0 %v8470, 64
        %v9072 = vpop.permute.xlu0 %9071
        %9073 = vrot.lane.b32.xlu0 %v8471, 64
        %v9074 = vpop.permute.xlu0 %9073
        %9075 = vrot.lane.b32.xlu0 %v8472, 64
        %v9076 = vpop.permute.xlu0 %9075
        %9077 = vrot.lane.b32.xlu0 %v8473, 64
        %v9078 = vpop.permute.xlu0 %9077
        %9079 = vrot.lane.b32.xlu0 %v8474, 64
        %v9080 = vpop.permute.xlu0 %9079
        %9081 = vrot.lane.b32.xlu0 %v8475, 64
        %v9082 = vpop.permute.xlu0 %9081
        %9083 = vrot.lane.b32.xlu0 %v8476, 64
        %v9084 = vpop.permute.xlu0 %9083
        %9149 = vrot.lane.b32.xlu0 %v8477, 80
        %v9150 = vpop.permute.xlu0 %9149
        %9151 = vrot.lane.b32.xlu0 %v8478, 80
        %v9152 = vpop.permute.xlu0 %9151
        %9153 = vrot.lane.b32.xlu0 %v8479, 80
        %v9154 = vpop.permute.xlu0 %9153
        %9155 = vrot.lane.b32.xlu0 %v8480, 80
        %v9156 = vpop.permute.xlu0 %9155
        %9157 = vrot.lane.b32.xlu0 %v8481, 80
        %v9158 = vpop.permute.xlu0 %9157
        %9159 = vrot.lane.b32.xlu0 %v8482, 80
        %v9160 = vpop.permute.xlu0 %9159
        %9161 = vrot.lane.b32.xlu0 %v8483, 80
        %v9162 = vpop.permute.xlu0 %9161
        %9163 = vrot.lane.b32.xlu0 %v8484, 80
        %v9164 = vpop.permute.xlu0 %9163
        %9165 = vrot.lane.b32.xlu0 %v8485, 80
        %v9166 = vpop.permute.xlu0 %9165
        %9167 = vrot.lane.b32.xlu0 %v8486, 80
        %v9168 = vpop.permute.xlu0 %9167
        %9169 = vrot.lane.b32.xlu0 %v8487, 80
        %v9170 = vpop.permute.xlu0 %9169
        %9171 = vrot.lane.b32.xlu0 %v8488, 80
        %v9172 = vpop.permute.xlu0 %9171
        %9173 = vrot.lane.b32.xlu0 %v8489, 80
        %v9174 = vpop.permute.xlu0 %9173
        %9175 = vrot.lane.b32.xlu0 %v8490, 80
        %v9176 = vpop.permute.xlu0 %9175
        %9177 = vrot.lane.b32.xlu0 %v8491, 80
        %v9178 = vpop.permute.xlu0 %9177
        %9179 = vrot.lane.b32.xlu0 %v8492, 80
        %v9180 = vpop.permute.xlu0 %9179
        %9181 = vrot.lane.b32.xlu0 %v8493, 80
        %v9182 = vpop.permute.xlu0 %9181
        %9183 = vrot.lane.b32.xlu0 %v8494, 80
        %v9184 = vpop.permute.xlu0 %9183
        %9185 = vrot.lane.b32.xlu0 %v8495, 80
        %v9186 = vpop.permute.xlu0 %9185
        %9187 = vrot.lane.b32.xlu0 %v8496, 80
        %v9188 = vpop.permute.xlu0 %9187
        %9189 = vrot.lane.b32.xlu0 %v8497, 80
        %v9190 = vpop.permute.xlu0 %9189
        %9191 = vrot.lane.b32.xlu0 %v8498, 80
        %v9192 = vpop.permute.xlu0 %9191
        %9193 = vrot.lane.b32.xlu0 %v8499, 80
        %v9194 = vpop.permute.xlu0 %9193
        %9195 = vrot.lane.b32.xlu0 %v8500, 80
        %v9196 = vpop.permute.xlu0 %9195
        %9197 = vrot.lane.b32.xlu0 %v8501, 80
        %v9198 = vpop.permute.xlu0 %9197
        %9199 = vrot.lane.b32.xlu0 %v8502, 80
        %v9200 = vpop.permute.xlu0 %9199
        %9201 = vrot.lane.b32.xlu0 %v8503, 80
        %v9202 = vpop.permute.xlu0 %9201
        %9203 = vrot.lane.b32.xlu0 %v8504, 80
        %v9204 = vpop.permute.xlu0 %9203
        %9205 = vrot.lane.b32.xlu0 %v8505, 80
        %v9206 = vpop.permute.xlu0 %9205
        %9207 = vrot.lane.b32.xlu0 %v8506, 80
        %v9208 = vpop.permute.xlu0 %9207
        %9209 = vrot.lane.b32.xlu0 %v8507, 80
        %v9210 = vpop.permute.xlu0 %9209
        %9211 = vrot.lane.b32.xlu0 %v8508, 80
        %v9212 = vpop.permute.xlu0 %9211
        %9277 = vrot.lane.b32.xlu0 %v8509, 96
        %v9278 = vpop.permute.xlu0 %9277
        %9279 = vrot.lane.b32.xlu0 %v8510, 96
        %v9280 = vpop.permute.xlu0 %9279
        %9281 = vrot.lane.b32.xlu0 %v8511, 96
        %v9282 = vpop.permute.xlu0 %9281
        %9283 = vrot.lane.b32.xlu0 %v8512, 96
        %v9284 = vpop.permute.xlu0 %9283
        %9285 = vrot.lane.b32.xlu0 %v8513, 96
        %v9286 = vpop.permute.xlu0 %9285
        %9287 = vrot.lane.b32.xlu0 %v8514, 96
        %v9288 = vpop.permute.xlu0 %9287
        %9289 = vrot.lane.b32.xlu0 %v8515, 96
        %v9290 = vpop.permute.xlu0 %9289
        %9291 = vrot.lane.b32.xlu0 %v8516, 96
        %v9292 = vpop.permute.xlu0 %9291
        %9293 = vrot.lane.b32.xlu0 %v8517, 96
        %v9294 = vpop.permute.xlu0 %9293
        %9295 = vrot.lane.b32.xlu0 %v8518, 96
        %v9296 = vpop.permute.xlu0 %9295
        %9297 = vrot.lane.b32.xlu0 %v8519, 96
        %v9298 = vpop.permute.xlu0 %9297
        %9299 = vrot.lane.b32.xlu0 %v8520, 96
        %v9300 = vpop.permute.xlu0 %9299
        %9301 = vrot.lane.b32.xlu0 %v8521, 96
        %v9302 = vpop.permute.xlu0 %9301
        %9303 = vrot.lane.b32.xlu0 %v8522, 96
        %v9304 = vpop.permute.xlu0 %9303
        %9305 = vrot.lane.b32.xlu0 %v8523, 96
        %v9306 = vpop.permute.xlu0 %9305
        %9307 = vrot.lane.b32.xlu0 %v8524, 96
        %v9308 = vpop.permute.xlu0 %9307
        %9309 = vrot.lane.b32.xlu0 %v8525, 96
        %v9310 = vpop.permute.xlu0 %9309
        %9311 = vrot.lane.b32.xlu0 %v8526, 96
        %v9312 = vpop.permute.xlu0 %9311
        %9313 = vrot.lane.b32.xlu0 %v8527, 96
        %v9314 = vpop.permute.xlu0 %9313
        %9315 = vrot.lane.b32.xlu0 %v8528, 96
        %v9316 = vpop.permute.xlu0 %9315
        %9317 = vrot.lane.b32.xlu0 %v8529, 96
        %v9318 = vpop.permute.xlu0 %9317
        %9319 = vrot.lane.b32.xlu0 %v8530, 96
        %v9320 = vpop.permute.xlu0 %9319
        %9321 = vrot.lane.b32.xlu0 %v8531, 96
        %v9322 = vpop.permute.xlu0 %9321
        %9323 = vrot.lane.b32.xlu0 %v8532, 96
        %v9324 = vpop.permute.xlu0 %9323
        %9325 = vrot.lane.b32.xlu0 %v8533, 96
        %v9326 = vpop.permute.xlu0 %9325
        %9327 = vrot.lane.b32.xlu0 %v8534, 96
        %v9328 = vpop.permute.xlu0 %9327
        %9329 = vrot.lane.b32.xlu0 %v8535, 96
        %v9330 = vpop.permute.xlu0 %9329
        %9331 = vrot.lane.b32.xlu0 %v8536, 96
        %v9332 = vpop.permute.xlu0 %9331
        %9333 = vrot.lane.b32.xlu0 %v8537, 96
        %v9334 = vpop.permute.xlu0 %9333
        %9335 = vrot.lane.b32.xlu0 %v8538, 96
        %v9336 = vpop.permute.xlu0 %9335
        %9337 = vrot.lane.b32.xlu0 %v8539, 96
        %v9338 = vpop.permute.xlu0 %9337
        %9339 = vrot.lane.b32.xlu0 %v8540, 96
        %v9340 = vpop.permute.xlu0 %9339
        %9405 = vrot.lane.b32.xlu0 %v8541, 112
        %v9406 = vpop.permute.xlu0 %9405
        %9407 = vrot.lane.b32.xlu0 %v8542, 112
        %v9408 = vpop.permute.xlu0 %9407
        %9409 = vrot.lane.b32.xlu0 %v8543, 112
        %v9410 = vpop.permute.xlu0 %9409
        %9411 = vrot.lane.b32.xlu0 %v8544, 112
        %v9412 = vpop.permute.xlu0 %9411
        %9413 = vrot.lane.b32.xlu0 %v8545, 112
        %v9414 = vpop.permute.xlu0 %9413
        %9415 = vrot.lane.b32.xlu0 %v8546, 112
        %v9416 = vpop.permute.xlu0 %9415
        %9417 = vrot.lane.b32.xlu0 %v8547, 112
        %v9418 = vpop.permute.xlu0 %9417
        %9419 = vrot.lane.b32.xlu0 %v8548, 112
        %v9420 = vpop.permute.xlu0 %9419
        %9421 = vrot.lane.b32.xlu0 %v8549, 112
        %v9422 = vpop.permute.xlu0 %9421
        %9423 = vrot.lane.b32.xlu0 %v8550, 112
        %v9424 = vpop.permute.xlu0 %9423
        %9425 = vrot.lane.b32.xlu0 %v8551, 112
        %v9426 = vpop.permute.xlu0 %9425
        %9427 = vrot.lane.b32.xlu0 %v8552, 112
        %v9428 = vpop.permute.xlu0 %9427
        %9429 = vrot.lane.b32.xlu0 %v8553, 112
        %v9430 = vpop.permute.xlu0 %9429
        %9431 = vrot.lane.b32.xlu0 %v8554, 112
        %v9432 = vpop.permute.xlu0 %9431
        %9433 = vrot.lane.b32.xlu0 %v8555, 112
        %v9434 = vpop.permute.xlu0 %9433
        %9435 = vrot.lane.b32.xlu0 %v8556, 112
        %v9436 = vpop.permute.xlu0 %9435
        %9437 = vrot.lane.b32.xlu0 %v8557, 112
        %v9438 = vpop.permute.xlu0 %9437
        %9439 = vrot.lane.b32.xlu0 %v8558, 112
        %v9440 = vpop.permute.xlu0 %9439
        %9441 = vrot.lane.b32.xlu0 %v8559, 112
        %v9442 = vpop.permute.xlu0 %9441
        %9443 = vrot.lane.b32.xlu0 %v8560, 112
        %v9444 = vpop.permute.xlu0 %9443
        %9445 = vrot.lane.b32.xlu0 %v8561, 112
        %v9446 = vpop.permute.xlu0 %9445
        %9447 = vrot.lane.b32.xlu0 %v8562, 112
        %v9448 = vpop.permute.xlu0 %9447
        %9449 = vrot.lane.b32.xlu0 %v8563, 112
        %v9450 = vpop.permute.xlu0 %9449
        %9451 = vrot.lane.b32.xlu0 %v8564, 112
        %v9452 = vpop.permute.xlu0 %9451
        %9453 = vrot.lane.b32.xlu0 %v8565, 112
        %v9454 = vpop.permute.xlu0 %9453
        %9455 = vrot.lane.b32.xlu0 %v8566, 112
        %v9456 = vpop.permute.xlu0 %9455
        %9457 = vrot.lane.b32.xlu0 %v8567, 112
        %v9458 = vpop.permute.xlu0 %9457
        %9459 = vrot.lane.b32.xlu0 %v8568, 112
        %v9460 = vpop.permute.xlu0 %9459
        %9461 = vrot.lane.b32.xlu0 %v8569, 112
        %v9462 = vpop.permute.xlu0 %9461
        %9463 = vrot.lane.b32.xlu0 %v8570, 112
        %v9464 = vpop.permute.xlu0 %9463
        %9465 = vrot.lane.b32.xlu0 %v8571, 112
        %v9466 = vpop.permute.xlu0 %9465
        %9467 = vrot.lane.b32.xlu0 %v8572, 112
        %v9468 = vpop.permute.xlu0 %9467
        %v9501 = vsel %vm351, %v8317, %v8638
        %v9502 = vsel %vm351, %v8318, %v8640
        %v9503 = vsel %vm351, %v8319, %v8642
        %v9504 = vsel %vm351, %v8320, %v8644
        %v9505 = vsel %vm351, %v8321, %v8646
        %v9506 = vsel %vm351, %v8322, %v8648
        %v9507 = vsel %vm351, %v8323, %v8650
        %v9508 = vsel %vm351, %v8324, %v8652
        %v9509 = vsel %vm351, %v8325, %v8654
        %v9510 = vsel %vm351, %v8326, %v8656
        %v9511 = vsel %vm351, %v8327, %v8658
        %v9512 = vsel %vm351, %v8328, %v8660
        %v9513 = vsel %vm351, %v8329, %v8662
        %v9514 = vsel %vm351, %v8330, %v8664
        %v9515 = vsel %vm351, %v8331, %v8666
        %v9516 = vsel %vm351, %v8332, %v8668
        %v9517 = vsel %vm351, %v8333, %v8670
        %v9518 = vsel %vm351, %v8334, %v8672
        %v9519 = vsel %vm351, %v8335, %v8674
        %v9520 = vsel %vm351, %v8336, %v8676
        %v9521 = vsel %vm351, %v8337, %v8678
        %v9522 = vsel %vm351, %v8338, %v8680
        %v9523 = vsel %vm351, %v8339, %v8682
        %v9524 = vsel %vm351, %v8340, %v8684
        %v9525 = vsel %vm351, %v8341, %v8686
        %v9526 = vsel %vm351, %v8342, %v8688
        %v9527 = vsel %vm351, %v8343, %v8690
        %v9528 = vsel %vm351, %v8344, %v8692
        %v9529 = vsel %vm351, %v8345, %v8694
        %v9530 = vsel %vm351, %v8346, %v8696
        %v9531 = vsel %vm351, %v8347, %v8698
        %v9532 = vsel %vm351, %v8348, %v8700
        %v9533 = vsel %vm1708, %v9501, %v8766
        %v9534 = vsel %vm1708, %v9502, %v8768
        %v9535 = vsel %vm1708, %v9503, %v8770
        %v9536 = vsel %vm1708, %v9504, %v8772
        %v9537 = vsel %vm1708, %v9505, %v8774
        %v9538 = vsel %vm1708, %v9506, %v8776
        %v9539 = vsel %vm1708, %v9507, %v8778
        %v9540 = vsel %vm1708, %v9508, %v8780
        %v9541 = vsel %vm1708, %v9509, %v8782
        %v9542 = vsel %vm1708, %v9510, %v8784
        %v9543 = vsel %vm1708, %v9511, %v8786
        %v9544 = vsel %vm1708, %v9512, %v8788
        %v9545 = vsel %vm1708, %v9513, %v8790
        %v9546 = vsel %vm1708, %v9514, %v8792
        %v9547 = vsel %vm1708, %v9515, %v8794
        %v9548 = vsel %vm1708, %v9516, %v8796
        %v9549 = vsel %vm1708, %v9517, %v8798
        %v9550 = vsel %vm1708, %v9518, %v8800
        %v9551 = vsel %vm1708, %v9519, %v8802
        %v9552 = vsel %vm1708, %v9520, %v8804
        %v9553 = vsel %vm1708, %v9521, %v8806
        %v9554 = vsel %vm1708, %v9522, %v8808
        %v9555 = vsel %vm1708, %v9523, %v8810
        %v9556 = vsel %vm1708, %v9524, %v8812
        %v9557 = vsel %vm1708, %v9525, %v8814
        %v9558 = vsel %vm1708, %v9526, %v8816
        %v9559 = vsel %vm1708, %v9527, %v8818
        %v9560 = vsel %vm1708, %v9528, %v8820
        %v9561 = vsel %vm1708, %v9529, %v8822
        %v9562 = vsel %vm1708, %v9530, %v8824
        %v9563 = vsel %vm1708, %v9531, %v8826
        %v9564 = vsel %vm1708, %v9532, %v8828
        %v9565 = vsel %vm1741, %v9533, %v8894
        %v9566 = vsel %vm1741, %v9534, %v8896
        %v9567 = vsel %vm1741, %v9535, %v8898
        %v9568 = vsel %vm1741, %v9536, %v8900
        %v9569 = vsel %vm1741, %v9537, %v8902
        %v9570 = vsel %vm1741, %v9538, %v8904
        %v9571 = vsel %vm1741, %v9539, %v8906
        %v9572 = vsel %vm1741, %v9540, %v8908
        %v9573 = vsel %vm1741, %v9541, %v8910
        %v9574 = vsel %vm1741, %v9542, %v8912
        %v9575 = vsel %vm1741, %v9543, %v8914
        %v9576 = vsel %vm1741, %v9544, %v8916
        %v9577 = vsel %vm1741, %v9545, %v8918
        %v9578 = vsel %vm1741, %v9546, %v8920
        %v9579 = vsel %vm1741, %v9547, %v8922
        %v9580 = vsel %vm1741, %v9548, %v8924
        %v9581 = vsel %vm1741, %v9549, %v8926
        %v9582 = vsel %vm1741, %v9550, %v8928
        %v9583 = vsel %vm1741, %v9551, %v8930
        %v9584 = vsel %vm1741, %v9552, %v8932
        %v9585 = vsel %vm1741, %v9553, %v8934
        %v9586 = vsel %vm1741, %v9554, %v8936
        %v9587 = vsel %vm1741, %v9555, %v8938
        %v9588 = vsel %vm1741, %v9556, %v8940
        %v9589 = vsel %vm1741, %v9557, %v8942
        %v9590 = vsel %vm1741, %v9558, %v8944
        %v9591 = vsel %vm1741, %v9559, %v8946
        %v9592 = vsel %vm1741, %v9560, %v8948
        %v9593 = vsel %vm1741, %v9561, %v8950
        %v9594 = vsel %vm1741, %v9562, %v8952
        %v9595 = vsel %vm1741, %v9563, %v8954
        %v9596 = vsel %vm1741, %v9564, %v8956
        %v9597 = vsel %vm1774, %v9565, %v9022
        %v9598 = vsel %vm1774, %v9566, %v9024
        %v9599 = vsel %vm1774, %v9567, %v9026
        %v9600 = vsel %vm1774, %v9568, %v9028
        %v9601 = vsel %vm1774, %v9569, %v9030
        %v9602 = vsel %vm1774, %v9570, %v9032
        %v9603 = vsel %vm1774, %v9571, %v9034
        %v9604 = vsel %vm1774, %v9572, %v9036
        %v9605 = vsel %vm1774, %v9573, %v9038
        %v9606 = vsel %vm1774, %v9574, %v9040
        %v9607 = vsel %vm1774, %v9575, %v9042
        %v9608 = vsel %vm1774, %v9576, %v9044
        %v9609 = vsel %vm1774, %v9577, %v9046
        %v9610 = vsel %vm1774, %v9578, %v9048
        %v9611 = vsel %vm1774, %v9579, %v9050
        %v9612 = vsel %vm1774, %v9580, %v9052
        %v9613 = vsel %vm1774, %v9581, %v9054
        %v9614 = vsel %vm1774, %v9582, %v9056
        %v9615 = vsel %vm1774, %v9583, %v9058
        %v9616 = vsel %vm1774, %v9584, %v9060
        %v9617 = vsel %vm1774, %v9585, %v9062
        %v9618 = vsel %vm1774, %v9586, %v9064
        %v9619 = vsel %vm1774, %v9587, %v9066
        %v9620 = vsel %vm1774, %v9588, %v9068
        %v9621 = vsel %vm1774, %v9589, %v9070
        %v9622 = vsel %vm1774, %v9590, %v9072
        %v9623 = vsel %vm1774, %v9591, %v9074
        %v9624 = vsel %vm1774, %v9592, %v9076
        %v9625 = vsel %vm1774, %v9593, %v9078
        %v9626 = vsel %vm1774, %v9594, %v9080
        %v9627 = vsel %vm1774, %v9595, %v9082
        %v9628 = vsel %vm1774, %v9596, %v9084
        %v9629 = vsel %vm1807, %v9597, %v9150
        %v9630 = vsel %vm1807, %v9598, %v9152
        %v9631 = vsel %vm1807, %v9599, %v9154
        %v9632 = vsel %vm1807, %v9600, %v9156
        %v9633 = vsel %vm1807, %v9601, %v9158
        %v9634 = vsel %vm1807, %v9602, %v9160
        %v9635 = vsel %vm1807, %v9603, %v9162
        %v9636 = vsel %vm1807, %v9604, %v9164
        %v9637 = vsel %vm1807, %v9605, %v9166
        %v9638 = vsel %vm1807, %v9606, %v9168
        %v9639 = vsel %vm1807, %v9607, %v9170
        %v9640 = vsel %vm1807, %v9608, %v9172
        %v9641 = vsel %vm1807, %v9609, %v9174
        %v9642 = vsel %vm1807, %v9610, %v9176
        %v9643 = vsel %vm1807, %v9611, %v9178
        %v9644 = vsel %vm1807, %v9612, %v9180
        %v9645 = vsel %vm1807, %v9613, %v9182
        %v9646 = vsel %vm1807, %v9614, %v9184
        %v9647 = vsel %vm1807, %v9615, %v9186
        %v9648 = vsel %vm1807, %v9616, %v9188
        %v9649 = vsel %vm1807, %v9617, %v9190
        %v9650 = vsel %vm1807, %v9618, %v9192
        %v9651 = vsel %vm1807, %v9619, %v9194
        %v9652 = vsel %vm1807, %v9620, %v9196
        %v9653 = vsel %vm1807, %v9621, %v9198
        %v9654 = vsel %vm1807, %v9622, %v9200
        %v9655 = vsel %vm1807, %v9623, %v9202
        %v9656 = vsel %vm1807, %v9624, %v9204
        %v9657 = vsel %vm1807, %v9625, %v9206
        %v9658 = vsel %vm1807, %v9626, %v9208
        %v9659 = vsel %vm1807, %v9627, %v9210
        %v9660 = vsel %vm1807, %v9628, %v9212
        %v9661 = vsel %vm1840, %v9629, %v9278
        %v9662 = vsel %vm1840, %v9630, %v9280
        %v9663 = vsel %vm1840, %v9631, %v9282
        %v9664 = vsel %vm1840, %v9632, %v9284
        %v9665 = vsel %vm1840, %v9633, %v9286
        %v9666 = vsel %vm1840, %v9634, %v9288
        %v9667 = vsel %vm1840, %v9635, %v9290
        %v9668 = vsel %vm1840, %v9636, %v9292
        %v9669 = vsel %vm1840, %v9637, %v9294
        %v9670 = vsel %vm1840, %v9638, %v9296
        %v9671 = vsel %vm1840, %v9639, %v9298
        %v9672 = vsel %vm1840, %v9640, %v9300
        %v9673 = vsel %vm1840, %v9641, %v9302
        %v9674 = vsel %vm1840, %v9642, %v9304
        %v9675 = vsel %vm1840, %v9643, %v9306
        %v9676 = vsel %vm1840, %v9644, %v9308
        %v9677 = vsel %vm1840, %v9645, %v9310
        %v9678 = vsel %vm1840, %v9646, %v9312
        %v9679 = vsel %vm1840, %v9647, %v9314
        %v9680 = vsel %vm1840, %v9648, %v9316
        %v9681 = vsel %vm1840, %v9649, %v9318
        %v9682 = vsel %vm1840, %v9650, %v9320
        %v9683 = vsel %vm1840, %v9651, %v9322
        %v9684 = vsel %vm1840, %v9652, %v9324
        %v9685 = vsel %vm1840, %v9653, %v9326
        %v9686 = vsel %vm1840, %v9654, %v9328
        %v9687 = vsel %vm1840, %v9655, %v9330
        %v9688 = vsel %vm1840, %v9656, %v9332
        %v9689 = vsel %vm1840, %v9657, %v9334
        %v9690 = vsel %vm1840, %v9658, %v9336
        %v9691 = vsel %vm1840, %v9659, %v9338
        %v9692 = vsel %vm1840, %v9660, %v9340
        %v9693 = vsel %vm1873, %v9661, %v9406
        %v9694 = vsel %vm1873, %v9662, %v9408
        %v9695 = vsel %vm1873, %v9663, %v9410
        %v9696 = vsel %vm1873, %v9664, %v9412
        %v9697 = vsel %vm1873, %v9665, %v9414
        %v9698 = vsel %vm1873, %v9666, %v9416
        %v9699 = vsel %vm1873, %v9667, %v9418
        %v9700 = vsel %vm1873, %v9668, %v9420
        %v9701 = vsel %vm1873, %v9669, %v9422
        %v9702 = vsel %vm1873, %v9670, %v9424
        %v9703 = vsel %vm1873, %v9671, %v9426
        %v9704 = vsel %vm1873, %v9672, %v9428
        %v9705 = vsel %vm1873, %v9673, %v9430
        %v9706 = vsel %vm1873, %v9674, %v9432
        %v9707 = vsel %vm1873, %v9675, %v9434
        %v9708 = vsel %vm1873, %v9676, %v9436
        %v9709 = vsel %vm1873, %v9677, %v9438
        %v9710 = vsel %vm1873, %v9678, %v9440
        %v9711 = vsel %vm1873, %v9679, %v9442
        %v9712 = vsel %vm1873, %v9680, %v9444
        %v9713 = vsel %vm1873, %v9681, %v9446
        %v9714 = vsel %vm1873, %v9682, %v9448
        %v9715 = vsel %vm1873, %v9683, %v9450
        %v9716 = vsel %vm1873, %v9684, %v9452
        %v9717 = vsel %vm1873, %v9685, %v9454
        %v9718 = vsel %vm1873, %v9686, %v9456
        %v9719 = vsel %vm1873, %v9687, %v9458
        %v9720 = vsel %vm1873, %v9688, %v9460
        %v9721 = vsel %vm1873, %v9689, %v9462
        %v9722 = vsel %vm1873, %v9690, %v9464
        %v9723 = vsel %vm1873, %v9691, %v9466
        %v9724 = vsel %vm1873, %v9692, %v9468
        %v9726 = vlaneseq
        %v9727 = vshrl.u32 %v9726, 7
        %v9728 = vsub.s32 0, %v9727
        %v9729 = vrot.slane %v8284, %v9728
        %v9732 = vsel %vm351, %v8573, 0
        %v9735 = vsel %vm351, %v8574, 0
        %v9738 = vsel %vm351, %v8575, 0
        %v9741 = vsel %vm351, %v8576, 0
        %v9744 = vsel %vm351, %v8577, 0
        %v9747 = vsel %vm351, %v8578, 0
        %v9750 = vsel %vm351, %v8579, 0
        %v9753 = vsel %vm351, %v8580, 0
        %v9756 = vsel %vm351, %v8581, 0
        %v9759 = vsel %vm351, %v8582, 0
        %v9762 = vsel %vm351, %v8583, 0
        %v9765 = vsel %vm351, %v8584, 0
        %v9768 = vsel %vm351, %v8585, 0
        %v9771 = vsel %vm351, %v8586, 0
        %v9774 = vsel %vm351, %v8587, 0
        %v9777 = vsel %vm351, %v8588, 0
        %v9780 = vsel %vm351, %v8589, 0
        %v9783 = vsel %vm351, %v8590, 0
        %v9786 = vsel %vm351, %v8591, 0
        %v9789 = vsel %vm351, %v8592, 0
        %v9792 = vsel %vm351, %v8593, 0
        %v9795 = vsel %vm351, %v8594, 0
        %v9798 = vsel %vm351, %v8595, 0
        %v9801 = vsel %vm351, %v8596, 0
        %v9804 = vsel %vm351, %v8597, 0
        %v9807 = vsel %vm351, %v8598, 0
        %v9810 = vsel %vm351, %v8599, 0
        %v9813 = vsel %vm351, %v8600, 0
        %v9816 = vsel %vm351, %v8601, 0
        %v9819 = vsel %vm351, %v8602, 0
        %v9822 = vsel %vm351, %v8603, 0
        %v9825 = vsel %vm351, %v8604, 0
        %9827 = vmatprep.subr.mxu0 0.0
        %9828 = vmatpush1.msra.mxu0 %v8266
        %9829 = vmatprep.subr.mxu0 0.0
        %9830 = vmatpush1.msra.mxu0 %v8267
        %9831 = vmatprep.subr.mxu0 0.0
        %9832 = vmatpush1.msra.mxu0 %v8268
        %9833 = vmatprep.subr.mxu0 0.0
        %9834 = vmatpush1.msra.mxu0 %v8269
        %9835 = vmatprep.subr.mxu0 0.0
        %9836 = vmatpush1.msra.mxu0 %v8270
        %9837 = vmatprep.subr.mxu0 0.0
        %9838 = vmatpush1.msra.mxu0 %v8271
        %9839 = vmatprep.subr.mxu0 0.0
        %9840 = vmatpush1.msra.mxu0 %v8272
        %9841 = vmatprep.subr.mxu0 0.0
        %9842 = vmatpush1.msra.mxu0 %v8273
        %9843 = vmatprep.subr.mxu0 0.0
        %9844 = vmatpush1.msra.mxu0 %v8274
        %9845 = vmatprep.subr.mxu0 0.0
        %9846 = vmatpush1.msra.mxu0 %v8275
        %9847 = vmatprep.subr.mxu0 0.0
        %9848 = vmatpush1.msra.mxu0 %v8276
        %9849 = vmatprep.subr.mxu0 0.0
        %9850 = vmatpush1.msra.mxu0 %v8277
        %9851 = vmatprep.subr.mxu0 0.0
        %9852 = vmatpush1.msra.mxu0 %v8278
        %9853 = vmatprep.subr.mxu0 0.0
        %9854 = vmatpush1.msra.mxu0 %v8279
        %9855 = vmatprep.subr.mxu0 0.0
        %9856 = vmatpush1.msra.mxu0 %v8280
        %9857 = vmatprep.subr.mxu0 0.0
        %9858 = vmatpush1.msra.mxu0 %v8281
        %9859 = vmatprep.subr.mxu0 0.0
        %9860 = vmatpush1.msra.mxu0 %v8282
        %9861 = vmatprep.subr.mxu0 0.0
        %9862 = vmatpush1.msra.mxu0 %v8283
        %9863 = vmatprep.subr.mxu0 0.0
        %9864 = vmatpush1.msra.mxu0 0.0
        %9865 = vmatprep.subr.mxu0 0.0
        %9866 = vmatpush1.msra.mxu0 0.0
        %9867 = vmatprep.subr.mxu0 0.0
        %9868 = vmatpush1.msra.mxu0 0.0
        %9869 = vmatprep.subr.mxu0 0.0
        %9870 = vmatpush1.msra.mxu0 0.0
        %9871 = vmatprep.subr.mxu0 0.0
        %9872 = vmatpush1.msra.mxu0 0.0
        %9873 = vmatprep.subr.mxu0 0.0
        %9874 = vmatpush1.msra.mxu0 0.0
        %9875 = vmatprep.subr.mxu0 0.0
        %9876 = vmatpush1.msra.mxu0 0.0
        %9877 = vmatprep.subr.mxu0 0.0
        %9878 = vmatpush1.msra.mxu0 0.0
        %9879 = vmatprep.subr.mxu0 0.0
        %9880 = vmatpush1.msra.mxu0 0.0
        %9881 = vmatprep.subr.mxu0 0.0
        %9882 = vmatpush1.msra.mxu0 0.0
        %9883 = vmatprep.subr.mxu0 0.0
        %9884 = vmatpush1.msra.mxu0 0.0
        %9885 = vmatprep.subr.mxu0 0.0
        %9886 = vmatpush1.msra.mxu0 0.0
        %9887 = vmatprep.subr.mxu0 0.0
        %9888 = vmatpush1.msra.mxu0 0.0
        %9889 = vmatprep.subr.mxu0 0.0
        %9890 = vmatpush1.msra.mxu0 0.0
        %9891 = vmatprep.mubr.f32.mxu0 %v9732
        %9892 = vmatmul.mubr.f32.gmra.mrb[0].mxu0 %v9693
        %v9893 = vpop.f32.mrb[0].mxu0
        %v9894 = vadd.f32 %v9729, %v9893
        %v9895 = vpop.f32.mrb[0].mxu0
        %9896 = vmatprep.mubr.f32.mxu0 %v9735
        %9897 = vmatmul.mubr.f32.gmra.mrb[0].mxu0 %v9694
        %v9898 = vpop.f32.mrb[0].mxu0
        %v9899 = vadd.f32 %v9729, %v9898
        %v9900 = vpop.f32.mrb[0].mxu0
        %9901 = vmatprep.mubr.f32.mxu0 %v9738
        %9902 = vmatmul.mubr.f32.gmra.mrb[0].mxu0 %v9695
        %v9903 = vpop.f32.mrb[0].mxu0
        %v9904 = vadd.f32 %v9729, %v9903
        %v9905 = vpop.f32.mrb[0].mxu0
        %9906 = vmatprep.mubr.f32.mxu0 %v9741
        %9907 = vmatmul.mubr.f32.gmra.mrb[0].mxu0 %v9696
        %v9908 = vpop.f32.mrb[0].mxu0
        %v9909 = vadd.f32 %v9729, %v9908
        %v9910 = vpop.f32.mrb[0].mxu0
        %9911 = vmatprep.mubr.f32.mxu0 %v9744
        %9912 = vmatmul.mubr.f32.gmra.mrb[0].mxu0 %v9697
        %v9913 = vpop.f32.mrb[0].mxu0
        %v9914 = vadd.f32 %v9729, %v9913
        %v9915 = vpop.f32.mrb[0].mxu0
        %9916 = vmatprep.mubr.f32.mxu0 %v9747
        %9917 = vmatmul.mubr.f32.gmra.mrb[0].mxu0 %v9698
        %v9918 = vpop.f32.mrb[0].mxu0
        %v9919 = vadd.f32 %v9729, %v9918
        %v9920 = vpop.f32.mrb[0].mxu0
        %9921 = vmatprep.mubr.f32.mxu0 %v9750
        %9922 = vmatmul.mubr.f32.gmra.mrb[0].mxu0 %v9699
        %v9923 = vpop.f32.mrb[0].mxu0
        %v9924 = vadd.f32 %v9729, %v9923
        %v9925 = vpop.f32.mrb[0].mxu0
        %9926 = vmatprep.mubr.f32.mxu0 %v9753
        %9927 = vmatmul.mubr.f32.gmra.mrb[0].mxu0 %v9700
        %v9928 = vpop.f32.mrb[0].mxu0
        %v9929 = vadd.f32 %v9729, %v9928
        %v9930 = vpop.f32.mrb[0].mxu0
        %9931 = vmatprep.mubr.f32.mxu0 %v9756
        %9932 = vmatmul.mubr.f32.gmra.mrb[0].mxu0 %v9701
        %v9933 = vpop.f32.mrb[0].mxu0
        %v9934 = vadd.f32 %v9729, %v9933
        %v9935 = vpop.f32.mrb[0].mxu0
        %9936 = vmatprep.mubr.f32.mxu0 %v9759
        %9937 = vmatmul.mubr.f32.gmra.mrb[0].mxu0 %v9702
        %v9938 = vpop.f32.mrb[0].mxu0
        %v9939 = vadd.f32 %v9729, %v9938
        %v9940 = vpop.f32.mrb[0].mxu0
        %9941 = vmatprep.mubr.f32.mxu0 %v9762
        %9942 = vmatmul.mubr.f32.gmra.mrb[0].mxu0 %v9703
        %v9943 = vpop.f32.mrb[0].mxu0
        %v9944 = vadd.f32 %v9729, %v9943
        %v9945 = vpop.f32.mrb[0].mxu0
        %9946 = vmatprep.mubr.f32.mxu0 %v9765
        %9947 = vmatmul.mubr.f32.gmra.mrb[0].mxu0 %v9704
        %v9948 = vpop.f32.mrb[0].mxu0
        %v9949 = vadd.f32 %v9729, %v9948
        %v9950 = vpop.f32.mrb[0].mxu0
        %9951 = vmatprep.mubr.f32.mxu0 %v9768
        %9952 = vmatmul.mubr.f32.gmra.mrb[0].mxu0 %v9705
        %v9953 = vpop.f32.mrb[0].mxu0
        %v9954 = vadd.f32 %v9729, %v9953
        %v9955 = vpop.f32.mrb[0].mxu0
        %9956 = vmatprep.mubr.f32.mxu0 %v9771
        %9957 = vmatmul.mubr.f32.gmra.mrb[0].mxu0 %v9706
        %v9958 = vpop.f32.mrb[0].mxu0
        %v9959 = vadd.f32 %v9729, %v9958
        %v9960 = vpop.f32.mrb[0].mxu0
        %9961 = vmatprep.mubr.f32.mxu0 %v9774
        %9962 = vmatmul.mubr.f32.gmra.mrb[0].mxu0 %v9707
        %v9963 = vpop.f32.mrb[0].mxu0
        %v9964 = vadd.f32 %v9729, %v9963
        %v9965 = vpop.f32.mrb[0].mxu0
        %9966 = vmatprep.mubr.f32.mxu0 %v9777
        %9967 = vmatmul.mubr.f32.gmra.mrb[0].mxu0 %v9708
        %v9968 = vpop.f32.mrb[0].mxu0
        %v9969 = vadd.f32 %v9729, %v9968
        %v9970 = vpop.f32.mrb[0].mxu0
        %9971 = vmatprep.mubr.f32.mxu0 %v9780
        %9972 = vmatmul.mubr.f32.gmra.mrb[0].mxu0 %v9709
        %v9973 = vpop.f32.mrb[0].mxu0
        %v9974 = vadd.f32 %v9729, %v9973
        %v9975 = vpop.f32.mrb[0].mxu0
        %9976 = vmatprep.mubr.f32.mxu0 %v9783
        %9977 = vmatmul.mubr.f32.gmra.mrb[0].mxu0 %v9710
        %v9978 = vpop.f32.mrb[0].mxu0
        %v9979 = vadd.f32 %v9729, %v9978
        %v9980 = vpop.f32.mrb[0].mxu0
        %9981 = vmatprep.mubr.f32.mxu0 %v9786
        %9982 = vmatmul.mubr.f32.gmra.mrb[0].mxu0 %v9711
        %v9983 = vpop.f32.mrb[0].mxu0
        %v9984 = vadd.f32 %v9729, %v9983
        %v9985 = vpop.f32.mrb[0].mxu0
        %9986 = vmatprep.mubr.f32.mxu0 %v9789
        %9987 = vmatmul.mubr.f32.gmra.mrb[0].mxu0 %v9712
        %v9988 = vpop.f32.mrb[0].mxu0
        %v9989 = vadd.f32 %v9729, %v9988
        %v9990 = vpop.f32.mrb[0].mxu0
        %9991 = vmatprep.mubr.f32.mxu0 %v9792
        %9992 = vmatmul.mubr.f32.gmra.mrb[0].mxu0 %v9713
        %v9993 = vpop.f32.mrb[0].mxu0
        %v9994 = vadd.f32 %v9729, %v9993
        %v9995 = vpop.f32.mrb[0].mxu0
        %9996 = vmatprep.mubr.f32.mxu0 %v9795
        %9997 = vmatmul.mubr.f32.gmra.mrb[0].mxu0 %v9714
        %v9998 = vpop.f32.mrb[0].mxu0
        %v9999 = vadd.f32 %v9729, %v9998
        %v10000 = vpop.f32.mrb[0].mxu0
        %10001 = vmatprep.mubr.f32.mxu0 %v9798
        %10002 = vmatmul.mubr.f32.gmra.mrb[0].mxu0 %v9715
        %v10003 = vpop.f32.mrb[0].mxu0
        %v10004 = vadd.f32 %v9729, %v10003
        %v10005 = vpop.f32.mrb[0].mxu0
        %10006 = vmatprep.mubr.f32.mxu0 %v9801
        %10007 = vmatmul.mubr.f32.gmra.mrb[0].mxu0 %v9716
        %v10008 = vpop.f32.mrb[0].mxu0
        %v10009 = vadd.f32 %v9729, %v10008
        %v10010 = vpop.f32.mrb[0].mxu0
        %10011 = vmatprep.mubr.f32.mxu0 %v9804
        %10012 = vmatmul.mubr.f32.gmra.mrb[0].mxu0 %v9717
        %v10013 = vpop.f32.mrb[0].mxu0
        %v10014 = vadd.f32 %v9729, %v10013
        %v10015 = vpop.f32.mrb[0].mxu0
        %10016 = vmatprep.mubr.f32.mxu0 %v9807
        %10017 = vmatmul.mubr.f32.gmra.mrb[0].mxu0 %v9718
        %v10018 = vpop.f32.mrb[0].mxu0
        %v10019 = vadd.f32 %v9729, %v10018
        %v10020 = vpop.f32.mrb[0].mxu0
        %10021 = vmatprep.mubr.f32.mxu0 %v9810
        %10022 = vmatmul.mubr.f32.gmra.mrb[0].mxu0 %v9719
        %v10023 = vpop.f32.mrb[0].mxu0
        %v10024 = vadd.f32 %v9729, %v10023
        %v10025 = vpop.f32.mrb[0].mxu0
        %10026 = vmatprep.mubr.f32.mxu0 %v9813
        %10027 = vmatmul.mubr.f32.gmra.mrb[0].mxu0 %v9720
        %v10028 = vpop.f32.mrb[0].mxu0
        %v10029 = vadd.f32 %v9729, %v10028
        %v10030 = vpop.f32.mrb[0].mxu0
        %10031 = vmatprep.mubr.f32.mxu0 %v9816
        %10032 = vmatmul.mubr.f32.gmra.mrb[0].mxu0 %v9721
        %v10033 = vpop.f32.mrb[0].mxu0
        %v10034 = vadd.f32 %v9729, %v10033
        %v10035 = vpop.f32.mrb[0].mxu0
        %10036 = vmatprep.mubr.f32.mxu0 %v9819
        %10037 = vmatmul.mubr.f32.gmra.mrb[0].mxu0 %v9722
        %v10038 = vpop.f32.mrb[0].mxu0
        %v10039 = vadd.f32 %v9729, %v10038
        %v10040 = vpop.f32.mrb[0].mxu0
        %10041 = vmatprep.mubr.f32.mxu0 %v9822
        %10042 = vmatmul.mubr.f32.gmra.mrb[0].mxu0 %v9723
        %v10043 = vpop.f32.mrb[0].mxu0
        %v10044 = vadd.f32 %v9729, %v10043
        %v10045 = vpop.f32.mrb[0].mxu0
        %10046 = vmatprep.mubr.f32.mxu0 %v9825
        %10047 = vmatmul.mubr.f32.gmra.mrb[0].mxu0 %v9724
        %v10048 = vpop.f32.mrb[0].mxu0
        %v10049 = vadd.f32 %v9729, %v10048
        %v10050 = vpop.f32.mrb[0].mxu0
        %10051 = vdwg.mxu0
        %v10052 = vadd.f32 %v9894, %v407
        %v10053 = vadd.f32 %v9899, %v408
        %v10054 = vadd.f32 %v9904, %v409
        %v10055 = vadd.f32 %v9909, %v410
        %v10056 = vadd.f32 %v9914, %v411
        %v10057 = vadd.f32 %v9919, %v412
        %v10058 = vadd.f32 %v9924, %v413
        %v10059 = vadd.f32 %v9929, %v414
        %v10060 = vadd.f32 %v9934, %v415
        %v10061 = vadd.f32 %v9939, %v416
        %v10062 = vadd.f32 %v9944, %v417
        %v10063 = vadd.f32 %v9949, %v418
        %v10064 = vadd.f32 %v9954, %v419
        %v10065 = vadd.f32 %v9959, %v420
        %v10066 = vadd.f32 %v9964, %v421
        %v10067 = vadd.f32 %v9969, %v422
        %v10068 = vadd.f32 %v9974, %v423
        %v10069 = vadd.f32 %v9979, %v424
        %v10070 = vadd.f32 %v9984, %v425
        %v10071 = vadd.f32 %v9989, %v426
        %v10072 = vadd.f32 %v9994, %v427
        %v10073 = vadd.f32 %v9999, %v428
        %v10074 = vadd.f32 %v10004, %v429
        %v10075 = vadd.f32 %v10009, %v430
        %v10076 = vadd.f32 %v10014, %v431
        %v10077 = vadd.f32 %v10019, %v432
        %v10078 = vadd.f32 %v10024, %v433
        %v10079 = vadd.f32 %v10029, %v434
        %v10080 = vadd.f32 %v10034, %v435
        %v10081 = vadd.f32 %v10039, %v436
        %v10082 = vadd.f32 %v10044, %v437
        %v10083 = vadd.f32 %v10049, %v438
        %10084 = vst.msk [vmem:[%s350] sm:$0xff] %vm351, %v10052
        %10085 = vst.msk [vmem:[%s350 + $0x8] sm:$0xff] %vm351, %v10053
        %10086 = vst.msk [vmem:[%s350 + $0x10] sm:$0xff] %vm351, %v10054
        %10087 = vst.msk [vmem:[%s350 + $0x18] sm:$0xff] %vm351, %v10055
        %10088 = vst.msk [vmem:[%s350 + $0x20] sm:$0xff] %vm351, %v10056
        %10089 = vst.msk [vmem:[%s350 + $0x28] sm:$0xff] %vm351, %v10057
        %10090 = vst.msk [vmem:[%s350 + $0x30] sm:$0xff] %vm351, %v10058
        %10091 = vst.msk [vmem:[%s350 + $0x38] sm:$0xff] %vm351, %v10059
        %10092 = vst.msk [vmem:[%s350 + $0x40] sm:$0xff] %vm351, %v10060
        %10093 = vst.msk [vmem:[%s350 + $0x48] sm:$0xff] %vm351, %v10061
        %10094 = vst.msk [vmem:[%s350 + $0x50] sm:$0xff] %vm351, %v10062
        %10095 = vst.msk [vmem:[%s350 + $0x58] sm:$0xff] %vm351, %v10063
        %10096 = vst.msk [vmem:[%s350 + $0x60] sm:$0xff] %vm351, %v10064
        %10097 = vst.msk [vmem:[%s350 + $0x68] sm:$0xff] %vm351, %v10065
        %10098 = vst.msk [vmem:[%s350 + $0x70] sm:$0xff] %vm351, %v10066
        %10099 = vst.msk [vmem:[%s350 + $0x78] sm:$0xff] %vm351, %v10067
        %10100 = vst.msk [vmem:[%s350 + $0x80] sm:$0xff] %vm351, %v10068
        %10101 = vst.msk [vmem:[%s350 + $0x88] sm:$0xff] %vm351, %v10069
        %10102 = vst.msk [vmem:[%s350 + $0x90] sm:$0xff] %vm351, %v10070
        %10103 = vst.msk [vmem:[%s350 + $0x98] sm:$0xff] %vm351, %v10071
        %10104 = vst.msk [vmem:[%s350 + $0xa0] sm:$0xff] %vm351, %v10072
        %10105 = vst.msk [vmem:[%s350 + $0xa8] sm:$0xff] %vm351, %v10073
        %10106 = vst.msk [vmem:[%s350 + $0xb0] sm:$0xff] %vm351, %v10074
        %10107 = vst.msk [vmem:[%s350 + $0xb8] sm:$0xff] %vm351, %v10075
        %10108 = vst.msk [vmem:[%s350 + $0xc0] sm:$0xff] %vm351, %v10076
        %10109 = vst.msk [vmem:[%s350 + $0xc8] sm:$0xff] %vm351, %v10077
        %10110 = vst.msk [vmem:[%s350 + $0xd0] sm:$0xff] %vm351, %v10078
        %10111 = vst.msk [vmem:[%s350 + $0xd8] sm:$0xff] %vm351, %v10079
        %10112 = vst.msk [vmem:[%s350 + $0xe0] sm:$0xff] %vm351, %v10080
        %10113 = vst.msk [vmem:[%s350 + $0xe8] sm:$0xff] %vm351, %v10081
        %10114 = vst.msk [vmem:[%s350 + $0xf0] sm:$0xff] %vm351, %v10082
        %10115 = vst.msk [vmem:[%s350 + $0xf8] sm:$0xff] %vm351, %v10083
        %s10116 = sand.u32 %s228, 1
        %s10117 = scalar_lea.sflag [#allocation5], %s10116
        %s10118 = sand.u32 %s228, 1
        %s10119 = smul.addr %s10118, 256
        %s10120 = scalar_lea.vmem [#allocation6], %s10119
        // Predicated region
        $region61: #{tpu_custom_call.1} parent=55 // pred_check
          %p10121 = pneg %p238
        $region62: #{tpu_custom_call.1} parent=55 // pred_check_branch
          %10123 = sbr.rel (%p10121) target = $region64
        $region63: #{tpu_custom_call.1} parent=55 // pred_region
          %s10125 = ssub.s32 4096, 4096
          %10126 = vsyncadd %s10117, %s10125
          %s10127 = smul.addr %s26, 32
          %s10128 = smul.addr %s10127, 128
          %s10129 = scalar_lea.hbm %s9, %s10128
          %s10130 = sshll.u32 %s10120, 4
          %s10131 = int_to_ptr.vmem [resolvable:$true] %s10130
          %10136 = dma.vmem_to_hbm [thread:$0]  %s10131, 4096, %s10129, %s10117, 128, 128, 8
        $region64: #{tpu_custom_call.1} parent=55 // pred_fallthru
          _
      $region56: #{tpu_custom_call.1} parent=5 // pred_fallthru
        _
      %p10137 = scmp.le.s32.totalorder 2, %s21
      // Predicated region
      $region65: #{tpu_custom_call.1} parent=5 // pred_check
        %p10138 = pneg %p10137
      $region66: #{tpu_custom_call.1} parent=5 // pred_check_branch
        %10140 = sbr.rel (%p10138) target = $region68
      $region67: #{tpu_custom_call.1} parent=5 // pred_region
        %s10141 = ssub.s32 %s21, 2
        // Predicated region
        $region69: #{tpu_custom_call.1} parent=67 // pred_check
          %p10142 = pneg %p244
        $region70: #{tpu_custom_call.1} parent=67 // pred_check_branch
          %10144 = sbr.rel (%p10142) target = $region72
        $region71: #{tpu_custom_call.1} parent=67 // pred_region
          %s10145 = sand.u32 %s229, 1
          %s10146 = scalar_lea.sflag [#allocation5], %s10145
          %s10147 = sand.u32 %s229, 1
          %s10148 = smul.addr %s10147, 256
          %s10149 = scalar_lea.vmem [#allocation6], %s10148
          %10150 = dma.done %s10146, 4096
        $region72: #{tpu_custom_call.1} parent=67 // pred_fallthru
          _
      $region68: #{tpu_custom_call.1} parent=5 // pred_fallthru
        _
    $region6: #{tpu_custom_call.1} parent=1 // loop_footer
      %s25 = sadd.s32 1, %s21
    $region7: #{tpu_custom_call.1} parent=1 // loop_footer_branch
      %20 = sbr.rel target = $region3
    $region8: #{tpu_custom_call.1} parent=1 // loop_exit
      _
    %10151 = vsyncpa [#allocation4], 1
    %s10152 = scalar_lea.sflag [#allocation4], 1
    %10153 = vsyncpa %s10152, 1
    %10154 = vsyncpa [#allocation5], 1
    %s10155 = scalar_lea.sflag [#allocation5], 1
    %10156 = vsyncpa %s10155, 1

</llo_original>
